<compile_context>
chip_gen: v6e
topology: v6e:2x2x1
jax: 0.10.0
libtpu: 0.0.40
codegen_flags: <defaults>
</compile_context>

<pallas_src>
import functools
import math

import numpy as np
import jax
import jax.numpy as jnp
from jax import lax
from jax.experimental import pallas as pl
from jax.experimental.pallas import tpu as pltpu

# ---------------- module config (small, consistent with the reference) ----------------
DIM = 32                 # channels C
NUM_HEADS = 4            # head_dim = 8
WINDOW = (2, 4, 4)       # window_size -> N = 32 tokens / window
SHIFT = (0, 0, 0)        # default shift_size (no SW-MSA mask needed)
MLP_RATIO = 4.0
LN_EPS = 1e-5
BN_EPS = 1e-5
_INV_SQRT2 = 1.0 / math.sqrt(2.0)


# ---------------------------------- helpers (glue) ------------------------------------
def get_window_size(x_size, window_size, shift_size=None):
    use_ws = list(window_size)
    use_ss = list(shift_size) if shift_size is not None else None
    for i in range(len(x_size)):
        if x_size[i] <= window_size[i]:
            use_ws[i] = x_size[i]
            if shift_size is not None:
                use_ss[i] = 0
    if shift_size is None:
        return tuple(use_ws)
    return tuple(use_ws), tuple(use_ss)


def window_partition(x, ws):
    B, D, H, W, C = x.shape
    x = x.reshape(B, D // ws[0], ws[0], H // ws[1], ws[1], W // ws[2], ws[2], C)
    x = x.transpose(0, 1, 3, 5, 2, 4, 6, 7)
    return x.reshape(-1, ws[0] * ws[1] * ws[2], C)


def window_reverse(windows, ws, B, D, H, W):
    x = windows.reshape(B, D // ws[0], H // ws[1], W // ws[2], ws[0], ws[1], ws[2], -1)
    x = x.transpose(0, 1, 4, 2, 5, 3, 6, 7)
    return x.reshape(B, D, H, W, -1)


def compute_relative_position_index(ws):
    wd, wh, ww = ws
    coords = np.stack(np.meshgrid(np.arange(wd), np.arange(wh), np.arange(ww),
                                  indexing="ij"))
    cf = coords.reshape(3, -1)
    rel = cf[:, :, None] - cf[:, None, :]
    rel = rel.transpose(1, 2, 0).astype(np.int64)
    rel[:, :, 0] += wd - 1
    rel[:, :, 1] += wh - 1
    rel[:, :, 2] += ww - 1
    rel[:, :, 0] *= (2 * wh - 1) * (2 * ww - 1)
    rel[:, :, 1] *= (2 * ww - 1)
    return rel.sum(-1).astype(np.int32)


def _row_tile(n, cap):
    """Largest divisor of n that is <= cap and a multiple of 8 (or n itself)."""
    for t in range(min(n, cap), 0, -1):
        if n % t == 0 and (t % 8 == 0 or t == n):
            return t
    return n


def _pick_wb(bw, n_tok, n_win_mask=None):
    """Windows per attention grid step: target ~256 flattened rows; must divide
    the total window count (and the mask period nW when a shift mask exists)."""
    cap = max(1, 256 // n_tok)
    m = bw if n_win_mask is None else math.gcd(bw, n_win_mask)
    for wb in range(min(cap, m), 0, -1):
        if m % wb == 0:
            return wb
    return 1


# --------------------------------- Pallas kernels --------------------------------------
def _attn_kernel(x_ref, bias_ref, ln_g_ref, ln_b_ref,
                 wqkv_ref, bqkv_ref, wproj_ref, bproj_ref, o_ref,
                 *, num_heads, scale):
    WB, N, C = x_ref.shape
    hd = C // num_heads
    x = x_ref[...].reshape(WB * N, C)                      # WB windows flattened

    # LayerNorm (norm1) over channels, f32.
    mu = jnp.mean(x, axis=-1, keepdims=True)
    var = jnp.mean(jnp.square(x - mu), axis=-1, keepdims=True)
    xn = (x - mu) * lax.rsqrt(var + LN_EPS)
    xn = xn * ln_g_ref[...] + ln_b_ref[...]

    # QKV projection: bf16 operands, f32 accumulation (M = WB*N rows on the MXU).
    qkv = jnp.dot(xn.astype(jnp.bfloat16), wqkv_ref[...],
                  preferred_element_type=jnp.float32) + bqkv_ref[...]
    q = (qkv[:, 0 * C:1 * C] * scale).astype(jnp.bfloat16)
    k = qkv[:, 1 * C:2 * C].astype(jnp.bfloat16)
    v = qkv[:, 2 * C:3 * C].astype(jnp.bfloat16)

    # Per-head attention, batched over the WB windows of this grid step.
    # (head loop kept static: nh=4 and head_dim=8 make a fully 4-D batched
    #  formulation layout-hostile with C=32; window batching is the big win.)
    head_outs = []
    for h in range(num_heads):
        qh = q[:, h * hd:(h + 1) * hd].reshape(WB, N, hd)
        kh = k[:, h * hd:(h + 1) * hd].reshape(WB, N, hd)
        vh = v[:, h * hd:(h + 1) * hd].reshape(WB, N, hd)
        s = lax.dot_general(qh, kh, (((2,), (2,)), ((0,), (0,))),
                            preferred_element_type=jnp.float32)     # (WB, N, N)
        s = s + bias_ref[:, h]          # (1, N, N) const or (WB, N, N) masked
        s = s - jnp.max(s, axis=-1, keepdims=True)
        p = jnp.exp(s)
        p = p * pl.reciprocal(jnp.sum(p, axis=-1, keepdims=True), approx=True)
        oh = lax.dot_general(p.astype(jnp.bfloat16), vh,
                             (((2,), (1,)), ((0,), (0,))),
                             preferred_element_type=jnp.float32)    # (WB, N, hd)
        head_outs.append(oh)
    out = jnp.concatenate(head_outs, axis=-1).reshape(WB * N, C)

    # Output projection.
    proj = jnp.dot(out.astype(jnp.bfloat16), wproj_ref[...],
                   preferred_element_type=jnp.float32) + bproj_ref[...]
    o_ref[...] = proj.reshape(WB, N, C)


def _bn1_stats_kernel(sc_ref, at_ref, st_ref):
    # residual added TWICE, exactly as in the reference forward:
    #   x = shortcut + part1(x); x = shortcut + x  ->  2*shortcut + part1(x)
    t = 2.0 * sc_ref[...] + at_ref[...]                     # lane-dense folded view
    cf = t.shape[1]
    s0 = jnp.sum(t, axis=0, keepdims=True)
    s1 = jnp.sum(t * t, axis=0, keepdims=True)
    st_ref[0] = jnp.concatenate([s0, s1, jnp.zeros((6, cf), jnp.float32)], axis=0)


def _mlp_bn1_kernel(sc_ref, at_ref, s1_ref, o1_ref,
                    w1_ref, b1_ref, w2_ref, b2_ref, z_ref, st_ref):
    t = 2.0 * sc_ref[...] + at_ref[...]
    y = t * s1_ref[...] + o1_ref[...]                       # BatchNorm3d #1 (affine-folded)
    h = jnp.dot(y.astype(jnp.bfloat16), w1_ref[...],
                preferred_element_type=jnp.float32) + b1_ref[...]
    h = 0.5 * h * (1.0 + lax.erf(h * _INV_SQRT2))           # exact GELU (torch default)
    m = jnp.dot(h.astype(jnp.bfloat16), w2_ref[...],
                preferred_element_type=jnp.float32) + b2_ref[...]
    z = y + m                                               # MLP residual: x + mlp(x)
    z_ref[...] = z
    c = z.shape[1]
    s0 = jnp.sum(z, axis=0, keepdims=True)                  # BN2 partial stats
    s1 = jnp.sum(z * z, axis=0, keepdims=True)
    st_ref[0] = jnp.concatenate([s0, s1, jnp.zeros((6, c), jnp.float32)], axis=0)


def _bn2_norm_kernel(z_ref, s_ref, o_ref, out_ref):
    out_ref[...] = z_ref[...] * s_ref[...] + o_ref[...]


# --------------------------------- pallas_call wrappers ---------------------------------
def window_attention_call(xw, bias, params, wb):
    BW, N, C = xw.shape
    nh = NUM_HEADS
    scale = (C // nh) ** (-0.5)
    grid = BW // wb
    nb = bias.shape[0]
    if nb == 1:
        # relative-position bias only: resident constant block.
        bias_spec = pl.BlockSpec((1, nh, N, N), lambda i: (0, 0, 0, 0))
    else:
        # shifted windows: bias[g % nW]; wb divides nW and windows are batch-major,
        # so a block of wb consecutive windows maps to one contiguous bias block.
        nblk = nb // wb
        bias_spec = pl.BlockSpec((wb, nh, N, N), lambda i: (i % nblk, 0, 0, 0))
    const = lambda shape: pl.BlockSpec(shape, lambda i: (0,) * len(shape))
    kernel = functools.partial(_attn_kernel, num_heads=nh, scale=scale)
    return pl.pallas_call(
        kernel,
        out_shape=jax.ShapeDtypeStruct((BW, N, C), jnp.float32),
        grid=(grid,),
        in_specs=[
            pl.BlockSpec((wb, N, C), lambda i: (i, 0, 0)),
            bias_spec,
            const((1, C)), const((1, C)),
            const((C, 3 * C)), const((1, 3 * C)),
            const((C, C)), const((1, C)),
        ],
        out_specs=pl.BlockSpec((wb, N, C), lambda i: (i, 0, 0)),
        compiler_params=pltpu.CompilerParams(dimension_semantics=("parallel",)),
    )(xw, bias,
      params["ln1_g"], params["ln1_b"],
      params["wqkv"].astype(jnp.bfloat16), params["bqkv"],
      params["wproj"].astype(jnp.bfloat16), params["bproj"])


def bn1_stats_call(sc_f, at_f):
    Tf, Cf = sc_f.shape
    tile = _row_tile(Tf, 512)
    grid = Tf // tile
    st = pl.pallas_call(
        _bn1_stats_kernel,
        out_shape=jax.ShapeDtypeStruct((grid, 8, Cf), jnp.float32),
        grid=(grid,),
        in_specs=[pl.BlockSpec((tile, Cf), lambda i: (i, 0)),
                  pl.BlockSpec((tile, Cf), lambda i: (i, 0))],
        out_specs=pl.BlockSpec((1, 8, Cf), lambda i: (i, 0, 0)),
        compiler_params=pltpu.CompilerParams(dimension_semantics=("parallel",)),
    )(sc_f, at_f)
    return jnp.sum(st[:, 0, :], axis=0), jnp.sum(st[:, 1, :], axis=0)


def mlp_bn1_call(sc, at, scale1, off1, params):
    T, C = sc.shape
    Ch = params["w1"].shape[1]
    tile = _row_tile(T, 256)
    grid = T // tile
    const = lambda shape: pl.BlockSpec(shape, lambda i: (0,) * len(shape))
    z, st = pl.pallas_call(
        _mlp_bn1_kernel,
        out_shape=(jax.ShapeDtypeStruct((T, C), jnp.float32),
                   jax.ShapeDtypeStruct((grid, 8, C), jnp.float32)),
        grid=(grid,),
        in_specs=[
            pl.BlockSpec((tile, C), lambda i: (i, 0)),
            pl.BlockSpec((tile, C), lambda i: (i, 0)),
            const((1, C)), const((1, C)),
            const((C, Ch)), const((1, Ch)),
            const((Ch, C)), const((1, C)),
        ],
        out_specs=(pl.BlockSpec((tile, C), lambda i: (i, 0)),
                   pl.BlockSpec((1, 8, C), lambda i: (i, 0, 0))),
        compiler_params=pltpu.CompilerParams(dimension_semantics=("parallel",)),
    )(sc, at, scale1, off1,
      params["w1"].astype(jnp.bfloat16), params["b1"],
      params["w2"].astype(jnp.bfloat16), params["b2"])
    return z, jnp.sum(st[:, 0, :], axis=0), jnp.sum(st[:, 1, :], axis=0)


def bn2_norm_call(z_f, scale_f, off_f):
    Tf, Cf = z_f.shape
    tile = _row_tile(Tf, 512)
    grid = Tf // tile
    return pl.pallas_call(
        _bn2_norm_kernel,
        out_shape=jax.ShapeDtypeStruct((Tf, Cf), jnp.float32),
        grid=(grid,),
        in_specs=[pl.BlockSpec((tile, Cf), lambda i: (i, 0)),
                  pl.BlockSpec((1, Cf), lambda i: (0, 0)),
                  pl.BlockSpec((1, Cf), lambda i: (0, 0))],
        out_specs=pl.BlockSpec((tile, Cf), lambda i: (i, 0)),
        compiler_params=pltpu.CompilerParams(dimension_semantics=("parallel",)),
    )(z_f, scale_f, off_f)


# ------------------------------------ full forward --------------------------------------
def _bn_affine(sum_c, sq_c, count, gamma, beta):
    mean = sum_c / count
    var = jnp.maximum(sq_c / count - mean * mean, 0.0)      # biased var (training BN)
    scale = gamma * lax.rsqrt(var + BN_EPS)
    return scale, beta - mean * scale


def swin_block_forward(x, mask_matrix, params):
    B, D, H, W, C = x.shape
    ws, ss = get_window_size((D, H, W), WINDOW, SHIFT)
    nh = NUM_HEADS
    shortcut = x

    # ---- forward_part1: norm1 (fused into attention kernel) + (S)W-MSA ----
    pad_d1 = (ws[0] - D % ws[0]) % ws[0]
    pad_b = (ws[1] - H % ws[1]) % ws[1]
    pad_r = (ws[2] - W % ws[2]) % ws[2]
    # TODO(synk): torch applies norm1 *before* zero-padding; fusing LN after the pad
    # is only exactly equivalent when LN beta == 0 or no padding is needed (true here).
    xp = jnp.pad(x, ((0, 0), (0, pad_d1), (0, pad_b), (0, pad_r), (0, 0)))
    _, Dp, Hp, Wp, _ = xp.shape

    if any(i > 0 for i in ss):
        shifted = jnp.roll(xp, shift=(-ss[0], -ss[1], -ss[2]), axis=(1, 2, 3))
        attn_mask = mask_matrix
    else:
        shifted = xp
        attn_mask = None

    xw = window_partition(shifted, ws)                       # (BW, N, C)
    BW, N, _ = xw.shape

    # relative-position bias (precomputed at init for the full window size)
    if N == params["rpb"].shape[-1]:
        rpb = params["rpb"]
    else:
        idx = params["rel_index"][:N, :N].reshape(-1)
        rpb = params["rel_table"][idx].reshape(N, N, nh).transpose(2, 0, 1)

    if attn_mask is not None:
        nW = attn_mask.shape[0]
        bias = (rpb[None] + attn_mask[:, None, :, :]).astype(jnp.float32)  # (nW,nh,N,N)
        wb = _pick_wb(BW, N, nW)
    else:
        bias = rpb[None].astype(jnp.float32)                                # (1,nh,N,N)
        wb = _pick_wb(BW, N)

    attn_w = window_attention_call(xw, bias, params, wb)      # (BW, N, C)
    shifted = window_reverse(attn_w, ws, B, Dp, Hp, Wp)
    if any(i > 0 for i in ss):
        xr = jnp.roll(shifted, shift=(ss[0], ss[1], ss[2]), axis=(1, 2, 3))
    else:
        xr = shifted
    attn_out = xr[:, :D, :H, :W, :]

    # ---- residual (applied twice, as in the reference) + BN1 + MLP + BN2 ----
    T = B * D * H * W
    sc = shortcut.reshape(T, C)
    at = attn_out.reshape(T, C)

    fold = 4 if (T % 4 == 0) else 1            # lane-dense (T/4, 4*C) folded view
    Tf, Cf = T // fold, C * fold

    # pass 1: BN1 batch statistics of t = 2*shortcut + attn (tiled reduction)
    s1, q1 = bn1_stats_call(sc.reshape(Tf, Cf), at.reshape(Tf, Cf))
    s1 = s1.reshape(fold, C).sum(axis=0)
    q1 = q1.reshape(fold, C).sum(axis=0)
    scale1, off1 = _bn_affine(s1, q1, float(T),
                              params["bn1_g"].reshape(-1), params["bn1_b"].reshape(-1))

    # pass 2: BN1 normalize + MLP + residual, with per-tile BN2 partial stats
    z, s2, q2 = mlp_bn1_call(sc, at, scale1.reshape(1, C), off1.reshape(1, C), params)
    scale2, off2 = _bn_affine(s2, q2, float(T),
                              params["bn2_g"].reshape(-1), params["bn2_b"].reshape(-1))

    # pass 3: BN2 normalize on the lane-dense folded view
    out = bn2_norm_call(z.reshape(Tf, Cf),
                        jnp.tile(scale2.reshape(1, C), (1, fold)),
                        jnp.tile(off2.reshape(1, C), (1, fold)))
    return out.reshape(B, D, H, W, C)


# ------------------------------------ parameter init ------------------------------------
def init_params(key):
    C = DIM
    Ch = int(C * MLP_RATIO)
    nh = NUM_HEADS
    Nf = WINDOW[0] * WINDOW[1] * WINDOW[2]
    ntab = (2 * WINDOW[0] - 1) * (2 * WINDOW[1] - 1) * (2 * WINDOW[2] - 1)
    ks = jax.random.split(key, 10)

    def lin_w(k, fin, fout):
        bound = 1.0 / math.sqrt(fin)
        return jax.random.uniform(k, (fin, fout), jnp.float32, -bound, bound)

    def lin_b(k, fin, fout):
        bound = 1.0 / math.sqrt(fin)
        return jax.random.uniform(k, (1, fout), jnp.float32, -bound, bound)

    rel_index = jnp.asarray(compute_relative_position_index(WINDOW))
    rel_table = 0.02 * jax.random.normal(ks[4], (ntab, nh), jnp.float32)
    # precompute the (nh, N, N) relative-position bias once (static given window size)
    rpb = rel_table[rel_index.reshape(-1)].reshape(Nf, Nf, nh).transpose(2, 0, 1)

    params = dict(
        ln1_g=jnp.ones((1, C), jnp.float32),
        ln1_b=jnp.zeros((1, C), jnp.float32),
        wqkv=lin_w(ks[0], C, 3 * C),
        bqkv=lin_b(ks[1], C, 3 * C),
        wproj=lin_w(ks[2], C, C),
        bproj=lin_b(ks[3], C, C),
        rel_table=rel_table,
        rel_index=rel_index,
        rpb=jnp.asarray(rpb, jnp.float32),
        w1=lin_w(ks[5], C, Ch),
        b1=lin_b(ks[6], C, Ch),
        w2=lin_w(ks[7], Ch, C),
        b2=lin_b(ks[8], Ch, C),
        bn1_g=jnp.ones((1, C), jnp.float32),
        bn1_b=jnp.zeros((1, C), jnp.float32),
        bn2_g=jnp.ones((1, C), jnp.float32),
        bn2_b=jnp.zeros((1, C), jnp.float32),
    )
    # TODO(synk): norm2 exists in the reference __init__ but is unused in forward;
    # BatchNorm running-stat (momentum buffer) updates are not modeled (they do not
    # affect the training-mode forward output). Dropout / drop_path are identity (p=0).
    return params


# ---------------------------------------- main -------------------------------------------
if __name__ == "__main__":
    B, D, H, W, C = 2, 4, 8, 8, DIM
    x = jax.random.normal(jax.random.PRNGKey(0), (B, D, H, W, C), jnp.float32)
    params = init_params(jax.random.PRNGKey(1))

    fwd = jax.jit(lambda xi: swin_block_forward(xi, None, params))  # shift=(0,0,0): no mask
    out = jax.block_until_ready(fwd(x))
    assert out.shape == (B, D, H, W, C)
    assert bool(jnp.all(jnp.isfinite(out)))
    print("KERNEL_OK")
</pallas_src>

<mosaic_0001>
module attributes {stable_mosaic.version = 11 : i64} {
  func.func @_attn_kernel(%arg0: i32, %arg1: memref<8x32x32xf32, #tpu.memory_space<vmem>>, %arg2: memref<1x4x32x32xf32, #tpu.memory_space<vmem>>, %arg3: memref<1x32xf32, #tpu.memory_space<vmem>>, %arg4: memref<1x32xf32, #tpu.memory_space<vmem>>, %arg5: memref<32x96xbf16, #tpu.memory_space<vmem>>, %arg6: memref<1x96xf32, #tpu.memory_space<vmem>>, %arg7: memref<32x32xbf16, #tpu.memory_space<vmem>>, %arg8: memref<1x32xf32, #tpu.memory_space<vmem>>, %arg9: memref<8x32x32xf32, #tpu.memory_space<vmem>>) attributes {dimension_semantics = [#tpu.dimension_semantics<parallel>], iteration_bounds = array<i64: 2>, scalar_prefetch = 0 : i64, scratch_operands = 0 : i64, tpu.core_type = #tpu.core_type<tc>, window_params = [{transform_indices = @transform_0, window_bounds = array<i64: 8, 32, 32>}, {pipeline_mode = #tpu.pipeline_mode<synchronous>, transform_indices = @transform_1, window_bounds = array<i64: 1, 4, 32, 32>}, {pipeline_mode = #tpu.pipeline_mode<synchronous>, transform_indices = @transform_2, window_bounds = array<i64: 1, 32>}, {pipeline_mode = #tpu.pipeline_mode<synchronous>, transform_indices = @transform_3, window_bounds = array<i64: 1, 32>}, {pipeline_mode = #tpu.pipeline_mode<synchronous>, transform_indices = @transform_4, window_bounds = array<i64: 32, 96>}, {pipeline_mode = #tpu.pipeline_mode<synchronous>, transform_indices = @transform_5, window_bounds = array<i64: 1, 96>}, {pipeline_mode = #tpu.pipeline_mode<synchronous>, transform_indices = @transform_6, window_bounds = array<i64: 32, 32>}, {pipeline_mode = #tpu.pipeline_mode<synchronous>, transform_indices = @transform_7, window_bounds = array<i64: 1, 32>}, {transform_indices = @transform_8, window_bounds = array<i64: 8, 32, 32>}]} {
    %c0 = arith.constant 0 : index
    %c0_0 = arith.constant 0 : index
    %c0_1 = arith.constant 0 : index
    %0 = vector.load %arg1[%c0, %c0_0, %c0_1] : memref<8x32x32xf32, #tpu.memory_space<vmem>>, vector<8x32x32xf32>
    %1 = vector.shape_cast %0 : vector<8x32x32xf32> to vector<256x32xf32>
    %cst = arith.constant dense<0.000000e+00> : vector<256xf32>
    %2 = vector.multi_reduction <add>, %1, %cst [1] : vector<256x32xf32> to vector<256xf32>
    %3 = vector.shape_cast %2 : vector<256xf32> to vector<256x1xf32>
    %cst_2 = arith.constant 3.200000e+01 : f32
    %4 = vector.broadcast %cst_2 : f32 to vector<256x1xf32>
    %5 = arith.divf %3, %4 : vector<256x1xf32>
    %6 = vector.broadcast %5 : vector<256x1xf32> to vector<256x32xf32>
    %7 = arith.subf %1, %6 : vector<256x32xf32>
    %8 = arith.mulf %7, %7 : vector<256x32xf32>
    %cst_3 = arith.constant dense<0.000000e+00> : vector<256xf32>
    %9 = vector.multi_reduction <add>, %8, %cst_3 [1] : vector<256x32xf32> to vector<256xf32>
    %10 = vector.shape_cast %9 : vector<256xf32> to vector<256x1xf32>
    %cst_4 = arith.constant 3.200000e+01 : f32
    %11 = vector.broadcast %cst_4 : f32 to vector<256x1xf32>
    %12 = arith.divf %10, %11 : vector<256x1xf32>
    %13 = vector.broadcast %5 : vector<256x1xf32> to vector<256x32xf32>
    %14 = arith.subf %1, %13 : vector<256x32xf32>
    %cst_5 = arith.constant 9.99999974E-6 : f32
    %15 = vector.broadcast %cst_5 : f32 to vector<256x1xf32>
    %16 = arith.addf %12, %15 : vector<256x1xf32>
    %17 = math.rsqrt %16 : vector<256x1xf32>
    %18 = vector.broadcast %17 : vector<256x1xf32> to vector<256x32xf32>
    %19 = arith.mulf %14, %18 : vector<256x32xf32>
    %c0_6 = arith.constant 0 : index
    %c0_7 = arith.constant 0 : index
    %20 = vector.load %arg3[%c0_6, %c0_7] : memref<1x32xf32, #tpu.memory_space<vmem>>, vector<1x32xf32>
    %21 = vector.broadcast %20 : vector<1x32xf32> to vector<256x32xf32>
    %22 = arith.mulf %19, %21 : vector<256x32xf32>
    %c0_8 = arith.constant 0 : index
    %c0_9 = arith.constant 0 : index
    %23 = vector.load %arg4[%c0_8, %c0_9] : memref<1x32xf32, #tpu.memory_space<vmem>>, vector<1x32xf32>
    %24 = vector.broadcast %23 : vector<1x32xf32> to vector<256x32xf32>
    %25 = arith.addf %22, %24 : vector<256x32xf32>
    %26 = arith.truncf %25 : vector<256x32xf32> to vector<256x32xbf16>
    %c0_10 = arith.constant 0 : index
    %c0_11 = arith.constant 0 : index
    %27 = vector.load %arg5[%c0_10, %c0_11] : memref<32x96xbf16, #tpu.memory_space<vmem>>, vector<32x96xbf16>
    %cst_12 = arith.constant dense<0.000000e+00> : vector<256x96xf32>
    %28 = tpu.matmul %26, %27, %cst_12 {dimension_numbers = #tpu.dot_dimension_numbers<[1], [0], [0], [1], [0, 0, 1, 1], [], []>} : vector<256x32xbf16>, vector<32x96xbf16>, vector<256x96xf32> -> vector<256x96xf32>
    %c0_13 = arith.constant 0 : index
    %c0_14 = arith.constant 0 : index
    %29 = vector.load %arg6[%c0_13, %c0_14] : memref<1x96xf32, #tpu.memory_space<vmem>>, vector<1x96xf32>
    %30 = vector.broadcast %29 : vector<1x96xf32> to vector<256x96xf32>
    %31 = arith.addf %28, %30 : vector<256x96xf32>
    %32 = vector.extract_strided_slice %31 {offsets = [0, 0], sizes = [256, 32], strides = [1, 1]} : vector<256x96xf32> to vector<256x32xf32>
    %cst_15 = arith.constant 0.353553385 : f32
    %33 = vector.broadcast %cst_15 : f32 to vector<256x32xf32>
    %34 = arith.mulf %32, %33 : vector<256x32xf32>
    %35 = arith.truncf %34 : vector<256x32xf32> to vector<256x32xbf16>
    %36 = vector.extract_strided_slice %31 {offsets = [0, 32], sizes = [256, 32], strides = [1, 1]} : vector<256x96xf32> to vector<256x32xf32>
    %37 = arith.truncf %36 : vector<256x32xf32> to vector<256x32xbf16>
    %38 = vector.extract_strided_slice %31 {offsets = [0, 64], sizes = [256, 32], strides = [1, 1]} : vector<256x96xf32> to vector<256x32xf32>
    %39 = arith.truncf %38 : vector<256x32xf32> to vector<256x32xbf16>
    %40 = vector.extract_strided_slice %35 {offsets = [0, 0], sizes = [256, 8], strides = [1, 1]} : vector<256x32xbf16> to vector<256x8xbf16>
    %41 = vector.shape_cast %40 : vector<256x8xbf16> to vector<8x32x8xbf16>
    %42 = vector.extract_strided_slice %37 {offsets = [0, 0], sizes = [256, 8], strides = [1, 1]} : vector<256x32xbf16> to vector<256x8xbf16>
    %43 = vector.shape_cast %42 : vector<256x8xbf16> to vector<8x32x8xbf16>
    %44 = vector.extract_strided_slice %39 {offsets = [0, 0], sizes = [256, 8], strides = [1, 1]} : vector<256x32xbf16> to vector<256x8xbf16>
    %45 = vector.shape_cast %44 : vector<256x8xbf16> to vector<8x32x8xbf16>
    %cst_16 = arith.constant dense<0.000000e+00> : vector<8x32x32xf32>
    %46 = tpu.matmul %41, %43, %cst_16 {dimension_numbers = #tpu.dot_dimension_numbers<[2], [2], [1], [1], [0, 0, 0, 1, 1, 1], [0], [0]>} : vector<8x32x8xbf16>, vector<8x32x8xbf16>, vector<8x32x32xf32> -> vector<8x32x32xf32>
    %c0_17 = arith.constant 0 : index
    %c0_18 = arith.constant 0 : index
    %c0_19 = arith.constant 0 : index
    %c0_20 = arith.constant 0 : index
    %47 = vector.load %arg2[%c0_17, %c0_18, %c0_19, %c0_20] : memref<1x4x32x32xf32, #tpu.memory_space<vmem>>, vector<1x1x32x32xf32>
    %48 = vector.shape_cast %47 : vector<1x1x32x32xf32> to vector<1x32x32xf32>
    %49 = vector.broadcast %48 : vector<1x32x32xf32> to vector<8x32x32xf32>
    %50 = arith.addf %46, %49 : vector<8x32x32xf32>
    %cst_21 = arith.constant dense<0xFF800000> : vector<8x32xf32>
    %51 = vector.multi_reduction <maximumf>, %50, %cst_21 [2] : vector<8x32x32xf32> to vector<8x32xf32>
    %52 = vector.shape_cast %51 : vector<8x32xf32> to vector<8x32x1xf32>
    %53 = vector.broadcast %52 : vector<8x32x1xf32> to vector<8x32x32xf32>
    %54 = arith.subf %50, %53 : vector<8x32x32xf32>
    %55 = math.exp %54 : vector<8x32x32xf32>
    %cst_22 = arith.constant dense<0.000000e+00> : vector<8x32xf32>
    %56 = vector.multi_reduction <add>, %55, %cst_22 [2] : vector<8x32x32xf32> to vector<8x32xf32>
    %57 = vector.shape_cast %56 : vector<8x32xf32> to vector<8x32x1xf32>
    %58 = tpu.reciprocal %57 {approx = true} : vector<8x32x1xf32> -> vector<8x32x1xf32>
    %59 = vector.broadcast %58 : vector<8x32x1xf32> to vector<8x32x32xf32>
    %60 = arith.mulf %55, %59 : vector<8x32x32xf32>
    %61 = arith.truncf %60 : vector<8x32x32xf32> to vector<8x32x32xbf16>
    %cst_23 = arith.constant dense<0.000000e+00> : vector<8x32x8xf32>
    %62 = tpu.matmul %61, %45, %cst_23 {dimension_numbers = #tpu.dot_dimension_numbers<[2], [1], [1], [2], [0, 0, 0, 1, 1, 2], [0], [0]>} : vector<8x32x32xbf16>, vector<8x32x8xbf16>, vector<8x32x8xf32> -> vector<8x32x8xf32>
    %63 = vector.extract_strided_slice %35 {offsets = [0, 8], sizes = [256, 8], strides = [1, 1]} : vector<256x32xbf16> to vector<256x8xbf16>
    %64 = vector.shape_cast %63 : vector<256x8xbf16> to vector<8x32x8xbf16>
    %65 = vector.extract_strided_slice %37 {offsets = [0, 8], sizes = [256, 8], strides = [1, 1]} : vector<256x32xbf16> to vector<256x8xbf16>
    %66 = vector.shape_cast %65 : vector<256x8xbf16> to vector<8x32x8xbf16>
    %67 = vector.extract_strided_slice %39 {offsets = [0, 8], sizes = [256, 8], strides = [1, 1]} : vector<256x32xbf16> to vector<256x8xbf16>
    %68 = vector.shape_cast %67 : vector<256x8xbf16> to vector<8x32x8xbf16>
    %cst_24 = arith.constant dense<0.000000e+00> : vector<8x32x32xf32>
    %69 = tpu.matmul %64, %66, %cst_24 {dimension_numbers = #tpu.dot_dimension_numbers<[2], [2], [1], [1], [0, 0, 0, 1, 1, 1], [0], [0]>} : vector<8x32x8xbf16>, vector<8x32x8xbf16>, vector<8x32x32xf32> -> vector<8x32x32xf32>
    %c0_25 = arith.constant 0 : index
    %c1 = arith.constant 1 : index
    %c0_26 = arith.constant 0 : index
    %c0_27 = arith.constant 0 : index
    %70 = vector.load %arg2[%c0_25, %c1, %c0_26, %c0_27] : memref<1x4x32x32xf32, #tpu.memory_space<vmem>>, vector<1x1x32x32xf32>
    %71 = vector.shape_cast %70 : vector<1x1x32x32xf32> to vector<1x32x32xf32>
    %72 = vector.broadcast %71 : vector<1x32x32xf32> to vector<8x32x32xf32>
    %73 = arith.addf %69, %72 : vector<8x32x32xf32>
    %cst_28 = arith.constant dense<0xFF800000> : vector<8x32xf32>
    %74 = vector.multi_reduction <maximumf>, %73, %cst_28 [2] : vector<8x32x32xf32> to vector<8x32xf32>
    %75 = vector.shape_cast %74 : vector<8x32xf32> to vector<8x32x1xf32>
    %76 = vector.broadcast %75 : vector<8x32x1xf32> to vector<8x32x32xf32>
    %77 = arith.subf %73, %76 : vector<8x32x32xf32>
    %78 = math.exp %77 : vector<8x32x32xf32>
    %cst_29 = arith.constant dense<0.000000e+00> : vector<8x32xf32>
    %79 = vector.multi_reduction <add>, %78, %cst_29 [2] : vector<8x32x32xf32> to vector<8x32xf32>
    %80 = vector.shape_cast %79 : vector<8x32xf32> to vector<8x32x1xf32>
    %81 = tpu.reciprocal %80 {approx = true} : vector<8x32x1xf32> -> vector<8x32x1xf32>
    %82 = vector.broadcast %81 : vector<8x32x1xf32> to vector<8x32x32xf32>
    %83 = arith.mulf %78, %82 : vector<8x32x32xf32>
    %84 = arith.truncf %83 : vector<8x32x32xf32> to vector<8x32x32xbf16>
    %cst_30 = arith.constant dense<0.000000e+00> : vector<8x32x8xf32>
    %85 = tpu.matmul %84, %68, %cst_30 {dimension_numbers = #tpu.dot_dimension_numbers<[2], [1], [1], [2], [0, 0, 0, 1, 1, 2], [0], [0]>} : vector<8x32x32xbf16>, vector<8x32x8xbf16>, vector<8x32x8xf32> -> vector<8x32x8xf32>
    %86 = vector.extract_strided_slice %35 {offsets = [0, 16], sizes = [256, 8], strides = [1, 1]} : vector<256x32xbf16> to vector<256x8xbf16>
    %87 = vector.shape_cast %86 : vector<256x8xbf16> to vector<8x32x8xbf16>
    %88 = vector.extract_strided_slice %37 {offsets = [0, 16], sizes = [256, 8], strides = [1, 1]} : vector<256x32xbf16> to vector<256x8xbf16>
    %89 = vector.shape_cast %88 : vector<256x8xbf16> to vector<8x32x8xbf16>
    %90 = vector.extract_strided_slice %39 {offsets = [0, 16], sizes = [256, 8], strides = [1, 1]} : vector<256x32xbf16> to vector<256x8xbf16>
    %91 = vector.shape_cast %90 : vector<256x8xbf16> to vector<8x32x8xbf16>
    %cst_31 = arith.constant dense<0.000000e+00> : vector<8x32x32xf32>
    %92 = tpu.matmul %87, %89, %cst_31 {dimension_numbers = #tpu.dot_dimension_numbers<[2], [2], [1], [1], [0, 0, 0, 1, 1, 1], [0], [0]>} : vector<8x32x8xbf16>, vector<8x32x8xbf16>, vector<8x32x32xf32> -> vector<8x32x32xf32>
    %c0_32 = arith.constant 0 : index
    %c2 = arith.constant 2 : index
    %c0_33 = arith.constant 0 : index
    %c0_34 = arith.constant 0 : index
    %93 = vector.load %arg2[%c0_32, %c2, %c0_33, %c0_34] : memref<1x4x32x32xf32, #tpu.memory_space<vmem>>, vector<1x1x32x32xf32>
    %94 = vector.shape_cast %93 : vector<1x1x32x32xf32> to vector<1x32x32xf32>
    %95 = vector.broadcast %94 : vector<1x32x32xf32> to vector<8x32x32xf32>
    %96 = arith.addf %92, %95 : vector<8x32x32xf32>
    %cst_35 = arith.constant dense<0xFF800000> : vector<8x32xf32>
    %97 = vector.multi_reduction <maximumf>, %96, %cst_35 [2] : vector<8x32x32xf32> to vector<8x32xf32>
    %98 = vector.shape_cast %97 : vector<8x32xf32> to vector<8x32x1xf32>
    %99 = vector.broadcast %98 : vector<8x32x1xf32> to vector<8x32x32xf32>
    %100 = arith.subf %96, %99 : vector<8x32x32xf32>
    %101 = math.exp %100 : vector<8x32x32xf32>
    %cst_36 = arith.constant dense<0.000000e+00> : vector<8x32xf32>
    %102 = vector.multi_reduction <add>, %101, %cst_36 [2] : vector<8x32x32xf32> to vector<8x32xf32>
    %103 = vector.shape_cast %102 : vector<8x32xf32> to vector<8x32x1xf32>
    %104 = tpu.reciprocal %103 {approx = true} : vector<8x32x1xf32> -> vector<8x32x1xf32>
    %105 = vector.broadcast %104 : vector<8x32x1xf32> to vector<8x32x32xf32>
    %106 = arith.mulf %101, %105 : vector<8x32x32xf32>
    %107 = arith.truncf %106 : vector<8x32x32xf32> to vector<8x32x32xbf16>
    %cst_37 = arith.constant dense<0.000000e+00> : vector<8x32x8xf32>
    %108 = tpu.matmul %107, %91, %cst_37 {dimension_numbers = #tpu.dot_dimension_numbers<[2], [1], [1], [2], [0, 0, 0, 1, 1, 2], [0], [0]>} : vector<8x32x32xbf16>, vector<8x32x8xbf16>, vector<8x32x8xf32> -> vector<8x32x8xf32>
    %109 = vector.extract_strided_slice %35 {offsets = [0, 24], sizes = [256, 8], strides = [1, 1]} : vector<256x32xbf16> to vector<256x8xbf16>
    %110 = vector.shape_cast %109 : vector<256x8xbf16> to vector<8x32x8xbf16>
    %111 = vector.extract_strided_slice %37 {offsets = [0, 24], sizes = [256, 8], strides = [1, 1]} : vector<256x32xbf16> to vector<256x8xbf16>
    %112 = vector.shape_cast %111 : vector<256x8xbf16> to vector<8x32x8xbf16>
    %113 = vector.extract_strided_slice %39 {offsets = [0, 24], sizes = [256, 8], strides = [1, 1]} : vector<256x32xbf16> to vector<256x8xbf16>
    %114 = vector.shape_cast %113 : vector<256x8xbf16> to vector<8x32x8xbf16>
    %cst_38 = arith.constant dense<0.000000e+00> : vector<8x32x32xf32>
    %115 = tpu.matmul %110, %112, %cst_38 {dimension_numbers = #tpu.dot_dimension_numbers<[2], [2], [1], [1], [0, 0, 0, 1, 1, 1], [0], [0]>} : vector<8x32x8xbf16>, vector<8x32x8xbf16>, vector<8x32x32xf32> -> vector<8x32x32xf32>
    %c0_39 = arith.constant 0 : index
    %c3 = arith.constant 3 : index
    %c0_40 = arith.constant 0 : index
    %c0_41 = arith.constant 0 : index
    %116 = vector.load %arg2[%c0_39, %c3, %c0_40, %c0_41] : memref<1x4x32x32xf32, #tpu.memory_space<vmem>>, vector<1x1x32x32xf32>
    %117 = vector.shape_cast %116 : vector<1x1x32x32xf32> to vector<1x32x32xf32>
    %118 = vector.broadcast %117 : vector<1x32x32xf32> to vector<8x32x32xf32>
    %119 = arith.addf %115, %118 : vector<8x32x32xf32>
    %cst_42 = arith.constant dense<0xFF800000> : vector<8x32xf32>
    %120 = vector.multi_reduction <maximumf>, %119, %cst_42 [2] : vector<8x32x32xf32> to vector<8x32xf32>
    %121 = vector.shape_cast %120 : vector<8x32xf32> to vector<8x32x1xf32>
    %122 = vector.broadcast %121 : vector<8x32x1xf32> to vector<8x32x32xf32>
    %123 = arith.subf %119, %122 : vector<8x32x32xf32>
    %124 = math.exp %123 : vector<8x32x32xf32>
    %cst_43 = arith.constant dense<0.000000e+00> : vector<8x32xf32>
    %125 = vector.multi_reduction <add>, %124, %cst_43 [2] : vector<8x32x32xf32> to vector<8x32xf32>
    %126 = vector.shape_cast %125 : vector<8x32xf32> to vector<8x32x1xf32>
    %127 = tpu.reciprocal %126 {approx = true} : vector<8x32x1xf32> -> vector<8x32x1xf32>
    %128 = vector.broadcast %127 : vector<8x32x1xf32> to vector<8x32x32xf32>
    %129 = arith.mulf %124, %128 : vector<8x32x32xf32>
    %130 = arith.truncf %129 : vector<8x32x32xf32> to vector<8x32x32xbf16>
    %cst_44 = arith.constant dense<0.000000e+00> : vector<8x32x8xf32>
    %131 = tpu.matmul %130, %114, %cst_44 {dimension_numbers = #tpu.dot_dimension_numbers<[2], [1], [1], [2], [0, 0, 0, 1, 1, 2], [0], [0]>} : vector<8x32x32xbf16>, vector<8x32x8xbf16>, vector<8x32x8xf32> -> vector<8x32x8xf32>
    %132 = tpu.concatenate %62, %85, %108, %131 in 2 : vector<8x32x8xf32>, vector<8x32x8xf32>, vector<8x32x8xf32>, vector<8x32x8xf32> -> vector<8x32x32xf32>
    %133 = vector.shape_cast %132 : vector<8x32x32xf32> to vector<256x32xf32>
    %134 = arith.truncf %133 : vector<256x32xf32> to vector<256x32xbf16>
    %c0_45 = arith.constant 0 : index
    %c0_46 = arith.constant 0 : index
    %135 = vector.load %arg7[%c0_45, %c0_46] : memref<32x32xbf16, #tpu.memory_space<vmem>>, vector<32x32xbf16>
    %cst_47 = arith.constant dense<0.000000e+00> : vector<256x32xf32>
    %136 = tpu.matmul %134, %135, %cst_47 {dimension_numbers = #tpu.dot_dimension_numbers<[1], [0], [0], [1], [0, 0, 1, 1], [], []>} : vector<256x32xbf16>, vector<32x32xbf16>, vector<256x32xf32> -> vector<256x32xf32>
    %c0_48 = arith.constant 0 : index
    %c0_49 = arith.constant 0 : index
    %137 = vector.load %arg8[%c0_48, %c0_49] : memref<1x32xf32, #tpu.memory_space<vmem>>, vector<1x32xf32>
    %138 = vector.broadcast %137 : vector<1x32xf32> to vector<256x32xf32>
    %139 = arith.addf %136, %138 : vector<256x32xf32>
    %140 = vector.shape_cast %139 : vector<256x32xf32> to vector<8x32x32xf32>
    %c0_50 = arith.constant 0 : index
    %c0_51 = arith.constant 0 : index
    %c0_52 = arith.constant 0 : index
    %141 = vector.load %arg9[%c0_50, %c0_51, %c0_52] : memref<8x32x32xf32, #tpu.memory_space<vmem>>, vector<8x32x32xf32>
    tpu.vector_store %arg9[%c0_50, %c0_51, %c0_52], %140 {strides = array<i32>} : memref<8x32x32xf32, #tpu.memory_space<vmem>>, vector<8x32x32xf32>,
    return
  }
  func.func @transform_0(%arg0: i32) -> (i32, i32, i32) {
    %c0_i32 = arith.constant 0 : i32
    %c0_i32_0 = arith.constant 0 : i32
    %c0_i32_1 = arith.constant 0 : i32
    return %arg0, %c0_i32, %c0_i32_0 : i32, i32, i32
  }
  func.func @transform_1(%arg0: i32) -> (i32, i32, i32, i32) {
    %c0_i32 = arith.constant 0 : i32
    %c0_i32_0 = arith.constant 0 : i32
    %c0_i32_1 = arith.constant 0 : i32
    %c0_i32_2 = arith.constant 0 : i32
    %c0_i32_3 = arith.constant 0 : i32
    return %c0_i32, %c0_i32_0, %c0_i32_1, %c0_i32_2 : i32, i32, i32, i32
  }
  func.func @transform_2(%arg0: i32) -> (i32, i32) {
    %c0_i32 = arith.constant 0 : i32
    %c0_i32_0 = arith.constant 0 : i32
    %c0_i32_1 = arith.constant 0 : i32
    return %c0_i32, %c0_i32_0 : i32, i32
  }
  func.func @transform_3(%arg0: i32) -> (i32, i32) {
    %c0_i32 = arith.constant 0 : i32
    %c0_i32_0 = arith.constant 0 : i32
    %c0_i32_1 = arith.constant 0 : i32
    return %c0_i32, %c0_i32_0 : i32, i32
  }
  func.func @transform_4(%arg0: i32) -> (i32, i32) {
    %c0_i32 = arith.constant 0 : i32
    %c0_i32_0 = arith.constant 0 : i32
    %c0_i32_1 = arith.constant 0 : i32
    return %c0_i32, %c0_i32_0 : i32, i32
  }
  func.func @transform_5(%arg0: i32) -> (i32, i32) {
    %c0_i32 = arith.constant 0 : i32
    %c0_i32_0 = arith.constant 0 : i32
    %c0_i32_1 = arith.constant 0 : i32
    return %c0_i32, %c0_i32_0 : i32, i32
  }
  func.func @transform_6(%arg0: i32) -> (i32, i32) {
    %c0_i32 = arith.constant 0 : i32
    %c0_i32_0 = arith.constant 0 : i32
    %c0_i32_1 = arith.constant 0 : i32
    return %c0_i32, %c0_i32_0 : i32, i32
  }
  func.func @transform_7(%arg0: i32) -> (i32, i32) {
    %c0_i32 = arith.constant 0 : i32
    %c0_i32_0 = arith.constant 0 : i32
    %c0_i32_1 = arith.constant 0 : i32
    return %c0_i32, %c0_i32_0 : i32, i32
  }
  func.func @transform_8(%arg0: i32) -> (i32, i32, i32) {
    %c0_i32 = arith.constant 0 : i32
    %c0_i32_0 = arith.constant 0 : i32
    %c0_i32_1 = arith.constant 0 : i32
    return %arg0, %c0_i32, %c0_i32_0 : i32, i32, i32
  }
}

module attributes {stable_mosaic.version = 11 : i64} {
  func.func @_bn1_stats_kernel(%arg0: i32, %arg1: memref<128x128xf32, #tpu.memory_space<vmem>>, %arg2: memref<128x128xf32, #tpu.memory_space<vmem>>, %arg3: memref<1x8x128xf32, #tpu.memory_space<vmem>>) attributes {dimension_semantics = [#tpu.dimension_semantics<parallel>], iteration_bounds = array<i64: 1>, scalar_prefetch = 0 : i64, scratch_operands = 0 : i64, tpu.core_type = #tpu.core_type<tc>, window_params = [{transform_indices = @transform_0, window_bounds = array<i64: 128, 128>}, {transform_indices = @transform_1, window_bounds = array<i64: 128, 128>}, {transform_indices = @transform_2, window_bounds = array<i64: 1, 8, 128>}]} {
    %c0 = arith.constant 0 : index
    %c0_0 = arith.constant 0 : index
    %0 = vector.load %arg1[%c0, %c0_0] : memref<128x128xf32, #tpu.memory_space<vmem>>, vector<128x128xf32>
    %cst = arith.constant 2.000000e+00 : f32
    %1 = vector.broadcast %cst : f32 to vector<128x128xf32>
    %2 = arith.mulf %1, %0 : vector<128x128xf32>
    %c0_1 = arith.constant 0 : index
    %c0_2 = arith.constant 0 : index
    %3 = vector.load %arg2[%c0_1, %c0_2] : memref<128x128xf32, #tpu.memory_space<vmem>>, vector<128x128xf32>
    %4 = arith.addf %2, %3 : vector<128x128xf32>
    %cst_3 = arith.constant dense<0.000000e+00> : vector<128xf32>
    %5 = vector.multi_reduction <add>, %4, %cst_3 [0] : vector<128x128xf32> to vector<128xf32>
    %6 = vector.shape_cast %5 : vector<128xf32> to vector<1x128xf32>
    %7 = arith.mulf %4, %4 : vector<128x128xf32>
    %cst_4 = arith.constant dense<0.000000e+00> : vector<128xf32>
    %8 = vector.multi_reduction <add>, %7, %cst_4 [0] : vector<128x128xf32> to vector<128xf32>
    %9 = vector.shape_cast %8 : vector<128xf32> to vector<1x128xf32>
    %cst_5 = arith.constant 0.000000e+00 : f32
    %10 = vector.broadcast %cst_5 : f32 to vector<6x128xf32>
    %11 = tpu.concatenate %6, %9, %10 in 0 : vector<1x128xf32>, vector<1x128xf32>, vector<6x128xf32> -> vector<8x128xf32>
    %c0_6 = arith.constant 0 : index
    %c0_7 = arith.constant 0 : index
    %c0_8 = arith.constant 0 : index
    %12 = vector.load %arg3[%c0_6, %c0_7, %c0_8] : memref<1x8x128xf32, #tpu.memory_space<vmem>>, vector<1x8x128xf32>
    %13 = vector.shape_cast %12 : vector<1x8x128xf32> to vector<8x128xf32>
    %14 = vector.shape_cast %11 : vector<8x128xf32> to vector<1x8x128xf32>
    tpu.vector_store %arg3[%c0_6, %c0_7, %c0_8], %14 {strides = array<i32>} : memref<1x8x128xf32, #tpu.memory_space<vmem>>, vector<1x8x128xf32>,
    return
  }
  func.func @transform_0(%arg0: i32) -> (i32, i32) {
    %c0_i32 = arith.constant 0 : i32
    %c0_i32_0 = arith.constant 0 : i32
    return %arg0, %c0_i32 : i32, i32
  }
  func.func @transform_1(%arg0: i32) -> (i32, i32) {
    %c0_i32 = arith.constant 0 : i32
    %c0_i32_0 = arith.constant 0 : i32
    return %arg0, %c0_i32 : i32, i32
  }
  func.func @transform_2(%arg0: i32) -> (i32, i32, i32) {
    %c0_i32 = arith.constant 0 : i32
    %c0_i32_0 = arith.constant 0 : i32
    %c0_i32_1 = arith.constant 0 : i32
    return %arg0, %c0_i32, %c0_i32_0 : i32, i32, i32
  }
}

module attributes {stable_mosaic.version = 11 : i64} {
  func.func @_mlp_bn1_kernel(%arg0: i32, %arg1: memref<256x32xf32, #tpu.memory_space<vmem>>, %arg2: memref<256x32xf32, #tpu.memory_space<vmem>>, %arg3: memref<1x32xf32, #tpu.memory_space<vmem>>, %arg4: memref<1x32xf32, #tpu.memory_space<vmem>>, %arg5: memref<32x128xbf16, #tpu.memory_space<vmem>>, %arg6: memref<1x128xf32, #tpu.memory_space<vmem>>, %arg7: memref<128x32xbf16, #tpu.memory_space<vmem>>, %arg8: memref<1x32xf32, #tpu.memory_space<vmem>>, %arg9: memref<256x32xf32, #tpu.memory_space<vmem>>, %arg10: memref<1x8x32xf32, #tpu.memory_space<vmem>>) attributes {dimension_semantics = [#tpu.dimension_semantics<parallel>], iteration_bounds = array<i64: 2>, scalar_prefetch = 0 : i64, scratch_operands = 0 : i64, tpu.core_type = #tpu.core_type<tc>, window_params = [{transform_indices = @transform_0, window_bounds = array<i64: 256, 32>}, {transform_indices = @transform_1, window_bounds = array<i64: 256, 32>}, {pipeline_mode = #tpu.pipeline_mode<synchronous>, transform_indices = @transform_2, window_bounds = array<i64: 1, 32>}, {pipeline_mode = #tpu.pipeline_mode<synchronous>, transform_indices = @transform_3, window_bounds = array<i64: 1, 32>}, {pipeline_mode = #tpu.pipeline_mode<synchronous>, transform_indices = @transform_4, window_bounds = array<i64: 32, 128>}, {pipeline_mode = #tpu.pipeline_mode<synchronous>, transform_indices = @transform_5, window_bounds = array<i64: 1, 128>}, {pipeline_mode = #tpu.pipeline_mode<synchronous>, transform_indices = @transform_6, window_bounds = array<i64: 128, 32>}, {pipeline_mode = #tpu.pipeline_mode<synchronous>, transform_indices = @transform_7, window_bounds = array<i64: 1, 32>}, {transform_indices = @transform_8, window_bounds = array<i64: 256, 32>}, {transform_indices = @transform_9, window_bounds = array<i64: 1, 8, 32>}]} {
    %c0 = arith.constant 0 : index
    %c0_0 = arith.constant 0 : index
    %0 = vector.load %arg1[%c0, %c0_0] : memref<256x32xf32, #tpu.memory_space<vmem>>, vector<256x32xf32>
    %cst = arith.constant 2.000000e+00 : f32
    %1 = vector.broadcast %cst : f32 to vector<256x32xf32>
    %2 = arith.mulf %1, %0 : vector<256x32xf32>
    %c0_1 = arith.constant 0 : index
    %c0_2 = arith.constant 0 : index
    %3 = vector.load %arg2[%c0_1, %c0_2] : memref<256x32xf32, #tpu.memory_space<vmem>>, vector<256x32xf32>
    %4 = arith.addf %2, %3 : vector<256x32xf32>
    %c0_3 = arith.constant 0 : index
    %c0_4 = arith.constant 0 : index
    %5 = vector.load %arg3[%c0_3, %c0_4] : memref<1x32xf32, #tpu.memory_space<vmem>>, vector<1x32xf32>
    %6 = vector.broadcast %5 : vector<1x32xf32> to vector<256x32xf32>
    %7 = arith.mulf %4, %6 : vector<256x32xf32>
    %c0_5 = arith.constant 0 : index
    %c0_6 = arith.constant 0 : index
    %8 = vector.load %arg4[%c0_5, %c0_6] : memref<1x32xf32, #tpu.memory_space<vmem>>, vector<1x32xf32>
    %9 = vector.broadcast %8 : vector<1x32xf32> to vector<256x32xf32>
    %10 = arith.addf %7, %9 : vector<256x32xf32>
    %11 = arith.truncf %10 : vector<256x32xf32> to vector<256x32xbf16>
    %c0_7 = arith.constant 0 : index
    %c0_8 = arith.constant 0 : index
    %12 = vector.load %arg5[%c0_7, %c0_8] : memref<32x128xbf16, #tpu.memory_space<vmem>>, vector<32x128xbf16>
    %cst_9 = arith.constant dense<0.000000e+00> : vector<256x128xf32>
    %13 = tpu.matmul %11, %12, %cst_9 {dimension_numbers = #tpu.dot_dimension_numbers<[1], [0], [0], [1], [0, 0, 1, 1], [], []>} : vector<256x32xbf16>, vector<32x128xbf16>, vector<256x128xf32> -> vector<256x128xf32>
    %c0_10 = arith.constant 0 : index
    %c0_11 = arith.constant 0 : index
    %14 = vector.load %arg6[%c0_10, %c0_11] : memref<1x128xf32, #tpu.memory_space<vmem>>, vector<1x128xf32>
    %15 = vector.broadcast %14 : vector<1x128xf32> to vector<256x128xf32>
    %16 = arith.addf %13, %15 : vector<256x128xf32>
    %cst_12 = arith.constant 5.000000e-01 : f32
    %17 = vector.broadcast %cst_12 : f32 to vector<256x128xf32>
    %18 = arith.mulf %17, %16 : vector<256x128xf32>
    %cst_13 = arith.constant 0.707106769 : f32
    %19 = vector.broadcast %cst_13 : f32 to vector<256x128xf32>
    %20 = arith.mulf %16, %19 : vector<256x128xf32>
    %21 = math.erf %20 : vector<256x128xf32>
    %cst_14 = arith.constant 1.000000e+00 : f32
    %22 = vector.broadcast %cst_14 : f32 to vector<256x128xf32>
    %23 = arith.addf %22, %21 : vector<256x128xf32>
    %24 = arith.mulf %18, %23 : vector<256x128xf32>
    %25 = arith.truncf %24 : vector<256x128xf32> to vector<256x128xbf16>
    %c0_15 = arith.constant 0 : index
    %c0_16 = arith.constant 0 : index
    %26 = vector.load %arg7[%c0_15, %c0_16] : memref<128x32xbf16, #tpu.memory_space<vmem>>, vector<128x32xbf16>
    %cst_17 = arith.constant dense<0.000000e+00> : vector<256x32xf32>
    %27 = tpu.matmul %25, %26, %cst_17 {dimension_numbers = #tpu.dot_dimension_numbers<[1], [0], [0], [1], [0, 0, 1, 1], [], []>} : vector<256x128xbf16>, vector<128x32xbf16>, vector<256x32xf32> -> vector<256x32xf32>
    %c0_18 = arith.constant 0 : index
    %c0_19 = arith.constant 0 : index
    %28 = vector.load %arg8[%c0_18, %c0_19] : memref<1x32xf32, #tpu.memory_space<vmem>>, vector<1x32xf32>
    %29 = vector.broadcast %28 : vector<1x32xf32> to vector<256x32xf32>
    %30 = arith.addf %27, %29 : vector<256x32xf32>
    %31 = arith.addf %10, %30 : vector<256x32xf32>
    %c0_20 = arith.constant 0 : index
    %c0_21 = arith.constant 0 : index
    %32 = vector.load %arg9[%c0_20, %c0_21] : memref<256x32xf32, #tpu.memory_space<vmem>>, vector<256x32xf32>
    tpu.vector_store %arg9[%c0_20, %c0_21], %31 {strides = array<i32>} : memref<256x32xf32, #tpu.memory_space<vmem>>, vector<256x32xf32>,
    %cst_22 = arith.constant dense<0.000000e+00> : vector<32xf32>
    %33 = vector.multi_reduction <add>, %31, %cst_22 [0] : vector<256x32xf32> to vector<32xf32>
    %34 = vector.shape_cast %33 : vector<32xf32> to vector<1x32xf32>
    %35 = arith.mulf %31, %31 : vector<256x32xf32>
    %cst_23 = arith.constant dense<0.000000e+00> : vector<32xf32>
    %36 = vector.multi_reduction <add>, %35, %cst_23 [0] : vector<256x32xf32> to vector<32xf32>
    %37 = vector.shape_cast %36 : vector<32xf32> to vector<1x32xf32>
    %cst_24 = arith.constant 0.000000e+00 : f32
    %38 = vector.broadcast %cst_24 : f32 to vector<6x32xf32>
    %39 = tpu.concatenate %34, %37, %38 in 0 : vector<1x32xf32>, vector<1x32xf32>, vector<6x32xf32> -> vector<8x32xf32>
    %c0_25 = arith.constant 0 : index
    %c0_26 = arith.constant 0 : index
    %c0_27 = arith.constant 0 : index
    %40 = vector.load %arg10[%c0_25, %c0_26, %c0_27] : memref<1x8x32xf32, #tpu.memory_space<vmem>>, vector<1x8x32xf32>
    %41 = vector.shape_cast %40 : vector<1x8x32xf32> to vector<8x32xf32>
    %42 = vector.shape_cast %39 : vector<8x32xf32> to vector<1x8x32xf32>
    tpu.vector_store %arg10[%c0_25, %c0_26, %c0_27], %42 {strides = array<i32>} : memref<1x8x32xf32, #tpu.memory_space<vmem>>, vector<1x8x32xf32>,
    return
  }
  func.func @transform_0(%arg0: i32) -> (i32, i32) {
    %c0_i32 = arith.constant 0 : i32
    %c0_i32_0 = arith.constant 0 : i32
    return %arg0, %c0_i32 : i32, i32
  }
  func.func @transform_1(%arg0: i32) -> (i32, i32) {
    %c0_i32 = arith.constant 0 : i32
    %c0_i32_0 = arith.constant 0 : i32
    return %arg0, %c0_i32 : i32, i32
  }
  func.func @transform_2(%arg0: i32) -> (i32, i32) {
    %c0_i32 = arith.constant 0 : i32
    %c0_i32_0 = arith.constant 0 : i32
    %c0_i32_1 = arith.constant 0 : i32
    return %c0_i32, %c0_i32_0 : i32, i32
  }
  func.func @transform_3(%arg0: i32) -> (i32, i32) {
    %c0_i32 = arith.constant 0 : i32
    %c0_i32_0 = arith.constant 0 : i32
    %c0_i32_1 = arith.constant 0 : i32
    return %c0_i32, %c0_i32_0 : i32, i32
  }
  func.func @transform_4(%arg0: i32) -> (i32, i32) {
    %c0_i32 = arith.constant 0 : i32
    %c0_i32_0 = arith.constant 0 : i32
    %c0_i32_1 = arith.constant 0 : i32
    return %c0_i32, %c0_i32_0 : i32, i32
  }
  func.func @transform_5(%arg0: i32) -> (i32, i32) {
    %c0_i32 = arith.constant 0 : i32
    %c0_i32_0 = arith.constant 0 : i32
    %c0_i32_1 = arith.constant 0 : i32
    return %c0_i32, %c0_i32_0 : i32, i32
  }
  func.func @transform_6(%arg0: i32) -> (i32, i32) {
    %c0_i32 = arith.constant 0 : i32
    %c0_i32_0 = arith.constant 0 : i32
    %c0_i32_1 = arith.constant 0 : i32
    return %c0_i32, %c0_i32_0 : i32, i32
  }
  func.func @transform_7(%arg0: i32) -> (i32, i32) {
    %c0_i32 = arith.constant 0 : i32
    %c0_i32_0 = arith.constant 0 : i32
    %c0_i32_1 = arith.constant 0 : i32
    return %c0_i32, %c0_i32_0 : i32, i32
  }
  func.func @transform_8(%arg0: i32) -> (i32, i32) {
    %c0_i32 = arith.constant 0 : i32
    %c0_i32_0 = arith.constant 0 : i32
    return %arg0, %c0_i32 : i32, i32
  }
  func.func @transform_9(%arg0: i32) -> (i32, i32, i32) {
    %c0_i32 = arith.constant 0 : i32
    %c0_i32_0 = arith.constant 0 : i32
    %c0_i32_1 = arith.constant 0 : i32
    return %arg0, %c0_i32, %c0_i32_0 : i32, i32, i32
  }
}

module attributes {stable_mosaic.version = 11 : i64} {
  func.func @_bn2_norm_kernel(%arg0: i32, %arg1: memref<128x128xf32, #tpu.memory_space<vmem>>, %arg2: memref<1x128xf32, #tpu.memory_space<vmem>>, %arg3: memref<1x128xf32, #tpu.memory_space<vmem>>, %arg4: memref<128x128xf32, #tpu.memory_space<vmem>>) attributes {dimension_semantics = [#tpu.dimension_semantics<parallel>], iteration_bounds = array<i64: 1>, scalar_prefetch = 0 : i64, scratch_operands = 0 : i64, tpu.core_type = #tpu.core_type<tc>, window_params = [{transform_indices = @transform_0, window_bounds = array<i64: 128, 128>}, {pipeline_mode = #tpu.pipeline_mode<synchronous>, transform_indices = @transform_1, window_bounds = array<i64: 1, 128>}, {pipeline_mode = #tpu.pipeline_mode<synchronous>, transform_indices = @transform_2, window_bounds = array<i64: 1, 128>}, {transform_indices = @transform_3, window_bounds = array<i64: 128, 128>}]} {
    %c0 = arith.constant 0 : index
    %c0_0 = arith.constant 0 : index
    %0 = vector.load %arg1[%c0, %c0_0] : memref<128x128xf32, #tpu.memory_space<vmem>>, vector<128x128xf32>
    %c0_1 = arith.constant 0 : index
    %c0_2 = arith.constant 0 : index
    %1 = vector.load %arg2[%c0_1, %c0_2] : memref<1x128xf32, #tpu.memory_space<vmem>>, vector<1x128xf32>
    %2 = vector.broadcast %1 : vector<1x128xf32> to vector<128x128xf32>
    %3 = arith.mulf %0, %2 : vector<128x128xf32>
    %c0_3 = arith.constant 0 : index
    %c0_4 = arith.constant 0 : index
    %4 = vector.load %arg3[%c0_3, %c0_4] : memref<1x128xf32, #tpu.memory_space<vmem>>, vector<1x128xf32>
    %5 = vector.broadcast %4 : vector<1x128xf32> to vector<128x128xf32>
    %6 = arith.addf %3, %5 : vector<128x128xf32>
    %c0_5 = arith.constant 0 : index
    %c0_6 = arith.constant 0 : index
    %7 = vector.load %arg4[%c0_5, %c0_6] : memref<128x128xf32, #tpu.memory_space<vmem>>, vector<128x128xf32>
    tpu.vector_store %arg4[%c0_5, %c0_6], %6 {strides = array<i32>} : memref<128x128xf32, #tpu.memory_space<vmem>>, vector<128x128xf32>,
    return
  }
  func.func @transform_0(%arg0: i32) -> (i32, i32) {
    %c0_i32 = arith.constant 0 : i32
    %c0_i32_0 = arith.constant 0 : i32
    return %arg0, %c0_i32 : i32, i32
  }
  func.func @transform_1(%arg0: i32) -> (i32, i32) {
    %c0_i32 = arith.constant 0 : i32
    %c0_i32_0 = arith.constant 0 : i32
    %c0_i32_1 = arith.constant 0 : i32
    return %c0_i32, %c0_i32_0 : i32, i32
  }
  func.func @transform_2(%arg0: i32) -> (i32, i32) {
    %c0_i32 = arith.constant 0 : i32
    %c0_i32_0 = arith.constant 0 : i32
    %c0_i32_1 = arith.constant 0 : i32
    return %c0_i32, %c0_i32_0 : i32, i32
  }
  func.func @transform_3(%arg0: i32) -> (i32, i32) {
    %c0_i32 = arith.constant 0 : i32
    %c0_i32_0 = arith.constant 0 : i32
    return %arg0, %c0_i32 : i32, i32
  }
}

</mosaic_0001>

<llo_original>
// kernel: _lambda_.5
$region0: #{_lambda_.5}
  #allocation0 [shape = 'u32[]', space=smem, size = 0x4, offset = 0x4, fixed_abs, tag = 'smem constant byte address 0x4 - core index']
  #allocation1 [shape = 'u32[144,128]{1,0:T(1,128)}', space=vmem, size = 0x12000, scoped, tag = 'internal scratch']
  %s0 = inlined_call_operand.vmem [shape: f32[128,128], index: 0, kind: input, shape index: {}]
  %s1 = inlined_call_operand.vmem [shape: f32[128,128], index: 1, kind: input, shape index: {}]
  %s2 = inlined_call_operand.vmem [shape: f32[1,8,128], index: 2, kind: output, shape index: {}]
  %s3 = sld [smem:[#allocation0]]
  $region18: #{_lambda_.5} parent=0
    _
  %s5 = ssub.s32 1, %s3
  %s6 = scalar_select 0, %s5, %s3
  // Predicated region
  $region2: #{_lambda_.5} parent=0 // pred_check
    _
  $region3: #{_lambda_.5} parent=0 // pred_check_branch
    %8 = sbr.rel (0) target = $region5
  $region4: #{_lambda_.5} parent=0 // pred_region
    _
  $region5: #{_lambda_.5} parent=0 // pred_fallthru
    _
  // Predicated region
  $region6: #{_lambda_.5} parent=0 // pred_check
    _
  $region7: #{_lambda_.5} parent=0 // pred_check_branch
    %10 = sbr.rel (0) target = $region9
  $region8: #{_lambda_.5} parent=0 // pred_region
    _
  $region9: #{_lambda_.5} parent=0 // pred_fallthru
    _
  %v11 = vld [vmem:[%s0] sm:$0xff]
  %v12 = vld [vmem:[%s0 + $0x8] sm:$0xff]
  %v13 = vld [vmem:[%s0 + $0x10] sm:$0xff]
  %v14 = vld [vmem:[%s0 + $0x18] sm:$0xff]
  %v15 = vld [vmem:[%s0 + $0x20] sm:$0xff]
  %v16 = vld [vmem:[%s0 + $0x28] sm:$0xff]
  %v17 = vld [vmem:[%s0 + $0x30] sm:$0xff]
  %v18 = vld [vmem:[%s0 + $0x38] sm:$0xff]
  %v19 = vld [vmem:[%s0 + $0x40] sm:$0xff]
  %v20 = vld [vmem:[%s0 + $0x48] sm:$0xff]
  %v21 = vld [vmem:[%s0 + $0x50] sm:$0xff]
  %v22 = vld [vmem:[%s0 + $0x58] sm:$0xff]
  %v23 = vld [vmem:[%s0 + $0x60] sm:$0xff]
  %v24 = vld [vmem:[%s0 + $0x68] sm:$0xff]
  %v25 = vld [vmem:[%s0 + $0x70] sm:$0xff]
  %v26 = vld [vmem:[%s0 + $0x78] sm:$0xff]
  %v27 = vmul.f32 %v11, 2.0
  %v28 = vmul.f32 %v12, 2.0
  %v29 = vmul.f32 %v13, 2.0
  %v30 = vmul.f32 %v14, 2.0
  %v31 = vmul.f32 %v15, 2.0
  %v32 = vmul.f32 %v16, 2.0
  %v33 = vmul.f32 %v17, 2.0
  %v34 = vmul.f32 %v18, 2.0
  %v35 = vmul.f32 %v19, 2.0
  %v36 = vmul.f32 %v20, 2.0
  %v37 = vmul.f32 %v21, 2.0
  %v38 = vmul.f32 %v22, 2.0
  %v39 = vmul.f32 %v23, 2.0
  %v40 = vmul.f32 %v24, 2.0
  %v41 = vmul.f32 %v25, 2.0
  %v42 = vmul.f32 %v26, 2.0
  %v43 = vld [vmem:[%s1] sm:$0xff]
  %v44 = vld [vmem:[%s1 + $0x8] sm:$0xff]
  %v45 = vld [vmem:[%s1 + $0x10] sm:$0xff]
  %v46 = vld [vmem:[%s1 + $0x18] sm:$0xff]
  %v47 = vld [vmem:[%s1 + $0x20] sm:$0xff]
  %v48 = vld [vmem:[%s1 + $0x28] sm:$0xff]
  %v49 = vld [vmem:[%s1 + $0x30] sm:$0xff]
  %v50 = vld [vmem:[%s1 + $0x38] sm:$0xff]
  %v51 = vld [vmem:[%s1 + $0x40] sm:$0xff]
  %v52 = vld [vmem:[%s1 + $0x48] sm:$0xff]
  %v53 = vld [vmem:[%s1 + $0x50] sm:$0xff]
  %v54 = vld [vmem:[%s1 + $0x58] sm:$0xff]
  %v55 = vld [vmem:[%s1 + $0x60] sm:$0xff]
  %v56 = vld [vmem:[%s1 + $0x68] sm:$0xff]
  %v57 = vld [vmem:[%s1 + $0x70] sm:$0xff]
  %v58 = vld [vmem:[%s1 + $0x78] sm:$0xff]
  %v59 = vadd.f32 %v27, %v43
  %v60 = vadd.f32 %v28, %v44
  %v61 = vadd.f32 %v29, %v45
  %v62 = vadd.f32 %v30, %v46
  %v63 = vadd.f32 %v31, %v47
  %v64 = vadd.f32 %v32, %v48
  %v65 = vadd.f32 %v33, %v49
  %v66 = vadd.f32 %v34, %v50
  %v67 = vadd.f32 %v35, %v51
  %v68 = vadd.f32 %v36, %v52
  %v69 = vadd.f32 %v37, %v53
  %v70 = vadd.f32 %v38, %v54
  %v71 = vadd.f32 %v39, %v55
  %v72 = vadd.f32 %v40, %v56
  %v73 = vadd.f32 %v41, %v57
  %v74 = vadd.f32 %v42, %v58
  %v75 = vadd.f32 %v59, %v60
  %v76 = vadd.f32 %v75, %v61
  %v77 = vadd.f32 %v76, %v62
  %v78 = vadd.f32 %v77, %v63
  %v79 = vadd.f32 %v78, %v64
  %v80 = vadd.f32 %v79, %v65
  %v81 = vadd.f32 %v80, %v66
  %v82 = vadd.f32 %v81, %v67
  %v83 = vadd.f32 %v82, %v68
  %v84 = vadd.f32 %v83, %v69
  %v85 = vadd.f32 %v84, %v70
  %v86 = vadd.f32 %v85, %v71
  %v87 = vadd.f32 %v86, %v72
  %v88 = vadd.f32 %v87, %v73
  %v89 = vadd.f32 %v88, %v74
  %v90 = vrot.slane %v89, 4
  %v91 = vadd.f32 %v89, %v90
  %v92 = vrot.slane %v91, 2
  %v93 = vadd.f32 %v91, %v92
  %v94 = vrot.slane %v93, 1
  %v95 = vadd.f32 %v93, %v94
  %v96 = vmul.f32 %v59, %v59
  %v97 = vmul.f32 %v60, %v60
  %v98 = vmul.f32 %v61, %v61
  %v99 = vmul.f32 %v62, %v62
  %v100 = vmul.f32 %v63, %v63
  %v101 = vmul.f32 %v64, %v64
  %v102 = vmul.f32 %v65, %v65
  %v103 = vmul.f32 %v66, %v66
  %v104 = vmul.f32 %v67, %v67
  %v105 = vmul.f32 %v68, %v68
  %v106 = vmul.f32 %v69, %v69
  %v107 = vmul.f32 %v70, %v70
  %v108 = vmul.f32 %v71, %v71
  %v109 = vmul.f32 %v72, %v72
  %v110 = vmul.f32 %v73, %v73
  %v111 = vmul.f32 %v74, %v74
  %v112 = vadd.f32 %v96, %v97
  %v113 = vadd.f32 %v112, %v98
  %v114 = vadd.f32 %v113, %v99
  %v115 = vadd.f32 %v114, %v100
  %v116 = vadd.f32 %v115, %v101
  %v117 = vadd.f32 %v116, %v102
  %v118 = vadd.f32 %v117, %v103
  %v119 = vadd.f32 %v118, %v104
  %v120 = vadd.f32 %v119, %v105
  %v121 = vadd.f32 %v120, %v106
  %v122 = vadd.f32 %v121, %v107
  %v123 = vadd.f32 %v122, %v108
  %v124 = vadd.f32 %v123, %v109
  %v125 = vadd.f32 %v124, %v110
  %v126 = vadd.f32 %v125, %v111
  %v127 = vrot.slane %v126, 4
  %v128 = vadd.f32 %v126, %v127
  %v129 = vrot.slane %v128, 2
  %v130 = vadd.f32 %v128, %v129
  %v131 = vrot.slane %v130, 1
  %v132 = vadd.f32 %v130, %v131
  %vm133 = vcmask 1040384
  %v134 = vsel %vm133, %v95, %v132
  %vm135 = vcmask 1041408
  %v136 = vsel %vm135, %v134, 0.0
  %137 = vst [vmem:[%s2] sm:$0xff] %v136
  // Predicated region
  $region10: #{_lambda_.5} parent=0 // pred_check
    _
  $region11: #{_lambda_.5} parent=0 // pred_check_branch
    %139 = sbr.rel (0) target = $region13
  $region12: #{_lambda_.5} parent=0 // pred_region
    _
  $region13: #{_lambda_.5} parent=0 // pred_fallthru
    _
  // Predicated region
  $region14: #{_lambda_.5} parent=0 // pred_check
    _
  $region15: #{_lambda_.5} parent=0 // pred_check_branch
    %141 = sbr.rel (0) target = $region17
  $region16: #{_lambda_.5} parent=0 // pred_region
    _
  $region17: #{_lambda_.5} parent=0 // pred_fallthru
    _

// kernel: _lambda_.7
$region0: #{_lambda_.7}
  #allocation0 [shape = 'u32[]', space=smem, size = 0x4, offset = 0x4, fixed_abs, tag = 'smem constant byte address 0x4 - core index']
  #allocation1 [shape = 'u32[144,128]{1,0:T(1,128)}', space=vmem, size = 0x12000, scoped, tag = 'internal scratch']
  %s0 = inlined_call_operand.vmem [shape: f32[128,128], index: 0, kind: input, shape index: {}]
  %s1 = inlined_call_operand.vmem [shape: f32[1,128], index: 1, kind: input, shape index: {}]
  %s2 = inlined_call_operand.vmem [shape: f32[1,128], index: 2, kind: input, shape index: {}]
  %s3 = inlined_call_operand.vmem [shape: f32[128,128], index: 3, kind: output, shape index: {}]
  %s4 = sld [smem:[#allocation0]]
  $region22: #{_lambda_.7} parent=0
    _
  %s6 = ssub.s32 1, %s4
  %s7 = scalar_select 0, %s6, %s4
  // Predicated region
  $region2: #{_lambda_.7} parent=0 // pred_check
    _
  $region3: #{_lambda_.7} parent=0 // pred_check_branch
    %9 = sbr.rel (0) target = $region5
  $region4: #{_lambda_.7} parent=0 // pred_region
    _
  $region5: #{_lambda_.7} parent=0 // pred_fallthru
    _
  // Predicated region
  $region6: #{_lambda_.7} parent=0 // pred_check
    _
  $region7: #{_lambda_.7} parent=0 // pred_check_branch
    %11 = sbr.rel (0) target = $region9
  $region8: #{_lambda_.7} parent=0 // pred_region
    _
  $region9: #{_lambda_.7} parent=0 // pred_fallthru
    _
  // Predicated region
  $region10: #{_lambda_.7} parent=0 // pred_check
    _
  $region11: #{_lambda_.7} parent=0 // pred_check_branch
    %13 = sbr.rel (0) target = $region13
  $region12: #{_lambda_.7} parent=0 // pred_region
    _
  $region13: #{_lambda_.7} parent=0 // pred_fallthru
    _
  %v14 = vld [vmem:[%s0] sm:$0xff]
  %v15 = vld [vmem:[%s0 + $0x8] sm:$0xff]
  %v16 = vld [vmem:[%s0 + $0x10] sm:$0xff]
  %v17 = vld [vmem:[%s0 + $0x18] sm:$0xff]
  %v18 = vld [vmem:[%s0 + $0x20] sm:$0xff]
  %v19 = vld [vmem:[%s0 + $0x28] sm:$0xff]
  %v20 = vld [vmem:[%s0 + $0x30] sm:$0xff]
  %v21 = vld [vmem:[%s0 + $0x38] sm:$0xff]
  %v22 = vld [vmem:[%s0 + $0x40] sm:$0xff]
  %v23 = vld [vmem:[%s0 + $0x48] sm:$0xff]
  %v24 = vld [vmem:[%s0 + $0x50] sm:$0xff]
  %v25 = vld [vmem:[%s0 + $0x58] sm:$0xff]
  %v26 = vld [vmem:[%s0 + $0x60] sm:$0xff]
  %v27 = vld [vmem:[%s0 + $0x68] sm:$0xff]
  %v28 = vld [vmem:[%s0 + $0x70] sm:$0xff]
  %v29 = vld [vmem:[%s0 + $0x78] sm:$0xff]
  %v30 = vld [vmem:[%s1] sm:$0x1]
  %v32 = vlaneseq
  %v33 = vshrl.u32 %v32, 7
  %v34 = vsub.s32 0, %v33
  %v35 = vrot.slane %v30, %v34
  %v37 = vmul.f32 %v14, %v35
  %v38 = vmul.f32 %v15, %v35
  %v39 = vmul.f32 %v16, %v35
  %v40 = vmul.f32 %v17, %v35
  %v41 = vmul.f32 %v18, %v35
  %v42 = vmul.f32 %v19, %v35
  %v43 = vmul.f32 %v20, %v35
  %v44 = vmul.f32 %v21, %v35
  %v45 = vmul.f32 %v22, %v35
  %v46 = vmul.f32 %v23, %v35
  %v47 = vmul.f32 %v24, %v35
  %v48 = vmul.f32 %v25, %v35
  %v49 = vmul.f32 %v26, %v35
  %v50 = vmul.f32 %v27, %v35
  %v51 = vmul.f32 %v28, %v35
  %v52 = vmul.f32 %v29, %v35
  %v53 = vld [vmem:[%s2] sm:$0x1]
  %v55 = vlaneseq
  %v56 = vshrl.u32 %v55, 7
  %v57 = vsub.s32 0, %v56
  %v58 = vrot.slane %v53, %v57
  %v60 = vadd.f32 %v37, %v58
  %v61 = vadd.f32 %v38, %v58
  %v62 = vadd.f32 %v39, %v58
  %v63 = vadd.f32 %v40, %v58
  %v64 = vadd.f32 %v41, %v58
  %v65 = vadd.f32 %v42, %v58
  %v66 = vadd.f32 %v43, %v58
  %v67 = vadd.f32 %v44, %v58
  %v68 = vadd.f32 %v45, %v58
  %v69 = vadd.f32 %v46, %v58
  %v70 = vadd.f32 %v47, %v58
  %v71 = vadd.f32 %v48, %v58
  %v72 = vadd.f32 %v49, %v58
  %v73 = vadd.f32 %v50, %v58
  %v74 = vadd.f32 %v51, %v58
  %v75 = vadd.f32 %v52, %v58
  %76 = vst [vmem:[%s3] sm:$0xff] %v60
  %77 = vst [vmem:[%s3 + $0x8] sm:$0xff] %v61
  %78 = vst [vmem:[%s3 + $0x10] sm:$0xff] %v62
  %79 = vst [vmem:[%s3 + $0x18] sm:$0xff] %v63
  %80 = vst [vmem:[%s3 + $0x20] sm:$0xff] %v64
  %81 = vst [vmem:[%s3 + $0x28] sm:$0xff] %v65
  %82 = vst [vmem:[%s3 + $0x30] sm:$0xff] %v66
  %83 = vst [vmem:[%s3 + $0x38] sm:$0xff] %v67
  %84 = vst [vmem:[%s3 + $0x40] sm:$0xff] %v68
  %85 = vst [vmem:[%s3 + $0x48] sm:$0xff] %v69
  %86 = vst [vmem:[%s3 + $0x50] sm:$0xff] %v70
  %87 = vst [vmem:[%s3 + $0x58] sm:$0xff] %v71
  %88 = vst [vmem:[%s3 + $0x60] sm:$0xff] %v72
  %89 = vst [vmem:[%s3 + $0x68] sm:$0xff] %v73
  %90 = vst [vmem:[%s3 + $0x70] sm:$0xff] %v74
  %91 = vst [vmem:[%s3 + $0x78] sm:$0xff] %v75
  // Predicated region
  $region14: #{_lambda_.7} parent=0 // pred_check
    _
  $region15: #{_lambda_.7} parent=0 // pred_check_branch
    %93 = sbr.rel (0) target = $region17
  $region16: #{_lambda_.7} parent=0 // pred_region
    _
  $region17: #{_lambda_.7} parent=0 // pred_fallthru
    _
  // Predicated region
  $region18: #{_lambda_.7} parent=0 // pred_check
    _
  $region19: #{_lambda_.7} parent=0 // pred_check_branch
    %95 = sbr.rel (0) target = $region21
  $region20: #{_lambda_.7} parent=0 // pred_region
    _
  $region21: #{_lambda_.7} parent=0 // pred_fallthru
    _

// kernel: _lambda_.6
$region0: #{_lambda_.6}
  #allocation0 [shape = 'u32[]', space=smem, size = 0x4, offset = 0x4, fixed_abs, tag = 'smem constant byte address 0x4 - core index']
  #allocation1 [shape = 'u32[144,128]{1,0:T(1,128)}', space=vmem, size = 0x12000, scoped, tag = 'internal scratch']
  %s0 = inlined_call_operand.vmem [shape: f32[512,32], index: 0, kind: input, shape index: {}]
  %s1 = inlined_call_operand.vmem [shape: f32[512,32], index: 1, kind: input, shape index: {}]
  %s2 = inlined_call_operand.vmem [shape: f32[1,32], index: 2, kind: input, shape index: {}]
  %s3 = inlined_call_operand.vmem [shape: f32[1,32], index: 3, kind: input, shape index: {}]
  %s4 = inlined_call_operand.vmem [shape: bf16[32,128], index: 4, kind: input, shape index: {}]
  %s5 = inlined_call_operand.vmem [shape: f32[1,128], index: 5, kind: input, shape index: {}]
  %s6 = inlined_call_operand.vmem [shape: bf16[128,32], index: 6, kind: input, shape index: {}]
  %s7 = inlined_call_operand.vmem [shape: f32[1,32], index: 7, kind: input, shape index: {}]
  %s8 = inlined_call_operand.vmem [shape: f32[512,32], index: 8, kind: output, shape index: {0}]
  %s9 = inlined_call_operand.vmem [shape: f32[2,8,32], index: 9, kind: output, shape index: {1}]
  %10 = xla_tuple %s8, %s9
  %s11 = sld [smem:[#allocation0]]
  $region73: #{_lambda_.6} parent=0
    _
  %s13 = ssub.s32 1, %s11
  %s14 = scalar_select 0, %s13, %s11
  loop: start=0, step=1, limit=4
  $region2: #{_lambda_.6} parent=0 // loop_pre_header
    _
  $region3: #{_lambda_.6} parent=0 // loop_header
    %s16 = sphi 0, %s20
    %p17 = scmp.ge.s32.totalorder %s16, 4
    %s26 = sphi 0, %s28
    %s29 = sphi 0, %s26
    %s30 = sphi 0, %s29
    %s46 = sphi 0, %s30
    %s52 = sphi 0, %s54
    %s55 = sphi 0, %s52
    %s56 = sphi 0, %s55
    %s72 = sphi 0, %s56
    %s76 = sphi 0, %s76
    %s78 = sphi 0, %s76
    %s79 = sphi 0, %s78
    %s93 = sphi 0, %s79
    %s97 = sphi 0, %s97
    %s99 = sphi 0, %s97
    %s100 = sphi 0, %s99
    %s114 = sphi 0, %s100
    %s118 = sphi 0, %s118
    %s120 = sphi 0, %s118
    %s121 = sphi 0, %s120
    %s135 = sphi 0, %s121
    %s139 = sphi 0, %s139
    %s141 = sphi 0, %s139
    %s142 = sphi 0, %s141
    %s156 = sphi 0, %s142
    %s160 = sphi 0, %s160
    %s162 = sphi 0, %s160
    %s163 = sphi 0, %s162
    %s177 = sphi 0, %s163
    %s181 = sphi 0, %s181
    %s183 = sphi 0, %s181
    %s184 = sphi 0, %s183
    %s198 = sphi 0, %s184
    %s204 = sphi 0, %s206
    %s207 = sphi 0, %s204
    %s208 = sphi 0, %s207
    %s224 = sphi 0, %s208
    %s230 = sphi 0, %s232
    %s233 = sphi 0, %s230
    %s234 = sphi 0, %s233
    %s250 = sphi 0, %s234
  $region4: #{_lambda_.6} parent=0 // loop_header_branch
    %19 = sbr.rel (%p17) target = $region8
  $region5: #{_lambda_.6} parent=0 // loop_body
    %s21 = ssub.s32 %s16, 1
    %s22 = ssub.s32 %s16, 2
    %s23 = sadd.s32 %s16, 1
    %s24 = ssub.s32 %s16, %s23
    %p25 = scmp.eq.s32.totalorder %s24, 0
    %s27 = sadd.s32 %s26, 1
    %s28 = scalar_select %p25, %s26, %s27
    %p31 = pneg %p25
    %p32 = scmp.eq.s32.totalorder %s16, 1
    %p33 = por %p31, %p32
    %p34 = scmp.ne.s32.totalorder %s26, %s29
    %p35 = scmp.eq.s32.totalorder %s16, 0
    %p36 = por %p34, %p35
    %p37 = scmp.ne.s32.totalorder %s26, %s29
    %p38 = scmp.eq.s32.totalorder %s21, 1
    %p39 = por %p37, %p38
    %p40 = scmp.ne.s32.totalorder %s29, %s30
    %p41 = scmp.eq.s32.totalorder %s21, 0
    %p42 = por %p40, %p41
    %p43 = scmp.ne.s32.totalorder %s29, %s30
    %p44 = scmp.eq.s32.totalorder %s22, 1
    %p45 = por %p43, %p44
    %p47 = scmp.ne.s32.totalorder %s30, %s46
    %p48 = scmp.eq.s32.totalorder %s22, 0
    %p49 = por %p47, %p48
    %s50 = ssub.s32 %s16, %s23
    %p51 = scmp.eq.s32.totalorder %s50, 0
    %s53 = sadd.s32 %s52, 1
    %s54 = scalar_select %p51, %s52, %s53
    %p57 = pneg %p51
    %p58 = scmp.eq.s32.totalorder %s16, 1
    %p59 = por %p57, %p58
    %p60 = scmp.ne.s32.totalorder %s52, %s55
    %p61 = scmp.eq.s32.totalorder %s16, 0
    %p62 = por %p60, %p61
    %p63 = scmp.ne.s32.totalorder %s52, %s55
    %p64 = scmp.eq.s32.totalorder %s21, 1
    %p65 = por %p63, %p64
    %p66 = scmp.ne.s32.totalorder %s55, %s56
    %p67 = scmp.eq.s32.totalorder %s21, 0
    %p68 = por %p66, %p67
    %p69 = scmp.ne.s32.totalorder %s55, %s56
    %p70 = scmp.eq.s32.totalorder %s22, 1
    %p71 = por %p69, %p70
    %p73 = scmp.ne.s32.totalorder %s56, %s72
    %p74 = scmp.eq.s32.totalorder %s22, 0
    %p75 = por %p73, %p74
    %s77 = sadd.s32 %s76, 1
    %p80 = scmp.eq.s32.totalorder %s16, 1
    %p81 = scmp.ne.s32.totalorder %s76, %s78
    %p82 = scmp.eq.s32.totalorder %s16, 0
    %p83 = por %p81, %p82
    %p84 = scmp.ne.s32.totalorder %s76, %s78
    %p85 = scmp.eq.s32.totalorder %s21, 1
    %p86 = por %p84, %p85
    %p87 = scmp.ne.s32.totalorder %s78, %s79
    %p88 = scmp.eq.s32.totalorder %s21, 0
    %p89 = por %p87, %p88
    %p90 = scmp.ne.s32.totalorder %s78, %s79
    %p91 = scmp.eq.s32.totalorder %s22, 1
    %p92 = por %p90, %p91
    %p94 = scmp.ne.s32.totalorder %s79, %s93
    %p95 = scmp.eq.s32.totalorder %s22, 0
    %p96 = por %p94, %p95
    %s98 = sadd.s32 %s97, 1
    %p101 = scmp.eq.s32.totalorder %s16, 1
    %p102 = scmp.ne.s32.totalorder %s97, %s99
    %p103 = scmp.eq.s32.totalorder %s16, 0
    %p104 = por %p102, %p103
    %p105 = scmp.ne.s32.totalorder %s97, %s99
    %p106 = scmp.eq.s32.totalorder %s21, 1
    %p107 = por %p105, %p106
    %p108 = scmp.ne.s32.totalorder %s99, %s100
    %p109 = scmp.eq.s32.totalorder %s21, 0
    %p110 = por %p108, %p109
    %p111 = scmp.ne.s32.totalorder %s99, %s100
    %p112 = scmp.eq.s32.totalorder %s22, 1
    %p113 = por %p111, %p112
    %p115 = scmp.ne.s32.totalorder %s100, %s114
    %p116 = scmp.eq.s32.totalorder %s22, 0
    %p117 = por %p115, %p116
    %s119 = sadd.s32 %s118, 1
    %p122 = scmp.eq.s32.totalorder %s16, 1
    %p123 = scmp.ne.s32.totalorder %s118, %s120
    %p124 = scmp.eq.s32.totalorder %s16, 0
    %p125 = por %p123, %p124
    %p126 = scmp.ne.s32.totalorder %s118, %s120
    %p127 = scmp.eq.s32.totalorder %s21, 1
    %p128 = por %p126, %p127
    %p129 = scmp.ne.s32.totalorder %s120, %s121
    %p130 = scmp.eq.s32.totalorder %s21, 0
    %p131 = por %p129, %p130
    %p132 = scmp.ne.s32.totalorder %s120, %s121
    %p133 = scmp.eq.s32.totalorder %s22, 1
    %p134 = por %p132, %p133
    %p136 = scmp.ne.s32.totalorder %s121, %s135
    %p137 = scmp.eq.s32.totalorder %s22, 0
    %p138 = por %p136, %p137
    %s140 = sadd.s32 %s139, 1
    %p143 = scmp.eq.s32.totalorder %s16, 1
    %p144 = scmp.ne.s32.totalorder %s139, %s141
    %p145 = scmp.eq.s32.totalorder %s16, 0
    %p146 = por %p144, %p145
    %p147 = scmp.ne.s32.totalorder %s139, %s141
    %p148 = scmp.eq.s32.totalorder %s21, 1
    %p149 = por %p147, %p148
    %p150 = scmp.ne.s32.totalorder %s141, %s142
    %p151 = scmp.eq.s32.totalorder %s21, 0
    %p152 = por %p150, %p151
    %p153 = scmp.ne.s32.totalorder %s141, %s142
    %p154 = scmp.eq.s32.totalorder %s22, 1
    %p155 = por %p153, %p154
    %p157 = scmp.ne.s32.totalorder %s142, %s156
    %p158 = scmp.eq.s32.totalorder %s22, 0
    %p159 = por %p157, %p158
    %s161 = sadd.s32 %s160, 1
    %p164 = scmp.eq.s32.totalorder %s16, 1
    %p165 = scmp.ne.s32.totalorder %s160, %s162
    %p166 = scmp.eq.s32.totalorder %s16, 0
    %p167 = por %p165, %p166
    %p168 = scmp.ne.s32.totalorder %s160, %s162
    %p169 = scmp.eq.s32.totalorder %s21, 1
    %p170 = por %p168, %p169
    %p171 = scmp.ne.s32.totalorder %s162, %s163
    %p172 = scmp.eq.s32.totalorder %s21, 0
    %p173 = por %p171, %p172
    %p174 = scmp.ne.s32.totalorder %s162, %s163
    %p175 = scmp.eq.s32.totalorder %s22, 1
    %p176 = por %p174, %p175
    %p178 = scmp.ne.s32.totalorder %s163, %s177
    %p179 = scmp.eq.s32.totalorder %s22, 0
    %p180 = por %p178, %p179
    %s182 = sadd.s32 %s181, 1
    %p185 = scmp.eq.s32.totalorder %s16, 1
    %p186 = scmp.ne.s32.totalorder %s181, %s183
    %p187 = scmp.eq.s32.totalorder %s16, 0
    %p188 = por %p186, %p187
    %p189 = scmp.ne.s32.totalorder %s181, %s183
    %p190 = scmp.eq.s32.totalorder %s21, 1
    %p191 = por %p189, %p190
    %p192 = scmp.ne.s32.totalorder %s183, %s184
    %p193 = scmp.eq.s32.totalorder %s21, 0
    %p194 = por %p192, %p193
    %p195 = scmp.ne.s32.totalorder %s183, %s184
    %p196 = scmp.eq.s32.totalorder %s22, 1
    %p197 = por %p195, %p196
    %p199 = scmp.ne.s32.totalorder %s184, %s198
    %p200 = scmp.eq.s32.totalorder %s22, 0
    %p201 = por %p199, %p200
    %s202 = ssub.s32 %s16, %s23
    %p203 = scmp.eq.s32.totalorder %s202, 0
    %s205 = sadd.s32 %s204, 1
    %s206 = scalar_select %p203, %s204, %s205
    %p209 = pneg %p203
    %p210 = scmp.eq.s32.totalorder %s16, 1
    %p211 = por %p209, %p210
    %p212 = scmp.ne.s32.totalorder %s204, %s207
    %p213 = scmp.eq.s32.totalorder %s16, 0
    %p214 = por %p212, %p213
    %p215 = scmp.ne.s32.totalorder %s204, %s207
    %p216 = scmp.eq.s32.totalorder %s21, 1
    %p217 = por %p215, %p216
    %p218 = scmp.ne.s32.totalorder %s207, %s208
    %p219 = scmp.eq.s32.totalorder %s21, 0
    %p220 = por %p218, %p219
    %p221 = scmp.ne.s32.totalorder %s207, %s208
    %p222 = scmp.eq.s32.totalorder %s22, 1
    %p223 = por %p221, %p222
    %p225 = scmp.ne.s32.totalorder %s208, %s224
    %p226 = scmp.eq.s32.totalorder %s22, 0
    %p227 = por %p225, %p226
    %s228 = ssub.s32 %s16, %s23
    %p229 = scmp.eq.s32.totalorder %s228, 0
    %s231 = sadd.s32 %s230, 1
    %s232 = scalar_select %p229, %s230, %s231
    %p235 = pneg %p229
    %p236 = scmp.eq.s32.totalorder %s16, 1
    %p237 = por %p235, %p236
    %p238 = scmp.ne.s32.totalorder %s230, %s233
    %p239 = scmp.eq.s32.totalorder %s16, 0
    %p240 = por %p238, %p239
    %p241 = scmp.ne.s32.totalorder %s230, %s233
    %p242 = scmp.eq.s32.totalorder %s21, 1
    %p243 = por %p241, %p242
    %p244 = scmp.ne.s32.totalorder %s233, %s234
    %p245 = scmp.eq.s32.totalorder %s21, 0
    %p246 = por %p244, %p245
    %p247 = scmp.ne.s32.totalorder %s233, %s234
    %p248 = scmp.eq.s32.totalorder %s22, 1
    %p249 = por %p247, %p248
    %p251 = scmp.ne.s32.totalorder %s234, %s250
    %p252 = scmp.eq.s32.totalorder %s22, 0
    %p253 = por %p251, %p252
    %p254 = scmp.le.s32.totalorder 1, %s16
    %p255 = scmp.lt.s32.totalorder %s16, 3
    %p256 = pnand %p254, %p255
    %p257 = pneg %p256
    // Predicated region
    $region9: #{_lambda_.6} parent=5 // pred_check
      _
    $region10: #{_lambda_.6} parent=5 // pred_check_branch
      %259 = sbr.rel (%p256) target = $region12
    $region11: #{_lambda_.6} parent=5 // pred_region
      %s260 = ssub.s32 %s16, 1
      // Predicated region
      $region13: #{_lambda_.6} parent=11 // pred_check
        %p261 = pneg %p89
      $region14: #{_lambda_.6} parent=11 // pred_check_branch
        %263 = sbr.rel (%p261) target = $region16
      $region15: #{_lambda_.6} parent=11 // pred_region
        _
      $region16: #{_lambda_.6} parent=11 // pred_fallthru
        _
      // Predicated region
      $region17: #{_lambda_.6} parent=11 // pred_check
        %p264 = pneg %p110
      $region18: #{_lambda_.6} parent=11 // pred_check_branch
        %266 = sbr.rel (%p264) target = $region20
      $region19: #{_lambda_.6} parent=11 // pred_region
        _
      $region20: #{_lambda_.6} parent=11 // pred_fallthru
        _
      // Predicated region
      $region21: #{_lambda_.6} parent=11 // pred_check
        %p267 = pneg %p131
      $region22: #{_lambda_.6} parent=11 // pred_check_branch
        %269 = sbr.rel (%p267) target = $region24
      $region23: #{_lambda_.6} parent=11 // pred_region
        _
      $region24: #{_lambda_.6} parent=11 // pred_fallthru
        _
      // Predicated region
      $region25: #{_lambda_.6} parent=11 // pred_check
        %p270 = pneg %p152
      $region26: #{_lambda_.6} parent=11 // pred_check_branch
        %272 = sbr.rel (%p270) target = $region28
      $region27: #{_lambda_.6} parent=11 // pred_region
        _
      $region28: #{_lambda_.6} parent=11 // pred_fallthru
        _
      // Predicated region
      $region29: #{_lambda_.6} parent=11 // pred_check
        %p273 = pneg %p173
      $region30: #{_lambda_.6} parent=11 // pred_check_branch
        %275 = sbr.rel (%p273) target = $region32
      $region31: #{_lambda_.6} parent=11 // pred_region
        _
      $region32: #{_lambda_.6} parent=11 // pred_fallthru
        _
      // Predicated region
      $region33: #{_lambda_.6} parent=11 // pred_check
        %p276 = pneg %p194
      $region34: #{_lambda_.6} parent=11 // pred_check_branch
        %278 = sbr.rel (%p276) target = $region36
      $region35: #{_lambda_.6} parent=11 // pred_region
        _
      $region36: #{_lambda_.6} parent=11 // pred_fallthru
        _
    $region12: #{_lambda_.6} parent=5 // pred_fallthru
      _
    %p279 = scmp.lt.s32.totalorder %s16, 2
    // Predicated region
    $region37: #{_lambda_.6} parent=5 // pred_check
      %p280 = pneg %p279
    $region38: #{_lambda_.6} parent=5 // pred_check_branch
      %282 = sbr.rel (%p280) target = $region40
    $region39: #{_lambda_.6} parent=5 // pred_region
      // Predicated region
      $region41: #{_lambda_.6} parent=39 // pred_check
        %p283 = pneg %p36
      $region42: #{_lambda_.6} parent=39 // pred_check_branch
        %285 = sbr.rel (%p283) target = $region44
      $region43: #{_lambda_.6} parent=39 // pred_region
        %s286 = smul.u32 32, %s16
        %p287 = scmp.lt.s32.totalorder %s286, 63
        %s288 = scalar_select %p287, %s286, 63
        %s289 = smul.addr %s288, 8
        %s290 = scalar_lea.vmem %s0, %s289
        %s291 = smul.u32 32, %s16
      $region44: #{_lambda_.6} parent=39 // pred_fallthru
        _
      // Predicated region
      $region45: #{_lambda_.6} parent=39 // pred_check
        %p292 = pneg %p62
      $region46: #{_lambda_.6} parent=39 // pred_check_branch
        %294 = sbr.rel (%p292) target = $region48
      $region47: #{_lambda_.6} parent=39 // pred_region
        %s295 = smul.u32 32, %s16
        %p296 = scmp.lt.s32.totalorder %s295, 63
        %s297 = scalar_select %p296, %s295, 63
        %s298 = smul.addr %s297, 8
        %s299 = scalar_lea.vmem %s1, %s298
        %s300 = smul.u32 32, %s16
      $region48: #{_lambda_.6} parent=39 // pred_fallthru
        _
    $region40: #{_lambda_.6} parent=5 // pred_fallthru
      _
    %p301 = scmp.le.s32.totalorder 1, %s16
    %p302 = scmp.lt.s32.totalorder %s16, 3
    %p303 = pnand %p301, %p302
    %p304 = pneg %p303
    // Predicated region
    $region49: #{_lambda_.6} parent=5 // pred_check
      _
    $region50: #{_lambda_.6} parent=5 // pred_check_branch
      %306 = sbr.rel (%p303) target = $region52
    $region51: #{_lambda_.6} parent=5 // pred_region
      %s307 = ssub.s32 %s16, 1
      %s308 = smul.u32 32, %s21
      %p309 = scmp.lt.s32.totalorder %s308, 63
      %s310 = scalar_select %p309, %s308, 63
      %s311 = smul.addr %s310, 8
      %s312 = scalar_lea.vmem %s0, %s311
      %p313 = pneg %p42
      %p314 = pneg %p39
      %s315 = smul.u32 32, %s21
      %p316 = scmp.lt.s32.totalorder %s315, 63
      %s317 = scalar_select %p316, %s315, 63
      %s318 = smul.addr %s317, 8
      %s319 = scalar_lea.vmem %s1, %s318
      %p320 = pneg %p68
      %p321 = pneg %p65
      %p322 = pneg %p89
      %p323 = pneg %p86
      %p324 = pneg %p110
      %p325 = pneg %p107
      %p326 = pneg %p131
      %p327 = pneg %p128
      %p328 = pneg %p152
      %p329 = pneg %p149
      %p330 = pneg %p173
      %p331 = pneg %p170
      %p332 = pneg %p194
      %p333 = pneg %p191
      %p334 = pneg %p220
      %p335 = pneg %p217
      %s336 = smul.u32 32, %s21
      %p337 = scmp.lt.s32.totalorder %s336, 63
      %s338 = scalar_select %p337, %s336, 63
      %s339 = smul.addr %s338, 8
      %s340 = scalar_lea.vmem %s8, %s339
      %p341 = pneg %p246
      %p342 = pneg %p243
      %p343 = scmp.lt.s32.totalorder %s21, 1
      %s344 = scalar_select %p343, %s21, 1
      %s345 = smul.addr %s344, 8
      %s346 = scalar_lea.vmem %s9, %s345
      %s347 = smul.u32 32, %s21
      %p348 = scmp.lt.s32.totalorder %s347, 63
      %s349 = scalar_select %p348, %s347, 63
      %s350 = smul.addr %s349, 8
      %s351 = scalar_lea.vmem %s0, %s350
      %s352 = smul.u32 32, %s21
      %s353 = smul.u32 32, %s21
      %p354 = scmp.lt.s32.totalorder %s353, 63
      %s355 = scalar_select %p354, %s353, 63
      %s356 = smul.addr %s355, 8
      %s357 = scalar_lea.vmem %s1, %s356
      %s358 = smul.u32 32, %s21
      %s359 = smul.u32 32, %s21
      %p360 = scmp.lt.s32.totalorder %s359, 63
      %s361 = scalar_select %p360, %s359, 63
      %s362 = smul.addr %s361, 8
      %s363 = scalar_lea.vmem %s8, %s362
      %s364 = smul.u32 32, %s21
      %p365 = scmp.lt.s32.totalorder %s21, 1
      %s366 = scalar_select %p365, %s21, 1
      %s367 = smul.addr %s366, 8
      %s368 = scalar_lea.vmem %s9, %s367
      %v370 = vld [vmem:[%s351] sm:$0xff]
      %v371 = vld [vmem:[%s351 + $0x8] sm:$0xff]
      %v372 = vld [vmem:[%s351 + $0x10] sm:$0xff]
      %v373 = vld [vmem:[%s351 + $0x18] sm:$0xff]
      %v374 = vld [vmem:[%s351 + $0x20] sm:$0xff]
      %v375 = vld [vmem:[%s351 + $0x28] sm:$0xff]
      %v376 = vld [vmem:[%s351 + $0x30] sm:$0xff]
      %v377 = vld [vmem:[%s351 + $0x38] sm:$0xff]
      %v378 = vld [vmem:[%s351 + $0x40] sm:$0xff]
      %v379 = vld [vmem:[%s351 + $0x48] sm:$0xff]
      %v380 = vld [vmem:[%s351 + $0x50] sm:$0xff]
      %v381 = vld [vmem:[%s351 + $0x58] sm:$0xff]
      %v382 = vld [vmem:[%s351 + $0x60] sm:$0xff]
      %v383 = vld [vmem:[%s351 + $0x68] sm:$0xff]
      %v384 = vld [vmem:[%s351 + $0x70] sm:$0xff]
      %v385 = vld [vmem:[%s351 + $0x78] sm:$0xff]
      %v386 = vld [vmem:[%s351 + $0x80] sm:$0xff]
      %v387 = vld [vmem:[%s351 + $0x88] sm:$0xff]
      %v388 = vld [vmem:[%s351 + $0x90] sm:$0xff]
      %v389 = vld [vmem:[%s351 + $0x98] sm:$0xff]
      %v390 = vld [vmem:[%s351 + $0xa0] sm:$0xff]
      %v391 = vld [vmem:[%s351 + $0xa8] sm:$0xff]
      %v392 = vld [vmem:[%s351 + $0xb0] sm:$0xff]
      %v393 = vld [vmem:[%s351 + $0xb8] sm:$0xff]
      %v394 = vld [vmem:[%s351 + $0xc0] sm:$0xff]
      %v395 = vld [vmem:[%s351 + $0xc8] sm:$0xff]
      %v396 = vld [vmem:[%s351 + $0xd0] sm:$0xff]
      %v397 = vld [vmem:[%s351 + $0xd8] sm:$0xff]
      %v398 = vld [vmem:[%s351 + $0xe0] sm:$0xff]
      %v399 = vld [vmem:[%s351 + $0xe8] sm:$0xff]
      %v400 = vld [vmem:[%s351 + $0xf0] sm:$0xff]
      %v401 = vld [vmem:[%s351 + $0xf8] sm:$0xff]
      %v402 = vmul.f32 %v370, 2.0
      %v403 = vmul.f32 %v371, 2.0
      %v404 = vmul.f32 %v372, 2.0
      %v405 = vmul.f32 %v373, 2.0
      %v406 = vmul.f32 %v374, 2.0
      %v407 = vmul.f32 %v375, 2.0
      %v408 = vmul.f32 %v376, 2.0
      %v409 = vmul.f32 %v377, 2.0
      %v410 = vmul.f32 %v378, 2.0
      %v411 = vmul.f32 %v379, 2.0
      %v412 = vmul.f32 %v380, 2.0
      %v413 = vmul.f32 %v381, 2.0
      %v414 = vmul.f32 %v382, 2.0
      %v415 = vmul.f32 %v383, 2.0
      %v416 = vmul.f32 %v384, 2.0
      %v417 = vmul.f32 %v385, 2.0
      %v418 = vmul.f32 %v386, 2.0
      %v419 = vmul.f32 %v387, 2.0
      %v420 = vmul.f32 %v388, 2.0
      %v421 = vmul.f32 %v389, 2.0
      %v422 = vmul.f32 %v390, 2.0
      %v423 = vmul.f32 %v391, 2.0
      %v424 = vmul.f32 %v392, 2.0
      %v425 = vmul.f32 %v393, 2.0
      %v426 = vmul.f32 %v394, 2.0
      %v427 = vmul.f32 %v395, 2.0
      %v428 = vmul.f32 %v396, 2.0
      %v429 = vmul.f32 %v397, 2.0
      %v430 = vmul.f32 %v398, 2.0
      %v431 = vmul.f32 %v399, 2.0
      %v432 = vmul.f32 %v400, 2.0
      %v433 = vmul.f32 %v401, 2.0
      %v434 = vld [vmem:[%s357] sm:$0xff]
      %v435 = vld [vmem:[%s357 + $0x8] sm:$0xff]
      %v436 = vld [vmem:[%s357 + $0x10] sm:$0xff]
      %v437 = vld [vmem:[%s357 + $0x18] sm:$0xff]
      %v438 = vld [vmem:[%s357 + $0x20] sm:$0xff]
      %v439 = vld [vmem:[%s357 + $0x28] sm:$0xff]
      %v440 = vld [vmem:[%s357 + $0x30] sm:$0xff]
      %v441 = vld [vmem:[%s357 + $0x38] sm:$0xff]
      %v442 = vld [vmem:[%s357 + $0x40] sm:$0xff]
      %v443 = vld [vmem:[%s357 + $0x48] sm:$0xff]
      %v444 = vld [vmem:[%s357 + $0x50] sm:$0xff]
      %v445 = vld [vmem:[%s357 + $0x58] sm:$0xff]
      %v446 = vld [vmem:[%s357 + $0x60] sm:$0xff]
      %v447 = vld [vmem:[%s357 + $0x68] sm:$0xff]
      %v448 = vld [vmem:[%s357 + $0x70] sm:$0xff]
      %v449 = vld [vmem:[%s357 + $0x78] sm:$0xff]
      %v450 = vld [vmem:[%s357 + $0x80] sm:$0xff]
      %v451 = vld [vmem:[%s357 + $0x88] sm:$0xff]
      %v452 = vld [vmem:[%s357 + $0x90] sm:$0xff]
      %v453 = vld [vmem:[%s357 + $0x98] sm:$0xff]
      %v454 = vld [vmem:[%s357 + $0xa0] sm:$0xff]
      %v455 = vld [vmem:[%s357 + $0xa8] sm:$0xff]
      %v456 = vld [vmem:[%s357 + $0xb0] sm:$0xff]
      %v457 = vld [vmem:[%s357 + $0xb8] sm:$0xff]
      %v458 = vld [vmem:[%s357 + $0xc0] sm:$0xff]
      %v459 = vld [vmem:[%s357 + $0xc8] sm:$0xff]
      %v460 = vld [vmem:[%s357 + $0xd0] sm:$0xff]
      %v461 = vld [vmem:[%s357 + $0xd8] sm:$0xff]
      %v462 = vld [vmem:[%s357 + $0xe0] sm:$0xff]
      %v463 = vld [vmem:[%s357 + $0xe8] sm:$0xff]
      %v464 = vld [vmem:[%s357 + $0xf0] sm:$0xff]
      %v465 = vld [vmem:[%s357 + $0xf8] sm:$0xff]
      %v466 = vadd.f32 %v402, %v434
      %v467 = vadd.f32 %v403, %v435
      %v468 = vadd.f32 %v404, %v436
      %v469 = vadd.f32 %v405, %v437
      %v470 = vadd.f32 %v406, %v438
      %v471 = vadd.f32 %v407, %v439
      %v472 = vadd.f32 %v408, %v440
      %v473 = vadd.f32 %v409, %v441
      %v474 = vadd.f32 %v410, %v442
      %v475 = vadd.f32 %v411, %v443
      %v476 = vadd.f32 %v412, %v444
      %v477 = vadd.f32 %v413, %v445
      %v478 = vadd.f32 %v414, %v446
      %v479 = vadd.f32 %v415, %v447
      %v480 = vadd.f32 %v416, %v448
      %v481 = vadd.f32 %v417, %v449
      %v482 = vadd.f32 %v418, %v450
      %v483 = vadd.f32 %v419, %v451
      %v484 = vadd.f32 %v420, %v452
      %v485 = vadd.f32 %v421, %v453
      %v486 = vadd.f32 %v422, %v454
      %v487 = vadd.f32 %v423, %v455
      %v488 = vadd.f32 %v424, %v456
      %v489 = vadd.f32 %v425, %v457
      %v490 = vadd.f32 %v426, %v458
      %v491 = vadd.f32 %v427, %v459
      %v492 = vadd.f32 %v428, %v460
      %v493 = vadd.f32 %v429, %v461
      %v494 = vadd.f32 %v430, %v462
      %v495 = vadd.f32 %v431, %v463
      %v496 = vadd.f32 %v432, %v464
      %v497 = vadd.f32 %v433, %v465
      %v498 = vld [vmem:[%s2] sm:$0x1]
      %v500 = vlaneseq
      %v501 = vshrl.u32 %v500, 7
      %v502 = vsub.s32 0, %v501
      %v503 = vrot.slane %v498, %v502
      %v505 = vmul.f32 %v466, %v503
      %v506 = vmul.f32 %v467, %v503
      %v507 = vmul.f32 %v468, %v503
      %v508 = vmul.f32 %v469, %v503
      %v509 = vmul.f32 %v470, %v503
      %v510 = vmul.f32 %v471, %v503
      %v511 = vmul.f32 %v472, %v503
      %v512 = vmul.f32 %v473, %v503
      %v513 = vmul.f32 %v474, %v503
      %v514 = vmul.f32 %v475, %v503
      %v515 = vmul.f32 %v476, %v503
      %v516 = vmul.f32 %v477, %v503
      %v517 = vmul.f32 %v478, %v503
      %v518 = vmul.f32 %v479, %v503
      %v519 = vmul.f32 %v480, %v503
      %v520 = vmul.f32 %v481, %v503
      %v521 = vmul.f32 %v482, %v503
      %v522 = vmul.f32 %v483, %v503
      %v523 = vmul.f32 %v484, %v503
      %v524 = vmul.f32 %v485, %v503
      %v525 = vmul.f32 %v486, %v503
      %v526 = vmul.f32 %v487, %v503
      %v527 = vmul.f32 %v488, %v503
      %v528 = vmul.f32 %v489, %v503
      %v529 = vmul.f32 %v490, %v503
      %v530 = vmul.f32 %v491, %v503
      %v531 = vmul.f32 %v492, %v503
      %v532 = vmul.f32 %v493, %v503
      %v533 = vmul.f32 %v494, %v503
      %v534 = vmul.f32 %v495, %v503
      %v535 = vmul.f32 %v496, %v503
      %v536 = vmul.f32 %v497, %v503
      %v537 = vld [vmem:[%s3] sm:$0x1]
      %v539 = vlaneseq
      %v540 = vshrl.u32 %v539, 7
      %v541 = vsub.s32 0, %v540
      %v542 = vrot.slane %v537, %v541
      %v544 = vadd.f32 %v505, %v542
      %v545 = vadd.f32 %v506, %v542
      %v546 = vadd.f32 %v507, %v542
      %v547 = vadd.f32 %v508, %v542
      %v548 = vadd.f32 %v509, %v542
      %v549 = vadd.f32 %v510, %v542
      %v550 = vadd.f32 %v511, %v542
      %v551 = vadd.f32 %v512, %v542
      %v552 = vadd.f32 %v513, %v542
      %v553 = vadd.f32 %v514, %v542
      %v554 = vadd.f32 %v515, %v542
      %v555 = vadd.f32 %v516, %v542
      %v556 = vadd.f32 %v517, %v542
      %v557 = vadd.f32 %v518, %v542
      %v558 = vadd.f32 %v519, %v542
      %v559 = vadd.f32 %v520, %v542
      %v560 = vadd.f32 %v521, %v542
      %v561 = vadd.f32 %v522, %v542
      %v562 = vadd.f32 %v523, %v542
      %v563 = vadd.f32 %v524, %v542
      %v564 = vadd.f32 %v525, %v542
      %v565 = vadd.f32 %v526, %v542
      %v566 = vadd.f32 %v527, %v542
      %v567 = vadd.f32 %v528, %v542
      %v568 = vadd.f32 %v529, %v542
      %v569 = vadd.f32 %v530, %v542
      %v570 = vadd.f32 %v531, %v542
      %v571 = vadd.f32 %v532, %v542
      %v572 = vadd.f32 %v533, %v542
      %v573 = vadd.f32 %v534, %v542
      %v574 = vadd.f32 %v535, %v542
      %v575 = vadd.f32 %v536, %v542
      %v576 = vpack.c.bf16 %v545, %v544
      %v577 = vpack.c.bf16 %v547, %v546
      %v578 = vpack.c.bf16 %v549, %v548
      %v579 = vpack.c.bf16 %v551, %v550
      %v580 = vpack.c.bf16 %v553, %v552
      %v581 = vpack.c.bf16 %v555, %v554
      %v582 = vpack.c.bf16 %v557, %v556
      %v583 = vpack.c.bf16 %v559, %v558
      %v584 = vpack.c.bf16 %v561, %v560
      %v585 = vpack.c.bf16 %v563, %v562
      %v586 = vpack.c.bf16 %v565, %v564
      %v587 = vpack.c.bf16 %v567, %v566
      %v588 = vpack.c.bf16 %v569, %v568
      %v589 = vpack.c.bf16 %v571, %v570
      %v590 = vpack.c.bf16 %v573, %v572
      %v591 = vpack.c.bf16 %v575, %v574
      %v592 = vld [vmem:[%s4] sm:$0xf]
      %v593 = vld [vmem:[%s4 + $0x4] sm:$0xf]
      %v594 = vld [vmem:[%s4 + $0x8] sm:$0xf]
      %v595 = vld [vmem:[%s4 + $0xc] sm:$0xf]
      %v596 = vld [vmem:[%s5] sm:$0x1]
      %v598 = vlaneseq
      %v599 = vshrl.u32 %v598, 7
      %v600 = vsub.s32 0, %v599
      %v601 = vrot.slane %v596, %v600
      %v607 = vunpack.c.l.b16 %v592
      %v608 = vunpack.c.l.b16 %v593
      %v609 = vunpack.c.l.b16 %v594
      %v610 = vunpack.c.l.b16 %v595
      %v611 = vpack.c.b16 %v608, %v607
      %v612 = vpack.c.b16 %v610, %v609
      %vm615 = vcmask 261120
      %v617 = vsel %vm615, %v576, 0
      %v620 = vsel %vm615, %v577, 0
      %v623 = vsel %vm615, %v578, 0
      %v626 = vsel %vm615, %v579, 0
      %v629 = vsel %vm615, %v580, 0
      %v632 = vsel %vm615, %v581, 0
      %v635 = vsel %vm615, %v582, 0
      %v638 = vsel %vm615, %v583, 0
      %v641 = vsel %vm615, %v584, 0
      %v644 = vsel %vm615, %v585, 0
      %v647 = vsel %vm615, %v586, 0
      %v650 = vsel %vm615, %v587, 0
      %v653 = vsel %vm615, %v588, 0
      %v656 = vsel %vm615, %v589, 0
      %v659 = vsel %vm615, %v590, 0
      %v662 = vsel %vm615, %v591, 0
      %664 = vmatprep.subr.bf16.mxu0 0
      %665 = vmatpush1.bf16.msra.mxu0 0
      %666 = vmatprep.subr.bf16.mxu0 0
      %667 = vmatpush1.bf16.msra.mxu0 0
      %668 = vmatprep.subr.bf16.mxu0 0
      %669 = vmatpush1.bf16.msra.mxu0 0
      %670 = vmatprep.subr.bf16.mxu0 0
      %671 = vmatpush1.bf16.msra.mxu0 0
      %672 = vmatprep.subr.bf16.mxu0 0
      %673 = vmatpush1.bf16.msra.mxu0 0
      %674 = vmatprep.subr.bf16.mxu0 0
      %675 = vmatpush1.bf16.msra.mxu0 0
      %676 = vmatprep.subr.bf16.mxu0 0
      %677 = vmatpush1.bf16.msra.mxu0 %v612
      %678 = vmatprep.subr.bf16.mxu0 0
      %679 = vmatpush1.bf16.msra.mxu0 %v611
      %680 = vmatprep.subr.bf16.mxu0 0
      %681 = vmatpush2.bf16.msra.mxu0 0
      %682 = vmatprep.subr.bf16.mxu0 0
      %683 = vmatpush2.bf16.msra.mxu0 0
      %684 = vmatprep.subr.bf16.mxu0 0
      %685 = vmatpush2.bf16.msra.mxu0 0
      %686 = vmatprep.subr.bf16.mxu0 0
      %687 = vmatpush2.bf16.msra.mxu0 0
      %688 = vmatprep.subr.bf16.mxu0 0
      %689 = vmatpush2.bf16.msra.mxu0 0
      %690 = vmatprep.subr.bf16.mxu0 0
      %691 = vmatpush2.bf16.msra.mxu0 0
      %692 = vmatprep.subr.bf16.mxu0 0
      %693 = vmatpush2.bf16.msra.mxu0 0
      %694 = vmatprep.subr.bf16.mxu0 0
      %695 = vmatpush2.bf16.msra.mxu0 0
      %696 = vmatprep.mubr.bf16.mxu0 0
      %697 = vmatmul.mubr.bf16.gmra.mxu0 %v617
      %v698 = vpop.f32.mrf.mxu0
      %v699 = vadd.f32 %v601, %v698
      %v700 = vpop.f32.mrf.mxu0
      %v701 = vpop.f32.mrf.mxu0
      %v702 = vadd.f32 %v601, %v701
      %v703 = vpop.f32.mrf.mxu0
      %704 = vmatprep.mubr.bf16.mxu0 0
      %705 = vmatmul.mubr.bf16.gmra.mxu0 %v620
      %v706 = vpop.f32.mrf.mxu0
      %v707 = vadd.f32 %v601, %v706
      %v708 = vpop.f32.mrf.mxu0
      %v709 = vpop.f32.mrf.mxu0
      %v710 = vadd.f32 %v601, %v709
      %v711 = vpop.f32.mrf.mxu0
      %712 = vmatprep.mubr.bf16.mxu0 0
      %713 = vmatmul.mubr.bf16.gmra.mxu0 %v623
      %v714 = vpop.f32.mrf.mxu0
      %v715 = vadd.f32 %v601, %v714
      %v716 = vpop.f32.mrf.mxu0
      %v717 = vpop.f32.mrf.mxu0
      %v718 = vadd.f32 %v601, %v717
      %v719 = vpop.f32.mrf.mxu0
      %720 = vmatprep.mubr.bf16.mxu0 0
      %721 = vmatmul.mubr.bf16.gmra.mxu0 %v626
      %v722 = vpop.f32.mrf.mxu0
      %v723 = vadd.f32 %v601, %v722
      %v724 = vpop.f32.mrf.mxu0
      %v725 = vpop.f32.mrf.mxu0
      %v726 = vadd.f32 %v601, %v725
      %v727 = vpop.f32.mrf.mxu0
      %728 = vmatprep.mubr.bf16.mxu0 0
      %729 = vmatmul.mubr.bf16.gmra.mxu0 %v629
      %v730 = vpop.f32.mrf.mxu0
      %v731 = vadd.f32 %v601, %v730
      %v732 = vpop.f32.mrf.mxu0
      %v733 = vpop.f32.mrf.mxu0
      %v734 = vadd.f32 %v601, %v733
      %v735 = vpop.f32.mrf.mxu0
      %736 = vmatprep.mubr.bf16.mxu0 0
      %737 = vmatmul.mubr.bf16.gmra.mxu0 %v632
      %v738 = vpop.f32.mrf.mxu0
      %v739 = vadd.f32 %v601, %v738
      %v740 = vpop.f32.mrf.mxu0
      %v741 = vpop.f32.mrf.mxu0
      %v742 = vadd.f32 %v601, %v741
      %v743 = vpop.f32.mrf.mxu0
      %744 = vmatprep.mubr.bf16.mxu0 0
      %745 = vmatmul.mubr.bf16.gmra.mxu0 %v635
      %v746 = vpop.f32.mrf.mxu0
      %v747 = vadd.f32 %v601, %v746
      %v748 = vpop.f32.mrf.mxu0
      %v749 = vpop.f32.mrf.mxu0
      %v750 = vadd.f32 %v601, %v749
      %v751 = vpop.f32.mrf.mxu0
      %752 = vmatprep.mubr.bf16.mxu0 0
      %753 = vmatmul.mubr.bf16.gmra.mxu0 %v638
      %v754 = vpop.f32.mrf.mxu0
      %v755 = vadd.f32 %v601, %v754
      %v756 = vpop.f32.mrf.mxu0
      %v757 = vpop.f32.mrf.mxu0
      %v758 = vadd.f32 %v601, %v757
      %v759 = vpop.f32.mrf.mxu0
      %760 = vmatprep.mubr.bf16.mxu0 0
      %761 = vmatmul.mubr.bf16.gmra.mxu0 %v641
      %v762 = vpop.f32.mrf.mxu0
      %v763 = vadd.f32 %v601, %v762
      %v764 = vpop.f32.mrf.mxu0
      %v765 = vpop.f32.mrf.mxu0
      %v766 = vadd.f32 %v601, %v765
      %v767 = vpop.f32.mrf.mxu0
      %768 = vmatprep.mubr.bf16.mxu0 0
      %769 = vmatmul.mubr.bf16.gmra.mxu0 %v644
      %v770 = vpop.f32.mrf.mxu0
      %v771 = vadd.f32 %v601, %v770
      %v772 = vpop.f32.mrf.mxu0
      %v773 = vpop.f32.mrf.mxu0
      %v774 = vadd.f32 %v601, %v773
      %v775 = vpop.f32.mrf.mxu0
      %776 = vmatprep.mubr.bf16.mxu0 0
      %777 = vmatmul.mubr.bf16.gmra.mxu0 %v647
      %v778 = vpop.f32.mrf.mxu0
      %v779 = vadd.f32 %v601, %v778
      %v780 = vpop.f32.mrf.mxu0
      %v781 = vpop.f32.mrf.mxu0
      %v782 = vadd.f32 %v601, %v781
      %v783 = vpop.f32.mrf.mxu0
      %784 = vmatprep.mubr.bf16.mxu0 0
      %785 = vmatmul.mubr.bf16.gmra.mxu0 %v650
      %v786 = vpop.f32.mrf.mxu0
      %v787 = vadd.f32 %v601, %v786
      %v788 = vpop.f32.mrf.mxu0
      %v789 = vpop.f32.mrf.mxu0
      %v790 = vadd.f32 %v601, %v789
      %v791 = vpop.f32.mrf.mxu0
      %792 = vmatprep.mubr.bf16.mxu0 0
      %793 = vmatmul.mubr.bf16.gmra.mxu0 %v653
      %v794 = vpop.f32.mrf.mxu0
      %v795 = vadd.f32 %v601, %v794
      %v796 = vpop.f32.mrf.mxu0
      %v797 = vpop.f32.mrf.mxu0
      %v798 = vadd.f32 %v601, %v797
      %v799 = vpop.f32.mrf.mxu0
      %800 = vmatprep.mubr.bf16.mxu0 0
      %801 = vmatmul.mubr.bf16.gmra.mxu0 %v656
      %v802 = vpop.f32.mrf.mxu0
      %v803 = vadd.f32 %v601, %v802
      %v804 = vpop.f32.mrf.mxu0
      %v805 = vpop.f32.mrf.mxu0
      %v806 = vadd.f32 %v601, %v805
      %v807 = vpop.f32.mrf.mxu0
      %808 = vmatprep.mubr.bf16.mxu0 0
      %809 = vmatmul.mubr.bf16.gmra.mxu0 %v659
      %v810 = vpop.f32.mrf.mxu0
      %v811 = vadd.f32 %v601, %v810
      %v812 = vpop.f32.mrf.mxu0
      %v813 = vpop.f32.mrf.mxu0
      %v814 = vadd.f32 %v601, %v813
      %v815 = vpop.f32.mrf.mxu0
      %816 = vmatprep.mubr.bf16.mxu0 0
      %817 = vmatmul.mubr.bf16.gmra.mxu0 %v662
      %v818 = vpop.f32.mrf.mxu0
      %v819 = vadd.f32 %v601, %v818
      %v820 = vpop.f32.mrf.mxu0
      %v821 = vpop.f32.mrf.mxu0
      %v822 = vadd.f32 %v601, %v821
      %v823 = vpop.f32.mrf.mxu0
      %824 = vdwg.mxu0
      %v825 = vmul.f32 %v699, 0.5
      %v826 = vmul.f32 %v702, 0.5
      %v827 = vmul.f32 %v707, 0.5
      %v828 = vmul.f32 %v710, 0.5
      %v829 = vmul.f32 %v715, 0.5
      %v830 = vmul.f32 %v718, 0.5
      %v831 = vmul.f32 %v723, 0.5
      %v832 = vmul.f32 %v726, 0.5
      %v833 = vmul.f32 %v731, 0.5
      %v834 = vmul.f32 %v734, 0.5
      %v835 = vmul.f32 %v739, 0.5
      %v836 = vmul.f32 %v742, 0.5
      %v837 = vmul.f32 %v747, 0.5
      %v838 = vmul.f32 %v750, 0.5
      %v839 = vmul.f32 %v755, 0.5
      %v840 = vmul.f32 %v758, 0.5
      %v841 = vmul.f32 %v763, 0.5
      %v842 = vmul.f32 %v766, 0.5
      %v843 = vmul.f32 %v771, 0.5
      %v844 = vmul.f32 %v774, 0.5
      %v845 = vmul.f32 %v779, 0.5
      %v846 = vmul.f32 %v782, 0.5
      %v847 = vmul.f32 %v787, 0.5
      %v848 = vmul.f32 %v790, 0.5
      %v849 = vmul.f32 %v795, 0.5
      %v850 = vmul.f32 %v798, 0.5
      %v851 = vmul.f32 %v803, 0.5
      %v852 = vmul.f32 %v806, 0.5
      %v853 = vmul.f32 %v811, 0.5
      %v854 = vmul.f32 %v814, 0.5
      %v855 = vmul.f32 %v819, 0.5
      %v856 = vmul.f32 %v822, 0.5
      %v857 = vmul.f32 %v699, 0.70710677
      %v858 = vmul.f32 %v702, 0.70710677
      %v859 = vmul.f32 %v707, 0.70710677
      %v860 = vmul.f32 %v710, 0.70710677
      %v861 = vmul.f32 %v715, 0.70710677
      %v862 = vmul.f32 %v718, 0.70710677
      %v863 = vmul.f32 %v723, 0.70710677
      %v864 = vmul.f32 %v726, 0.70710677
      %v865 = vmul.f32 %v731, 0.70710677
      %v866 = vmul.f32 %v734, 0.70710677
      %v867 = vmul.f32 %v739, 0.70710677
      %v868 = vmul.f32 %v742, 0.70710677
      %v869 = vmul.f32 %v747, 0.70710677
      %v870 = vmul.f32 %v750, 0.70710677
      %v871 = vmul.f32 %v755, 0.70710677
      %v872 = vmul.f32 %v758, 0.70710677
      %v873 = vmul.f32 %v763, 0.70710677
      %v874 = vmul.f32 %v766, 0.70710677
      %v875 = vmul.f32 %v771, 0.70710677
      %v876 = vmul.f32 %v774, 0.70710677
      %v877 = vmul.f32 %v779, 0.70710677
      %v878 = vmul.f32 %v782, 0.70710677
      %v879 = vmul.f32 %v787, 0.70710677
      %v880 = vmul.f32 %v790, 0.70710677
      %v881 = vmul.f32 %v795, 0.70710677
      %v882 = vmul.f32 %v798, 0.70710677
      %v883 = vmul.f32 %v803, 0.70710677
      %v884 = vmul.f32 %v806, 0.70710677
      %v885 = vmul.f32 %v811, 0.70710677
      %v886 = vmul.f32 %v814, 0.70710677
      %v887 = vmul.f32 %v819, 0.70710677
      %v888 = vmul.f32 %v822, 0.70710677
      %v889 = verf.f32.pop %v857
      %v890 = verf.f32.pop %v858
      %v891 = verf.f32.pop %v859
      %v892 = verf.f32.pop %v860
      %v893 = verf.f32.pop %v861
      %v894 = verf.f32.pop %v862
      %v895 = verf.f32.pop %v863
      %v896 = verf.f32.pop %v864
      %v897 = verf.f32.pop %v865
      %v898 = verf.f32.pop %v866
      %v899 = verf.f32.pop %v867
      %v900 = verf.f32.pop %v868
      %v901 = verf.f32.pop %v869
      %v902 = verf.f32.pop %v870
      %v903 = verf.f32.pop %v871
      %v904 = verf.f32.pop %v872
      %v905 = verf.f32.pop %v873
      %v906 = verf.f32.pop %v874
      %v907 = verf.f32.pop %v875
      %v908 = verf.f32.pop %v876
      %v909 = verf.f32.pop %v877
      %v910 = verf.f32.pop %v878
      %v911 = verf.f32.pop %v879
      %v912 = verf.f32.pop %v880
      %v913 = verf.f32.pop %v881
      %v914 = verf.f32.pop %v882
      %v915 = verf.f32.pop %v883
      %v916 = verf.f32.pop %v884
      %v917 = verf.f32.pop %v885
      %v918 = verf.f32.pop %v886
      %v919 = verf.f32.pop %v887
      %v920 = verf.f32.pop %v888
      %v921 = vadd.f32 %v889, 1.0
      %v922 = vadd.f32 %v890, 1.0
      %v923 = vadd.f32 %v891, 1.0
      %v924 = vadd.f32 %v892, 1.0
      %v925 = vadd.f32 %v893, 1.0
      %v926 = vadd.f32 %v894, 1.0
      %v927 = vadd.f32 %v895, 1.0
      %v928 = vadd.f32 %v896, 1.0
      %v929 = vadd.f32 %v897, 1.0
      %v930 = vadd.f32 %v898, 1.0
      %v931 = vadd.f32 %v899, 1.0
      %v932 = vadd.f32 %v900, 1.0
      %v933 = vadd.f32 %v901, 1.0
      %v934 = vadd.f32 %v902, 1.0
      %v935 = vadd.f32 %v903, 1.0
      %v936 = vadd.f32 %v904, 1.0
      %v937 = vadd.f32 %v905, 1.0
      %v938 = vadd.f32 %v906, 1.0
      %v939 = vadd.f32 %v907, 1.0
      %v940 = vadd.f32 %v908, 1.0
      %v941 = vadd.f32 %v909, 1.0
      %v942 = vadd.f32 %v910, 1.0
      %v943 = vadd.f32 %v911, 1.0
      %v944 = vadd.f32 %v912, 1.0
      %v945 = vadd.f32 %v913, 1.0
      %v946 = vadd.f32 %v914, 1.0
      %v947 = vadd.f32 %v915, 1.0
      %v948 = vadd.f32 %v916, 1.0
      %v949 = vadd.f32 %v917, 1.0
      %v950 = vadd.f32 %v918, 1.0
      %v951 = vadd.f32 %v919, 1.0
      %v952 = vadd.f32 %v920, 1.0
      %v953 = vmul.f32 %v825, %v921
      %v954 = vmul.f32 %v826, %v922
      %v955 = vmul.f32 %v827, %v923
      %v956 = vmul.f32 %v828, %v924
      %v957 = vmul.f32 %v829, %v925
      %v958 = vmul.f32 %v830, %v926
      %v959 = vmul.f32 %v831, %v927
      %v960 = vmul.f32 %v832, %v928
      %v961 = vmul.f32 %v833, %v929
      %v962 = vmul.f32 %v834, %v930
      %v963 = vmul.f32 %v835, %v931
      %v964 = vmul.f32 %v836, %v932
      %v965 = vmul.f32 %v837, %v933
      %v966 = vmul.f32 %v838, %v934
      %v967 = vmul.f32 %v839, %v935
      %v968 = vmul.f32 %v840, %v936
      %v969 = vmul.f32 %v841, %v937
      %v970 = vmul.f32 %v842, %v938
      %v971 = vmul.f32 %v843, %v939
      %v972 = vmul.f32 %v844, %v940
      %v973 = vmul.f32 %v845, %v941
      %v974 = vmul.f32 %v846, %v942
      %v975 = vmul.f32 %v847, %v943
      %v976 = vmul.f32 %v848, %v944
      %v977 = vmul.f32 %v849, %v945
      %v978 = vmul.f32 %v850, %v946
      %v979 = vmul.f32 %v851, %v947
      %v980 = vmul.f32 %v852, %v948
      %v981 = vmul.f32 %v853, %v949
      %v982 = vmul.f32 %v854, %v950
      %v983 = vmul.f32 %v855, %v951
      %v984 = vmul.f32 %v856, %v952
      %v985 = vpack.c.bf16 %v954, %v953
      %v986 = vpack.c.bf16 %v956, %v955
      %v987 = vpack.c.bf16 %v958, %v957
      %v988 = vpack.c.bf16 %v960, %v959
      %v989 = vpack.c.bf16 %v962, %v961
      %v990 = vpack.c.bf16 %v964, %v963
      %v991 = vpack.c.bf16 %v966, %v965
      %v992 = vpack.c.bf16 %v968, %v967
      %v993 = vpack.c.bf16 %v970, %v969
      %v994 = vpack.c.bf16 %v972, %v971
      %v995 = vpack.c.bf16 %v974, %v973
      %v996 = vpack.c.bf16 %v976, %v975
      %v997 = vpack.c.bf16 %v978, %v977
      %v998 = vpack.c.bf16 %v980, %v979
      %v999 = vpack.c.bf16 %v982, %v981
      %v1000 = vpack.c.bf16 %v984, %v983
      %v1001 = vld [vmem:[%s6] sm:$0xf]
      %v1002 = vld [vmem:[%s6 + $0x4] sm:$0xf]
      %v1003 = vld [vmem:[%s6 + $0x8] sm:$0xf]
      %v1004 = vld [vmem:[%s6 + $0xc] sm:$0xf]
      %v1005 = vld [vmem:[%s6 + $0x10] sm:$0xf]
      %v1006 = vld [vmem:[%s6 + $0x14] sm:$0xf]
      %v1007 = vld [vmem:[%s6 + $0x18] sm:$0xf]
      %v1008 = vld [vmem:[%s6 + $0x1c] sm:$0xf]
      %v1009 = vld [vmem:[%s6 + $0x20] sm:$0xf]
      %v1010 = vld [vmem:[%s6 + $0x24] sm:$0xf]
      %v1011 = vld [vmem:[%s6 + $0x28] sm:$0xf]
      %v1012 = vld [vmem:[%s6 + $0x2c] sm:$0xf]
      %v1013 = vld [vmem:[%s6 + $0x30] sm:$0xf]
      %v1014 = vld [vmem:[%s6 + $0x34] sm:$0xf]
      %v1015 = vld [vmem:[%s6 + $0x38] sm:$0xf]
      %v1016 = vld [vmem:[%s6 + $0x3c] sm:$0xf]
      %v1017 = vld [vmem:[%s7] sm:$0x1]
      %v1019 = vlaneseq
      %v1020 = vshrl.u32 %v1019, 7
      %v1021 = vsub.s32 0, %v1020
      %v1022 = vrot.slane %v1017, %v1021
      %v1040 = vunpack.c.l.b16 %v1001
      %v1041 = vunpack.c.l.b16 %v1002
      %v1042 = vunpack.c.l.b16 %v1003
      %v1043 = vunpack.c.l.b16 %v1004
      %v1044 = vunpack.c.l.b16 %v1005
      %v1045 = vunpack.c.l.b16 %v1006
      %v1046 = vunpack.c.l.b16 %v1007
      %v1047 = vunpack.c.l.b16 %v1008
      %v1048 = vunpack.c.l.b16 %v1009
      %v1049 = vunpack.c.l.b16 %v1010
      %v1050 = vunpack.c.l.b16 %v1011
      %v1051 = vunpack.c.l.b16 %v1012
      %v1052 = vunpack.c.l.b16 %v1013
      %v1053 = vunpack.c.l.b16 %v1014
      %v1054 = vunpack.c.l.b16 %v1015
      %v1055 = vunpack.c.l.b16 %v1016
      %v1056 = vpack.c.b16 %v1041, %v1040
      %v1057 = vpack.c.b16 %v1043, %v1042
      %v1058 = vpack.c.b16 %v1045, %v1044
      %v1059 = vpack.c.b16 %v1047, %v1046
      %v1060 = vpack.c.b16 %v1049, %v1048
      %v1061 = vpack.c.b16 %v1051, %v1050
      %v1062 = vpack.c.b16 %v1053, %v1052
      %v1063 = vpack.c.b16 %v1055, %v1054
      %1072 = vmatprep.subr.bf16.mxu0 0
      %1073 = vmatpush1.bf16.msra.mxu0 %v1063
      %1074 = vmatprep.subr.bf16.mxu0 0
      %1075 = vmatpush1.bf16.msra.mxu0 %v1062
      %1076 = vmatprep.subr.bf16.mxu0 0
      %1077 = vmatpush1.bf16.msra.mxu0 %v1061
      %1078 = vmatprep.subr.bf16.mxu0 0
      %1079 = vmatpush1.bf16.msra.mxu0 %v1060
      %1080 = vmatprep.subr.bf16.mxu0 0
      %1081 = vmatpush1.bf16.msra.mxu0 %v1059
      %1082 = vmatprep.subr.bf16.mxu0 0
      %1083 = vmatpush1.bf16.msra.mxu0 %v1058
      %1084 = vmatprep.subr.bf16.mxu0 0
      %1085 = vmatpush1.bf16.msra.mxu0 %v1057
      %1086 = vmatprep.subr.bf16.mxu0 0
      %1087 = vmatpush1.bf16.msra.mxu0 %v1056
      %1088 = vmatprep.subr.bf16.mxu0 0
      %1089 = vmatpush2.bf16.msra.mxu0 0
      %1090 = vmatprep.subr.bf16.mxu0 0
      %1091 = vmatpush2.bf16.msra.mxu0 0
      %1092 = vmatprep.subr.bf16.mxu0 0
      %1093 = vmatpush2.bf16.msra.mxu0 0
      %1094 = vmatprep.subr.bf16.mxu0 0
      %1095 = vmatpush2.bf16.msra.mxu0 0
      %1096 = vmatprep.subr.bf16.mxu0 0
      %1097 = vmatpush2.bf16.msra.mxu0 0
      %1098 = vmatprep.subr.bf16.mxu0 0
      %1099 = vmatpush2.bf16.msra.mxu0 0
      %1100 = vmatprep.subr.bf16.mxu0 0
      %1101 = vmatpush2.bf16.msra.mxu0 0
      %1102 = vmatprep.subr.bf16.mxu0 0
      %1103 = vmatpush2.bf16.msra.mxu0 0
      %1104 = vmatprep.mubr.bf16.mxu0 0
      %1105 = vmatmul.mubr.bf16.gmra.mxu0 %v985
      %v1106 = vpop.f32.mrf.mxu0
      %v1107 = vadd.f32 %v1022, %v1106
      %v1108 = vpop.f32.mrf.mxu0
      %v1109 = vpop.f32.mrf.mxu0
      %v1110 = vadd.f32 %v1022, %v1109
      %v1111 = vpop.f32.mrf.mxu0
      %1112 = vmatprep.mubr.bf16.mxu0 0
      %1113 = vmatmul.mubr.bf16.gmra.mxu0 %v986
      %v1114 = vpop.f32.mrf.mxu0
      %v1115 = vadd.f32 %v1022, %v1114
      %v1116 = vpop.f32.mrf.mxu0
      %v1117 = vpop.f32.mrf.mxu0
      %v1118 = vadd.f32 %v1022, %v1117
      %v1119 = vpop.f32.mrf.mxu0
      %1120 = vmatprep.mubr.bf16.mxu0 0
      %1121 = vmatmul.mubr.bf16.gmra.mxu0 %v987
      %v1122 = vpop.f32.mrf.mxu0
      %v1123 = vadd.f32 %v1022, %v1122
      %v1124 = vpop.f32.mrf.mxu0
      %v1125 = vpop.f32.mrf.mxu0
      %v1126 = vadd.f32 %v1022, %v1125
      %v1127 = vpop.f32.mrf.mxu0
      %1128 = vmatprep.mubr.bf16.mxu0 0
      %1129 = vmatmul.mubr.bf16.gmra.mxu0 %v988
      %v1130 = vpop.f32.mrf.mxu0
      %v1131 = vadd.f32 %v1022, %v1130
      %v1132 = vpop.f32.mrf.mxu0
      %v1133 = vpop.f32.mrf.mxu0
      %v1134 = vadd.f32 %v1022, %v1133
      %v1135 = vpop.f32.mrf.mxu0
      %1136 = vmatprep.mubr.bf16.mxu0 0
      %1137 = vmatmul.mubr.bf16.gmra.mxu0 %v989
      %v1138 = vpop.f32.mrf.mxu0
      %v1139 = vadd.f32 %v1022, %v1138
      %v1140 = vpop.f32.mrf.mxu0
      %v1141 = vpop.f32.mrf.mxu0
      %v1142 = vadd.f32 %v1022, %v1141
      %v1143 = vpop.f32.mrf.mxu0
      %1144 = vmatprep.mubr.bf16.mxu0 0
      %1145 = vmatmul.mubr.bf16.gmra.mxu0 %v990
      %v1146 = vpop.f32.mrf.mxu0
      %v1147 = vadd.f32 %v1022, %v1146
      %v1148 = vpop.f32.mrf.mxu0
      %v1149 = vpop.f32.mrf.mxu0
      %v1150 = vadd.f32 %v1022, %v1149
      %v1151 = vpop.f32.mrf.mxu0
      %1152 = vmatprep.mubr.bf16.mxu0 0
      %1153 = vmatmul.mubr.bf16.gmra.mxu0 %v991
      %v1154 = vpop.f32.mrf.mxu0
      %v1155 = vadd.f32 %v1022, %v1154
      %v1156 = vpop.f32.mrf.mxu0
      %v1157 = vpop.f32.mrf.mxu0
      %v1158 = vadd.f32 %v1022, %v1157
      %v1159 = vpop.f32.mrf.mxu0
      %1160 = vmatprep.mubr.bf16.mxu0 0
      %1161 = vmatmul.mubr.bf16.gmra.mxu0 %v992
      %v1162 = vpop.f32.mrf.mxu0
      %v1163 = vadd.f32 %v1022, %v1162
      %v1164 = vpop.f32.mrf.mxu0
      %v1165 = vpop.f32.mrf.mxu0
      %v1166 = vadd.f32 %v1022, %v1165
      %v1167 = vpop.f32.mrf.mxu0
      %1168 = vmatprep.mubr.bf16.mxu0 0
      %1169 = vmatmul.mubr.bf16.gmra.mxu0 %v993
      %v1170 = vpop.f32.mrf.mxu0
      %v1171 = vadd.f32 %v1022, %v1170
      %v1172 = vpop.f32.mrf.mxu0
      %v1173 = vpop.f32.mrf.mxu0
      %v1174 = vadd.f32 %v1022, %v1173
      %v1175 = vpop.f32.mrf.mxu0
      %1176 = vmatprep.mubr.bf16.mxu0 0
      %1177 = vmatmul.mubr.bf16.gmra.mxu0 %v994
      %v1178 = vpop.f32.mrf.mxu0
      %v1179 = vadd.f32 %v1022, %v1178
      %v1180 = vpop.f32.mrf.mxu0
      %v1181 = vpop.f32.mrf.mxu0
      %v1182 = vadd.f32 %v1022, %v1181
      %v1183 = vpop.f32.mrf.mxu0
      %1184 = vmatprep.mubr.bf16.mxu0 0
      %1185 = vmatmul.mubr.bf16.gmra.mxu0 %v995
      %v1186 = vpop.f32.mrf.mxu0
      %v1187 = vadd.f32 %v1022, %v1186
      %v1188 = vpop.f32.mrf.mxu0
      %v1189 = vpop.f32.mrf.mxu0
      %v1190 = vadd.f32 %v1022, %v1189
      %v1191 = vpop.f32.mrf.mxu0
      %1192 = vmatprep.mubr.bf16.mxu0 0
      %1193 = vmatmul.mubr.bf16.gmra.mxu0 %v996
      %v1194 = vpop.f32.mrf.mxu0
      %v1195 = vadd.f32 %v1022, %v1194
      %v1196 = vpop.f32.mrf.mxu0
      %v1197 = vpop.f32.mrf.mxu0
      %v1198 = vadd.f32 %v1022, %v1197
      %v1199 = vpop.f32.mrf.mxu0
      %1200 = vmatprep.mubr.bf16.mxu0 0
      %1201 = vmatmul.mubr.bf16.gmra.mxu0 %v997
      %v1202 = vpop.f32.mrf.mxu0
      %v1203 = vadd.f32 %v1022, %v1202
      %v1204 = vpop.f32.mrf.mxu0
      %v1205 = vpop.f32.mrf.mxu0
      %v1206 = vadd.f32 %v1022, %v1205
      %v1207 = vpop.f32.mrf.mxu0
      %1208 = vmatprep.mubr.bf16.mxu0 0
      %1209 = vmatmul.mubr.bf16.gmra.mxu0 %v998
      %v1210 = vpop.f32.mrf.mxu0
      %v1211 = vadd.f32 %v1022, %v1210
      %v1212 = vpop.f32.mrf.mxu0
      %v1213 = vpop.f32.mrf.mxu0
      %v1214 = vadd.f32 %v1022, %v1213
      %v1215 = vpop.f32.mrf.mxu0
      %1216 = vmatprep.mubr.bf16.mxu0 0
      %1217 = vmatmul.mubr.bf16.gmra.mxu0 %v999
      %v1218 = vpop.f32.mrf.mxu0
      %v1219 = vadd.f32 %v1022, %v1218
      %v1220 = vpop.f32.mrf.mxu0
      %v1221 = vpop.f32.mrf.mxu0
      %v1222 = vadd.f32 %v1022, %v1221
      %v1223 = vpop.f32.mrf.mxu0
      %1224 = vmatprep.mubr.bf16.mxu0 0
      %1225 = vmatmul.mubr.bf16.gmra.mxu0 %v1000
      %v1226 = vpop.f32.mrf.mxu0
      %v1227 = vadd.f32 %v1022, %v1226
      %v1228 = vpop.f32.mrf.mxu0
      %v1229 = vpop.f32.mrf.mxu0
      %v1230 = vadd.f32 %v1022, %v1229
      %v1231 = vpop.f32.mrf.mxu0
      %1232 = vdwg.mxu0
      %v1233 = vadd.f32 %v544, %v1107
      %v1234 = vadd.f32 %v545, %v1110
      %v1235 = vadd.f32 %v546, %v1115
      %v1236 = vadd.f32 %v547, %v1118
      %v1237 = vadd.f32 %v548, %v1123
      %v1238 = vadd.f32 %v549, %v1126
      %v1239 = vadd.f32 %v550, %v1131
      %v1240 = vadd.f32 %v551, %v1134
      %v1241 = vadd.f32 %v552, %v1139
      %v1242 = vadd.f32 %v553, %v1142
      %v1243 = vadd.f32 %v554, %v1147
      %v1244 = vadd.f32 %v555, %v1150
      %v1245 = vadd.f32 %v556, %v1155
      %v1246 = vadd.f32 %v557, %v1158
      %v1247 = vadd.f32 %v558, %v1163
      %v1248 = vadd.f32 %v559, %v1166
      %v1249 = vadd.f32 %v560, %v1171
      %v1250 = vadd.f32 %v561, %v1174
      %v1251 = vadd.f32 %v562, %v1179
      %v1252 = vadd.f32 %v563, %v1182
      %v1253 = vadd.f32 %v564, %v1187
      %v1254 = vadd.f32 %v565, %v1190
      %v1255 = vadd.f32 %v566, %v1195
      %v1256 = vadd.f32 %v567, %v1198
      %v1257 = vadd.f32 %v568, %v1203
      %v1258 = vadd.f32 %v569, %v1206
      %v1259 = vadd.f32 %v570, %v1211
      %v1260 = vadd.f32 %v571, %v1214
      %v1261 = vadd.f32 %v572, %v1219
      %v1262 = vadd.f32 %v573, %v1222
      %v1263 = vadd.f32 %v574, %v1227
      %v1264 = vadd.f32 %v575, %v1230
      %1265 = vst.msk [vmem:[%s363] sm:$0xff] %vm615, %v1233
      %1266 = vst.msk [vmem:[%s363 + $0x8] sm:$0xff] %vm615, %v1234
      %1267 = vst.msk [vmem:[%s363 + $0x10] sm:$0xff] %vm615, %v1235
      %1268 = vst.msk [vmem:[%s363 + $0x18] sm:$0xff] %vm615, %v1236
      %1269 = vst.msk [vmem:[%s363 + $0x20] sm:$0xff] %vm615, %v1237
      %1270 = vst.msk [vmem:[%s363 + $0x28] sm:$0xff] %vm615, %v1238
      %1271 = vst.msk [vmem:[%s363 + $0x30] sm:$0xff] %vm615, %v1239
      %1272 = vst.msk [vmem:[%s363 + $0x38] sm:$0xff] %vm615, %v1240
      %1273 = vst.msk [vmem:[%s363 + $0x40] sm:$0xff] %vm615, %v1241
      %1274 = vst.msk [vmem:[%s363 + $0x48] sm:$0xff] %vm615, %v1242
      %1275 = vst.msk [vmem:[%s363 + $0x50] sm:$0xff] %vm615, %v1243
      %1276 = vst.msk [vmem:[%s363 + $0x58] sm:$0xff] %vm615, %v1244
      %1277 = vst.msk [vmem:[%s363 + $0x60] sm:$0xff] %vm615, %v1245
      %1278 = vst.msk [vmem:[%s363 + $0x68] sm:$0xff] %vm615, %v1246
      %1279 = vst.msk [vmem:[%s363 + $0x70] sm:$0xff] %vm615, %v1247
      %1280 = vst.msk [vmem:[%s363 + $0x78] sm:$0xff] %vm615, %v1248
      %1281 = vst.msk [vmem:[%s363 + $0x80] sm:$0xff] %vm615, %v1249
      %1282 = vst.msk [vmem:[%s363 + $0x88] sm:$0xff] %vm615, %v1250
      %1283 = vst.msk [vmem:[%s363 + $0x90] sm:$0xff] %vm615, %v1251
      %1284 = vst.msk [vmem:[%s363 + $0x98] sm:$0xff] %vm615, %v1252
      %1285 = vst.msk [vmem:[%s363 + $0xa0] sm:$0xff] %vm615, %v1253
      %1286 = vst.msk [vmem:[%s363 + $0xa8] sm:$0xff] %vm615, %v1254
      %1287 = vst.msk [vmem:[%s363 + $0xb0] sm:$0xff] %vm615, %v1255
      %1288 = vst.msk [vmem:[%s363 + $0xb8] sm:$0xff] %vm615, %v1256
      %1289 = vst.msk [vmem:[%s363 + $0xc0] sm:$0xff] %vm615, %v1257
      %1290 = vst.msk [vmem:[%s363 + $0xc8] sm:$0xff] %vm615, %v1258
      %1291 = vst.msk [vmem:[%s363 + $0xd0] sm:$0xff] %vm615, %v1259
      %1292 = vst.msk [vmem:[%s363 + $0xd8] sm:$0xff] %vm615, %v1260
      %1293 = vst.msk [vmem:[%s363 + $0xe0] sm:$0xff] %vm615, %v1261
      %1294 = vst.msk [vmem:[%s363 + $0xe8] sm:$0xff] %vm615, %v1262
      %1295 = vst.msk [vmem:[%s363 + $0xf0] sm:$0xff] %vm615, %v1263
      %1296 = vst.msk [vmem:[%s363 + $0xf8] sm:$0xff] %vm615, %v1264
      %v1297 = vsel %vm615, %v1233, 0.0
      %v1298 = vsel %vm615, %v1234, 0.0
      %v1299 = vadd.f32 %v1297, %v1298
      %v1300 = vsel %vm615, %v1235, 0.0
      %v1301 = vadd.f32 %v1299, %v1300
      %v1302 = vsel %vm615, %v1236, 0.0
      %v1303 = vadd.f32 %v1301, %v1302
      %v1304 = vsel %vm615, %v1237, 0.0
      %v1305 = vadd.f32 %v1303, %v1304
      %v1306 = vsel %vm615, %v1238, 0.0
      %v1307 = vadd.f32 %v1305, %v1306
      %v1308 = vsel %vm615, %v1239, 0.0
      %v1309 = vadd.f32 %v1307, %v1308
      %v1310 = vsel %vm615, %v1240, 0.0
      %v1311 = vadd.f32 %v1309, %v1310
      %v1312 = vsel %vm615, %v1241, 0.0
      %v1313 = vadd.f32 %v1311, %v1312
      %v1314 = vsel %vm615, %v1242, 0.0
      %v1315 = vadd.f32 %v1313, %v1314
      %v1316 = vsel %vm615, %v1243, 0.0
      %v1317 = vadd.f32 %v1315, %v1316
      %v1318 = vsel %vm615, %v1244, 0.0
      %v1319 = vadd.f32 %v1317, %v1318
      %v1320 = vsel %vm615, %v1245, 0.0
      %v1321 = vadd.f32 %v1319, %v1320
      %v1322 = vsel %vm615, %v1246, 0.0
      %v1323 = vadd.f32 %v1321, %v1322
      %v1324 = vsel %vm615, %v1247, 0.0
      %v1325 = vadd.f32 %v1323, %v1324
      %v1326 = vsel %vm615, %v1248, 0.0
      %v1327 = vadd.f32 %v1325, %v1326
      %v1328 = vsel %vm615, %v1249, 0.0
      %v1329 = vadd.f32 %v1327, %v1328
      %v1330 = vsel %vm615, %v1250, 0.0
      %v1331 = vadd.f32 %v1329, %v1330
      %v1332 = vsel %vm615, %v1251, 0.0
      %v1333 = vadd.f32 %v1331, %v1332
      %v1334 = vsel %vm615, %v1252, 0.0
      %v1335 = vadd.f32 %v1333, %v1334
      %v1336 = vsel %vm615, %v1253, 0.0
      %v1337 = vadd.f32 %v1335, %v1336
      %v1338 = vsel %vm615, %v1254, 0.0
      %v1339 = vadd.f32 %v1337, %v1338
      %v1340 = vsel %vm615, %v1255, 0.0
      %v1341 = vadd.f32 %v1339, %v1340
      %v1342 = vsel %vm615, %v1256, 0.0
      %v1343 = vadd.f32 %v1341, %v1342
      %v1344 = vsel %vm615, %v1257, 0.0
      %v1345 = vadd.f32 %v1343, %v1344
      %v1346 = vsel %vm615, %v1258, 0.0
      %v1347 = vadd.f32 %v1345, %v1346
      %v1348 = vsel %vm615, %v1259, 0.0
      %v1349 = vadd.f32 %v1347, %v1348
      %v1350 = vsel %vm615, %v1260, 0.0
      %v1351 = vadd.f32 %v1349, %v1350
      %v1352 = vsel %vm615, %v1261, 0.0
      %v1353 = vadd.f32 %v1351, %v1352
      %v1354 = vsel %vm615, %v1262, 0.0
      %v1355 = vadd.f32 %v1353, %v1354
      %v1356 = vsel %vm615, %v1263, 0.0
      %v1357 = vadd.f32 %v1355, %v1356
      %v1358 = vsel %vm615, %v1264, 0.0
      %v1359 = vadd.f32 %v1357, %v1358
      %v1360 = vrot.slane %v1359, 4
      %v1361 = vadd.f32 %v1359, %v1360
      %v1362 = vrot.slane %v1361, 2
      %v1363 = vadd.f32 %v1361, %v1362
      %v1364 = vrot.slane %v1363, 1
      %v1365 = vadd.f32 %v1363, %v1364
      %v1366 = vmul.f32 %v1233, %v1233
      %v1367 = vmul.f32 %v1234, %v1234
      %v1368 = vmul.f32 %v1235, %v1235
      %v1369 = vmul.f32 %v1236, %v1236
      %v1370 = vmul.f32 %v1237, %v1237
      %v1371 = vmul.f32 %v1238, %v1238
      %v1372 = vmul.f32 %v1239, %v1239
      %v1373 = vmul.f32 %v1240, %v1240
      %v1374 = vmul.f32 %v1241, %v1241
      %v1375 = vmul.f32 %v1242, %v1242
      %v1376 = vmul.f32 %v1243, %v1243
      %v1377 = vmul.f32 %v1244, %v1244
      %v1378 = vmul.f32 %v1245, %v1245
      %v1379 = vmul.f32 %v1246, %v1246
      %v1380 = vmul.f32 %v1247, %v1247
      %v1381 = vmul.f32 %v1248, %v1248
      %v1382 = vmul.f32 %v1249, %v1249
      %v1383 = vmul.f32 %v1250, %v1250
      %v1384 = vmul.f32 %v1251, %v1251
      %v1385 = vmul.f32 %v1252, %v1252
      %v1386 = vmul.f32 %v1253, %v1253
      %v1387 = vmul.f32 %v1254, %v1254
      %v1388 = vmul.f32 %v1255, %v1255
      %v1389 = vmul.f32 %v1256, %v1256
      %v1390 = vmul.f32 %v1257, %v1257
      %v1391 = vmul.f32 %v1258, %v1258
      %v1392 = vmul.f32 %v1259, %v1259
      %v1393 = vmul.f32 %v1260, %v1260
      %v1394 = vmul.f32 %v1261, %v1261
      %v1395 = vmul.f32 %v1262, %v1262
      %v1396 = vmul.f32 %v1263, %v1263
      %v1397 = vmul.f32 %v1264, %v1264
      %v1398 = vsel %vm615, %v1366, 0.0
      %v1399 = vsel %vm615, %v1367, 0.0
      %v1400 = vadd.f32 %v1398, %v1399
      %v1401 = vsel %vm615, %v1368, 0.0
      %v1402 = vadd.f32 %v1400, %v1401
      %v1403 = vsel %vm615, %v1369, 0.0
      %v1404 = vadd.f32 %v1402, %v1403
      %v1405 = vsel %vm615, %v1370, 0.0
      %v1406 = vadd.f32 %v1404, %v1405
      %v1407 = vsel %vm615, %v1371, 0.0
      %v1408 = vadd.f32 %v1406, %v1407
      %v1409 = vsel %vm615, %v1372, 0.0
      %v1410 = vadd.f32 %v1408, %v1409
      %v1411 = vsel %vm615, %v1373, 0.0
      %v1412 = vadd.f32 %v1410, %v1411
      %v1413 = vsel %vm615, %v1374, 0.0
      %v1414 = vadd.f32 %v1412, %v1413
      %v1415 = vsel %vm615, %v1375, 0.0
      %v1416 = vadd.f32 %v1414, %v1415
      %v1417 = vsel %vm615, %v1376, 0.0
      %v1418 = vadd.f32 %v1416, %v1417
      %v1419 = vsel %vm615, %v1377, 0.0
      %v1420 = vadd.f32 %v1418, %v1419
      %v1421 = vsel %vm615, %v1378, 0.0
      %v1422 = vadd.f32 %v1420, %v1421
      %v1423 = vsel %vm615, %v1379, 0.0
      %v1424 = vadd.f32 %v1422, %v1423
      %v1425 = vsel %vm615, %v1380, 0.0
      %v1426 = vadd.f32 %v1424, %v1425
      %v1427 = vsel %vm615, %v1381, 0.0
      %v1428 = vadd.f32 %v1426, %v1427
      %v1429 = vsel %vm615, %v1382, 0.0
      %v1430 = vadd.f32 %v1428, %v1429
      %v1431 = vsel %vm615, %v1383, 0.0
      %v1432 = vadd.f32 %v1430, %v1431
      %v1433 = vsel %vm615, %v1384, 0.0
      %v1434 = vadd.f32 %v1432, %v1433
      %v1435 = vsel %vm615, %v1385, 0.0
      %v1436 = vadd.f32 %v1434, %v1435
      %v1437 = vsel %vm615, %v1386, 0.0
      %v1438 = vadd.f32 %v1436, %v1437
      %v1439 = vsel %vm615, %v1387, 0.0
      %v1440 = vadd.f32 %v1438, %v1439
      %v1441 = vsel %vm615, %v1388, 0.0
      %v1442 = vadd.f32 %v1440, %v1441
      %v1443 = vsel %vm615, %v1389, 0.0
      %v1444 = vadd.f32 %v1442, %v1443
      %v1445 = vsel %vm615, %v1390, 0.0
      %v1446 = vadd.f32 %v1444, %v1445
      %v1447 = vsel %vm615, %v1391, 0.0
      %v1448 = vadd.f32 %v1446, %v1447
      %v1449 = vsel %vm615, %v1392, 0.0
      %v1450 = vadd.f32 %v1448, %v1449
      %v1451 = vsel %vm615, %v1393, 0.0
      %v1452 = vadd.f32 %v1450, %v1451
      %v1453 = vsel %vm615, %v1394, 0.0
      %v1454 = vadd.f32 %v1452, %v1453
      %v1455 = vsel %vm615, %v1395, 0.0
      %v1456 = vadd.f32 %v1454, %v1455
      %v1457 = vsel %vm615, %v1396, 0.0
      %v1458 = vadd.f32 %v1456, %v1457
      %v1459 = vsel %vm615, %v1397, 0.0
      %v1460 = vadd.f32 %v1458, %v1459
      %v1461 = vrot.slane %v1460, 4
      %v1462 = vadd.f32 %v1460, %v1461
      %v1463 = vrot.slane %v1462, 2
      %v1464 = vadd.f32 %v1462, %v1463
      %v1465 = vrot.slane %v1464, 1
      %v1466 = vadd.f32 %v1464, %v1465
      %vm1467 = vcmask 1040384
      %v1468 = vsel %vm1467, %v1365, %v1466
      %vm1469 = vcmask 1041408
      %v1470 = vsel %vm1469, %v1468, 0.0
      %1471 = vst.msk [vmem:[%s368] sm:$0xff] %vm615, %v1470
      %s1472 = smul.u32 32, %s21
      %p1473 = scmp.lt.s32.totalorder %s1472, 63
      %s1474 = scalar_select %p1473, %s1472, 63
      %s1475 = smul.addr %s1474, 8
      %s1476 = scalar_lea.vmem %s8, %s1475
      %p1477 = scmp.lt.s32.totalorder %s21, 1
      %s1478 = scalar_select %p1477, %s21, 1
      %s1479 = smul.addr %s1478, 8
      %s1480 = scalar_lea.vmem %s9, %s1479
      // Predicated region
      $region53: #{_lambda_.6} parent=51 // pred_check
        %p1481 = pneg %p217
      $region54: #{_lambda_.6} parent=51 // pred_check_branch
        %1483 = sbr.rel (%p1481) target = $region56
      $region55: #{_lambda_.6} parent=51 // pred_region
        %s1484 = smul.u32 32, %s21
      $region56: #{_lambda_.6} parent=51 // pred_fallthru
        _
      // Predicated region
      $region57: #{_lambda_.6} parent=51 // pred_check
        %p1485 = pneg %p243
      $region58: #{_lambda_.6} parent=51 // pred_check_branch
        %1487 = sbr.rel (%p1485) target = $region60
      $region59: #{_lambda_.6} parent=51 // pred_region
        _
      $region60: #{_lambda_.6} parent=51 // pred_fallthru
        _
    $region52: #{_lambda_.6} parent=5 // pred_fallthru
      _
    %p1488 = scmp.le.s32.totalorder 2, %s16
    // Predicated region
    $region61: #{_lambda_.6} parent=5 // pred_check
      %p1489 = pneg %p1488
    $region62: #{_lambda_.6} parent=5 // pred_check_branch
      %1491 = sbr.rel (%p1489) target = $region64
    $region63: #{_lambda_.6} parent=5 // pred_region
      %s1492 = ssub.s32 %s16, 2
      // Predicated region
      $region65: #{_lambda_.6} parent=63 // pred_check
        %p1493 = pneg %p223
      $region66: #{_lambda_.6} parent=63 // pred_check_branch
        %1495 = sbr.rel (%p1493) target = $region68
      $region67: #{_lambda_.6} parent=63 // pred_region
        %s1496 = smul.u32 32, %s22
        %p1497 = scmp.lt.s32.totalorder %s1496, 63
        %s1498 = scalar_select %p1497, %s1496, 63
        %s1499 = smul.addr %s1498, 8
        %s1500 = scalar_lea.vmem %s8, %s1499
      $region68: #{_lambda_.6} parent=63 // pred_fallthru
        _
      // Predicated region
      $region69: #{_lambda_.6} parent=63 // pred_check
        %p1501 = pneg %p249
      $region70: #{_lambda_.6} parent=63 // pred_check_branch
        %1503 = sbr.rel (%p1501) target = $region72
      $region71: #{_lambda_.6} parent=63 // pred_region
        %p1504 = scmp.lt.s32.totalorder %s22, 1
        %s1505 = scalar_select %p1504, %s22, 1
        %s1506 = smul.addr %s1505, 8
        %s1507 = scalar_lea.vmem %s9, %s1506
      $region72: #{_lambda_.6} parent=63 // pred_fallthru
        _
    $region64: #{_lambda_.6} parent=5 // pred_fallthru
      _
  $region6: #{_lambda_.6} parent=0 // loop_footer
    %s20 = sadd.s32 1, %s16
  $region7: #{_lambda_.6} parent=0 // loop_footer_branch
    %15 = sbr.rel target = $region3
  $region8: #{_lambda_.6} parent=0 // loop_exit
    _

// kernel: _lambda_.4
$region0: #{_lambda_.4}
  #allocation0 [shape = 'u32[]', space=smem, size = 0x4, offset = 0x4, fixed_abs, tag = 'smem constant byte address 0x4 - core index']
  #allocation1 [shape = 'u32[144,128]{1,0:T(1,128)}', space=vmem, size = 0x12000, scoped, tag = 'internal scratch']
  %s0 = inlined_call_operand.vmem [shape: f32[16,32,32], index: 0, kind: input, shape index: {}]
  %s1 = inlined_call_operand.vmem [shape: f32[1,4,32,32], index: 1, kind: input, shape index: {}]
  %s2 = inlined_call_operand.vmem [shape: f32[1,32], index: 2, kind: input, shape index: {}]
  %s3 = inlined_call_operand.vmem [shape: f32[1,32], index: 3, kind: input, shape index: {}]
  %s4 = inlined_call_operand.vmem [shape: bf16[32,96], index: 4, kind: input, shape index: {}]
  %s5 = inlined_call_operand.vmem [shape: f32[1,96], index: 5, kind: input, shape index: {}]
  %s6 = inlined_call_operand.vmem [shape: bf16[32,32], index: 6, kind: input, shape index: {}]
  %s7 = inlined_call_operand.vmem [shape: f32[1,32], index: 7, kind: input, shape index: {}]
  %s8 = inlined_call_operand.vmem [shape: f32[16,32,32], index: 8, kind: output, shape index: {}]
  %s9 = sld [smem:[#allocation0]]
  $region65: #{_lambda_.4} parent=0
    _
  %s11 = ssub.s32 1, %s9
  %s12 = scalar_select 0, %s11, %s9
  loop: start=0, step=1, limit=4
  $region2: #{_lambda_.4} parent=0 // loop_pre_header
    _
  $region3: #{_lambda_.4} parent=0 // loop_header
    %s14 = sphi 0, %s18
    %p15 = scmp.ge.s32.totalorder %s14, 4
    %s24 = sphi 0, %s26
    %s27 = sphi 0, %s24
    %s28 = sphi 0, %s27
    %s44 = sphi 0, %s28
    %s48 = sphi 0, %s48
    %s50 = sphi 0, %s48
    %s51 = sphi 0, %s50
    %s65 = sphi 0, %s51
    %s69 = sphi 0, %s69
    %s71 = sphi 0, %s69
    %s72 = sphi 0, %s71
    %s86 = sphi 0, %s72
    %s90 = sphi 0, %s90
    %s92 = sphi 0, %s90
    %s93 = sphi 0, %s92
    %s107 = sphi 0, %s93
    %s111 = sphi 0, %s111
    %s113 = sphi 0, %s111
    %s114 = sphi 0, %s113
    %s128 = sphi 0, %s114
    %s132 = sphi 0, %s132
    %s134 = sphi 0, %s132
    %s135 = sphi 0, %s134
    %s149 = sphi 0, %s135
    %s153 = sphi 0, %s153
    %s155 = sphi 0, %s153
    %s156 = sphi 0, %s155
    %s170 = sphi 0, %s156
    %s174 = sphi 0, %s174
    %s176 = sphi 0, %s174
    %s177 = sphi 0, %s176
    %s191 = sphi 0, %s177
    %s197 = sphi 0, %s199
    %s200 = sphi 0, %s197
    %s201 = sphi 0, %s200
    %s217 = sphi 0, %s201
  $region4: #{_lambda_.4} parent=0 // loop_header_branch
    %17 = sbr.rel (%p15) target = $region8
  $region5: #{_lambda_.4} parent=0 // loop_body
    %s19 = ssub.s32 %s14, 1
    %s20 = ssub.s32 %s14, 2
    %s21 = sadd.s32 %s14, 1
    %s22 = ssub.s32 %s14, %s21
    %p23 = scmp.eq.s32.totalorder %s22, 0
    %s25 = sadd.s32 %s24, 1
    %s26 = scalar_select %p23, %s24, %s25
    %p29 = pneg %p23
    %p30 = scmp.eq.s32.totalorder %s14, 1
    %p31 = por %p29, %p30
    %p32 = scmp.ne.s32.totalorder %s24, %s27
    %p33 = scmp.eq.s32.totalorder %s14, 0
    %p34 = por %p32, %p33
    %p35 = scmp.ne.s32.totalorder %s24, %s27
    %p36 = scmp.eq.s32.totalorder %s19, 1
    %p37 = por %p35, %p36
    %p38 = scmp.ne.s32.totalorder %s27, %s28
    %p39 = scmp.eq.s32.totalorder %s19, 0
    %p40 = por %p38, %p39
    %p41 = scmp.ne.s32.totalorder %s27, %s28
    %p42 = scmp.eq.s32.totalorder %s20, 1
    %p43 = por %p41, %p42
    %p45 = scmp.ne.s32.totalorder %s28, %s44
    %p46 = scmp.eq.s32.totalorder %s20, 0
    %p47 = por %p45, %p46
    %s49 = sadd.s32 %s48, 1
    %p52 = scmp.eq.s32.totalorder %s14, 1
    %p53 = scmp.ne.s32.totalorder %s48, %s50
    %p54 = scmp.eq.s32.totalorder %s14, 0
    %p55 = por %p53, %p54
    %p56 = scmp.ne.s32.totalorder %s48, %s50
    %p57 = scmp.eq.s32.totalorder %s19, 1
    %p58 = por %p56, %p57
    %p59 = scmp.ne.s32.totalorder %s50, %s51
    %p60 = scmp.eq.s32.totalorder %s19, 0
    %p61 = por %p59, %p60
    %p62 = scmp.ne.s32.totalorder %s50, %s51
    %p63 = scmp.eq.s32.totalorder %s20, 1
    %p64 = por %p62, %p63
    %p66 = scmp.ne.s32.totalorder %s51, %s65
    %p67 = scmp.eq.s32.totalorder %s20, 0
    %p68 = por %p66, %p67
    %s70 = sadd.s32 %s69, 1
    %p73 = scmp.eq.s32.totalorder %s14, 1
    %p74 = scmp.ne.s32.totalorder %s69, %s71
    %p75 = scmp.eq.s32.totalorder %s14, 0
    %p76 = por %p74, %p75
    %p77 = scmp.ne.s32.totalorder %s69, %s71
    %p78 = scmp.eq.s32.totalorder %s19, 1
    %p79 = por %p77, %p78
    %p80 = scmp.ne.s32.totalorder %s71, %s72
    %p81 = scmp.eq.s32.totalorder %s19, 0
    %p82 = por %p80, %p81
    %p83 = scmp.ne.s32.totalorder %s71, %s72
    %p84 = scmp.eq.s32.totalorder %s20, 1
    %p85 = por %p83, %p84
    %p87 = scmp.ne.s32.totalorder %s72, %s86
    %p88 = scmp.eq.s32.totalorder %s20, 0
    %p89 = por %p87, %p88
    %s91 = sadd.s32 %s90, 1
    %p94 = scmp.eq.s32.totalorder %s14, 1
    %p95 = scmp.ne.s32.totalorder %s90, %s92
    %p96 = scmp.eq.s32.totalorder %s14, 0
    %p97 = por %p95, %p96
    %p98 = scmp.ne.s32.totalorder %s90, %s92
    %p99 = scmp.eq.s32.totalorder %s19, 1
    %p100 = por %p98, %p99
    %p101 = scmp.ne.s32.totalorder %s92, %s93
    %p102 = scmp.eq.s32.totalorder %s19, 0
    %p103 = por %p101, %p102
    %p104 = scmp.ne.s32.totalorder %s92, %s93
    %p105 = scmp.eq.s32.totalorder %s20, 1
    %p106 = por %p104, %p105
    %p108 = scmp.ne.s32.totalorder %s93, %s107
    %p109 = scmp.eq.s32.totalorder %s20, 0
    %p110 = por %p108, %p109
    %s112 = sadd.s32 %s111, 1
    %p115 = scmp.eq.s32.totalorder %s14, 1
    %p116 = scmp.ne.s32.totalorder %s111, %s113
    %p117 = scmp.eq.s32.totalorder %s14, 0
    %p118 = por %p116, %p117
    %p119 = scmp.ne.s32.totalorder %s111, %s113
    %p120 = scmp.eq.s32.totalorder %s19, 1
    %p121 = por %p119, %p120
    %p122 = scmp.ne.s32.totalorder %s113, %s114
    %p123 = scmp.eq.s32.totalorder %s19, 0
    %p124 = por %p122, %p123
    %p125 = scmp.ne.s32.totalorder %s113, %s114
    %p126 = scmp.eq.s32.totalorder %s20, 1
    %p127 = por %p125, %p126
    %p129 = scmp.ne.s32.totalorder %s114, %s128
    %p130 = scmp.eq.s32.totalorder %s20, 0
    %p131 = por %p129, %p130
    %s133 = sadd.s32 %s132, 1
    %p136 = scmp.eq.s32.totalorder %s14, 1
    %p137 = scmp.ne.s32.totalorder %s132, %s134
    %p138 = scmp.eq.s32.totalorder %s14, 0
    %p139 = por %p137, %p138
    %p140 = scmp.ne.s32.totalorder %s132, %s134
    %p141 = scmp.eq.s32.totalorder %s19, 1
    %p142 = por %p140, %p141
    %p143 = scmp.ne.s32.totalorder %s134, %s135
    %p144 = scmp.eq.s32.totalorder %s19, 0
    %p145 = por %p143, %p144
    %p146 = scmp.ne.s32.totalorder %s134, %s135
    %p147 = scmp.eq.s32.totalorder %s20, 1
    %p148 = por %p146, %p147
    %p150 = scmp.ne.s32.totalorder %s135, %s149
    %p151 = scmp.eq.s32.totalorder %s20, 0
    %p152 = por %p150, %p151
    %s154 = sadd.s32 %s153, 1
    %p157 = scmp.eq.s32.totalorder %s14, 1
    %p158 = scmp.ne.s32.totalorder %s153, %s155
    %p159 = scmp.eq.s32.totalorder %s14, 0
    %p160 = por %p158, %p159
    %p161 = scmp.ne.s32.totalorder %s153, %s155
    %p162 = scmp.eq.s32.totalorder %s19, 1
    %p163 = por %p161, %p162
    %p164 = scmp.ne.s32.totalorder %s155, %s156
    %p165 = scmp.eq.s32.totalorder %s19, 0
    %p166 = por %p164, %p165
    %p167 = scmp.ne.s32.totalorder %s155, %s156
    %p168 = scmp.eq.s32.totalorder %s20, 1
    %p169 = por %p167, %p168
    %p171 = scmp.ne.s32.totalorder %s156, %s170
    %p172 = scmp.eq.s32.totalorder %s20, 0
    %p173 = por %p171, %p172
    %s175 = sadd.s32 %s174, 1
    %p178 = scmp.eq.s32.totalorder %s14, 1
    %p179 = scmp.ne.s32.totalorder %s174, %s176
    %p180 = scmp.eq.s32.totalorder %s14, 0
    %p181 = por %p179, %p180
    %p182 = scmp.ne.s32.totalorder %s174, %s176
    %p183 = scmp.eq.s32.totalorder %s19, 1
    %p184 = por %p182, %p183
    %p185 = scmp.ne.s32.totalorder %s176, %s177
    %p186 = scmp.eq.s32.totalorder %s19, 0
    %p187 = por %p185, %p186
    %p188 = scmp.ne.s32.totalorder %s176, %s177
    %p189 = scmp.eq.s32.totalorder %s20, 1
    %p190 = por %p188, %p189
    %p192 = scmp.ne.s32.totalorder %s177, %s191
    %p193 = scmp.eq.s32.totalorder %s20, 0
    %p194 = por %p192, %p193
    %s195 = ssub.s32 %s14, %s21
    %p196 = scmp.eq.s32.totalorder %s195, 0
    %s198 = sadd.s32 %s197, 1
    %s199 = scalar_select %p196, %s197, %s198
    %p202 = pneg %p196
    %p203 = scmp.eq.s32.totalorder %s14, 1
    %p204 = por %p202, %p203
    %p205 = scmp.ne.s32.totalorder %s197, %s200
    %p206 = scmp.eq.s32.totalorder %s14, 0
    %p207 = por %p205, %p206
    %p208 = scmp.ne.s32.totalorder %s197, %s200
    %p209 = scmp.eq.s32.totalorder %s19, 1
    %p210 = por %p208, %p209
    %p211 = scmp.ne.s32.totalorder %s200, %s201
    %p212 = scmp.eq.s32.totalorder %s19, 0
    %p213 = por %p211, %p212
    %p214 = scmp.ne.s32.totalorder %s200, %s201
    %p215 = scmp.eq.s32.totalorder %s20, 1
    %p216 = por %p214, %p215
    %p218 = scmp.ne.s32.totalorder %s201, %s217
    %p219 = scmp.eq.s32.totalorder %s20, 0
    %p220 = por %p218, %p219
    %p221 = scmp.le.s32.totalorder 1, %s14
    %p222 = scmp.lt.s32.totalorder %s14, 3
    %p223 = pnand %p221, %p222
    %p224 = pneg %p223
    // Predicated region
    $region9: #{_lambda_.4} parent=5 // pred_check
      _
    $region10: #{_lambda_.4} parent=5 // pred_check_branch
      %226 = sbr.rel (%p223) target = $region12
    $region11: #{_lambda_.4} parent=5 // pred_region
      %s227 = ssub.s32 %s14, 1
      // Predicated region
      $region13: #{_lambda_.4} parent=11 // pred_check
        %p228 = pneg %p61
      $region14: #{_lambda_.4} parent=11 // pred_check_branch
        %230 = sbr.rel (%p228) target = $region16
      $region15: #{_lambda_.4} parent=11 // pred_region
        _
      $region16: #{_lambda_.4} parent=11 // pred_fallthru
        _
      // Predicated region
      $region17: #{_lambda_.4} parent=11 // pred_check
        %p231 = pneg %p82
      $region18: #{_lambda_.4} parent=11 // pred_check_branch
        %233 = sbr.rel (%p231) target = $region20
      $region19: #{_lambda_.4} parent=11 // pred_region
        _
      $region20: #{_lambda_.4} parent=11 // pred_fallthru
        _
      // Predicated region
      $region21: #{_lambda_.4} parent=11 // pred_check
        %p234 = pneg %p103
      $region22: #{_lambda_.4} parent=11 // pred_check_branch
        %236 = sbr.rel (%p234) target = $region24
      $region23: #{_lambda_.4} parent=11 // pred_region
        _
      $region24: #{_lambda_.4} parent=11 // pred_fallthru
        _
      // Predicated region
      $region25: #{_lambda_.4} parent=11 // pred_check
        %p237 = pneg %p124
      $region26: #{_lambda_.4} parent=11 // pred_check_branch
        %239 = sbr.rel (%p237) target = $region28
      $region27: #{_lambda_.4} parent=11 // pred_region
        _
      $region28: #{_lambda_.4} parent=11 // pred_fallthru
        _
      // Predicated region
      $region29: #{_lambda_.4} parent=11 // pred_check
        %p240 = pneg %p145
      $region30: #{_lambda_.4} parent=11 // pred_check_branch
        %242 = sbr.rel (%p240) target = $region32
      $region31: #{_lambda_.4} parent=11 // pred_region
        _
      $region32: #{_lambda_.4} parent=11 // pred_fallthru
        _
      // Predicated region
      $region33: #{_lambda_.4} parent=11 // pred_check
        %p243 = pneg %p166
      $region34: #{_lambda_.4} parent=11 // pred_check_branch
        %245 = sbr.rel (%p243) target = $region36
      $region35: #{_lambda_.4} parent=11 // pred_region
        _
      $region36: #{_lambda_.4} parent=11 // pred_fallthru
        _
      // Predicated region
      $region37: #{_lambda_.4} parent=11 // pred_check
        %p246 = pneg %p187
      $region38: #{_lambda_.4} parent=11 // pred_check_branch
        %248 = sbr.rel (%p246) target = $region40
      $region39: #{_lambda_.4} parent=11 // pred_region
        _
      $region40: #{_lambda_.4} parent=11 // pred_fallthru
        _
    $region12: #{_lambda_.4} parent=5 // pred_fallthru
      _
    %p249 = scmp.lt.s32.totalorder %s14, 2
    // Predicated region
    $region41: #{_lambda_.4} parent=5 // pred_check
      %p250 = pneg %p249
    $region42: #{_lambda_.4} parent=5 // pred_check_branch
      %252 = sbr.rel (%p250) target = $region44
    $region43: #{_lambda_.4} parent=5 // pred_region
      // Predicated region
      $region45: #{_lambda_.4} parent=43 // pred_check
        %p253 = pneg %p34
      $region46: #{_lambda_.4} parent=43 // pred_check_branch
        %255 = sbr.rel (%p253) target = $region48
      $region47: #{_lambda_.4} parent=43 // pred_region
        %s256 = smul.u32 8, %s14
        %p257 = scmp.lt.s32.totalorder %s256, 15
        %s258 = scalar_select %p257, %s256, 15
        %s259 = smul.addr %s258, 4
        %s260 = smul.addr %s259, 8
        %s261 = scalar_lea.vmem %s0, %s260
        %s262 = smul.u32 8, %s14
      $region48: #{_lambda_.4} parent=43 // pred_fallthru
        _
    $region44: #{_lambda_.4} parent=5 // pred_fallthru
      _
    %p263 = scmp.le.s32.totalorder 1, %s14
    %p264 = scmp.lt.s32.totalorder %s14, 3
    %p265 = pnand %p263, %p264
    %p266 = pneg %p265
    // Predicated region
    $region49: #{_lambda_.4} parent=5 // pred_check
      _
    $region50: #{_lambda_.4} parent=5 // pred_check_branch
      %268 = sbr.rel (%p265) target = $region52
    $region51: #{_lambda_.4} parent=5 // pred_region
      %s269 = ssub.s32 %s14, 1
      %s270 = smul.u32 8, %s19
      %p271 = scmp.lt.s32.totalorder %s270, 15
      %s272 = scalar_select %p271, %s270, 15
      %s273 = smul.addr %s272, 4
      %s274 = smul.addr %s273, 8
      %s275 = scalar_lea.vmem %s0, %s274
      %p276 = pneg %p40
      %p277 = pneg %p37
      %p278 = pneg %p61
      %p279 = pneg %p58
      %p280 = pneg %p82
      %p281 = pneg %p79
      %p282 = pneg %p103
      %p283 = pneg %p100
      %p284 = pneg %p124
      %p285 = pneg %p121
      %p286 = pneg %p145
      %p287 = pneg %p142
      %p288 = pneg %p166
      %p289 = pneg %p163
      %p290 = pneg %p187
      %p291 = pneg %p184
      %p292 = pneg %p213
      %p293 = pneg %p210
      %s294 = smul.u32 8, %s19
      %p295 = scmp.lt.s32.totalorder %s294, 15
      %s296 = scalar_select %p295, %s294, 15
      %s297 = smul.addr %s296, 4
      %s298 = smul.addr %s297, 8
      %s299 = scalar_lea.vmem %s8, %s298
      %s300 = smul.u32 8, %s19
      %p301 = scmp.lt.s32.totalorder %s300, 15
      %s302 = scalar_select %p301, %s300, 15
      %s303 = smul.addr %s302, 4
      %s304 = smul.addr %s303, 8
      %s305 = scalar_lea.vmem %s0, %s304
      %s306 = smul.u32 8, %s19
      %s307 = smul.u32 8, %s19
      %p308 = scmp.lt.s32.totalorder %s307, 15
      %s309 = scalar_select %p308, %s307, 15
      %s310 = smul.addr %s309, 4
      %s311 = smul.addr %s310, 8
      %s312 = scalar_lea.vmem %s8, %s311
      %s313 = smul.u32 8, %s19
      %v315 = vld [vmem:[%s305] sm:$0xff]
      %v316 = vld [vmem:[%s305 + $0x8] sm:$0xff]
      %v317 = vld [vmem:[%s305 + $0x10] sm:$0xff]
      %v318 = vld [vmem:[%s305 + $0x18] sm:$0xff]
      %v319 = vld [vmem:[%s305 + $0x20] sm:$0xff]
      %v320 = vld [vmem:[%s305 + $0x28] sm:$0xff]
      %v321 = vld [vmem:[%s305 + $0x30] sm:$0xff]
      %v322 = vld [vmem:[%s305 + $0x38] sm:$0xff]
      %v323 = vld [vmem:[%s305 + $0x40] sm:$0xff]
      %v324 = vld [vmem:[%s305 + $0x48] sm:$0xff]
      %v325 = vld [vmem:[%s305 + $0x50] sm:$0xff]
      %v326 = vld [vmem:[%s305 + $0x58] sm:$0xff]
      %v327 = vld [vmem:[%s305 + $0x60] sm:$0xff]
      %v328 = vld [vmem:[%s305 + $0x68] sm:$0xff]
      %v329 = vld [vmem:[%s305 + $0x70] sm:$0xff]
      %v330 = vld [vmem:[%s305 + $0x78] sm:$0xff]
      %v331 = vld [vmem:[%s305 + $0x80] sm:$0xff]
      %v332 = vld [vmem:[%s305 + $0x88] sm:$0xff]
      %v333 = vld [vmem:[%s305 + $0x90] sm:$0xff]
      %v334 = vld [vmem:[%s305 + $0x98] sm:$0xff]
      %v335 = vld [vmem:[%s305 + $0xa0] sm:$0xff]
      %v336 = vld [vmem:[%s305 + $0xa8] sm:$0xff]
      %v337 = vld [vmem:[%s305 + $0xb0] sm:$0xff]
      %v338 = vld [vmem:[%s305 + $0xb8] sm:$0xff]
      %v339 = vld [vmem:[%s305 + $0xc0] sm:$0xff]
      %v340 = vld [vmem:[%s305 + $0xc8] sm:$0xff]
      %v341 = vld [vmem:[%s305 + $0xd0] sm:$0xff]
      %v342 = vld [vmem:[%s305 + $0xd8] sm:$0xff]
      %v343 = vld [vmem:[%s305 + $0xe0] sm:$0xff]
      %v344 = vld [vmem:[%s305 + $0xe8] sm:$0xff]
      %v345 = vld [vmem:[%s305 + $0xf0] sm:$0xff]
      %v346 = vld [vmem:[%s305 + $0xf8] sm:$0xff]
      %vm347 = vcmask 261120
      %v348 = vsel %vm347, %v315, 0.0
      %349 = vadd.xlane.f32.xlu0 %v348
      %v350 = vpop.xlane.xlu0 %349
      %v351 = vsel %vm347, %v316, 0.0
      %352 = vadd.xlane.f32.xlu0 %v351
      %v353 = vpop.xlane.xlu0 %352
      %v354 = vsel %vm347, %v317, 0.0
      %355 = vadd.xlane.f32.xlu0 %v354
      %v356 = vpop.xlane.xlu0 %355
      %v357 = vsel %vm347, %v318, 0.0
      %358 = vadd.xlane.f32.xlu0 %v357
      %v359 = vpop.xlane.xlu0 %358
      %v360 = vsel %vm347, %v319, 0.0
      %361 = vadd.xlane.f32.xlu0 %v360
      %v362 = vpop.xlane.xlu0 %361
      %v363 = vsel %vm347, %v320, 0.0
      %364 = vadd.xlane.f32.xlu0 %v363
      %v365 = vpop.xlane.xlu0 %364
      %v366 = vsel %vm347, %v321, 0.0
      %367 = vadd.xlane.f32.xlu0 %v366
      %v368 = vpop.xlane.xlu0 %367
      %v369 = vsel %vm347, %v322, 0.0
      %370 = vadd.xlane.f32.xlu0 %v369
      %v371 = vpop.xlane.xlu0 %370
      %v372 = vsel %vm347, %v323, 0.0
      %373 = vadd.xlane.f32.xlu0 %v372
      %v374 = vpop.xlane.xlu0 %373
      %v375 = vsel %vm347, %v324, 0.0
      %376 = vadd.xlane.f32.xlu0 %v375
      %v377 = vpop.xlane.xlu0 %376
      %v378 = vsel %vm347, %v325, 0.0
      %379 = vadd.xlane.f32.xlu0 %v378
      %v380 = vpop.xlane.xlu0 %379
      %v381 = vsel %vm347, %v326, 0.0
      %382 = vadd.xlane.f32.xlu0 %v381
      %v383 = vpop.xlane.xlu0 %382
      %v384 = vsel %vm347, %v327, 0.0
      %385 = vadd.xlane.f32.xlu0 %v384
      %v386 = vpop.xlane.xlu0 %385
      %v387 = vsel %vm347, %v328, 0.0
      %388 = vadd.xlane.f32.xlu0 %v387
      %v389 = vpop.xlane.xlu0 %388
      %v390 = vsel %vm347, %v329, 0.0
      %391 = vadd.xlane.f32.xlu0 %v390
      %v392 = vpop.xlane.xlu0 %391
      %v393 = vsel %vm347, %v330, 0.0
      %394 = vadd.xlane.f32.xlu0 %v393
      %v395 = vpop.xlane.xlu0 %394
      %v396 = vsel %vm347, %v331, 0.0
      %397 = vadd.xlane.f32.xlu0 %v396
      %v398 = vpop.xlane.xlu0 %397
      %v399 = vsel %vm347, %v332, 0.0
      %400 = vadd.xlane.f32.xlu0 %v399
      %v401 = vpop.xlane.xlu0 %400
      %v402 = vsel %vm347, %v333, 0.0
      %403 = vadd.xlane.f32.xlu0 %v402
      %v404 = vpop.xlane.xlu0 %403
      %v405 = vsel %vm347, %v334, 0.0
      %406 = vadd.xlane.f32.xlu0 %v405
      %v407 = vpop.xlane.xlu0 %406
      %v408 = vsel %vm347, %v335, 0.0
      %409 = vadd.xlane.f32.xlu0 %v408
      %v410 = vpop.xlane.xlu0 %409
      %v411 = vsel %vm347, %v336, 0.0
      %412 = vadd.xlane.f32.xlu0 %v411
      %v413 = vpop.xlane.xlu0 %412
      %v414 = vsel %vm347, %v337, 0.0
      %415 = vadd.xlane.f32.xlu0 %v414
      %v416 = vpop.xlane.xlu0 %415
      %v417 = vsel %vm347, %v338, 0.0
      %418 = vadd.xlane.f32.xlu0 %v417
      %v419 = vpop.xlane.xlu0 %418
      %v420 = vsel %vm347, %v339, 0.0
      %421 = vadd.xlane.f32.xlu0 %v420
      %v422 = vpop.xlane.xlu0 %421
      %v423 = vsel %vm347, %v340, 0.0
      %424 = vadd.xlane.f32.xlu0 %v423
      %v425 = vpop.xlane.xlu0 %424
      %v426 = vsel %vm347, %v341, 0.0
      %427 = vadd.xlane.f32.xlu0 %v426
      %v428 = vpop.xlane.xlu0 %427
      %v429 = vsel %vm347, %v342, 0.0
      %430 = vadd.xlane.f32.xlu0 %v429
      %v431 = vpop.xlane.xlu0 %430
      %v432 = vsel %vm347, %v343, 0.0
      %433 = vadd.xlane.f32.xlu0 %v432
      %v434 = vpop.xlane.xlu0 %433
      %v435 = vsel %vm347, %v344, 0.0
      %436 = vadd.xlane.f32.xlu0 %v435
      %v437 = vpop.xlane.xlu0 %436
      %v438 = vsel %vm347, %v345, 0.0
      %439 = vadd.xlane.f32.xlu0 %v438
      %v440 = vpop.xlane.xlu0 %439
      %v441 = vsel %vm347, %v346, 0.0
      %442 = vadd.xlane.f32.xlu0 %v441
      %v443 = vpop.xlane.xlu0 %442
      %v444 = vrcp.pop 32.0
      %v445 = vmul.f32 %v350, %v444
      %v446 = vmul.f32 %v353, %v444
      %v447 = vmul.f32 %v356, %v444
      %v448 = vmul.f32 %v359, %v444
      %v449 = vmul.f32 %v362, %v444
      %v450 = vmul.f32 %v365, %v444
      %v451 = vmul.f32 %v368, %v444
      %v452 = vmul.f32 %v371, %v444
      %v453 = vmul.f32 %v374, %v444
      %v454 = vmul.f32 %v377, %v444
      %v455 = vmul.f32 %v380, %v444
      %v456 = vmul.f32 %v383, %v444
      %v457 = vmul.f32 %v386, %v444
      %v458 = vmul.f32 %v389, %v444
      %v459 = vmul.f32 %v392, %v444
      %v460 = vmul.f32 %v395, %v444
      %v461 = vmul.f32 %v398, %v444
      %v462 = vmul.f32 %v401, %v444
      %v463 = vmul.f32 %v404, %v444
      %v464 = vmul.f32 %v407, %v444
      %v465 = vmul.f32 %v410, %v444
      %v466 = vmul.f32 %v413, %v444
      %v467 = vmul.f32 %v416, %v444
      %v468 = vmul.f32 %v419, %v444
      %v469 = vmul.f32 %v422, %v444
      %v470 = vmul.f32 %v425, %v444
      %v471 = vmul.f32 %v428, %v444
      %v472 = vmul.f32 %v431, %v444
      %v473 = vmul.f32 %v434, %v444
      %v474 = vmul.f32 %v437, %v444
      %v475 = vmul.f32 %v440, %v444
      %v476 = vmul.f32 %v443, %v444
      %v477 = vsub.f32 %v315, %v445
      %v478 = vsub.f32 %v316, %v446
      %v479 = vsub.f32 %v317, %v447
      %v480 = vsub.f32 %v318, %v448
      %v481 = vsub.f32 %v319, %v449
      %v482 = vsub.f32 %v320, %v450
      %v483 = vsub.f32 %v321, %v451
      %v484 = vsub.f32 %v322, %v452
      %v485 = vsub.f32 %v323, %v453
      %v486 = vsub.f32 %v324, %v454
      %v487 = vsub.f32 %v325, %v455
      %v488 = vsub.f32 %v326, %v456
      %v489 = vsub.f32 %v327, %v457
      %v490 = vsub.f32 %v328, %v458
      %v491 = vsub.f32 %v329, %v459
      %v492 = vsub.f32 %v330, %v460
      %v493 = vsub.f32 %v331, %v461
      %v494 = vsub.f32 %v332, %v462
      %v495 = vsub.f32 %v333, %v463
      %v496 = vsub.f32 %v334, %v464
      %v497 = vsub.f32 %v335, %v465
      %v498 = vsub.f32 %v336, %v466
      %v499 = vsub.f32 %v337, %v467
      %v500 = vsub.f32 %v338, %v468
      %v501 = vsub.f32 %v339, %v469
      %v502 = vsub.f32 %v340, %v470
      %v503 = vsub.f32 %v341, %v471
      %v504 = vsub.f32 %v342, %v472
      %v505 = vsub.f32 %v343, %v473
      %v506 = vsub.f32 %v344, %v474
      %v507 = vsub.f32 %v345, %v475
      %v508 = vsub.f32 %v346, %v476
      %v509 = vmul.f32 %v477, %v477
      %v510 = vmul.f32 %v478, %v478
      %v511 = vmul.f32 %v479, %v479
      %v512 = vmul.f32 %v480, %v480
      %v513 = vmul.f32 %v481, %v481
      %v514 = vmul.f32 %v482, %v482
      %v515 = vmul.f32 %v483, %v483
      %v516 = vmul.f32 %v484, %v484
      %v517 = vmul.f32 %v485, %v485
      %v518 = vmul.f32 %v486, %v486
      %v519 = vmul.f32 %v487, %v487
      %v520 = vmul.f32 %v488, %v488
      %v521 = vmul.f32 %v489, %v489
      %v522 = vmul.f32 %v490, %v490
      %v523 = vmul.f32 %v491, %v491
      %v524 = vmul.f32 %v492, %v492
      %v525 = vmul.f32 %v493, %v493
      %v526 = vmul.f32 %v494, %v494
      %v527 = vmul.f32 %v495, %v495
      %v528 = vmul.f32 %v496, %v496
      %v529 = vmul.f32 %v497, %v497
      %v530 = vmul.f32 %v498, %v498
      %v531 = vmul.f32 %v499, %v499
      %v532 = vmul.f32 %v500, %v500
      %v533 = vmul.f32 %v501, %v501
      %v534 = vmul.f32 %v502, %v502
      %v535 = vmul.f32 %v503, %v503
      %v536 = vmul.f32 %v504, %v504
      %v537 = vmul.f32 %v505, %v505
      %v538 = vmul.f32 %v506, %v506
      %v539 = vmul.f32 %v507, %v507
      %v540 = vmul.f32 %v508, %v508
      %v541 = vsel %vm347, %v509, 0.0
      %542 = vadd.xlane.f32.xlu0 %v541
      %v543 = vpop.xlane.xlu0 %542
      %v544 = vsel %vm347, %v510, 0.0
      %545 = vadd.xlane.f32.xlu0 %v544
      %v546 = vpop.xlane.xlu0 %545
      %v547 = vsel %vm347, %v511, 0.0
      %548 = vadd.xlane.f32.xlu0 %v547
      %v549 = vpop.xlane.xlu0 %548
      %v550 = vsel %vm347, %v512, 0.0
      %551 = vadd.xlane.f32.xlu0 %v550
      %v552 = vpop.xlane.xlu0 %551
      %v553 = vsel %vm347, %v513, 0.0
      %554 = vadd.xlane.f32.xlu0 %v553
      %v555 = vpop.xlane.xlu0 %554
      %v556 = vsel %vm347, %v514, 0.0
      %557 = vadd.xlane.f32.xlu0 %v556
      %v558 = vpop.xlane.xlu0 %557
      %v559 = vsel %vm347, %v515, 0.0
      %560 = vadd.xlane.f32.xlu0 %v559
      %v561 = vpop.xlane.xlu0 %560
      %v562 = vsel %vm347, %v516, 0.0
      %563 = vadd.xlane.f32.xlu0 %v562
      %v564 = vpop.xlane.xlu0 %563
      %v565 = vsel %vm347, %v517, 0.0
      %566 = vadd.xlane.f32.xlu0 %v565
      %v567 = vpop.xlane.xlu0 %566
      %v568 = vsel %vm347, %v518, 0.0
      %569 = vadd.xlane.f32.xlu0 %v568
      %v570 = vpop.xlane.xlu0 %569
      %v571 = vsel %vm347, %v519, 0.0
      %572 = vadd.xlane.f32.xlu0 %v571
      %v573 = vpop.xlane.xlu0 %572
      %v574 = vsel %vm347, %v520, 0.0
      %575 = vadd.xlane.f32.xlu0 %v574
      %v576 = vpop.xlane.xlu0 %575
      %v577 = vsel %vm347, %v521, 0.0
      %578 = vadd.xlane.f32.xlu0 %v577
      %v579 = vpop.xlane.xlu0 %578
      %v580 = vsel %vm347, %v522, 0.0
      %581 = vadd.xlane.f32.xlu0 %v580
      %v582 = vpop.xlane.xlu0 %581
      %v583 = vsel %vm347, %v523, 0.0
      %584 = vadd.xlane.f32.xlu0 %v583
      %v585 = vpop.xlane.xlu0 %584
      %v586 = vsel %vm347, %v524, 0.0
      %587 = vadd.xlane.f32.xlu0 %v586
      %v588 = vpop.xlane.xlu0 %587
      %v589 = vsel %vm347, %v525, 0.0
      %590 = vadd.xlane.f32.xlu0 %v589
      %v591 = vpop.xlane.xlu0 %590
      %v592 = vsel %vm347, %v526, 0.0
      %593 = vadd.xlane.f32.xlu0 %v592
      %v594 = vpop.xlane.xlu0 %593
      %v595 = vsel %vm347, %v527, 0.0
      %596 = vadd.xlane.f32.xlu0 %v595
      %v597 = vpop.xlane.xlu0 %596
      %v598 = vsel %vm347, %v528, 0.0
      %599 = vadd.xlane.f32.xlu0 %v598
      %v600 = vpop.xlane.xlu0 %599
      %v601 = vsel %vm347, %v529, 0.0
      %602 = vadd.xlane.f32.xlu0 %v601
      %v603 = vpop.xlane.xlu0 %602
      %v604 = vsel %vm347, %v530, 0.0
      %605 = vadd.xlane.f32.xlu0 %v604
      %v606 = vpop.xlane.xlu0 %605
      %v607 = vsel %vm347, %v531, 0.0
      %608 = vadd.xlane.f32.xlu0 %v607
      %v609 = vpop.xlane.xlu0 %608
      %v610 = vsel %vm347, %v532, 0.0
      %611 = vadd.xlane.f32.xlu0 %v610
      %v612 = vpop.xlane.xlu0 %611
      %v613 = vsel %vm347, %v533, 0.0
      %614 = vadd.xlane.f32.xlu0 %v613
      %v615 = vpop.xlane.xlu0 %614
      %v616 = vsel %vm347, %v534, 0.0
      %617 = vadd.xlane.f32.xlu0 %v616
      %v618 = vpop.xlane.xlu0 %617
      %v619 = vsel %vm347, %v535, 0.0
      %620 = vadd.xlane.f32.xlu0 %v619
      %v621 = vpop.xlane.xlu0 %620
      %v622 = vsel %vm347, %v536, 0.0
      %623 = vadd.xlane.f32.xlu0 %v622
      %v624 = vpop.xlane.xlu0 %623
      %v625 = vsel %vm347, %v537, 0.0
      %626 = vadd.xlane.f32.xlu0 %v625
      %v627 = vpop.xlane.xlu0 %626
      %v628 = vsel %vm347, %v538, 0.0
      %629 = vadd.xlane.f32.xlu0 %v628
      %v630 = vpop.xlane.xlu0 %629
      %v631 = vsel %vm347, %v539, 0.0
      %632 = vadd.xlane.f32.xlu0 %v631
      %v633 = vpop.xlane.xlu0 %632
      %v634 = vsel %vm347, %v540, 0.0
      %635 = vadd.xlane.f32.xlu0 %v634
      %v636 = vpop.xlane.xlu0 %635
      %v637 = vmul.f32 %v543, %v444
      %v638 = vmul.f32 %v546, %v444
      %v639 = vmul.f32 %v549, %v444
      %v640 = vmul.f32 %v552, %v444
      %v641 = vmul.f32 %v555, %v444
      %v642 = vmul.f32 %v558, %v444
      %v643 = vmul.f32 %v561, %v444
      %v644 = vmul.f32 %v564, %v444
      %v645 = vmul.f32 %v567, %v444
      %v646 = vmul.f32 %v570, %v444
      %v647 = vmul.f32 %v573, %v444
      %v648 = vmul.f32 %v576, %v444
      %v649 = vmul.f32 %v579, %v444
      %v650 = vmul.f32 %v582, %v444
      %v651 = vmul.f32 %v585, %v444
      %v652 = vmul.f32 %v588, %v444
      %v653 = vmul.f32 %v591, %v444
      %v654 = vmul.f32 %v594, %v444
      %v655 = vmul.f32 %v597, %v444
      %v656 = vmul.f32 %v600, %v444
      %v657 = vmul.f32 %v603, %v444
      %v658 = vmul.f32 %v606, %v444
      %v659 = vmul.f32 %v609, %v444
      %v660 = vmul.f32 %v612, %v444
      %v661 = vmul.f32 %v615, %v444
      %v662 = vmul.f32 %v618, %v444
      %v663 = vmul.f32 %v621, %v444
      %v664 = vmul.f32 %v624, %v444
      %v665 = vmul.f32 %v627, %v444
      %v666 = vmul.f32 %v630, %v444
      %v667 = vmul.f32 %v633, %v444
      %v668 = vmul.f32 %v636, %v444
      %v669 = vadd.f32 %v637, 1e-05
      %v670 = vadd.f32 %v638, 1e-05
      %v671 = vadd.f32 %v639, 1e-05
      %v672 = vadd.f32 %v640, 1e-05
      %v673 = vadd.f32 %v641, 1e-05
      %v674 = vadd.f32 %v642, 1e-05
      %v675 = vadd.f32 %v643, 1e-05
      %v676 = vadd.f32 %v644, 1e-05
      %v677 = vadd.f32 %v645, 1e-05
      %v678 = vadd.f32 %v646, 1e-05
      %v679 = vadd.f32 %v647, 1e-05
      %v680 = vadd.f32 %v648, 1e-05
      %v681 = vadd.f32 %v649, 1e-05
      %v682 = vadd.f32 %v650, 1e-05
      %v683 = vadd.f32 %v651, 1e-05
      %v684 = vadd.f32 %v652, 1e-05
      %v685 = vadd.f32 %v653, 1e-05
      %v686 = vadd.f32 %v654, 1e-05
      %v687 = vadd.f32 %v655, 1e-05
      %v688 = vadd.f32 %v656, 1e-05
      %v689 = vadd.f32 %v657, 1e-05
      %v690 = vadd.f32 %v658, 1e-05
      %v691 = vadd.f32 %v659, 1e-05
      %v692 = vadd.f32 %v660, 1e-05
      %v693 = vadd.f32 %v661, 1e-05
      %v694 = vadd.f32 %v662, 1e-05
      %v695 = vadd.f32 %v663, 1e-05
      %v696 = vadd.f32 %v664, 1e-05
      %v697 = vadd.f32 %v665, 1e-05
      %v698 = vadd.f32 %v666, 1e-05
      %v699 = vadd.f32 %v667, 1e-05
      %v700 = vadd.f32 %v668, 1e-05
      %v701 = vrsqrt.pop %v669
      %v702 = vrsqrt.pop %v670
      %v703 = vrsqrt.pop %v671
      %v704 = vrsqrt.pop %v672
      %v705 = vrsqrt.pop %v673
      %v706 = vrsqrt.pop %v674
      %v707 = vrsqrt.pop %v675
      %v708 = vrsqrt.pop %v676
      %v709 = vrsqrt.pop %v677
      %v710 = vrsqrt.pop %v678
      %v711 = vrsqrt.pop %v679
      %v712 = vrsqrt.pop %v680
      %v713 = vrsqrt.pop %v681
      %v714 = vrsqrt.pop %v682
      %v715 = vrsqrt.pop %v683
      %v716 = vrsqrt.pop %v684
      %v717 = vrsqrt.pop %v685
      %v718 = vrsqrt.pop %v686
      %v719 = vrsqrt.pop %v687
      %v720 = vrsqrt.pop %v688
      %v721 = vrsqrt.pop %v689
      %v722 = vrsqrt.pop %v690
      %v723 = vrsqrt.pop %v691
      %v724 = vrsqrt.pop %v692
      %v725 = vrsqrt.pop %v693
      %v726 = vrsqrt.pop %v694
      %v727 = vrsqrt.pop %v695
      %v728 = vrsqrt.pop %v696
      %v729 = vrsqrt.pop %v697
      %v730 = vrsqrt.pop %v698
      %v731 = vrsqrt.pop %v699
      %v732 = vrsqrt.pop %v700
      %v733 = vmul.f32 %v477, %v701
      %v734 = vmul.f32 %v478, %v702
      %v735 = vmul.f32 %v479, %v703
      %v736 = vmul.f32 %v480, %v704
      %v737 = vmul.f32 %v481, %v705
      %v738 = vmul.f32 %v482, %v706
      %v739 = vmul.f32 %v483, %v707
      %v740 = vmul.f32 %v484, %v708
      %v741 = vmul.f32 %v485, %v709
      %v742 = vmul.f32 %v486, %v710
      %v743 = vmul.f32 %v487, %v711
      %v744 = vmul.f32 %v488, %v712
      %v745 = vmul.f32 %v489, %v713
      %v746 = vmul.f32 %v490, %v714
      %v747 = vmul.f32 %v491, %v715
      %v748 = vmul.f32 %v492, %v716
      %v749 = vmul.f32 %v493, %v717
      %v750 = vmul.f32 %v494, %v718
      %v751 = vmul.f32 %v495, %v719
      %v752 = vmul.f32 %v496, %v720
      %v753 = vmul.f32 %v497, %v721
      %v754 = vmul.f32 %v498, %v722
      %v755 = vmul.f32 %v499, %v723
      %v756 = vmul.f32 %v500, %v724
      %v757 = vmul.f32 %v501, %v725
      %v758 = vmul.f32 %v502, %v726
      %v759 = vmul.f32 %v503, %v727
      %v760 = vmul.f32 %v504, %v728
      %v761 = vmul.f32 %v505, %v729
      %v762 = vmul.f32 %v506, %v730
      %v763 = vmul.f32 %v507, %v731
      %v764 = vmul.f32 %v508, %v732
      %v765 = vld [vmem:[%s2] sm:$0x1]
      %v767 = vlaneseq
      %v768 = vshrl.u32 %v767, 7
      %v769 = vsub.s32 0, %v768
      %v770 = vrot.slane %v765, %v769
      %v772 = vmul.f32 %v733, %v770
      %v773 = vmul.f32 %v734, %v770
      %v774 = vmul.f32 %v735, %v770
      %v775 = vmul.f32 %v736, %v770
      %v776 = vmul.f32 %v737, %v770
      %v777 = vmul.f32 %v738, %v770
      %v778 = vmul.f32 %v739, %v770
      %v779 = vmul.f32 %v740, %v770
      %v780 = vmul.f32 %v741, %v770
      %v781 = vmul.f32 %v742, %v770
      %v782 = vmul.f32 %v743, %v770
      %v783 = vmul.f32 %v744, %v770
      %v784 = vmul.f32 %v745, %v770
      %v785 = vmul.f32 %v746, %v770
      %v786 = vmul.f32 %v747, %v770
      %v787 = vmul.f32 %v748, %v770
      %v788 = vmul.f32 %v749, %v770
      %v789 = vmul.f32 %v750, %v770
      %v790 = vmul.f32 %v751, %v770
      %v791 = vmul.f32 %v752, %v770
      %v792 = vmul.f32 %v753, %v770
      %v793 = vmul.f32 %v754, %v770
      %v794 = vmul.f32 %v755, %v770
      %v795 = vmul.f32 %v756, %v770
      %v796 = vmul.f32 %v757, %v770
      %v797 = vmul.f32 %v758, %v770
      %v798 = vmul.f32 %v759, %v770
      %v799 = vmul.f32 %v760, %v770
      %v800 = vmul.f32 %v761, %v770
      %v801 = vmul.f32 %v762, %v770
      %v802 = vmul.f32 %v763, %v770
      %v803 = vmul.f32 %v764, %v770
      %v804 = vld [vmem:[%s3] sm:$0x1]
      %v806 = vlaneseq
      %v807 = vshrl.u32 %v806, 7
      %v808 = vsub.s32 0, %v807
      %v809 = vrot.slane %v804, %v808
      %v811 = vadd.f32 %v772, %v809
      %v812 = vadd.f32 %v773, %v809
      %v813 = vadd.f32 %v774, %v809
      %v814 = vadd.f32 %v775, %v809
      %v815 = vadd.f32 %v776, %v809
      %v816 = vadd.f32 %v777, %v809
      %v817 = vadd.f32 %v778, %v809
      %v818 = vadd.f32 %v779, %v809
      %v819 = vadd.f32 %v780, %v809
      %v820 = vadd.f32 %v781, %v809
      %v821 = vadd.f32 %v782, %v809
      %v822 = vadd.f32 %v783, %v809
      %v823 = vadd.f32 %v784, %v809
      %v824 = vadd.f32 %v785, %v809
      %v825 = vadd.f32 %v786, %v809
      %v826 = vadd.f32 %v787, %v809
      %v827 = vadd.f32 %v788, %v809
      %v828 = vadd.f32 %v789, %v809
      %v829 = vadd.f32 %v790, %v809
      %v830 = vadd.f32 %v791, %v809
      %v831 = vadd.f32 %v792, %v809
      %v832 = vadd.f32 %v793, %v809
      %v833 = vadd.f32 %v794, %v809
      %v834 = vadd.f32 %v795, %v809
      %v835 = vadd.f32 %v796, %v809
      %v836 = vadd.f32 %v797, %v809
      %v837 = vadd.f32 %v798, %v809
      %v838 = vadd.f32 %v799, %v809
      %v839 = vadd.f32 %v800, %v809
      %v840 = vadd.f32 %v801, %v809
      %v841 = vadd.f32 %v802, %v809
      %v842 = vadd.f32 %v803, %v809
      %v843 = vpack.c.bf16 %v812, %v811
      %v844 = vpack.c.bf16 %v814, %v813
      %v845 = vpack.c.bf16 %v816, %v815
      %v846 = vpack.c.bf16 %v818, %v817
      %v847 = vpack.c.bf16 %v820, %v819
      %v848 = vpack.c.bf16 %v822, %v821
      %v849 = vpack.c.bf16 %v824, %v823
      %v850 = vpack.c.bf16 %v826, %v825
      %v851 = vpack.c.bf16 %v828, %v827
      %v852 = vpack.c.bf16 %v830, %v829
      %v853 = vpack.c.bf16 %v832, %v831
      %v854 = vpack.c.bf16 %v834, %v833
      %v855 = vpack.c.bf16 %v836, %v835
      %v856 = vpack.c.bf16 %v838, %v837
      %v857 = vpack.c.bf16 %v840, %v839
      %v858 = vpack.c.bf16 %v842, %v841
      %v859 = vld [vmem:[%s4] sm:$0xf]
      %v860 = vld [vmem:[%s4 + $0x4] sm:$0xf]
      %v861 = vld [vmem:[%s4 + $0x8] sm:$0xf]
      %v862 = vld [vmem:[%s4 + $0xc] sm:$0xf]
      %v863 = vld [vmem:[%s5] sm:$0x1]
      %v865 = vlaneseq
      %v866 = vshrl.u32 %v865, 7
      %v867 = vsub.s32 0, %v866
      %v868 = vrot.slane %v863, %v867
      %v874 = vunpack.c.l.b16 %v859
      %v875 = vunpack.c.l.b16 %v860
      %v876 = vunpack.c.l.b16 %v861
      %v877 = vunpack.c.l.b16 %v862
      %v878 = vpack.c.b16 %v875, %v874
      %v879 = vpack.c.b16 %v877, %v876
      %v883 = vsel %vm347, %v843, 0
      %v886 = vsel %vm347, %v844, 0
      %v889 = vsel %vm347, %v845, 0
      %v892 = vsel %vm347, %v846, 0
      %v895 = vsel %vm347, %v847, 0
      %v898 = vsel %vm347, %v848, 0
      %v901 = vsel %vm347, %v849, 0
      %v904 = vsel %vm347, %v850, 0
      %v907 = vsel %vm347, %v851, 0
      %v910 = vsel %vm347, %v852, 0
      %v913 = vsel %vm347, %v853, 0
      %v916 = vsel %vm347, %v854, 0
      %v919 = vsel %vm347, %v855, 0
      %v922 = vsel %vm347, %v856, 0
      %v925 = vsel %vm347, %v857, 0
      %v928 = vsel %vm347, %v858, 0
      %930 = vmatprep.subr.bf16.mxu0 0
      %931 = vmatpush1.bf16.msra.mxu0 0
      %932 = vmatprep.subr.bf16.mxu0 0
      %933 = vmatpush1.bf16.msra.mxu0 0
      %934 = vmatprep.subr.bf16.mxu0 0
      %935 = vmatpush1.bf16.msra.mxu0 0
      %936 = vmatprep.subr.bf16.mxu0 0
      %937 = vmatpush1.bf16.msra.mxu0 0
      %938 = vmatprep.subr.bf16.mxu0 0
      %939 = vmatpush1.bf16.msra.mxu0 0
      %940 = vmatprep.subr.bf16.mxu0 0
      %941 = vmatpush1.bf16.msra.mxu0 0
      %942 = vmatprep.subr.bf16.mxu0 0
      %943 = vmatpush1.bf16.msra.mxu0 %v879
      %944 = vmatprep.subr.bf16.mxu0 0
      %945 = vmatpush1.bf16.msra.mxu0 %v878
      %946 = vmatprep.subr.bf16.mxu0 0
      %947 = vmatpush2.bf16.msra.mxu0 0
      %948 = vmatprep.subr.bf16.mxu0 0
      %949 = vmatpush2.bf16.msra.mxu0 0
      %950 = vmatprep.subr.bf16.mxu0 0
      %951 = vmatpush2.bf16.msra.mxu0 0
      %952 = vmatprep.subr.bf16.mxu0 0
      %953 = vmatpush2.bf16.msra.mxu0 0
      %954 = vmatprep.subr.bf16.mxu0 0
      %955 = vmatpush2.bf16.msra.mxu0 0
      %956 = vmatprep.subr.bf16.mxu0 0
      %957 = vmatpush2.bf16.msra.mxu0 0
      %958 = vmatprep.subr.bf16.mxu0 0
      %959 = vmatpush2.bf16.msra.mxu0 0
      %960 = vmatprep.subr.bf16.mxu0 0
      %961 = vmatpush2.bf16.msra.mxu0 0
      %962 = vmatprep.mubr.bf16.mxu0 0
      %963 = vmatmul.mubr.bf16.gmra.mxu0 %v883
      %v964 = vpop.f32.mrf.mxu0
      %v965 = vadd.f32 %v868, %v964
      %v966 = vpop.f32.mrf.mxu0
      %v967 = vpop.f32.mrf.mxu0
      %v968 = vadd.f32 %v868, %v967
      %v969 = vpop.f32.mrf.mxu0
      %970 = vmatprep.mubr.bf16.mxu0 0
      %971 = vmatmul.mubr.bf16.gmra.mxu0 %v886
      %v972 = vpop.f32.mrf.mxu0
      %v973 = vadd.f32 %v868, %v972
      %v974 = vpop.f32.mrf.mxu0
      %v975 = vpop.f32.mrf.mxu0
      %v976 = vadd.f32 %v868, %v975
      %v977 = vpop.f32.mrf.mxu0
      %978 = vmatprep.mubr.bf16.mxu0 0
      %979 = vmatmul.mubr.bf16.gmra.mxu0 %v889
      %v980 = vpop.f32.mrf.mxu0
      %v981 = vadd.f32 %v868, %v980
      %v982 = vpop.f32.mrf.mxu0
      %v983 = vpop.f32.mrf.mxu0
      %v984 = vadd.f32 %v868, %v983
      %v985 = vpop.f32.mrf.mxu0
      %986 = vmatprep.mubr.bf16.mxu0 0
      %987 = vmatmul.mubr.bf16.gmra.mxu0 %v892
      %v988 = vpop.f32.mrf.mxu0
      %v989 = vadd.f32 %v868, %v988
      %v990 = vpop.f32.mrf.mxu0
      %v991 = vpop.f32.mrf.mxu0
      %v992 = vadd.f32 %v868, %v991
      %v993 = vpop.f32.mrf.mxu0
      %994 = vmatprep.mubr.bf16.mxu0 0
      %995 = vmatmul.mubr.bf16.gmra.mxu0 %v895
      %v996 = vpop.f32.mrf.mxu0
      %v997 = vadd.f32 %v868, %v996
      %v998 = vpop.f32.mrf.mxu0
      %v999 = vpop.f32.mrf.mxu0
      %v1000 = vadd.f32 %v868, %v999
      %v1001 = vpop.f32.mrf.mxu0
      %1002 = vmatprep.mubr.bf16.mxu0 0
      %1003 = vmatmul.mubr.bf16.gmra.mxu0 %v898
      %v1004 = vpop.f32.mrf.mxu0
      %v1005 = vadd.f32 %v868, %v1004
      %v1006 = vpop.f32.mrf.mxu0
      %v1007 = vpop.f32.mrf.mxu0
      %v1008 = vadd.f32 %v868, %v1007
      %v1009 = vpop.f32.mrf.mxu0
      %1010 = vmatprep.mubr.bf16.mxu0 0
      %1011 = vmatmul.mubr.bf16.gmra.mxu0 %v901
      %v1012 = vpop.f32.mrf.mxu0
      %v1013 = vadd.f32 %v868, %v1012
      %v1014 = vpop.f32.mrf.mxu0
      %v1015 = vpop.f32.mrf.mxu0
      %v1016 = vadd.f32 %v868, %v1015
      %v1017 = vpop.f32.mrf.mxu0
      %1018 = vmatprep.mubr.bf16.mxu0 0
      %1019 = vmatmul.mubr.bf16.gmra.mxu0 %v904
      %v1020 = vpop.f32.mrf.mxu0
      %v1021 = vadd.f32 %v868, %v1020
      %v1022 = vpop.f32.mrf.mxu0
      %v1023 = vpop.f32.mrf.mxu0
      %v1024 = vadd.f32 %v868, %v1023
      %v1025 = vpop.f32.mrf.mxu0
      %1026 = vmatprep.mubr.bf16.mxu0 0
      %1027 = vmatmul.mubr.bf16.gmra.mxu0 %v907
      %v1028 = vpop.f32.mrf.mxu0
      %v1029 = vadd.f32 %v868, %v1028
      %v1030 = vpop.f32.mrf.mxu0
      %v1031 = vpop.f32.mrf.mxu0
      %v1032 = vadd.f32 %v868, %v1031
      %v1033 = vpop.f32.mrf.mxu0
      %1034 = vmatprep.mubr.bf16.mxu0 0
      %1035 = vmatmul.mubr.bf16.gmra.mxu0 %v910
      %v1036 = vpop.f32.mrf.mxu0
      %v1037 = vadd.f32 %v868, %v1036
      %v1038 = vpop.f32.mrf.mxu0
      %v1039 = vpop.f32.mrf.mxu0
      %v1040 = vadd.f32 %v868, %v1039
      %v1041 = vpop.f32.mrf.mxu0
      %1042 = vmatprep.mubr.bf16.mxu0 0
      %1043 = vmatmul.mubr.bf16.gmra.mxu0 %v913
      %v1044 = vpop.f32.mrf.mxu0
      %v1045 = vadd.f32 %v868, %v1044
      %v1046 = vpop.f32.mrf.mxu0
      %v1047 = vpop.f32.mrf.mxu0
      %v1048 = vadd.f32 %v868, %v1047
      %v1049 = vpop.f32.mrf.mxu0
      %1050 = vmatprep.mubr.bf16.mxu0 0
      %1051 = vmatmul.mubr.bf16.gmra.mxu0 %v916
      %v1052 = vpop.f32.mrf.mxu0
      %v1053 = vadd.f32 %v868, %v1052
      %v1054 = vpop.f32.mrf.mxu0
      %v1055 = vpop.f32.mrf.mxu0
      %v1056 = vadd.f32 %v868, %v1055
      %v1057 = vpop.f32.mrf.mxu0
      %1058 = vmatprep.mubr.bf16.mxu0 0
      %1059 = vmatmul.mubr.bf16.gmra.mxu0 %v919
      %v1060 = vpop.f32.mrf.mxu0
      %v1061 = vadd.f32 %v868, %v1060
      %v1062 = vpop.f32.mrf.mxu0
      %v1063 = vpop.f32.mrf.mxu0
      %v1064 = vadd.f32 %v868, %v1063
      %v1065 = vpop.f32.mrf.mxu0
      %1066 = vmatprep.mubr.bf16.mxu0 0
      %1067 = vmatmul.mubr.bf16.gmra.mxu0 %v922
      %v1068 = vpop.f32.mrf.mxu0
      %v1069 = vadd.f32 %v868, %v1068
      %v1070 = vpop.f32.mrf.mxu0
      %v1071 = vpop.f32.mrf.mxu0
      %v1072 = vadd.f32 %v868, %v1071
      %v1073 = vpop.f32.mrf.mxu0
      %1074 = vmatprep.mubr.bf16.mxu0 0
      %1075 = vmatmul.mubr.bf16.gmra.mxu0 %v925
      %v1076 = vpop.f32.mrf.mxu0
      %v1077 = vadd.f32 %v868, %v1076
      %v1078 = vpop.f32.mrf.mxu0
      %v1079 = vpop.f32.mrf.mxu0
      %v1080 = vadd.f32 %v868, %v1079
      %v1081 = vpop.f32.mrf.mxu0
      %1082 = vmatprep.mubr.bf16.mxu0 0
      %1083 = vmatmul.mubr.bf16.gmra.mxu0 %v928
      %v1084 = vpop.f32.mrf.mxu0
      %v1085 = vadd.f32 %v868, %v1084
      %v1086 = vpop.f32.mrf.mxu0
      %v1087 = vpop.f32.mrf.mxu0
      %v1088 = vadd.f32 %v868, %v1087
      %v1089 = vpop.f32.mrf.mxu0
      %1090 = vdwg.mxu0
      %v1091 = vmul.f32 %v965, 0.35355338
      %v1092 = vmul.f32 %v968, 0.35355338
      %v1093 = vmul.f32 %v973, 0.35355338
      %v1094 = vmul.f32 %v976, 0.35355338
      %v1095 = vmul.f32 %v981, 0.35355338
      %v1096 = vmul.f32 %v984, 0.35355338
      %v1097 = vmul.f32 %v989, 0.35355338
      %v1098 = vmul.f32 %v992, 0.35355338
      %v1099 = vmul.f32 %v997, 0.35355338
      %v1100 = vmul.f32 %v1000, 0.35355338
      %v1101 = vmul.f32 %v1005, 0.35355338
      %v1102 = vmul.f32 %v1008, 0.35355338
      %v1103 = vmul.f32 %v1013, 0.35355338
      %v1104 = vmul.f32 %v1016, 0.35355338
      %v1105 = vmul.f32 %v1021, 0.35355338
      %v1106 = vmul.f32 %v1024, 0.35355338
      %v1107 = vmul.f32 %v1029, 0.35355338
      %v1108 = vmul.f32 %v1032, 0.35355338
      %v1109 = vmul.f32 %v1037, 0.35355338
      %v1110 = vmul.f32 %v1040, 0.35355338
      %v1111 = vmul.f32 %v1045, 0.35355338
      %v1112 = vmul.f32 %v1048, 0.35355338
      %v1113 = vmul.f32 %v1053, 0.35355338
      %v1114 = vmul.f32 %v1056, 0.35355338
      %v1115 = vmul.f32 %v1061, 0.35355338
      %v1116 = vmul.f32 %v1064, 0.35355338
      %v1117 = vmul.f32 %v1069, 0.35355338
      %v1118 = vmul.f32 %v1072, 0.35355338
      %v1119 = vmul.f32 %v1077, 0.35355338
      %v1120 = vmul.f32 %v1080, 0.35355338
      %v1121 = vmul.f32 %v1085, 0.35355338
      %v1122 = vmul.f32 %v1088, 0.35355338
      %v1123 = vpack.c.bf16 %v1092, %v1091
      %v1124 = vpack.c.bf16 %v1094, %v1093
      %v1125 = vpack.c.bf16 %v1096, %v1095
      %v1126 = vpack.c.bf16 %v1098, %v1097
      %v1127 = vpack.c.bf16 %v1100, %v1099
      %v1128 = vpack.c.bf16 %v1102, %v1101
      %v1129 = vpack.c.bf16 %v1104, %v1103
      %v1130 = vpack.c.bf16 %v1106, %v1105
      %v1131 = vpack.c.bf16 %v1108, %v1107
      %v1132 = vpack.c.bf16 %v1110, %v1109
      %v1133 = vpack.c.bf16 %v1112, %v1111
      %v1134 = vpack.c.bf16 %v1114, %v1113
      %v1135 = vpack.c.bf16 %v1116, %v1115
      %v1136 = vpack.c.bf16 %v1118, %v1117
      %v1137 = vpack.c.bf16 %v1120, %v1119
      %v1138 = vpack.c.bf16 %v1122, %v1121
      %v1139 = vpack.c.bf16 %v968, %v965
      %v1140 = vpack.c.bf16 %v976, %v973
      %v1141 = vpack.c.bf16 %v984, %v981
      %v1142 = vpack.c.bf16 %v992, %v989
      %v1143 = vpack.c.bf16 %v1000, %v997
      %v1144 = vpack.c.bf16 %v1008, %v1005
      %v1145 = vpack.c.bf16 %v1016, %v1013
      %v1146 = vpack.c.bf16 %v1024, %v1021
      %v1147 = vpack.c.bf16 %v1032, %v1029
      %v1148 = vpack.c.bf16 %v1040, %v1037
      %v1149 = vpack.c.bf16 %v1048, %v1045
      %v1150 = vpack.c.bf16 %v1056, %v1053
      %v1151 = vpack.c.bf16 %v1064, %v1061
      %v1152 = vpack.c.bf16 %v1072, %v1069
      %v1153 = vpack.c.bf16 %v1080, %v1077
      %v1154 = vpack.c.bf16 %v1088, %v1085
      %v1155 = vld [vmem:[%s1] sm:$0xff]
      %v1156 = vld [vmem:[%s1 + $0x8] sm:$0xff]
      %v1157 = vld [vmem:[%s1 + $0x10] sm:$0xff]
      %v1158 = vld [vmem:[%s1 + $0x18] sm:$0xff]
      %1161 = vrot.lane.b32.xlu0 %v1139, 96
      %v1162 = vpop.permute.xlu0 %1161
      %1163 = vrot.lane.b32.xlu0 %v1140, 96
      %v1164 = vpop.permute.xlu0 %1163
      %vm1165 = vcmask 64512
      %v1167 = vsel %vm1165, %v1123, 0
      %v1170 = vsel %vm1165, %v1124, 0
      %v1173 = vsel %vm1165, %v1162, 0
      %v1176 = vsel %vm1165, %v1164, 0
      %1178 = vmatprep.subr.bf16.mxu0 0
      %1179 = vmatpush1.bf16.xpose.msra.mxu0 0
      %1180 = vmatprep.subr.bf16.mxu0 0
      %1181 = vmatpush1.bf16.xpose.msra.mxu0 0
      %1182 = vmatprep.subr.bf16.mxu0 0
      %1183 = vmatpush1.bf16.xpose.msra.mxu0 0
      %1184 = vmatprep.subr.bf16.mxu0 0
      %1185 = vmatpush1.bf16.xpose.msra.mxu0 0
      %1186 = vmatprep.subr.bf16.mxu0 0
      %1187 = vmatpush1.bf16.xpose.msra.mxu0 0
      %1188 = vmatprep.subr.bf16.mxu0 0
      %1189 = vmatpush1.bf16.xpose.msra.mxu0 0
      %1190 = vmatprep.subr.bf16.mxu0 0
      %1191 = vmatpush1.bf16.xpose.msra.mxu0 %v1176
      %1192 = vmatprep.subr.bf16.mxu0 0
      %1193 = vmatpush1.bf16.xpose.msra.mxu0 %v1173
      %1194 = vmatprep.subr.bf16.mxu0 0
      %1195 = vmatpush2.bf16.xpose.msra.mxu0 0
      %1196 = vmatprep.subr.bf16.mxu0 0
      %1197 = vmatpush2.bf16.xpose.msra.mxu0 0
      %1198 = vmatprep.subr.bf16.mxu0 0
      %1199 = vmatpush2.bf16.xpose.msra.mxu0 0
      %1200 = vmatprep.subr.bf16.mxu0 0
      %1201 = vmatpush2.bf16.xpose.msra.mxu0 0
      %1202 = vmatprep.subr.bf16.mxu0 0
      %1203 = vmatpush2.bf16.xpose.msra.mxu0 0
      %1204 = vmatprep.subr.bf16.mxu0 0
      %1205 = vmatpush2.bf16.xpose.msra.mxu0 0
      %1206 = vmatprep.subr.bf16.mxu0 0
      %1207 = vmatpush2.bf16.xpose.msra.mxu0 0
      %1208 = vmatprep.subr.bf16.mxu0 0
      %1209 = vmatpush2.bf16.xpose.msra.mxu0 0
      %1210 = vmatprep.mubr.bf16.mxu0 0
      %1211 = vmatmul.mubr.bf16.gmra.mxu0 %v1167
      %v1212 = vpop.f32.mrf.mxu0
      %v1213 = vadd.f32 %v1155, %v1212
      %v1214 = vpop.f32.mrf.mxu0
      %v1215 = vpop.f32.mrf.mxu0
      %v1216 = vadd.f32 %v1156, %v1215
      %v1217 = vpop.f32.mrf.mxu0
      %1218 = vmatprep.mubr.bf16.mxu0 0
      %1219 = vmatmul.mubr.bf16.gmra.mxu0 %v1170
      %v1220 = vpop.f32.mrf.mxu0
      %v1221 = vadd.f32 %v1157, %v1220
      %v1222 = vpop.f32.mrf.mxu0
      %v1223 = vpop.f32.mrf.mxu0
      %v1224 = vadd.f32 %v1158, %v1223
      %v1225 = vpop.f32.mrf.mxu0
      %1226 = vdwg.mxu0
      %1229 = vrot.lane.b32.xlu0 %v1141, 96
      %v1230 = vpop.permute.xlu0 %1229
      %1231 = vrot.lane.b32.xlu0 %v1142, 96
      %v1232 = vpop.permute.xlu0 %1231
      %v1234 = vsel %vm1165, %v1125, 0
      %v1237 = vsel %vm1165, %v1126, 0
      %v1240 = vsel %vm1165, %v1230, 0
      %v1243 = vsel %vm1165, %v1232, 0
      %1245 = vmatprep.subr.bf16.mxu0 0
      %1246 = vmatpush1.bf16.xpose.msra.mxu0 0
      %1247 = vmatprep.subr.bf16.mxu0 0
      %1248 = vmatpush1.bf16.xpose.msra.mxu0 0
      %1249 = vmatprep.subr.bf16.mxu0 0
      %1250 = vmatpush1.bf16.xpose.msra.mxu0 0
      %1251 = vmatprep.subr.bf16.mxu0 0
      %1252 = vmatpush1.bf16.xpose.msra.mxu0 0
      %1253 = vmatprep.subr.bf16.mxu0 0
      %1254 = vmatpush1.bf16.xpose.msra.mxu0 0
      %1255 = vmatprep.subr.bf16.mxu0 0
      %1256 = vmatpush1.bf16.xpose.msra.mxu0 0
      %1257 = vmatprep.subr.bf16.mxu0 0
      %1258 = vmatpush1.bf16.xpose.msra.mxu0 %v1243
      %1259 = vmatprep.subr.bf16.mxu0 0
      %1260 = vmatpush1.bf16.xpose.msra.mxu0 %v1240
      %1261 = vmatprep.subr.bf16.mxu0 0
      %1262 = vmatpush2.bf16.xpose.msra.mxu0 0
      %1263 = vmatprep.subr.bf16.mxu0 0
      %1264 = vmatpush2.bf16.xpose.msra.mxu0 0
      %1265 = vmatprep.subr.bf16.mxu0 0
      %1266 = vmatpush2.bf16.xpose.msra.mxu0 0
      %1267 = vmatprep.subr.bf16.mxu0 0
      %1268 = vmatpush2.bf16.xpose.msra.mxu0 0
      %1269 = vmatprep.subr.bf16.mxu0 0
      %1270 = vmatpush2.bf16.xpose.msra.mxu0 0
      %1271 = vmatprep.subr.bf16.mxu0 0
      %1272 = vmatpush2.bf16.xpose.msra.mxu0 0
      %1273 = vmatprep.subr.bf16.mxu0 0
      %1274 = vmatpush2.bf16.xpose.msra.mxu0 0
      %1275 = vmatprep.subr.bf16.mxu0 0
      %1276 = vmatpush2.bf16.xpose.msra.mxu0 0
      %1277 = vmatprep.mubr.bf16.mxu0 0
      %1278 = vmatmul.mubr.bf16.gmra.mxu0 %v1234
      %v1279 = vpop.f32.mrf.mxu0
      %v1280 = vadd.f32 %v1155, %v1279
      %v1281 = vpop.f32.mrf.mxu0
      %v1282 = vpop.f32.mrf.mxu0
      %v1283 = vadd.f32 %v1156, %v1282
      %v1284 = vpop.f32.mrf.mxu0
      %1285 = vmatprep.mubr.bf16.mxu0 0
      %1286 = vmatmul.mubr.bf16.gmra.mxu0 %v1237
      %v1287 = vpop.f32.mrf.mxu0
      %v1288 = vadd.f32 %v1157, %v1287
      %v1289 = vpop.f32.mrf.mxu0
      %v1290 = vpop.f32.mrf.mxu0
      %v1291 = vadd.f32 %v1158, %v1290
      %v1292 = vpop.f32.mrf.mxu0
      %1293 = vdwg.mxu0
      %1296 = vrot.lane.b32.xlu0 %v1143, 96
      %v1297 = vpop.permute.xlu0 %1296
      %1298 = vrot.lane.b32.xlu0 %v1144, 96
      %v1299 = vpop.permute.xlu0 %1298
      %v1301 = vsel %vm1165, %v1127, 0
      %v1304 = vsel %vm1165, %v1128, 0
      %v1307 = vsel %vm1165, %v1297, 0
      %v1310 = vsel %vm1165, %v1299, 0
      %1312 = vmatprep.subr.bf16.mxu0 0
      %1313 = vmatpush1.bf16.xpose.msra.mxu0 0
      %1314 = vmatprep.subr.bf16.mxu0 0
      %1315 = vmatpush1.bf16.xpose.msra.mxu0 0
      %1316 = vmatprep.subr.bf16.mxu0 0
      %1317 = vmatpush1.bf16.xpose.msra.mxu0 0
      %1318 = vmatprep.subr.bf16.mxu0 0
      %1319 = vmatpush1.bf16.xpose.msra.mxu0 0
      %1320 = vmatprep.subr.bf16.mxu0 0
      %1321 = vmatpush1.bf16.xpose.msra.mxu0 0
      %1322 = vmatprep.subr.bf16.mxu0 0
      %1323 = vmatpush1.bf16.xpose.msra.mxu0 0
      %1324 = vmatprep.subr.bf16.mxu0 0
      %1325 = vmatpush1.bf16.xpose.msra.mxu0 %v1310
      %1326 = vmatprep.subr.bf16.mxu0 0
      %1327 = vmatpush1.bf16.xpose.msra.mxu0 %v1307
      %1328 = vmatprep.subr.bf16.mxu0 0
      %1329 = vmatpush2.bf16.xpose.msra.mxu0 0
      %1330 = vmatprep.subr.bf16.mxu0 0
      %1331 = vmatpush2.bf16.xpose.msra.mxu0 0
      %1332 = vmatprep.subr.bf16.mxu0 0
      %1333 = vmatpush2.bf16.xpose.msra.mxu0 0
      %1334 = vmatprep.subr.bf16.mxu0 0
      %1335 = vmatpush2.bf16.xpose.msra.mxu0 0
      %1336 = vmatprep.subr.bf16.mxu0 0
      %1337 = vmatpush2.bf16.xpose.msra.mxu0 0
      %1338 = vmatprep.subr.bf16.mxu0 0
      %1339 = vmatpush2.bf16.xpose.msra.mxu0 0
      %1340 = vmatprep.subr.bf16.mxu0 0
      %1341 = vmatpush2.bf16.xpose.msra.mxu0 0
      %1342 = vmatprep.subr.bf16.mxu0 0
      %1343 = vmatpush2.bf16.xpose.msra.mxu0 0
      %1344 = vmatprep.mubr.bf16.mxu0 0
      %1345 = vmatmul.mubr.bf16.gmra.mxu0 %v1301
      %v1346 = vpop.f32.mrf.mxu0
      %v1347 = vadd.f32 %v1155, %v1346
      %v1348 = vpop.f32.mrf.mxu0
      %v1349 = vpop.f32.mrf.mxu0
      %v1350 = vadd.f32 %v1156, %v1349
      %v1351 = vpop.f32.mrf.mxu0
      %1352 = vmatprep.mubr.bf16.mxu0 0
      %1353 = vmatmul.mubr.bf16.gmra.mxu0 %v1304
      %v1354 = vpop.f32.mrf.mxu0
      %v1355 = vadd.f32 %v1157, %v1354
      %v1356 = vpop.f32.mrf.mxu0
      %v1357 = vpop.f32.mrf.mxu0
      %v1358 = vadd.f32 %v1158, %v1357
      %v1359 = vpop.f32.mrf.mxu0
      %1360 = vdwg.mxu0
      %1363 = vrot.lane.b32.xlu0 %v1145, 96
      %v1364 = vpop.permute.xlu0 %1363
      %1365 = vrot.lane.b32.xlu0 %v1146, 96
      %v1366 = vpop.permute.xlu0 %1365
      %v1368 = vsel %vm1165, %v1129, 0
      %v1371 = vsel %vm1165, %v1130, 0
      %v1374 = vsel %vm1165, %v1364, 0
      %v1377 = vsel %vm1165, %v1366, 0
      %1379 = vmatprep.subr.bf16.mxu0 0
      %1380 = vmatpush1.bf16.xpose.msra.mxu0 0
      %1381 = vmatprep.subr.bf16.mxu0 0
      %1382 = vmatpush1.bf16.xpose.msra.mxu0 0
      %1383 = vmatprep.subr.bf16.mxu0 0
      %1384 = vmatpush1.bf16.xpose.msra.mxu0 0
      %1385 = vmatprep.subr.bf16.mxu0 0
      %1386 = vmatpush1.bf16.xpose.msra.mxu0 0
      %1387 = vmatprep.subr.bf16.mxu0 0
      %1388 = vmatpush1.bf16.xpose.msra.mxu0 0
      %1389 = vmatprep.subr.bf16.mxu0 0
      %1390 = vmatpush1.bf16.xpose.msra.mxu0 0
      %1391 = vmatprep.subr.bf16.mxu0 0
      %1392 = vmatpush1.bf16.xpose.msra.mxu0 %v1377
      %1393 = vmatprep.subr.bf16.mxu0 0
      %1394 = vmatpush1.bf16.xpose.msra.mxu0 %v1374
      %1395 = vmatprep.subr.bf16.mxu0 0
      %1396 = vmatpush2.bf16.xpose.msra.mxu0 0
      %1397 = vmatprep.subr.bf16.mxu0 0
      %1398 = vmatpush2.bf16.xpose.msra.mxu0 0
      %1399 = vmatprep.subr.bf16.mxu0 0
      %1400 = vmatpush2.bf16.xpose.msra.mxu0 0
      %1401 = vmatprep.subr.bf16.mxu0 0
      %1402 = vmatpush2.bf16.xpose.msra.mxu0 0
      %1403 = vmatprep.subr.bf16.mxu0 0
      %1404 = vmatpush2.bf16.xpose.msra.mxu0 0
      %1405 = vmatprep.subr.bf16.mxu0 0
      %1406 = vmatpush2.bf16.xpose.msra.mxu0 0
      %1407 = vmatprep.subr.bf16.mxu0 0
      %1408 = vmatpush2.bf16.xpose.msra.mxu0 0
      %1409 = vmatprep.subr.bf16.mxu0 0
      %1410 = vmatpush2.bf16.xpose.msra.mxu0 0
      %1411 = vmatprep.mubr.bf16.mxu0 0
      %1412 = vmatmul.mubr.bf16.gmra.mxu0 %v1368
      %v1413 = vpop.f32.mrf.mxu0
      %v1414 = vadd.f32 %v1155, %v1413
      %v1415 = vpop.f32.mrf.mxu0
      %v1416 = vpop.f32.mrf.mxu0
      %v1417 = vadd.f32 %v1156, %v1416
      %v1418 = vpop.f32.mrf.mxu0
      %1419 = vmatprep.mubr.bf16.mxu0 0
      %1420 = vmatmul.mubr.bf16.gmra.mxu0 %v1371
      %v1421 = vpop.f32.mrf.mxu0
      %v1422 = vadd.f32 %v1157, %v1421
      %v1423 = vpop.f32.mrf.mxu0
      %v1424 = vpop.f32.mrf.mxu0
      %v1425 = vadd.f32 %v1158, %v1424
      %v1426 = vpop.f32.mrf.mxu0
      %1427 = vdwg.mxu0
      %1430 = vrot.lane.b32.xlu0 %v1147, 96
      %v1431 = vpop.permute.xlu0 %1430
      %1432 = vrot.lane.b32.xlu0 %v1148, 96
      %v1433 = vpop.permute.xlu0 %1432
      %v1435 = vsel %vm1165, %v1131, 0
      %v1438 = vsel %vm1165, %v1132, 0
      %v1441 = vsel %vm1165, %v1431, 0
      %v1444 = vsel %vm1165, %v1433, 0
      %1446 = vmatprep.subr.bf16.mxu0 0
      %1447 = vmatpush1.bf16.xpose.msra.mxu0 0
      %1448 = vmatprep.subr.bf16.mxu0 0
      %1449 = vmatpush1.bf16.xpose.msra.mxu0 0
      %1450 = vmatprep.subr.bf16.mxu0 0
      %1451 = vmatpush1.bf16.xpose.msra.mxu0 0
      %1452 = vmatprep.subr.bf16.mxu0 0
      %1453 = vmatpush1.bf16.xpose.msra.mxu0 0
      %1454 = vmatprep.subr.bf16.mxu0 0
      %1455 = vmatpush1.bf16.xpose.msra.mxu0 0
      %1456 = vmatprep.subr.bf16.mxu0 0
      %1457 = vmatpush1.bf16.xpose.msra.mxu0 0
      %1458 = vmatprep.subr.bf16.mxu0 0
      %1459 = vmatpush1.bf16.xpose.msra.mxu0 %v1444
      %1460 = vmatprep.subr.bf16.mxu0 0
      %1461 = vmatpush1.bf16.xpose.msra.mxu0 %v1441
      %1462 = vmatprep.subr.bf16.mxu0 0
      %1463 = vmatpush2.bf16.xpose.msra.mxu0 0
      %1464 = vmatprep.subr.bf16.mxu0 0
      %1465 = vmatpush2.bf16.xpose.msra.mxu0 0
      %1466 = vmatprep.subr.bf16.mxu0 0
      %1467 = vmatpush2.bf16.xpose.msra.mxu0 0
      %1468 = vmatprep.subr.bf16.mxu0 0
      %1469 = vmatpush2.bf16.xpose.msra.mxu0 0
      %1470 = vmatprep.subr.bf16.mxu0 0
      %1471 = vmatpush2.bf16.xpose.msra.mxu0 0
      %1472 = vmatprep.subr.bf16.mxu0 0
      %1473 = vmatpush2.bf16.xpose.msra.mxu0 0
      %1474 = vmatprep.subr.bf16.mxu0 0
      %1475 = vmatpush2.bf16.xpose.msra.mxu0 0
      %1476 = vmatprep.subr.bf16.mxu0 0
      %1477 = vmatpush2.bf16.xpose.msra.mxu0 0
      %1478 = vmatprep.mubr.bf16.mxu0 0
      %1479 = vmatmul.mubr.bf16.gmra.mxu0 %v1435
      %v1480 = vpop.f32.mrf.mxu0
      %v1481 = vadd.f32 %v1155, %v1480
      %v1482 = vpop.f32.mrf.mxu0
      %v1483 = vpop.f32.mrf.mxu0
      %v1484 = vadd.f32 %v1156, %v1483
      %v1485 = vpop.f32.mrf.mxu0
      %1486 = vmatprep.mubr.bf16.mxu0 0
      %1487 = vmatmul.mubr.bf16.gmra.mxu0 %v1438
      %v1488 = vpop.f32.mrf.mxu0
      %v1489 = vadd.f32 %v1157, %v1488
      %v1490 = vpop.f32.mrf.mxu0
      %v1491 = vpop.f32.mrf.mxu0
      %v1492 = vadd.f32 %v1158, %v1491
      %v1493 = vpop.f32.mrf.mxu0
      %1494 = vdwg.mxu0
      %1497 = vrot.lane.b32.xlu0 %v1149, 96
      %v1498 = vpop.permute.xlu0 %1497
      %1499 = vrot.lane.b32.xlu0 %v1150, 96
      %v1500 = vpop.permute.xlu0 %1499
      %v1502 = vsel %vm1165, %v1133, 0
      %v1505 = vsel %vm1165, %v1134, 0
      %v1508 = vsel %vm1165, %v1498, 0
      %v1511 = vsel %vm1165, %v1500, 0
      %1513 = vmatprep.subr.bf16.mxu0 0
      %1514 = vmatpush1.bf16.xpose.msra.mxu0 0
      %1515 = vmatprep.subr.bf16.mxu0 0
      %1516 = vmatpush1.bf16.xpose.msra.mxu0 0
      %1517 = vmatprep.subr.bf16.mxu0 0
      %1518 = vmatpush1.bf16.xpose.msra.mxu0 0
      %1519 = vmatprep.subr.bf16.mxu0 0
      %1520 = vmatpush1.bf16.xpose.msra.mxu0 0
      %1521 = vmatprep.subr.bf16.mxu0 0
      %1522 = vmatpush1.bf16.xpose.msra.mxu0 0
      %1523 = vmatprep.subr.bf16.mxu0 0
      %1524 = vmatpush1.bf16.xpose.msra.mxu0 0
      %1525 = vmatprep.subr.bf16.mxu0 0
      %1526 = vmatpush1.bf16.xpose.msra.mxu0 %v1511
      %1527 = vmatprep.subr.bf16.mxu0 0
      %1528 = vmatpush1.bf16.xpose.msra.mxu0 %v1508
      %1529 = vmatprep.subr.bf16.mxu0 0
      %1530 = vmatpush2.bf16.xpose.msra.mxu0 0
      %1531 = vmatprep.subr.bf16.mxu0 0
      %1532 = vmatpush2.bf16.xpose.msra.mxu0 0
      %1533 = vmatprep.subr.bf16.mxu0 0
      %1534 = vmatpush2.bf16.xpose.msra.mxu0 0
      %1535 = vmatprep.subr.bf16.mxu0 0
      %1536 = vmatpush2.bf16.xpose.msra.mxu0 0
      %1537 = vmatprep.subr.bf16.mxu0 0
      %1538 = vmatpush2.bf16.xpose.msra.mxu0 0
      %1539 = vmatprep.subr.bf16.mxu0 0
      %1540 = vmatpush2.bf16.xpose.msra.mxu0 0
      %1541 = vmatprep.subr.bf16.mxu0 0
      %1542 = vmatpush2.bf16.xpose.msra.mxu0 0
      %1543 = vmatprep.subr.bf16.mxu0 0
      %1544 = vmatpush2.bf16.xpose.msra.mxu0 0
      %1545 = vmatprep.mubr.bf16.mxu0 0
      %1546 = vmatmul.mubr.bf16.gmra.mxu0 %v1502
      %v1547 = vpop.f32.mrf.mxu0
      %v1548 = vadd.f32 %v1155, %v1547
      %v1549 = vpop.f32.mrf.mxu0
      %v1550 = vpop.f32.mrf.mxu0
      %v1551 = vadd.f32 %v1156, %v1550
      %v1552 = vpop.f32.mrf.mxu0
      %1553 = vmatprep.mubr.bf16.mxu0 0
      %1554 = vmatmul.mubr.bf16.gmra.mxu0 %v1505
      %v1555 = vpop.f32.mrf.mxu0
      %v1556 = vadd.f32 %v1157, %v1555
      %v1557 = vpop.f32.mrf.mxu0
      %v1558 = vpop.f32.mrf.mxu0
      %v1559 = vadd.f32 %v1158, %v1558
      %v1560 = vpop.f32.mrf.mxu0
      %1561 = vdwg.mxu0
      %1564 = vrot.lane.b32.xlu0 %v1151, 96
      %v1565 = vpop.permute.xlu0 %1564
      %1566 = vrot.lane.b32.xlu0 %v1152, 96
      %v1567 = vpop.permute.xlu0 %1566
      %v1569 = vsel %vm1165, %v1135, 0
      %v1572 = vsel %vm1165, %v1136, 0
      %v1575 = vsel %vm1165, %v1565, 0
      %v1578 = vsel %vm1165, %v1567, 0
      %1580 = vmatprep.subr.bf16.mxu0 0
      %1581 = vmatpush1.bf16.xpose.msra.mxu0 0
      %1582 = vmatprep.subr.bf16.mxu0 0
      %1583 = vmatpush1.bf16.xpose.msra.mxu0 0
      %1584 = vmatprep.subr.bf16.mxu0 0
      %1585 = vmatpush1.bf16.xpose.msra.mxu0 0
      %1586 = vmatprep.subr.bf16.mxu0 0
      %1587 = vmatpush1.bf16.xpose.msra.mxu0 0
      %1588 = vmatprep.subr.bf16.mxu0 0
      %1589 = vmatpush1.bf16.xpose.msra.mxu0 0
      %1590 = vmatprep.subr.bf16.mxu0 0
      %1591 = vmatpush1.bf16.xpose.msra.mxu0 0
      %1592 = vmatprep.subr.bf16.mxu0 0
      %1593 = vmatpush1.bf16.xpose.msra.mxu0 %v1578
      %1594 = vmatprep.subr.bf16.mxu0 0
      %1595 = vmatpush1.bf16.xpose.msra.mxu0 %v1575
      %1596 = vmatprep.subr.bf16.mxu0 0
      %1597 = vmatpush2.bf16.xpose.msra.mxu0 0
      %1598 = vmatprep.subr.bf16.mxu0 0
      %1599 = vmatpush2.bf16.xpose.msra.mxu0 0
      %1600 = vmatprep.subr.bf16.mxu0 0
      %1601 = vmatpush2.bf16.xpose.msra.mxu0 0
      %1602 = vmatprep.subr.bf16.mxu0 0
      %1603 = vmatpush2.bf16.xpose.msra.mxu0 0
      %1604 = vmatprep.subr.bf16.mxu0 0
      %1605 = vmatpush2.bf16.xpose.msra.mxu0 0
      %1606 = vmatprep.subr.bf16.mxu0 0
      %1607 = vmatpush2.bf16.xpose.msra.mxu0 0
      %1608 = vmatprep.subr.bf16.mxu0 0
      %1609 = vmatpush2.bf16.xpose.msra.mxu0 0
      %1610 = vmatprep.subr.bf16.mxu0 0
      %1611 = vmatpush2.bf16.xpose.msra.mxu0 0
      %1612 = vmatprep.mubr.bf16.mxu0 0
      %1613 = vmatmul.mubr.bf16.gmra.mxu0 %v1569
      %v1614 = vpop.f32.mrf.mxu0
      %v1615 = vadd.f32 %v1155, %v1614
      %v1616 = vpop.f32.mrf.mxu0
      %v1617 = vpop.f32.mrf.mxu0
      %v1618 = vadd.f32 %v1156, %v1617
      %v1619 = vpop.f32.mrf.mxu0
      %1620 = vmatprep.mubr.bf16.mxu0 0
      %1621 = vmatmul.mubr.bf16.gmra.mxu0 %v1572
      %v1622 = vpop.f32.mrf.mxu0
      %v1623 = vadd.f32 %v1157, %v1622
      %v1624 = vpop.f32.mrf.mxu0
      %v1625 = vpop.f32.mrf.mxu0
      %v1626 = vadd.f32 %v1158, %v1625
      %v1627 = vpop.f32.mrf.mxu0
      %1628 = vdwg.mxu0
      %1631 = vrot.lane.b32.xlu0 %v1153, 96
      %v1632 = vpop.permute.xlu0 %1631
      %1633 = vrot.lane.b32.xlu0 %v1154, 96
      %v1634 = vpop.permute.xlu0 %1633
      %v1636 = vsel %vm1165, %v1137, 0
      %v1639 = vsel %vm1165, %v1138, 0
      %v1642 = vsel %vm1165, %v1632, 0
      %v1645 = vsel %vm1165, %v1634, 0
      %1647 = vmatprep.subr.bf16.mxu0 0
      %1648 = vmatpush1.bf16.xpose.msra.mxu0 0
      %1649 = vmatprep.subr.bf16.mxu0 0
      %1650 = vmatpush1.bf16.xpose.msra.mxu0 0
      %1651 = vmatprep.subr.bf16.mxu0 0
      %1652 = vmatpush1.bf16.xpose.msra.mxu0 0
      %1653 = vmatprep.subr.bf16.mxu0 0
      %1654 = vmatpush1.bf16.xpose.msra.mxu0 0
      %1655 = vmatprep.subr.bf16.mxu0 0
      %1656 = vmatpush1.bf16.xpose.msra.mxu0 0
      %1657 = vmatprep.subr.bf16.mxu0 0
      %1658 = vmatpush1.bf16.xpose.msra.mxu0 0
      %1659 = vmatprep.subr.bf16.mxu0 0
      %1660 = vmatpush1.bf16.xpose.msra.mxu0 %v1645
      %1661 = vmatprep.subr.bf16.mxu0 0
      %1662 = vmatpush1.bf16.xpose.msra.mxu0 %v1642
      %1663 = vmatprep.subr.bf16.mxu0 0
      %1664 = vmatpush2.bf16.xpose.msra.mxu0 0
      %1665 = vmatprep.subr.bf16.mxu0 0
      %1666 = vmatpush2.bf16.xpose.msra.mxu0 0
      %1667 = vmatprep.subr.bf16.mxu0 0
      %1668 = vmatpush2.bf16.xpose.msra.mxu0 0
      %1669 = vmatprep.subr.bf16.mxu0 0
      %1670 = vmatpush2.bf16.xpose.msra.mxu0 0
      %1671 = vmatprep.subr.bf16.mxu0 0
      %1672 = vmatpush2.bf16.xpose.msra.mxu0 0
      %1673 = vmatprep.subr.bf16.mxu0 0
      %1674 = vmatpush2.bf16.xpose.msra.mxu0 0
      %1675 = vmatprep.subr.bf16.mxu0 0
      %1676 = vmatpush2.bf16.xpose.msra.mxu0 0
      %1677 = vmatprep.subr.bf16.mxu0 0
      %1678 = vmatpush2.bf16.xpose.msra.mxu0 0
      %1679 = vmatprep.mubr.bf16.mxu0 0
      %1680 = vmatmul.mubr.bf16.gmra.mxu0 %v1636
      %v1681 = vpop.f32.mrf.mxu0
      %v1682 = vadd.f32 %v1155, %v1681
      %v1683 = vpop.f32.mrf.mxu0
      %v1684 = vpop.f32.mrf.mxu0
      %v1685 = vadd.f32 %v1156, %v1684
      %v1686 = vpop.f32.mrf.mxu0
      %1687 = vmatprep.mubr.bf16.mxu0 0
      %1688 = vmatmul.mubr.bf16.gmra.mxu0 %v1639
      %v1689 = vpop.f32.mrf.mxu0
      %v1690 = vadd.f32 %v1157, %v1689
      %v1691 = vpop.f32.mrf.mxu0
      %v1692 = vpop.f32.mrf.mxu0
      %v1693 = vadd.f32 %v1158, %v1692
      %v1694 = vpop.f32.mrf.mxu0
      %1695 = vdwg.mxu0
      %v1696 = vsel %vm347, %v1213, -inf
      %1697 = vmax.xlane.f32.xlu0 %v1696
      %v1698 = vpop.xlane.xlu0 %1697
      %v1699 = vsel %vm347, %v1216, -inf
      %1700 = vmax.xlane.f32.xlu0 %v1699
      %v1701 = vpop.xlane.xlu0 %1700
      %v1702 = vsel %vm347, %v1221, -inf
      %1703 = vmax.xlane.f32.xlu0 %v1702
      %v1704 = vpop.xlane.xlu0 %1703
      %v1705 = vsel %vm347, %v1224, -inf
      %1706 = vmax.xlane.f32.xlu0 %v1705
      %v1707 = vpop.xlane.xlu0 %1706
      %v1708 = vsel %vm347, %v1280, -inf
      %1709 = vmax.xlane.f32.xlu0 %v1708
      %v1710 = vpop.xlane.xlu0 %1709
      %v1711 = vsel %vm347, %v1283, -inf
      %1712 = vmax.xlane.f32.xlu0 %v1711
      %v1713 = vpop.xlane.xlu0 %1712
      %v1714 = vsel %vm347, %v1288, -inf
      %1715 = vmax.xlane.f32.xlu0 %v1714
      %v1716 = vpop.xlane.xlu0 %1715
      %v1717 = vsel %vm347, %v1291, -inf
      %1718 = vmax.xlane.f32.xlu0 %v1717
      %v1719 = vpop.xlane.xlu0 %1718
      %v1720 = vsel %vm347, %v1347, -inf
      %1721 = vmax.xlane.f32.xlu0 %v1720
      %v1722 = vpop.xlane.xlu0 %1721
      %v1723 = vsel %vm347, %v1350, -inf
      %1724 = vmax.xlane.f32.xlu0 %v1723
      %v1725 = vpop.xlane.xlu0 %1724
      %v1726 = vsel %vm347, %v1355, -inf
      %1727 = vmax.xlane.f32.xlu0 %v1726
      %v1728 = vpop.xlane.xlu0 %1727
      %v1729 = vsel %vm347, %v1358, -inf
      %1730 = vmax.xlane.f32.xlu0 %v1729
      %v1731 = vpop.xlane.xlu0 %1730
      %v1732 = vsel %vm347, %v1414, -inf
      %1733 = vmax.xlane.f32.xlu0 %v1732
      %v1734 = vpop.xlane.xlu0 %1733
      %v1735 = vsel %vm347, %v1417, -inf
      %1736 = vmax.xlane.f32.xlu0 %v1735
      %v1737 = vpop.xlane.xlu0 %1736
      %v1738 = vsel %vm347, %v1422, -inf
      %1739 = vmax.xlane.f32.xlu0 %v1738
      %v1740 = vpop.xlane.xlu0 %1739
      %v1741 = vsel %vm347, %v1425, -inf
      %1742 = vmax.xlane.f32.xlu0 %v1741
      %v1743 = vpop.xlane.xlu0 %1742
      %v1744 = vsel %vm347, %v1481, -inf
      %1745 = vmax.xlane.f32.xlu0 %v1744
      %v1746 = vpop.xlane.xlu0 %1745
      %v1747 = vsel %vm347, %v1484, -inf
      %1748 = vmax.xlane.f32.xlu0 %v1747
      %v1749 = vpop.xlane.xlu0 %1748
      %v1750 = vsel %vm347, %v1489, -inf
      %1751 = vmax.xlane.f32.xlu0 %v1750
      %v1752 = vpop.xlane.xlu0 %1751
      %v1753 = vsel %vm347, %v1492, -inf
      %1754 = vmax.xlane.f32.xlu0 %v1753
      %v1755 = vpop.xlane.xlu0 %1754
      %v1756 = vsel %vm347, %v1548, -inf
      %1757 = vmax.xlane.f32.xlu0 %v1756
      %v1758 = vpop.xlane.xlu0 %1757
      %v1759 = vsel %vm347, %v1551, -inf
      %1760 = vmax.xlane.f32.xlu0 %v1759
      %v1761 = vpop.xlane.xlu0 %1760
      %v1762 = vsel %vm347, %v1556, -inf
      %1763 = vmax.xlane.f32.xlu0 %v1762
      %v1764 = vpop.xlane.xlu0 %1763
      %v1765 = vsel %vm347, %v1559, -inf
      %1766 = vmax.xlane.f32.xlu0 %v1765
      %v1767 = vpop.xlane.xlu0 %1766
      %v1768 = vsel %vm347, %v1615, -inf
      %1769 = vmax.xlane.f32.xlu0 %v1768
      %v1770 = vpop.xlane.xlu0 %1769
      %v1771 = vsel %vm347, %v1618, -inf
      %1772 = vmax.xlane.f32.xlu0 %v1771
      %v1773 = vpop.xlane.xlu0 %1772
      %v1774 = vsel %vm347, %v1623, -inf
      %1775 = vmax.xlane.f32.xlu0 %v1774
      %v1776 = vpop.xlane.xlu0 %1775
      %v1777 = vsel %vm347, %v1626, -inf
      %1778 = vmax.xlane.f32.xlu0 %v1777
      %v1779 = vpop.xlane.xlu0 %1778
      %v1780 = vsel %vm347, %v1682, -inf
      %1781 = vmax.xlane.f32.xlu0 %v1780
      %v1782 = vpop.xlane.xlu0 %1781
      %v1783 = vsel %vm347, %v1685, -inf
      %1784 = vmax.xlane.f32.xlu0 %v1783
      %v1785 = vpop.xlane.xlu0 %1784
      %v1786 = vsel %vm347, %v1690, -inf
      %1787 = vmax.xlane.f32.xlu0 %v1786
      %v1788 = vpop.xlane.xlu0 %1787
      %v1789 = vsel %vm347, %v1693, -inf
      %1790 = vmax.xlane.f32.xlu0 %v1789
      %v1791 = vpop.xlane.xlu0 %1790
      %v1792 = vsub.f32 %v1213, %v1698
      %v1793 = vsub.f32 %v1216, %v1701
      %v1794 = vsub.f32 %v1221, %v1704
      %v1795 = vsub.f32 %v1224, %v1707
      %v1796 = vsub.f32 %v1280, %v1710
      %v1797 = vsub.f32 %v1283, %v1713
      %v1798 = vsub.f32 %v1288, %v1716
      %v1799 = vsub.f32 %v1291, %v1719
      %v1800 = vsub.f32 %v1347, %v1722
      %v1801 = vsub.f32 %v1350, %v1725
      %v1802 = vsub.f32 %v1355, %v1728
      %v1803 = vsub.f32 %v1358, %v1731
      %v1804 = vsub.f32 %v1414, %v1734
      %v1805 = vsub.f32 %v1417, %v1737
      %v1806 = vsub.f32 %v1422, %v1740
      %v1807 = vsub.f32 %v1425, %v1743
      %v1808 = vsub.f32 %v1481, %v1746
      %v1809 = vsub.f32 %v1484, %v1749
      %v1810 = vsub.f32 %v1489, %v1752
      %v1811 = vsub.f32 %v1492, %v1755
      %v1812 = vsub.f32 %v1548, %v1758
      %v1813 = vsub.f32 %v1551, %v1761
      %v1814 = vsub.f32 %v1556, %v1764
      %v1815 = vsub.f32 %v1559, %v1767
      %v1816 = vsub.f32 %v1615, %v1770
      %v1817 = vsub.f32 %v1618, %v1773
      %v1818 = vsub.f32 %v1623, %v1776
      %v1819 = vsub.f32 %v1626, %v1779
      %v1820 = vsub.f32 %v1682, %v1782
      %v1821 = vsub.f32 %v1685, %v1785
      %v1822 = vsub.f32 %v1690, %v1788
      %v1823 = vsub.f32 %v1693, %v1791
      %v1824 = vmul.f32 %v1792, 1.442695
      %v1825 = vpow.pop %v1824
      %v1826 = vmul.f32 %v1793, 1.442695
      %v1827 = vpow.pop %v1826
      %v1828 = vmul.f32 %v1794, 1.442695
      %v1829 = vpow.pop %v1828
      %v1830 = vmul.f32 %v1795, 1.442695
      %v1831 = vpow.pop %v1830
      %v1832 = vmul.f32 %v1796, 1.442695
      %v1833 = vpow.pop %v1832
      %v1834 = vmul.f32 %v1797, 1.442695
      %v1835 = vpow.pop %v1834
      %v1836 = vmul.f32 %v1798, 1.442695
      %v1837 = vpow.pop %v1836
      %v1838 = vmul.f32 %v1799, 1.442695
      %v1839 = vpow.pop %v1838
      %v1840 = vmul.f32 %v1800, 1.442695
      %v1841 = vpow.pop %v1840
      %v1842 = vmul.f32 %v1801, 1.442695
      %v1843 = vpow.pop %v1842
      %v1844 = vmul.f32 %v1802, 1.442695
      %v1845 = vpow.pop %v1844
      %v1846 = vmul.f32 %v1803, 1.442695
      %v1847 = vpow.pop %v1846
      %v1848 = vmul.f32 %v1804, 1.442695
      %v1849 = vpow.pop %v1848
      %v1850 = vmul.f32 %v1805, 1.442695
      %v1851 = vpow.pop %v1850
      %v1852 = vmul.f32 %v1806, 1.442695
      %v1853 = vpow.pop %v1852
      %v1854 = vmul.f32 %v1807, 1.442695
      %v1855 = vpow.pop %v1854
      %v1856 = vmul.f32 %v1808, 1.442695
      %v1857 = vpow.pop %v1856
      %v1858 = vmul.f32 %v1809, 1.442695
      %v1859 = vpow.pop %v1858
      %v1860 = vmul.f32 %v1810, 1.442695
      %v1861 = vpow.pop %v1860
      %v1862 = vmul.f32 %v1811, 1.442695
      %v1863 = vpow.pop %v1862
      %v1864 = vmul.f32 %v1812, 1.442695
      %v1865 = vpow.pop %v1864
      %v1866 = vmul.f32 %v1813, 1.442695
      %v1867 = vpow.pop %v1866
      %v1868 = vmul.f32 %v1814, 1.442695
      %v1869 = vpow.pop %v1868
      %v1870 = vmul.f32 %v1815, 1.442695
      %v1871 = vpow.pop %v1870
      %v1872 = vmul.f32 %v1816, 1.442695
      %v1873 = vpow.pop %v1872
      %v1874 = vmul.f32 %v1817, 1.442695
      %v1875 = vpow.pop %v1874
      %v1876 = vmul.f32 %v1818, 1.442695
      %v1877 = vpow.pop %v1876
      %v1878 = vmul.f32 %v1819, 1.442695
      %v1879 = vpow.pop %v1878
      %v1880 = vmul.f32 %v1820, 1.442695
      %v1881 = vpow.pop %v1880
      %v1882 = vmul.f32 %v1821, 1.442695
      %v1883 = vpow.pop %v1882
      %v1884 = vmul.f32 %v1822, 1.442695
      %v1885 = vpow.pop %v1884
      %v1886 = vmul.f32 %v1823, 1.442695
      %v1887 = vpow.pop %v1886
      %v1888 = vsel %vm347, %v1825, 0.0
      %1889 = vadd.xlane.f32.xlu0 %v1888
      %v1890 = vpop.xlane.xlu0 %1889
      %v1891 = vsel %vm347, %v1827, 0.0
      %1892 = vadd.xlane.f32.xlu0 %v1891
      %v1893 = vpop.xlane.xlu0 %1892
      %v1894 = vsel %vm347, %v1829, 0.0
      %1895 = vadd.xlane.f32.xlu0 %v1894
      %v1896 = vpop.xlane.xlu0 %1895
      %v1897 = vsel %vm347, %v1831, 0.0
      %1898 = vadd.xlane.f32.xlu0 %v1897
      %v1899 = vpop.xlane.xlu0 %1898
      %v1900 = vsel %vm347, %v1833, 0.0
      %1901 = vadd.xlane.f32.xlu0 %v1900
      %v1902 = vpop.xlane.xlu0 %1901
      %v1903 = vsel %vm347, %v1835, 0.0
      %1904 = vadd.xlane.f32.xlu0 %v1903
      %v1905 = vpop.xlane.xlu0 %1904
      %v1906 = vsel %vm347, %v1837, 0.0
      %1907 = vadd.xlane.f32.xlu0 %v1906
      %v1908 = vpop.xlane.xlu0 %1907
      %v1909 = vsel %vm347, %v1839, 0.0
      %1910 = vadd.xlane.f32.xlu0 %v1909
      %v1911 = vpop.xlane.xlu0 %1910
      %v1912 = vsel %vm347, %v1841, 0.0
      %1913 = vadd.xlane.f32.xlu0 %v1912
      %v1914 = vpop.xlane.xlu0 %1913
      %v1915 = vsel %vm347, %v1843, 0.0
      %1916 = vadd.xlane.f32.xlu0 %v1915
      %v1917 = vpop.xlane.xlu0 %1916
      %v1918 = vsel %vm347, %v1845, 0.0
      %1919 = vadd.xlane.f32.xlu0 %v1918
      %v1920 = vpop.xlane.xlu0 %1919
      %v1921 = vsel %vm347, %v1847, 0.0
      %1922 = vadd.xlane.f32.xlu0 %v1921
      %v1923 = vpop.xlane.xlu0 %1922
      %v1924 = vsel %vm347, %v1849, 0.0
      %1925 = vadd.xlane.f32.xlu0 %v1924
      %v1926 = vpop.xlane.xlu0 %1925
      %v1927 = vsel %vm347, %v1851, 0.0
      %1928 = vadd.xlane.f32.xlu0 %v1927
      %v1929 = vpop.xlane.xlu0 %1928
      %v1930 = vsel %vm347, %v1853, 0.0
      %1931 = vadd.xlane.f32.xlu0 %v1930
      %v1932 = vpop.xlane.xlu0 %1931
      %v1933 = vsel %vm347, %v1855, 0.0
      %1934 = vadd.xlane.f32.xlu0 %v1933
      %v1935 = vpop.xlane.xlu0 %1934
      %v1936 = vsel %vm347, %v1857, 0.0
      %1937 = vadd.xlane.f32.xlu0 %v1936
      %v1938 = vpop.xlane.xlu0 %1937
      %v1939 = vsel %vm347, %v1859, 0.0
      %1940 = vadd.xlane.f32.xlu0 %v1939
      %v1941 = vpop.xlane.xlu0 %1940
      %v1942 = vsel %vm347, %v1861, 0.0
      %1943 = vadd.xlane.f32.xlu0 %v1942
      %v1944 = vpop.xlane.xlu0 %1943
      %v1945 = vsel %vm347, %v1863, 0.0
      %1946 = vadd.xlane.f32.xlu0 %v1945
      %v1947 = vpop.xlane.xlu0 %1946
      %v1948 = vsel %vm347, %v1865, 0.0
      %1949 = vadd.xlane.f32.xlu0 %v1948
      %v1950 = vpop.xlane.xlu0 %1949
      %v1951 = vsel %vm347, %v1867, 0.0
      %1952 = vadd.xlane.f32.xlu0 %v1951
      %v1953 = vpop.xlane.xlu0 %1952
      %v1954 = vsel %vm347, %v1869, 0.0
      %1955 = vadd.xlane.f32.xlu0 %v1954
      %v1956 = vpop.xlane.xlu0 %1955
      %v1957 = vsel %vm347, %v1871, 0.0
      %1958 = vadd.xlane.f32.xlu0 %v1957
      %v1959 = vpop.xlane.xlu0 %1958
      %v1960 = vsel %vm347, %v1873, 0.0
      %1961 = vadd.xlane.f32.xlu0 %v1960
      %v1962 = vpop.xlane.xlu0 %1961
      %v1963 = vsel %vm347, %v1875, 0.0
      %1964 = vadd.xlane.f32.xlu0 %v1963
      %v1965 = vpop.xlane.xlu0 %1964
      %v1966 = vsel %vm347, %v1877, 0.0
      %1967 = vadd.xlane.f32.xlu0 %v1966
      %v1968 = vpop.xlane.xlu0 %1967
      %v1969 = vsel %vm347, %v1879, 0.0
      %1970 = vadd.xlane.f32.xlu0 %v1969
      %v1971 = vpop.xlane.xlu0 %1970
      %v1972 = vsel %vm347, %v1881, 0.0
      %1973 = vadd.xlane.f32.xlu0 %v1972
      %v1974 = vpop.xlane.xlu0 %1973
      %v1975 = vsel %vm347, %v1883, 0.0
      %1976 = vadd.xlane.f32.xlu0 %v1975
      %v1977 = vpop.xlane.xlu0 %1976
      %v1978 = vsel %vm347, %v1885, 0.0
      %1979 = vadd.xlane.f32.xlu0 %v1978
      %v1980 = vpop.xlane.xlu0 %1979
      %v1981 = vsel %vm347, %v1887, 0.0
      %1982 = vadd.xlane.f32.xlu0 %v1981
      %v1983 = vpop.xlane.xlu0 %1982
      %v1984 = vrcp.pop %v1890
      %v1985 = vrcp.pop %v1893
      %v1986 = vrcp.pop %v1896
      %v1987 = vrcp.pop %v1899
      %v1988 = vrcp.pop %v1902
      %v1989 = vrcp.pop %v1905
      %v1990 = vrcp.pop %v1908
      %v1991 = vrcp.pop %v1911
      %v1992 = vrcp.pop %v1914
      %v1993 = vrcp.pop %v1917
      %v1994 = vrcp.pop %v1920
      %v1995 = vrcp.pop %v1923
      %v1996 = vrcp.pop %v1926
      %v1997 = vrcp.pop %v1929
      %v1998 = vrcp.pop %v1932
      %v1999 = vrcp.pop %v1935
      %v2000 = vrcp.pop %v1938
      %v2001 = vrcp.pop %v1941
      %v2002 = vrcp.pop %v1944
      %v2003 = vrcp.pop %v1947
      %v2004 = vrcp.pop %v1950
      %v2005 = vrcp.pop %v1953
      %v2006 = vrcp.pop %v1956
      %v2007 = vrcp.pop %v1959
      %v2008 = vrcp.pop %v1962
      %v2009 = vrcp.pop %v1965
      %v2010 = vrcp.pop %v1968
      %v2011 = vrcp.pop %v1971
      %v2012 = vrcp.pop %v1974
      %v2013 = vrcp.pop %v1977
      %v2014 = vrcp.pop %v1980
      %v2015 = vrcp.pop %v1983
      %v2016 = vmul.f32 %v1825, %v1984
      %v2017 = vmul.f32 %v1827, %v1985
      %v2018 = vmul.f32 %v1829, %v1986
      %v2019 = vmul.f32 %v1831, %v1987
      %v2020 = vmul.f32 %v1833, %v1988
      %v2021 = vmul.f32 %v1835, %v1989
      %v2022 = vmul.f32 %v1837, %v1990
      %v2023 = vmul.f32 %v1839, %v1991
      %v2024 = vmul.f32 %v1841, %v1992
      %v2025 = vmul.f32 %v1843, %v1993
      %v2026 = vmul.f32 %v1845, %v1994
      %v2027 = vmul.f32 %v1847, %v1995
      %v2028 = vmul.f32 %v1849, %v1996
      %v2029 = vmul.f32 %v1851, %v1997
      %v2030 = vmul.f32 %v1853, %v1998
      %v2031 = vmul.f32 %v1855, %v1999
      %v2032 = vmul.f32 %v1857, %v2000
      %v2033 = vmul.f32 %v1859, %v2001
      %v2034 = vmul.f32 %v1861, %v2002
      %v2035 = vmul.f32 %v1863, %v2003
      %v2036 = vmul.f32 %v1865, %v2004
      %v2037 = vmul.f32 %v1867, %v2005
      %v2038 = vmul.f32 %v1869, %v2006
      %v2039 = vmul.f32 %v1871, %v2007
      %v2040 = vmul.f32 %v1873, %v2008
      %v2041 = vmul.f32 %v1875, %v2009
      %v2042 = vmul.f32 %v1877, %v2010
      %v2043 = vmul.f32 %v1879, %v2011
      %v2044 = vmul.f32 %v1881, %v2012
      %v2045 = vmul.f32 %v1883, %v2013
      %v2046 = vmul.f32 %v1885, %v2014
      %v2047 = vmul.f32 %v1887, %v2015
      %v2048 = vpack.c.bf16 %v2017, %v2016
      %v2049 = vpack.c.bf16 %v2019, %v2018
      %v2050 = vpack.c.bf16 %v2021, %v2020
      %v2051 = vpack.c.bf16 %v2023, %v2022
      %v2052 = vpack.c.bf16 %v2025, %v2024
      %v2053 = vpack.c.bf16 %v2027, %v2026
      %v2054 = vpack.c.bf16 %v2029, %v2028
      %v2055 = vpack.c.bf16 %v2031, %v2030
      %v2056 = vpack.c.bf16 %v2033, %v2032
      %v2057 = vpack.c.bf16 %v2035, %v2034
      %v2058 = vpack.c.bf16 %v2037, %v2036
      %v2059 = vpack.c.bf16 %v2039, %v2038
      %v2060 = vpack.c.bf16 %v2041, %v2040
      %v2061 = vpack.c.bf16 %v2043, %v2042
      %v2062 = vpack.c.bf16 %v2045, %v2044
      %v2063 = vpack.c.bf16 %v2047, %v2046
      %2064 = vrot.lane.b32.xlu0 %v1139, 64
      %v2065 = vpop.permute.xlu0 %2064
      %2066 = vrot.lane.b32.xlu0 %v1140, 64
      %v2067 = vpop.permute.xlu0 %2066
      %v2071 = vsel %vm347, %v2048, 0
      %v2074 = vsel %vm347, %v2049, 0
      %2076 = vmatprep.subr.bf16.mxu0 0
      %2077 = vmatpush1.bf16.msra.mxu0 0
      %2078 = vmatprep.subr.bf16.mxu0 0
      %2079 = vmatpush1.bf16.msra.mxu0 0
      %2080 = vmatprep.subr.bf16.mxu0 0
      %2081 = vmatpush1.bf16.msra.mxu0 0
      %2082 = vmatprep.subr.bf16.mxu0 0
      %2083 = vmatpush1.bf16.msra.mxu0 0
      %2084 = vmatprep.subr.bf16.mxu0 0
      %2085 = vmatpush1.bf16.msra.mxu0 0
      %2086 = vmatprep.subr.bf16.mxu0 0
      %2087 = vmatpush1.bf16.msra.mxu0 0
      %2088 = vmatprep.subr.bf16.mxu0 0
      %2089 = vmatpush1.bf16.msra.mxu0 %v2067
      %2090 = vmatprep.subr.bf16.mxu0 0
      %2091 = vmatpush1.bf16.msra.mxu0 %v2065
      %2092 = vmatprep.subr.bf16.mxu0 0
      %2093 = vmatpush2.bf16.msra.mxu0 0
      %2094 = vmatprep.subr.bf16.mxu0 0
      %2095 = vmatpush2.bf16.msra.mxu0 0
      %2096 = vmatprep.subr.bf16.mxu0 0
      %2097 = vmatpush2.bf16.msra.mxu0 0
      %2098 = vmatprep.subr.bf16.mxu0 0
      %2099 = vmatpush2.bf16.msra.mxu0 0
      %2100 = vmatprep.subr.bf16.mxu0 0
      %2101 = vmatpush2.bf16.msra.mxu0 0
      %2102 = vmatprep.subr.bf16.mxu0 0
      %2103 = vmatpush2.bf16.msra.mxu0 0
      %2104 = vmatprep.subr.bf16.mxu0 0
      %2105 = vmatpush2.bf16.msra.mxu0 0
      %2106 = vmatprep.subr.bf16.mxu0 0
      %2107 = vmatpush2.bf16.msra.mxu0 0
      %2108 = vmatprep.mubr.bf16.mxu0 0
      %2109 = vmatmul.mubr.bf16.gmra.mxu0 %v2071
      %v2110 = vpop.f32.mrf.mxu0
      %v2111 = vadd.f32 0.0, %v2110
      %v2112 = vpop.f32.mrf.mxu0
      %v2113 = vpop.f32.mrf.mxu0
      %v2114 = vadd.f32 0.0, %v2113
      %v2115 = vpop.f32.mrf.mxu0
      %2116 = vmatprep.mubr.bf16.mxu0 0
      %2117 = vmatmul.mubr.bf16.gmra.mxu0 %v2074
      %v2118 = vpop.f32.mrf.mxu0
      %v2119 = vadd.f32 0.0, %v2118
      %v2120 = vpop.f32.mrf.mxu0
      %v2121 = vpop.f32.mrf.mxu0
      %v2122 = vadd.f32 0.0, %v2121
      %v2123 = vpop.f32.mrf.mxu0
      %2124 = vdwg.mxu0
      %2125 = vrot.lane.b32.xlu0 %v1141, 64
      %v2126 = vpop.permute.xlu0 %2125
      %2127 = vrot.lane.b32.xlu0 %v1142, 64
      %v2128 = vpop.permute.xlu0 %2127
      %v2132 = vsel %vm347, %v2050, 0
      %v2135 = vsel %vm347, %v2051, 0
      %2137 = vmatprep.subr.bf16.mxu0 0
      %2138 = vmatpush1.bf16.msra.mxu0 0
      %2139 = vmatprep.subr.bf16.mxu0 0
      %2140 = vmatpush1.bf16.msra.mxu0 0
      %2141 = vmatprep.subr.bf16.mxu0 0
      %2142 = vmatpush1.bf16.msra.mxu0 0
      %2143 = vmatprep.subr.bf16.mxu0 0
      %2144 = vmatpush1.bf16.msra.mxu0 0
      %2145 = vmatprep.subr.bf16.mxu0 0
      %2146 = vmatpush1.bf16.msra.mxu0 0
      %2147 = vmatprep.subr.bf16.mxu0 0
      %2148 = vmatpush1.bf16.msra.mxu0 0
      %2149 = vmatprep.subr.bf16.mxu0 0
      %2150 = vmatpush1.bf16.msra.mxu0 %v2128
      %2151 = vmatprep.subr.bf16.mxu0 0
      %2152 = vmatpush1.bf16.msra.mxu0 %v2126
      %2153 = vmatprep.subr.bf16.mxu0 0
      %2154 = vmatpush2.bf16.msra.mxu0 0
      %2155 = vmatprep.subr.bf16.mxu0 0
      %2156 = vmatpush2.bf16.msra.mxu0 0
      %2157 = vmatprep.subr.bf16.mxu0 0
      %2158 = vmatpush2.bf16.msra.mxu0 0
      %2159 = vmatprep.subr.bf16.mxu0 0
      %2160 = vmatpush2.bf16.msra.mxu0 0
      %2161 = vmatprep.subr.bf16.mxu0 0
      %2162 = vmatpush2.bf16.msra.mxu0 0
      %2163 = vmatprep.subr.bf16.mxu0 0
      %2164 = vmatpush2.bf16.msra.mxu0 0
      %2165 = vmatprep.subr.bf16.mxu0 0
      %2166 = vmatpush2.bf16.msra.mxu0 0
      %2167 = vmatprep.subr.bf16.mxu0 0
      %2168 = vmatpush2.bf16.msra.mxu0 0
      %2169 = vmatprep.mubr.bf16.mxu0 0
      %2170 = vmatmul.mubr.bf16.gmra.mxu0 %v2132
      %v2171 = vpop.f32.mrf.mxu0
      %v2172 = vadd.f32 0.0, %v2171
      %v2173 = vpop.f32.mrf.mxu0
      %v2174 = vpop.f32.mrf.mxu0
      %v2175 = vadd.f32 0.0, %v2174
      %v2176 = vpop.f32.mrf.mxu0
      %2177 = vmatprep.mubr.bf16.mxu0 0
      %2178 = vmatmul.mubr.bf16.gmra.mxu0 %v2135
      %v2179 = vpop.f32.mrf.mxu0
      %v2180 = vadd.f32 0.0, %v2179
      %v2181 = vpop.f32.mrf.mxu0
      %v2182 = vpop.f32.mrf.mxu0
      %v2183 = vadd.f32 0.0, %v2182
      %v2184 = vpop.f32.mrf.mxu0
      %2185 = vdwg.mxu0
      %2186 = vrot.lane.b32.xlu0 %v1143, 64
      %v2187 = vpop.permute.xlu0 %2186
      %2188 = vrot.lane.b32.xlu0 %v1144, 64
      %v2189 = vpop.permute.xlu0 %2188
      %v2193 = vsel %vm347, %v2052, 0
      %v2196 = vsel %vm347, %v2053, 0
      %2198 = vmatprep.subr.bf16.mxu0 0
      %2199 = vmatpush1.bf16.msra.mxu0 0
      %2200 = vmatprep.subr.bf16.mxu0 0
      %2201 = vmatpush1.bf16.msra.mxu0 0
      %2202 = vmatprep.subr.bf16.mxu0 0
      %2203 = vmatpush1.bf16.msra.mxu0 0
      %2204 = vmatprep.subr.bf16.mxu0 0
      %2205 = vmatpush1.bf16.msra.mxu0 0
      %2206 = vmatprep.subr.bf16.mxu0 0
      %2207 = vmatpush1.bf16.msra.mxu0 0
      %2208 = vmatprep.subr.bf16.mxu0 0
      %2209 = vmatpush1.bf16.msra.mxu0 0
      %2210 = vmatprep.subr.bf16.mxu0 0
      %2211 = vmatpush1.bf16.msra.mxu0 %v2189
      %2212 = vmatprep.subr.bf16.mxu0 0
      %2213 = vmatpush1.bf16.msra.mxu0 %v2187
      %2214 = vmatprep.subr.bf16.mxu0 0
      %2215 = vmatpush2.bf16.msra.mxu0 0
      %2216 = vmatprep.subr.bf16.mxu0 0
      %2217 = vmatpush2.bf16.msra.mxu0 0
      %2218 = vmatprep.subr.bf16.mxu0 0
      %2219 = vmatpush2.bf16.msra.mxu0 0
      %2220 = vmatprep.subr.bf16.mxu0 0
      %2221 = vmatpush2.bf16.msra.mxu0 0
      %2222 = vmatprep.subr.bf16.mxu0 0
      %2223 = vmatpush2.bf16.msra.mxu0 0
      %2224 = vmatprep.subr.bf16.mxu0 0
      %2225 = vmatpush2.bf16.msra.mxu0 0
      %2226 = vmatprep.subr.bf16.mxu0 0
      %2227 = vmatpush2.bf16.msra.mxu0 0
      %2228 = vmatprep.subr.bf16.mxu0 0
      %2229 = vmatpush2.bf16.msra.mxu0 0
      %2230 = vmatprep.mubr.bf16.mxu0 0
      %2231 = vmatmul.mubr.bf16.gmra.mxu0 %v2193
      %v2232 = vpop.f32.mrf.mxu0
      %v2233 = vadd.f32 0.0, %v2232
      %v2234 = vpop.f32.mrf.mxu0
      %v2235 = vpop.f32.mrf.mxu0
      %v2236 = vadd.f32 0.0, %v2235
      %v2237 = vpop.f32.mrf.mxu0
      %2238 = vmatprep.mubr.bf16.mxu0 0
      %2239 = vmatmul.mubr.bf16.gmra.mxu0 %v2196
      %v2240 = vpop.f32.mrf.mxu0
      %v2241 = vadd.f32 0.0, %v2240
      %v2242 = vpop.f32.mrf.mxu0
      %v2243 = vpop.f32.mrf.mxu0
      %v2244 = vadd.f32 0.0, %v2243
      %v2245 = vpop.f32.mrf.mxu0
      %2246 = vdwg.mxu0
      %2247 = vrot.lane.b32.xlu0 %v1145, 64
      %v2248 = vpop.permute.xlu0 %2247
      %2249 = vrot.lane.b32.xlu0 %v1146, 64
      %v2250 = vpop.permute.xlu0 %2249
      %v2254 = vsel %vm347, %v2054, 0
      %v2257 = vsel %vm347, %v2055, 0
      %2259 = vmatprep.subr.bf16.mxu0 0
      %2260 = vmatpush1.bf16.msra.mxu0 0
      %2261 = vmatprep.subr.bf16.mxu0 0
      %2262 = vmatpush1.bf16.msra.mxu0 0
      %2263 = vmatprep.subr.bf16.mxu0 0
      %2264 = vmatpush1.bf16.msra.mxu0 0
      %2265 = vmatprep.subr.bf16.mxu0 0
      %2266 = vmatpush1.bf16.msra.mxu0 0
      %2267 = vmatprep.subr.bf16.mxu0 0
      %2268 = vmatpush1.bf16.msra.mxu0 0
      %2269 = vmatprep.subr.bf16.mxu0 0
      %2270 = vmatpush1.bf16.msra.mxu0 0
      %2271 = vmatprep.subr.bf16.mxu0 0
      %2272 = vmatpush1.bf16.msra.mxu0 %v2250
      %2273 = vmatprep.subr.bf16.mxu0 0
      %2274 = vmatpush1.bf16.msra.mxu0 %v2248
      %2275 = vmatprep.subr.bf16.mxu0 0
      %2276 = vmatpush2.bf16.msra.mxu0 0
      %2277 = vmatprep.subr.bf16.mxu0 0
      %2278 = vmatpush2.bf16.msra.mxu0 0
      %2279 = vmatprep.subr.bf16.mxu0 0
      %2280 = vmatpush2.bf16.msra.mxu0 0
      %2281 = vmatprep.subr.bf16.mxu0 0
      %2282 = vmatpush2.bf16.msra.mxu0 0
      %2283 = vmatprep.subr.bf16.mxu0 0
      %2284 = vmatpush2.bf16.msra.mxu0 0
      %2285 = vmatprep.subr.bf16.mxu0 0
      %2286 = vmatpush2.bf16.msra.mxu0 0
      %2287 = vmatprep.subr.bf16.mxu0 0
      %2288 = vmatpush2.bf16.msra.mxu0 0
      %2289 = vmatprep.subr.bf16.mxu0 0
      %2290 = vmatpush2.bf16.msra.mxu0 0
      %2291 = vmatprep.mubr.bf16.mxu0 0
      %2292 = vmatmul.mubr.bf16.gmra.mxu0 %v2254
      %v2293 = vpop.f32.mrf.mxu0
      %v2294 = vadd.f32 0.0, %v2293
      %v2295 = vpop.f32.mrf.mxu0
      %v2296 = vpop.f32.mrf.mxu0
      %v2297 = vadd.f32 0.0, %v2296
      %v2298 = vpop.f32.mrf.mxu0
      %2299 = vmatprep.mubr.bf16.mxu0 0
      %2300 = vmatmul.mubr.bf16.gmra.mxu0 %v2257
      %v2301 = vpop.f32.mrf.mxu0
      %v2302 = vadd.f32 0.0, %v2301
      %v2303 = vpop.f32.mrf.mxu0
      %v2304 = vpop.f32.mrf.mxu0
      %v2305 = vadd.f32 0.0, %v2304
      %v2306 = vpop.f32.mrf.mxu0
      %2307 = vdwg.mxu0
      %2308 = vrot.lane.b32.xlu0 %v1147, 64
      %v2309 = vpop.permute.xlu0 %2308
      %2310 = vrot.lane.b32.xlu0 %v1148, 64
      %v2311 = vpop.permute.xlu0 %2310
      %v2315 = vsel %vm347, %v2056, 0
      %v2318 = vsel %vm347, %v2057, 0
      %2320 = vmatprep.subr.bf16.mxu0 0
      %2321 = vmatpush1.bf16.msra.mxu0 0
      %2322 = vmatprep.subr.bf16.mxu0 0
      %2323 = vmatpush1.bf16.msra.mxu0 0
      %2324 = vmatprep.subr.bf16.mxu0 0
      %2325 = vmatpush1.bf16.msra.mxu0 0
      %2326 = vmatprep.subr.bf16.mxu0 0
      %2327 = vmatpush1.bf16.msra.mxu0 0
      %2328 = vmatprep.subr.bf16.mxu0 0
      %2329 = vmatpush1.bf16.msra.mxu0 0
      %2330 = vmatprep.subr.bf16.mxu0 0
      %2331 = vmatpush1.bf16.msra.mxu0 0
      %2332 = vmatprep.subr.bf16.mxu0 0
      %2333 = vmatpush1.bf16.msra.mxu0 %v2311
      %2334 = vmatprep.subr.bf16.mxu0 0
      %2335 = vmatpush1.bf16.msra.mxu0 %v2309
      %2336 = vmatprep.subr.bf16.mxu0 0
      %2337 = vmatpush2.bf16.msra.mxu0 0
      %2338 = vmatprep.subr.bf16.mxu0 0
      %2339 = vmatpush2.bf16.msra.mxu0 0
      %2340 = vmatprep.subr.bf16.mxu0 0
      %2341 = vmatpush2.bf16.msra.mxu0 0
      %2342 = vmatprep.subr.bf16.mxu0 0
      %2343 = vmatpush2.bf16.msra.mxu0 0
      %2344 = vmatprep.subr.bf16.mxu0 0
      %2345 = vmatpush2.bf16.msra.mxu0 0
      %2346 = vmatprep.subr.bf16.mxu0 0
      %2347 = vmatpush2.bf16.msra.mxu0 0
      %2348 = vmatprep.subr.bf16.mxu0 0
      %2349 = vmatpush2.bf16.msra.mxu0 0
      %2350 = vmatprep.subr.bf16.mxu0 0
      %2351 = vmatpush2.bf16.msra.mxu0 0
      %2352 = vmatprep.mubr.bf16.mxu0 0
      %2353 = vmatmul.mubr.bf16.gmra.mxu0 %v2315
      %v2354 = vpop.f32.mrf.mxu0
      %v2355 = vadd.f32 0.0, %v2354
      %v2356 = vpop.f32.mrf.mxu0
      %v2357 = vpop.f32.mrf.mxu0
      %v2358 = vadd.f32 0.0, %v2357
      %v2359 = vpop.f32.mrf.mxu0
      %2360 = vmatprep.mubr.bf16.mxu0 0
      %2361 = vmatmul.mubr.bf16.gmra.mxu0 %v2318
      %v2362 = vpop.f32.mrf.mxu0
      %v2363 = vadd.f32 0.0, %v2362
      %v2364 = vpop.f32.mrf.mxu0
      %v2365 = vpop.f32.mrf.mxu0
      %v2366 = vadd.f32 0.0, %v2365
      %v2367 = vpop.f32.mrf.mxu0
      %2368 = vdwg.mxu0
      %2369 = vrot.lane.b32.xlu0 %v1149, 64
      %v2370 = vpop.permute.xlu0 %2369
      %2371 = vrot.lane.b32.xlu0 %v1150, 64
      %v2372 = vpop.permute.xlu0 %2371
      %v2376 = vsel %vm347, %v2058, 0
      %v2379 = vsel %vm347, %v2059, 0
      %2381 = vmatprep.subr.bf16.mxu0 0
      %2382 = vmatpush1.bf16.msra.mxu0 0
      %2383 = vmatprep.subr.bf16.mxu0 0
      %2384 = vmatpush1.bf16.msra.mxu0 0
      %2385 = vmatprep.subr.bf16.mxu0 0
      %2386 = vmatpush1.bf16.msra.mxu0 0
      %2387 = vmatprep.subr.bf16.mxu0 0
      %2388 = vmatpush1.bf16.msra.mxu0 0
      %2389 = vmatprep.subr.bf16.mxu0 0
      %2390 = vmatpush1.bf16.msra.mxu0 0
      %2391 = vmatprep.subr.bf16.mxu0 0
      %2392 = vmatpush1.bf16.msra.mxu0 0
      %2393 = vmatprep.subr.bf16.mxu0 0
      %2394 = vmatpush1.bf16.msra.mxu0 %v2372
      %2395 = vmatprep.subr.bf16.mxu0 0
      %2396 = vmatpush1.bf16.msra.mxu0 %v2370
      %2397 = vmatprep.subr.bf16.mxu0 0
      %2398 = vmatpush2.bf16.msra.mxu0 0
      %2399 = vmatprep.subr.bf16.mxu0 0
      %2400 = vmatpush2.bf16.msra.mxu0 0
      %2401 = vmatprep.subr.bf16.mxu0 0
      %2402 = vmatpush2.bf16.msra.mxu0 0
      %2403 = vmatprep.subr.bf16.mxu0 0
      %2404 = vmatpush2.bf16.msra.mxu0 0
      %2405 = vmatprep.subr.bf16.mxu0 0
      %2406 = vmatpush2.bf16.msra.mxu0 0
      %2407 = vmatprep.subr.bf16.mxu0 0
      %2408 = vmatpush2.bf16.msra.mxu0 0
      %2409 = vmatprep.subr.bf16.mxu0 0
      %2410 = vmatpush2.bf16.msra.mxu0 0
      %2411 = vmatprep.subr.bf16.mxu0 0
      %2412 = vmatpush2.bf16.msra.mxu0 0
      %2413 = vmatprep.mubr.bf16.mxu0 0
      %2414 = vmatmul.mubr.bf16.gmra.mxu0 %v2376
      %v2415 = vpop.f32.mrf.mxu0
      %v2416 = vadd.f32 0.0, %v2415
      %v2417 = vpop.f32.mrf.mxu0
      %v2418 = vpop.f32.mrf.mxu0
      %v2419 = vadd.f32 0.0, %v2418
      %v2420 = vpop.f32.mrf.mxu0
      %2421 = vmatprep.mubr.bf16.mxu0 0
      %2422 = vmatmul.mubr.bf16.gmra.mxu0 %v2379
      %v2423 = vpop.f32.mrf.mxu0
      %v2424 = vadd.f32 0.0, %v2423
      %v2425 = vpop.f32.mrf.mxu0
      %v2426 = vpop.f32.mrf.mxu0
      %v2427 = vadd.f32 0.0, %v2426
      %v2428 = vpop.f32.mrf.mxu0
      %2429 = vdwg.mxu0
      %2430 = vrot.lane.b32.xlu0 %v1151, 64
      %v2431 = vpop.permute.xlu0 %2430
      %2432 = vrot.lane.b32.xlu0 %v1152, 64
      %v2433 = vpop.permute.xlu0 %2432
      %v2437 = vsel %vm347, %v2060, 0
      %v2440 = vsel %vm347, %v2061, 0
      %2442 = vmatprep.subr.bf16.mxu0 0
      %2443 = vmatpush1.bf16.msra.mxu0 0
      %2444 = vmatprep.subr.bf16.mxu0 0
      %2445 = vmatpush1.bf16.msra.mxu0 0
      %2446 = vmatprep.subr.bf16.mxu0 0
      %2447 = vmatpush1.bf16.msra.mxu0 0
      %2448 = vmatprep.subr.bf16.mxu0 0
      %2449 = vmatpush1.bf16.msra.mxu0 0
      %2450 = vmatprep.subr.bf16.mxu0 0
      %2451 = vmatpush1.bf16.msra.mxu0 0
      %2452 = vmatprep.subr.bf16.mxu0 0
      %2453 = vmatpush1.bf16.msra.mxu0 0
      %2454 = vmatprep.subr.bf16.mxu0 0
      %2455 = vmatpush1.bf16.msra.mxu0 %v2433
      %2456 = vmatprep.subr.bf16.mxu0 0
      %2457 = vmatpush1.bf16.msra.mxu0 %v2431
      %2458 = vmatprep.subr.bf16.mxu0 0
      %2459 = vmatpush2.bf16.msra.mxu0 0
      %2460 = vmatprep.subr.bf16.mxu0 0
      %2461 = vmatpush2.bf16.msra.mxu0 0
      %2462 = vmatprep.subr.bf16.mxu0 0
      %2463 = vmatpush2.bf16.msra.mxu0 0
      %2464 = vmatprep.subr.bf16.mxu0 0
      %2465 = vmatpush2.bf16.msra.mxu0 0
      %2466 = vmatprep.subr.bf16.mxu0 0
      %2467 = vmatpush2.bf16.msra.mxu0 0
      %2468 = vmatprep.subr.bf16.mxu0 0
      %2469 = vmatpush2.bf16.msra.mxu0 0
      %2470 = vmatprep.subr.bf16.mxu0 0
      %2471 = vmatpush2.bf16.msra.mxu0 0
      %2472 = vmatprep.subr.bf16.mxu0 0
      %2473 = vmatpush2.bf16.msra.mxu0 0
      %2474 = vmatprep.mubr.bf16.mxu0 0
      %2475 = vmatmul.mubr.bf16.gmra.mxu0 %v2437
      %v2476 = vpop.f32.mrf.mxu0
      %v2477 = vadd.f32 0.0, %v2476
      %v2478 = vpop.f32.mrf.mxu0
      %v2479 = vpop.f32.mrf.mxu0
      %v2480 = vadd.f32 0.0, %v2479
      %v2481 = vpop.f32.mrf.mxu0
      %2482 = vmatprep.mubr.bf16.mxu0 0
      %2483 = vmatmul.mubr.bf16.gmra.mxu0 %v2440
      %v2484 = vpop.f32.mrf.mxu0
      %v2485 = vadd.f32 0.0, %v2484
      %v2486 = vpop.f32.mrf.mxu0
      %v2487 = vpop.f32.mrf.mxu0
      %v2488 = vadd.f32 0.0, %v2487
      %v2489 = vpop.f32.mrf.mxu0
      %2490 = vdwg.mxu0
      %2491 = vrot.lane.b32.xlu0 %v1153, 64
      %v2492 = vpop.permute.xlu0 %2491
      %2493 = vrot.lane.b32.xlu0 %v1154, 64
      %v2494 = vpop.permute.xlu0 %2493
      %v2498 = vsel %vm347, %v2062, 0
      %v2501 = vsel %vm347, %v2063, 0
      %2503 = vmatprep.subr.bf16.mxu0 0
      %2504 = vmatpush1.bf16.msra.mxu0 0
      %2505 = vmatprep.subr.bf16.mxu0 0
      %2506 = vmatpush1.bf16.msra.mxu0 0
      %2507 = vmatprep.subr.bf16.mxu0 0
      %2508 = vmatpush1.bf16.msra.mxu0 0
      %2509 = vmatprep.subr.bf16.mxu0 0
      %2510 = vmatpush1.bf16.msra.mxu0 0
      %2511 = vmatprep.subr.bf16.mxu0 0
      %2512 = vmatpush1.bf16.msra.mxu0 0
      %2513 = vmatprep.subr.bf16.mxu0 0
      %2514 = vmatpush1.bf16.msra.mxu0 0
      %2515 = vmatprep.subr.bf16.mxu0 0
      %2516 = vmatpush1.bf16.msra.mxu0 %v2494
      %2517 = vmatprep.subr.bf16.mxu0 0
      %2518 = vmatpush1.bf16.msra.mxu0 %v2492
      %2519 = vmatprep.subr.bf16.mxu0 0
      %2520 = vmatpush2.bf16.msra.mxu0 0
      %2521 = vmatprep.subr.bf16.mxu0 0
      %2522 = vmatpush2.bf16.msra.mxu0 0
      %2523 = vmatprep.subr.bf16.mxu0 0
      %2524 = vmatpush2.bf16.msra.mxu0 0
      %2525 = vmatprep.subr.bf16.mxu0 0
      %2526 = vmatpush2.bf16.msra.mxu0 0
      %2527 = vmatprep.subr.bf16.mxu0 0
      %2528 = vmatpush2.bf16.msra.mxu0 0
      %2529 = vmatprep.subr.bf16.mxu0 0
      %2530 = vmatpush2.bf16.msra.mxu0 0
      %2531 = vmatprep.subr.bf16.mxu0 0
      %2532 = vmatpush2.bf16.msra.mxu0 0
      %2533 = vmatprep.subr.bf16.mxu0 0
      %2534 = vmatpush2.bf16.msra.mxu0 0
      %2535 = vmatprep.mubr.bf16.mxu0 0
      %2536 = vmatmul.mubr.bf16.gmra.mxu0 %v2498
      %v2537 = vpop.f32.mrf.mxu0
      %v2538 = vadd.f32 0.0, %v2537
      %v2539 = vpop.f32.mrf.mxu0
      %v2540 = vpop.f32.mrf.mxu0
      %v2541 = vadd.f32 0.0, %v2540
      %v2542 = vpop.f32.mrf.mxu0
      %2543 = vmatprep.mubr.bf16.mxu0 0
      %2544 = vmatmul.mubr.bf16.gmra.mxu0 %v2501
      %v2545 = vpop.f32.mrf.mxu0
      %v2546 = vadd.f32 0.0, %v2545
      %v2547 = vpop.f32.mrf.mxu0
      %v2548 = vpop.f32.mrf.mxu0
      %v2549 = vadd.f32 0.0, %v2548
      %v2550 = vpop.f32.mrf.mxu0
      %2551 = vdwg.mxu0
      %s2552 = scalar_lea.vmem %s1, 32
      %v2553 = vld [vmem:[%s2552] sm:$0xff]
      %v2554 = vld [vmem:[%s2552 + $0x8] sm:$0xff]
      %v2555 = vld [vmem:[%s2552 + $0x10] sm:$0xff]
      %v2556 = vld [vmem:[%s2552 + $0x18] sm:$0xff]
      %2559 = vrot.lane.b32.xlu0 %v1123, 120
      %v2560 = vpop.permute.xlu0 %2559
      %2561 = vrot.lane.b32.xlu0 %v1124, 120
      %v2562 = vpop.permute.xlu0 %2561
      %2563 = vrot.lane.b32.xlu0 %v1139, 88
      %v2564 = vpop.permute.xlu0 %2563
      %2565 = vrot.lane.b32.xlu0 %v1140, 88
      %v2566 = vpop.permute.xlu0 %2565
      %v2568 = vsel %vm1165, %v2560, 0
      %v2571 = vsel %vm1165, %v2562, 0
      %v2574 = vsel %vm1165, %v2564, 0
      %v2577 = vsel %vm1165, %v2566, 0
      %2579 = vmatprep.subr.bf16.mxu0 0
      %2580 = vmatpush1.bf16.xpose.msra.mxu0 0
      %2581 = vmatprep.subr.bf16.mxu0 0
      %2582 = vmatpush1.bf16.xpose.msra.mxu0 0
      %2583 = vmatprep.subr.bf16.mxu0 0
      %2584 = vmatpush1.bf16.xpose.msra.mxu0 0
      %2585 = vmatprep.subr.bf16.mxu0 0
      %2586 = vmatpush1.bf16.xpose.msra.mxu0 0
      %2587 = vmatprep.subr.bf16.mxu0 0
      %2588 = vmatpush1.bf16.xpose.msra.mxu0 0
      %2589 = vmatprep.subr.bf16.mxu0 0
      %2590 = vmatpush1.bf16.xpose.msra.mxu0 0
      %2591 = vmatprep.subr.bf16.mxu0 0
      %2592 = vmatpush1.bf16.xpose.msra.mxu0 %v2577
      %2593 = vmatprep.subr.bf16.mxu0 0
      %2594 = vmatpush1.bf16.xpose.msra.mxu0 %v2574
      %2595 = vmatprep.subr.bf16.mxu0 0
      %2596 = vmatpush2.bf16.xpose.msra.mxu0 0
      %2597 = vmatprep.subr.bf16.mxu0 0
      %2598 = vmatpush2.bf16.xpose.msra.mxu0 0
      %2599 = vmatprep.subr.bf16.mxu0 0
      %2600 = vmatpush2.bf16.xpose.msra.mxu0 0
      %2601 = vmatprep.subr.bf16.mxu0 0
      %2602 = vmatpush2.bf16.xpose.msra.mxu0 0
      %2603 = vmatprep.subr.bf16.mxu0 0
      %2604 = vmatpush2.bf16.xpose.msra.mxu0 0
      %2605 = vmatprep.subr.bf16.mxu0 0
      %2606 = vmatpush2.bf16.xpose.msra.mxu0 0
      %2607 = vmatprep.subr.bf16.mxu0 0
      %2608 = vmatpush2.bf16.xpose.msra.mxu0 0
      %2609 = vmatprep.subr.bf16.mxu0 0
      %2610 = vmatpush2.bf16.xpose.msra.mxu0 0
      %2611 = vmatprep.mubr.bf16.mxu0 0
      %2612 = vmatmul.mubr.bf16.gmra.mxu0 %v2568
      %v2613 = vpop.f32.mrf.mxu0
      %v2614 = vadd.f32 %v2553, %v2613
      %v2615 = vpop.f32.mrf.mxu0
      %v2616 = vpop.f32.mrf.mxu0
      %v2617 = vadd.f32 %v2554, %v2616
      %v2618 = vpop.f32.mrf.mxu0
      %2619 = vmatprep.mubr.bf16.mxu0 0
      %2620 = vmatmul.mubr.bf16.gmra.mxu0 %v2571
      %v2621 = vpop.f32.mrf.mxu0
      %v2622 = vadd.f32 %v2555, %v2621
      %v2623 = vpop.f32.mrf.mxu0
      %v2624 = vpop.f32.mrf.mxu0
      %v2625 = vadd.f32 %v2556, %v2624
      %v2626 = vpop.f32.mrf.mxu0
      %2627 = vdwg.mxu0
      %2630 = vrot.lane.b32.xlu0 %v1125, 120
      %v2631 = vpop.permute.xlu0 %2630
      %2632 = vrot.lane.b32.xlu0 %v1126, 120
      %v2633 = vpop.permute.xlu0 %2632
      %2634 = vrot.lane.b32.xlu0 %v1141, 88
      %v2635 = vpop.permute.xlu0 %2634
      %2636 = vrot.lane.b32.xlu0 %v1142, 88
      %v2637 = vpop.permute.xlu0 %2636
      %v2639 = vsel %vm1165, %v2631, 0
      %v2642 = vsel %vm1165, %v2633, 0
      %v2645 = vsel %vm1165, %v2635, 0
      %v2648 = vsel %vm1165, %v2637, 0
      %2650 = vmatprep.subr.bf16.mxu0 0
      %2651 = vmatpush1.bf16.xpose.msra.mxu0 0
      %2652 = vmatprep.subr.bf16.mxu0 0
      %2653 = vmatpush1.bf16.xpose.msra.mxu0 0
      %2654 = vmatprep.subr.bf16.mxu0 0
      %2655 = vmatpush1.bf16.xpose.msra.mxu0 0
      %2656 = vmatprep.subr.bf16.mxu0 0
      %2657 = vmatpush1.bf16.xpose.msra.mxu0 0
      %2658 = vmatprep.subr.bf16.mxu0 0
      %2659 = vmatpush1.bf16.xpose.msra.mxu0 0
      %2660 = vmatprep.subr.bf16.mxu0 0
      %2661 = vmatpush1.bf16.xpose.msra.mxu0 0
      %2662 = vmatprep.subr.bf16.mxu0 0
      %2663 = vmatpush1.bf16.xpose.msra.mxu0 %v2648
      %2664 = vmatprep.subr.bf16.mxu0 0
      %2665 = vmatpush1.bf16.xpose.msra.mxu0 %v2645
      %2666 = vmatprep.subr.bf16.mxu0 0
      %2667 = vmatpush2.bf16.xpose.msra.mxu0 0
      %2668 = vmatprep.subr.bf16.mxu0 0
      %2669 = vmatpush2.bf16.xpose.msra.mxu0 0
      %2670 = vmatprep.subr.bf16.mxu0 0
      %2671 = vmatpush2.bf16.xpose.msra.mxu0 0
      %2672 = vmatprep.subr.bf16.mxu0 0
      %2673 = vmatpush2.bf16.xpose.msra.mxu0 0
      %2674 = vmatprep.subr.bf16.mxu0 0
      %2675 = vmatpush2.bf16.xpose.msra.mxu0 0
      %2676 = vmatprep.subr.bf16.mxu0 0
      %2677 = vmatpush2.bf16.xpose.msra.mxu0 0
      %2678 = vmatprep.subr.bf16.mxu0 0
      %2679 = vmatpush2.bf16.xpose.msra.mxu0 0
      %2680 = vmatprep.subr.bf16.mxu0 0
      %2681 = vmatpush2.bf16.xpose.msra.mxu0 0
      %2682 = vmatprep.mubr.bf16.mxu0 0
      %2683 = vmatmul.mubr.bf16.gmra.mxu0 %v2639
      %v2684 = vpop.f32.mrf.mxu0
      %v2685 = vadd.f32 %v2553, %v2684
      %v2686 = vpop.f32.mrf.mxu0
      %v2687 = vpop.f32.mrf.mxu0
      %v2688 = vadd.f32 %v2554, %v2687
      %v2689 = vpop.f32.mrf.mxu0
      %2690 = vmatprep.mubr.bf16.mxu0 0
      %2691 = vmatmul.mubr.bf16.gmra.mxu0 %v2642
      %v2692 = vpop.f32.mrf.mxu0
      %v2693 = vadd.f32 %v2555, %v2692
      %v2694 = vpop.f32.mrf.mxu0
      %v2695 = vpop.f32.mrf.mxu0
      %v2696 = vadd.f32 %v2556, %v2695
      %v2697 = vpop.f32.mrf.mxu0
      %2698 = vdwg.mxu0
      %2701 = vrot.lane.b32.xlu0 %v1127, 120
      %v2702 = vpop.permute.xlu0 %2701
      %2703 = vrot.lane.b32.xlu0 %v1128, 120
      %v2704 = vpop.permute.xlu0 %2703
      %2705 = vrot.lane.b32.xlu0 %v1143, 88
      %v2706 = vpop.permute.xlu0 %2705
      %2707 = vrot.lane.b32.xlu0 %v1144, 88
      %v2708 = vpop.permute.xlu0 %2707
      %v2710 = vsel %vm1165, %v2702, 0
      %v2713 = vsel %vm1165, %v2704, 0
      %v2716 = vsel %vm1165, %v2706, 0
      %v2719 = vsel %vm1165, %v2708, 0
      %2721 = vmatprep.subr.bf16.mxu0 0
      %2722 = vmatpush1.bf16.xpose.msra.mxu0 0
      %2723 = vmatprep.subr.bf16.mxu0 0
      %2724 = vmatpush1.bf16.xpose.msra.mxu0 0
      %2725 = vmatprep.subr.bf16.mxu0 0
      %2726 = vmatpush1.bf16.xpose.msra.mxu0 0
      %2727 = vmatprep.subr.bf16.mxu0 0
      %2728 = vmatpush1.bf16.xpose.msra.mxu0 0
      %2729 = vmatprep.subr.bf16.mxu0 0
      %2730 = vmatpush1.bf16.xpose.msra.mxu0 0
      %2731 = vmatprep.subr.bf16.mxu0 0
      %2732 = vmatpush1.bf16.xpose.msra.mxu0 0
      %2733 = vmatprep.subr.bf16.mxu0 0
      %2734 = vmatpush1.bf16.xpose.msra.mxu0 %v2719
      %2735 = vmatprep.subr.bf16.mxu0 0
      %2736 = vmatpush1.bf16.xpose.msra.mxu0 %v2716
      %2737 = vmatprep.subr.bf16.mxu0 0
      %2738 = vmatpush2.bf16.xpose.msra.mxu0 0
      %2739 = vmatprep.subr.bf16.mxu0 0
      %2740 = vmatpush2.bf16.xpose.msra.mxu0 0
      %2741 = vmatprep.subr.bf16.mxu0 0
      %2742 = vmatpush2.bf16.xpose.msra.mxu0 0
      %2743 = vmatprep.subr.bf16.mxu0 0
      %2744 = vmatpush2.bf16.xpose.msra.mxu0 0
      %2745 = vmatprep.subr.bf16.mxu0 0
      %2746 = vmatpush2.bf16.xpose.msra.mxu0 0
      %2747 = vmatprep.subr.bf16.mxu0 0
      %2748 = vmatpush2.bf16.xpose.msra.mxu0 0
      %2749 = vmatprep.subr.bf16.mxu0 0
      %2750 = vmatpush2.bf16.xpose.msra.mxu0 0
      %2751 = vmatprep.subr.bf16.mxu0 0
      %2752 = vmatpush2.bf16.xpose.msra.mxu0 0
      %2753 = vmatprep.mubr.bf16.mxu0 0
      %2754 = vmatmul.mubr.bf16.gmra.mxu0 %v2710
      %v2755 = vpop.f32.mrf.mxu0
      %v2756 = vadd.f32 %v2553, %v2755
      %v2757 = vpop.f32.mrf.mxu0
      %v2758 = vpop.f32.mrf.mxu0
      %v2759 = vadd.f32 %v2554, %v2758
      %v2760 = vpop.f32.mrf.mxu0
      %2761 = vmatprep.mubr.bf16.mxu0 0
      %2762 = vmatmul.mubr.bf16.gmra.mxu0 %v2713
      %v2763 = vpop.f32.mrf.mxu0
      %v2764 = vadd.f32 %v2555, %v2763
      %v2765 = vpop.f32.mrf.mxu0
      %v2766 = vpop.f32.mrf.mxu0
      %v2767 = vadd.f32 %v2556, %v2766
      %v2768 = vpop.f32.mrf.mxu0
      %2769 = vdwg.mxu0
      %2772 = vrot.lane.b32.xlu0 %v1129, 120
      %v2773 = vpop.permute.xlu0 %2772
      %2774 = vrot.lane.b32.xlu0 %v1130, 120
      %v2775 = vpop.permute.xlu0 %2774
      %2776 = vrot.lane.b32.xlu0 %v1145, 88
      %v2777 = vpop.permute.xlu0 %2776
      %2778 = vrot.lane.b32.xlu0 %v1146, 88
      %v2779 = vpop.permute.xlu0 %2778
      %v2781 = vsel %vm1165, %v2773, 0
      %v2784 = vsel %vm1165, %v2775, 0
      %v2787 = vsel %vm1165, %v2777, 0
      %v2790 = vsel %vm1165, %v2779, 0
      %2792 = vmatprep.subr.bf16.mxu0 0
      %2793 = vmatpush1.bf16.xpose.msra.mxu0 0
      %2794 = vmatprep.subr.bf16.mxu0 0
      %2795 = vmatpush1.bf16.xpose.msra.mxu0 0
      %2796 = vmatprep.subr.bf16.mxu0 0
      %2797 = vmatpush1.bf16.xpose.msra.mxu0 0
      %2798 = vmatprep.subr.bf16.mxu0 0
      %2799 = vmatpush1.bf16.xpose.msra.mxu0 0
      %2800 = vmatprep.subr.bf16.mxu0 0
      %2801 = vmatpush1.bf16.xpose.msra.mxu0 0
      %2802 = vmatprep.subr.bf16.mxu0 0
      %2803 = vmatpush1.bf16.xpose.msra.mxu0 0
      %2804 = vmatprep.subr.bf16.mxu0 0
      %2805 = vmatpush1.bf16.xpose.msra.mxu0 %v2790
      %2806 = vmatprep.subr.bf16.mxu0 0
      %2807 = vmatpush1.bf16.xpose.msra.mxu0 %v2787
      %2808 = vmatprep.subr.bf16.mxu0 0
      %2809 = vmatpush2.bf16.xpose.msra.mxu0 0
      %2810 = vmatprep.subr.bf16.mxu0 0
      %2811 = vmatpush2.bf16.xpose.msra.mxu0 0
      %2812 = vmatprep.subr.bf16.mxu0 0
      %2813 = vmatpush2.bf16.xpose.msra.mxu0 0
      %2814 = vmatprep.subr.bf16.mxu0 0
      %2815 = vmatpush2.bf16.xpose.msra.mxu0 0
      %2816 = vmatprep.subr.bf16.mxu0 0
      %2817 = vmatpush2.bf16.xpose.msra.mxu0 0
      %2818 = vmatprep.subr.bf16.mxu0 0
      %2819 = vmatpush2.bf16.xpose.msra.mxu0 0
      %2820 = vmatprep.subr.bf16.mxu0 0
      %2821 = vmatpush2.bf16.xpose.msra.mxu0 0
      %2822 = vmatprep.subr.bf16.mxu0 0
      %2823 = vmatpush2.bf16.xpose.msra.mxu0 0
      %2824 = vmatprep.mubr.bf16.mxu0 0
      %2825 = vmatmul.mubr.bf16.gmra.mxu0 %v2781
      %v2826 = vpop.f32.mrf.mxu0
      %v2827 = vadd.f32 %v2553, %v2826
      %v2828 = vpop.f32.mrf.mxu0
      %v2829 = vpop.f32.mrf.mxu0
      %v2830 = vadd.f32 %v2554, %v2829
      %v2831 = vpop.f32.mrf.mxu0
      %2832 = vmatprep.mubr.bf16.mxu0 0
      %2833 = vmatmul.mubr.bf16.gmra.mxu0 %v2784
      %v2834 = vpop.f32.mrf.mxu0
      %v2835 = vadd.f32 %v2555, %v2834
      %v2836 = vpop.f32.mrf.mxu0
      %v2837 = vpop.f32.mrf.mxu0
      %v2838 = vadd.f32 %v2556, %v2837
      %v2839 = vpop.f32.mrf.mxu0
      %2840 = vdwg.mxu0
      %2843 = vrot.lane.b32.xlu0 %v1131, 120
      %v2844 = vpop.permute.xlu0 %2843
      %2845 = vrot.lane.b32.xlu0 %v1132, 120
      %v2846 = vpop.permute.xlu0 %2845
      %2847 = vrot.lane.b32.xlu0 %v1147, 88
      %v2848 = vpop.permute.xlu0 %2847
      %2849 = vrot.lane.b32.xlu0 %v1148, 88
      %v2850 = vpop.permute.xlu0 %2849
      %v2852 = vsel %vm1165, %v2844, 0
      %v2855 = vsel %vm1165, %v2846, 0
      %v2858 = vsel %vm1165, %v2848, 0
      %v2861 = vsel %vm1165, %v2850, 0
      %2863 = vmatprep.subr.bf16.mxu0 0
      %2864 = vmatpush1.bf16.xpose.msra.mxu0 0
      %2865 = vmatprep.subr.bf16.mxu0 0
      %2866 = vmatpush1.bf16.xpose.msra.mxu0 0
      %2867 = vmatprep.subr.bf16.mxu0 0
      %2868 = vmatpush1.bf16.xpose.msra.mxu0 0
      %2869 = vmatprep.subr.bf16.mxu0 0
      %2870 = vmatpush1.bf16.xpose.msra.mxu0 0
      %2871 = vmatprep.subr.bf16.mxu0 0
      %2872 = vmatpush1.bf16.xpose.msra.mxu0 0
      %2873 = vmatprep.subr.bf16.mxu0 0
      %2874 = vmatpush1.bf16.xpose.msra.mxu0 0
      %2875 = vmatprep.subr.bf16.mxu0 0
      %2876 = vmatpush1.bf16.xpose.msra.mxu0 %v2861
      %2877 = vmatprep.subr.bf16.mxu0 0
      %2878 = vmatpush1.bf16.xpose.msra.mxu0 %v2858
      %2879 = vmatprep.subr.bf16.mxu0 0
      %2880 = vmatpush2.bf16.xpose.msra.mxu0 0
      %2881 = vmatprep.subr.bf16.mxu0 0
      %2882 = vmatpush2.bf16.xpose.msra.mxu0 0
      %2883 = vmatprep.subr.bf16.mxu0 0
      %2884 = vmatpush2.bf16.xpose.msra.mxu0 0
      %2885 = vmatprep.subr.bf16.mxu0 0
      %2886 = vmatpush2.bf16.xpose.msra.mxu0 0
      %2887 = vmatprep.subr.bf16.mxu0 0
      %2888 = vmatpush2.bf16.xpose.msra.mxu0 0
      %2889 = vmatprep.subr.bf16.mxu0 0
      %2890 = vmatpush2.bf16.xpose.msra.mxu0 0
      %2891 = vmatprep.subr.bf16.mxu0 0
      %2892 = vmatpush2.bf16.xpose.msra.mxu0 0
      %2893 = vmatprep.subr.bf16.mxu0 0
      %2894 = vmatpush2.bf16.xpose.msra.mxu0 0
      %2895 = vmatprep.mubr.bf16.mxu0 0
      %2896 = vmatmul.mubr.bf16.gmra.mxu0 %v2852
      %v2897 = vpop.f32.mrf.mxu0
      %v2898 = vadd.f32 %v2553, %v2897
      %v2899 = vpop.f32.mrf.mxu0
      %v2900 = vpop.f32.mrf.mxu0
      %v2901 = vadd.f32 %v2554, %v2900
      %v2902 = vpop.f32.mrf.mxu0
      %2903 = vmatprep.mubr.bf16.mxu0 0
      %2904 = vmatmul.mubr.bf16.gmra.mxu0 %v2855
      %v2905 = vpop.f32.mrf.mxu0
      %v2906 = vadd.f32 %v2555, %v2905
      %v2907 = vpop.f32.mrf.mxu0
      %v2908 = vpop.f32.mrf.mxu0
      %v2909 = vadd.f32 %v2556, %v2908
      %v2910 = vpop.f32.mrf.mxu0
      %2911 = vdwg.mxu0
      %2914 = vrot.lane.b32.xlu0 %v1133, 120
      %v2915 = vpop.permute.xlu0 %2914
      %2916 = vrot.lane.b32.xlu0 %v1134, 120
      %v2917 = vpop.permute.xlu0 %2916
      %2918 = vrot.lane.b32.xlu0 %v1149, 88
      %v2919 = vpop.permute.xlu0 %2918
      %2920 = vrot.lane.b32.xlu0 %v1150, 88
      %v2921 = vpop.permute.xlu0 %2920
      %v2923 = vsel %vm1165, %v2915, 0
      %v2926 = vsel %vm1165, %v2917, 0
      %v2929 = vsel %vm1165, %v2919, 0
      %v2932 = vsel %vm1165, %v2921, 0
      %2934 = vmatprep.subr.bf16.mxu0 0
      %2935 = vmatpush1.bf16.xpose.msra.mxu0 0
      %2936 = vmatprep.subr.bf16.mxu0 0
      %2937 = vmatpush1.bf16.xpose.msra.mxu0 0
      %2938 = vmatprep.subr.bf16.mxu0 0
      %2939 = vmatpush1.bf16.xpose.msra.mxu0 0
      %2940 = vmatprep.subr.bf16.mxu0 0
      %2941 = vmatpush1.bf16.xpose.msra.mxu0 0
      %2942 = vmatprep.subr.bf16.mxu0 0
      %2943 = vmatpush1.bf16.xpose.msra.mxu0 0
      %2944 = vmatprep.subr.bf16.mxu0 0
      %2945 = vmatpush1.bf16.xpose.msra.mxu0 0
      %2946 = vmatprep.subr.bf16.mxu0 0
      %2947 = vmatpush1.bf16.xpose.msra.mxu0 %v2932
      %2948 = vmatprep.subr.bf16.mxu0 0
      %2949 = vmatpush1.bf16.xpose.msra.mxu0 %v2929
      %2950 = vmatprep.subr.bf16.mxu0 0
      %2951 = vmatpush2.bf16.xpose.msra.mxu0 0
      %2952 = vmatprep.subr.bf16.mxu0 0
      %2953 = vmatpush2.bf16.xpose.msra.mxu0 0
      %2954 = vmatprep.subr.bf16.mxu0 0
      %2955 = vmatpush2.bf16.xpose.msra.mxu0 0
      %2956 = vmatprep.subr.bf16.mxu0 0
      %2957 = vmatpush2.bf16.xpose.msra.mxu0 0
      %2958 = vmatprep.subr.bf16.mxu0 0
      %2959 = vmatpush2.bf16.xpose.msra.mxu0 0
      %2960 = vmatprep.subr.bf16.mxu0 0
      %2961 = vmatpush2.bf16.xpose.msra.mxu0 0
      %2962 = vmatprep.subr.bf16.mxu0 0
      %2963 = vmatpush2.bf16.xpose.msra.mxu0 0
      %2964 = vmatprep.subr.bf16.mxu0 0
      %2965 = vmatpush2.bf16.xpose.msra.mxu0 0
      %2966 = vmatprep.mubr.bf16.mxu0 0
      %2967 = vmatmul.mubr.bf16.gmra.mxu0 %v2923
      %v2968 = vpop.f32.mrf.mxu0
      %v2969 = vadd.f32 %v2553, %v2968
      %v2970 = vpop.f32.mrf.mxu0
      %v2971 = vpop.f32.mrf.mxu0
      %v2972 = vadd.f32 %v2554, %v2971
      %v2973 = vpop.f32.mrf.mxu0
      %2974 = vmatprep.mubr.bf16.mxu0 0
      %2975 = vmatmul.mubr.bf16.gmra.mxu0 %v2926
      %v2976 = vpop.f32.mrf.mxu0
      %v2977 = vadd.f32 %v2555, %v2976
      %v2978 = vpop.f32.mrf.mxu0
      %v2979 = vpop.f32.mrf.mxu0
      %v2980 = vadd.f32 %v2556, %v2979
      %v2981 = vpop.f32.mrf.mxu0
      %2982 = vdwg.mxu0
      %2985 = vrot.lane.b32.xlu0 %v1135, 120
      %v2986 = vpop.permute.xlu0 %2985
      %2987 = vrot.lane.b32.xlu0 %v1136, 120
      %v2988 = vpop.permute.xlu0 %2987
      %2989 = vrot.lane.b32.xlu0 %v1151, 88
      %v2990 = vpop.permute.xlu0 %2989
      %2991 = vrot.lane.b32.xlu0 %v1152, 88
      %v2992 = vpop.permute.xlu0 %2991
      %v2994 = vsel %vm1165, %v2986, 0
      %v2997 = vsel %vm1165, %v2988, 0
      %v3000 = vsel %vm1165, %v2990, 0
      %v3003 = vsel %vm1165, %v2992, 0
      %3005 = vmatprep.subr.bf16.mxu0 0
      %3006 = vmatpush1.bf16.xpose.msra.mxu0 0
      %3007 = vmatprep.subr.bf16.mxu0 0
      %3008 = vmatpush1.bf16.xpose.msra.mxu0 0
      %3009 = vmatprep.subr.bf16.mxu0 0
      %3010 = vmatpush1.bf16.xpose.msra.mxu0 0
      %3011 = vmatprep.subr.bf16.mxu0 0
      %3012 = vmatpush1.bf16.xpose.msra.mxu0 0
      %3013 = vmatprep.subr.bf16.mxu0 0
      %3014 = vmatpush1.bf16.xpose.msra.mxu0 0
      %3015 = vmatprep.subr.bf16.mxu0 0
      %3016 = vmatpush1.bf16.xpose.msra.mxu0 0
      %3017 = vmatprep.subr.bf16.mxu0 0
      %3018 = vmatpush1.bf16.xpose.msra.mxu0 %v3003
      %3019 = vmatprep.subr.bf16.mxu0 0
      %3020 = vmatpush1.bf16.xpose.msra.mxu0 %v3000
      %3021 = vmatprep.subr.bf16.mxu0 0
      %3022 = vmatpush2.bf16.xpose.msra.mxu0 0
      %3023 = vmatprep.subr.bf16.mxu0 0
      %3024 = vmatpush2.bf16.xpose.msra.mxu0 0
      %3025 = vmatprep.subr.bf16.mxu0 0
      %3026 = vmatpush2.bf16.xpose.msra.mxu0 0
      %3027 = vmatprep.subr.bf16.mxu0 0
      %3028 = vmatpush2.bf16.xpose.msra.mxu0 0
      %3029 = vmatprep.subr.bf16.mxu0 0
      %3030 = vmatpush2.bf16.xpose.msra.mxu0 0
      %3031 = vmatprep.subr.bf16.mxu0 0
      %3032 = vmatpush2.bf16.xpose.msra.mxu0 0
      %3033 = vmatprep.subr.bf16.mxu0 0
      %3034 = vmatpush2.bf16.xpose.msra.mxu0 0
      %3035 = vmatprep.subr.bf16.mxu0 0
      %3036 = vmatpush2.bf16.xpose.msra.mxu0 0
      %3037 = vmatprep.mubr.bf16.mxu0 0
      %3038 = vmatmul.mubr.bf16.gmra.mxu0 %v2994
      %v3039 = vpop.f32.mrf.mxu0
      %v3040 = vadd.f32 %v2553, %v3039
      %v3041 = vpop.f32.mrf.mxu0
      %v3042 = vpop.f32.mrf.mxu0
      %v3043 = vadd.f32 %v2554, %v3042
      %v3044 = vpop.f32.mrf.mxu0
      %3045 = vmatprep.mubr.bf16.mxu0 0
      %3046 = vmatmul.mubr.bf16.gmra.mxu0 %v2997
      %v3047 = vpop.f32.mrf.mxu0
      %v3048 = vadd.f32 %v2555, %v3047
      %v3049 = vpop.f32.mrf.mxu0
      %v3050 = vpop.f32.mrf.mxu0
      %v3051 = vadd.f32 %v2556, %v3050
      %v3052 = vpop.f32.mrf.mxu0
      %3053 = vdwg.mxu0
      %3056 = vrot.lane.b32.xlu0 %v1137, 120
      %v3057 = vpop.permute.xlu0 %3056
      %3058 = vrot.lane.b32.xlu0 %v1138, 120
      %v3059 = vpop.permute.xlu0 %3058
      %3060 = vrot.lane.b32.xlu0 %v1153, 88
      %v3061 = vpop.permute.xlu0 %3060
      %3062 = vrot.lane.b32.xlu0 %v1154, 88
      %v3063 = vpop.permute.xlu0 %3062
      %v3065 = vsel %vm1165, %v3057, 0
      %v3068 = vsel %vm1165, %v3059, 0
      %v3071 = vsel %vm1165, %v3061, 0
      %v3074 = vsel %vm1165, %v3063, 0
      %3076 = vmatprep.subr.bf16.mxu0 0
      %3077 = vmatpush1.bf16.xpose.msra.mxu0 0
      %3078 = vmatprep.subr.bf16.mxu0 0
      %3079 = vmatpush1.bf16.xpose.msra.mxu0 0
      %3080 = vmatprep.subr.bf16.mxu0 0
      %3081 = vmatpush1.bf16.xpose.msra.mxu0 0
      %3082 = vmatprep.subr.bf16.mxu0 0
      %3083 = vmatpush1.bf16.xpose.msra.mxu0 0
      %3084 = vmatprep.subr.bf16.mxu0 0
      %3085 = vmatpush1.bf16.xpose.msra.mxu0 0
      %3086 = vmatprep.subr.bf16.mxu0 0
      %3087 = vmatpush1.bf16.xpose.msra.mxu0 0
      %3088 = vmatprep.subr.bf16.mxu0 0
      %3089 = vmatpush1.bf16.xpose.msra.mxu0 %v3074
      %3090 = vmatprep.subr.bf16.mxu0 0
      %3091 = vmatpush1.bf16.xpose.msra.mxu0 %v3071
      %3092 = vmatprep.subr.bf16.mxu0 0
      %3093 = vmatpush2.bf16.xpose.msra.mxu0 0
      %3094 = vmatprep.subr.bf16.mxu0 0
      %3095 = vmatpush2.bf16.xpose.msra.mxu0 0
      %3096 = vmatprep.subr.bf16.mxu0 0
      %3097 = vmatpush2.bf16.xpose.msra.mxu0 0
      %3098 = vmatprep.subr.bf16.mxu0 0
      %3099 = vmatpush2.bf16.xpose.msra.mxu0 0
      %3100 = vmatprep.subr.bf16.mxu0 0
      %3101 = vmatpush2.bf16.xpose.msra.mxu0 0
      %3102 = vmatprep.subr.bf16.mxu0 0
      %3103 = vmatpush2.bf16.xpose.msra.mxu0 0
      %3104 = vmatprep.subr.bf16.mxu0 0
      %3105 = vmatpush2.bf16.xpose.msra.mxu0 0
      %3106 = vmatprep.subr.bf16.mxu0 0
      %3107 = vmatpush2.bf16.xpose.msra.mxu0 0
      %3108 = vmatprep.mubr.bf16.mxu0 0
      %3109 = vmatmul.mubr.bf16.gmra.mxu0 %v3065
      %v3110 = vpop.f32.mrf.mxu0
      %v3111 = vadd.f32 %v2553, %v3110
      %v3112 = vpop.f32.mrf.mxu0
      %v3113 = vpop.f32.mrf.mxu0
      %v3114 = vadd.f32 %v2554, %v3113
      %v3115 = vpop.f32.mrf.mxu0
      %3116 = vmatprep.mubr.bf16.mxu0 0
      %3117 = vmatmul.mubr.bf16.gmra.mxu0 %v3068
      %v3118 = vpop.f32.mrf.mxu0
      %v3119 = vadd.f32 %v2555, %v3118
      %v3120 = vpop.f32.mrf.mxu0
      %v3121 = vpop.f32.mrf.mxu0
      %v3122 = vadd.f32 %v2556, %v3121
      %v3123 = vpop.f32.mrf.mxu0
      %3124 = vdwg.mxu0
      %v3125 = vsel %vm347, %v2614, -inf
      %3126 = vmax.xlane.f32.xlu0 %v3125
      %v3127 = vpop.xlane.xlu0 %3126
      %v3128 = vsel %vm347, %v2617, -inf
      %3129 = vmax.xlane.f32.xlu0 %v3128
      %v3130 = vpop.xlane.xlu0 %3129
      %v3131 = vsel %vm347, %v2622, -inf
      %3132 = vmax.xlane.f32.xlu0 %v3131
      %v3133 = vpop.xlane.xlu0 %3132
      %v3134 = vsel %vm347, %v2625, -inf
      %3135 = vmax.xlane.f32.xlu0 %v3134
      %v3136 = vpop.xlane.xlu0 %3135
      %v3137 = vsel %vm347, %v2685, -inf
      %3138 = vmax.xlane.f32.xlu0 %v3137
      %v3139 = vpop.xlane.xlu0 %3138
      %v3140 = vsel %vm347, %v2688, -inf
      %3141 = vmax.xlane.f32.xlu0 %v3140
      %v3142 = vpop.xlane.xlu0 %3141
      %v3143 = vsel %vm347, %v2693, -inf
      %3144 = vmax.xlane.f32.xlu0 %v3143
      %v3145 = vpop.xlane.xlu0 %3144
      %v3146 = vsel %vm347, %v2696, -inf
      %3147 = vmax.xlane.f32.xlu0 %v3146
      %v3148 = vpop.xlane.xlu0 %3147
      %v3149 = vsel %vm347, %v2756, -inf
      %3150 = vmax.xlane.f32.xlu0 %v3149
      %v3151 = vpop.xlane.xlu0 %3150
      %v3152 = vsel %vm347, %v2759, -inf
      %3153 = vmax.xlane.f32.xlu0 %v3152
      %v3154 = vpop.xlane.xlu0 %3153
      %v3155 = vsel %vm347, %v2764, -inf
      %3156 = vmax.xlane.f32.xlu0 %v3155
      %v3157 = vpop.xlane.xlu0 %3156
      %v3158 = vsel %vm347, %v2767, -inf
      %3159 = vmax.xlane.f32.xlu0 %v3158
      %v3160 = vpop.xlane.xlu0 %3159
      %v3161 = vsel %vm347, %v2827, -inf
      %3162 = vmax.xlane.f32.xlu0 %v3161
      %v3163 = vpop.xlane.xlu0 %3162
      %v3164 = vsel %vm347, %v2830, -inf
      %3165 = vmax.xlane.f32.xlu0 %v3164
      %v3166 = vpop.xlane.xlu0 %3165
      %v3167 = vsel %vm347, %v2835, -inf
      %3168 = vmax.xlane.f32.xlu0 %v3167
      %v3169 = vpop.xlane.xlu0 %3168
      %v3170 = vsel %vm347, %v2838, -inf
      %3171 = vmax.xlane.f32.xlu0 %v3170
      %v3172 = vpop.xlane.xlu0 %3171
      %v3173 = vsel %vm347, %v2898, -inf
      %3174 = vmax.xlane.f32.xlu0 %v3173
      %v3175 = vpop.xlane.xlu0 %3174
      %v3176 = vsel %vm347, %v2901, -inf
      %3177 = vmax.xlane.f32.xlu0 %v3176
      %v3178 = vpop.xlane.xlu0 %3177
      %v3179 = vsel %vm347, %v2906, -inf
      %3180 = vmax.xlane.f32.xlu0 %v3179
      %v3181 = vpop.xlane.xlu0 %3180
      %v3182 = vsel %vm347, %v2909, -inf
      %3183 = vmax.xlane.f32.xlu0 %v3182
      %v3184 = vpop.xlane.xlu0 %3183
      %v3185 = vsel %vm347, %v2969, -inf
      %3186 = vmax.xlane.f32.xlu0 %v3185
      %v3187 = vpop.xlane.xlu0 %3186
      %v3188 = vsel %vm347, %v2972, -inf
      %3189 = vmax.xlane.f32.xlu0 %v3188
      %v3190 = vpop.xlane.xlu0 %3189
      %v3191 = vsel %vm347, %v2977, -inf
      %3192 = vmax.xlane.f32.xlu0 %v3191
      %v3193 = vpop.xlane.xlu0 %3192
      %v3194 = vsel %vm347, %v2980, -inf
      %3195 = vmax.xlane.f32.xlu0 %v3194
      %v3196 = vpop.xlane.xlu0 %3195
      %v3197 = vsel %vm347, %v3040, -inf
      %3198 = vmax.xlane.f32.xlu0 %v3197
      %v3199 = vpop.xlane.xlu0 %3198
      %v3200 = vsel %vm347, %v3043, -inf
      %3201 = vmax.xlane.f32.xlu0 %v3200
      %v3202 = vpop.xlane.xlu0 %3201
      %v3203 = vsel %vm347, %v3048, -inf
      %3204 = vmax.xlane.f32.xlu0 %v3203
      %v3205 = vpop.xlane.xlu0 %3204
      %v3206 = vsel %vm347, %v3051, -inf
      %3207 = vmax.xlane.f32.xlu0 %v3206
      %v3208 = vpop.xlane.xlu0 %3207
      %v3209 = vsel %vm347, %v3111, -inf
      %3210 = vmax.xlane.f32.xlu0 %v3209
      %v3211 = vpop.xlane.xlu0 %3210
      %v3212 = vsel %vm347, %v3114, -inf
      %3213 = vmax.xlane.f32.xlu0 %v3212
      %v3214 = vpop.xlane.xlu0 %3213
      %v3215 = vsel %vm347, %v3119, -inf
      %3216 = vmax.xlane.f32.xlu0 %v3215
      %v3217 = vpop.xlane.xlu0 %3216
      %v3218 = vsel %vm347, %v3122, -inf
      %3219 = vmax.xlane.f32.xlu0 %v3218
      %v3220 = vpop.xlane.xlu0 %3219
      %v3221 = vsub.f32 %v2614, %v3127
      %v3222 = vsub.f32 %v2617, %v3130
      %v3223 = vsub.f32 %v2622, %v3133
      %v3224 = vsub.f32 %v2625, %v3136
      %v3225 = vsub.f32 %v2685, %v3139
      %v3226 = vsub.f32 %v2688, %v3142
      %v3227 = vsub.f32 %v2693, %v3145
      %v3228 = vsub.f32 %v2696, %v3148
      %v3229 = vsub.f32 %v2756, %v3151
      %v3230 = vsub.f32 %v2759, %v3154
      %v3231 = vsub.f32 %v2764, %v3157
      %v3232 = vsub.f32 %v2767, %v3160
      %v3233 = vsub.f32 %v2827, %v3163
      %v3234 = vsub.f32 %v2830, %v3166
      %v3235 = vsub.f32 %v2835, %v3169
      %v3236 = vsub.f32 %v2838, %v3172
      %v3237 = vsub.f32 %v2898, %v3175
      %v3238 = vsub.f32 %v2901, %v3178
      %v3239 = vsub.f32 %v2906, %v3181
      %v3240 = vsub.f32 %v2909, %v3184
      %v3241 = vsub.f32 %v2969, %v3187
      %v3242 = vsub.f32 %v2972, %v3190
      %v3243 = vsub.f32 %v2977, %v3193
      %v3244 = vsub.f32 %v2980, %v3196
      %v3245 = vsub.f32 %v3040, %v3199
      %v3246 = vsub.f32 %v3043, %v3202
      %v3247 = vsub.f32 %v3048, %v3205
      %v3248 = vsub.f32 %v3051, %v3208
      %v3249 = vsub.f32 %v3111, %v3211
      %v3250 = vsub.f32 %v3114, %v3214
      %v3251 = vsub.f32 %v3119, %v3217
      %v3252 = vsub.f32 %v3122, %v3220
      %v3253 = vmul.f32 %v3221, 1.442695
      %v3254 = vpow.pop %v3253
      %v3255 = vmul.f32 %v3222, 1.442695
      %v3256 = vpow.pop %v3255
      %v3257 = vmul.f32 %v3223, 1.442695
      %v3258 = vpow.pop %v3257
      %v3259 = vmul.f32 %v3224, 1.442695
      %v3260 = vpow.pop %v3259
      %v3261 = vmul.f32 %v3225, 1.442695
      %v3262 = vpow.pop %v3261
      %v3263 = vmul.f32 %v3226, 1.442695
      %v3264 = vpow.pop %v3263
      %v3265 = vmul.f32 %v3227, 1.442695
      %v3266 = vpow.pop %v3265
      %v3267 = vmul.f32 %v3228, 1.442695
      %v3268 = vpow.pop %v3267
      %v3269 = vmul.f32 %v3229, 1.442695
      %v3270 = vpow.pop %v3269
      %v3271 = vmul.f32 %v3230, 1.442695
      %v3272 = vpow.pop %v3271
      %v3273 = vmul.f32 %v3231, 1.442695
      %v3274 = vpow.pop %v3273
      %v3275 = vmul.f32 %v3232, 1.442695
      %v3276 = vpow.pop %v3275
      %v3277 = vmul.f32 %v3233, 1.442695
      %v3278 = vpow.pop %v3277
      %v3279 = vmul.f32 %v3234, 1.442695
      %v3280 = vpow.pop %v3279
      %v3281 = vmul.f32 %v3235, 1.442695
      %v3282 = vpow.pop %v3281
      %v3283 = vmul.f32 %v3236, 1.442695
      %v3284 = vpow.pop %v3283
      %v3285 = vmul.f32 %v3237, 1.442695
      %v3286 = vpow.pop %v3285
      %v3287 = vmul.f32 %v3238, 1.442695
      %v3288 = vpow.pop %v3287
      %v3289 = vmul.f32 %v3239, 1.442695
      %v3290 = vpow.pop %v3289
      %v3291 = vmul.f32 %v3240, 1.442695
      %v3292 = vpow.pop %v3291
      %v3293 = vmul.f32 %v3241, 1.442695
      %v3294 = vpow.pop %v3293
      %v3295 = vmul.f32 %v3242, 1.442695
      %v3296 = vpow.pop %v3295
      %v3297 = vmul.f32 %v3243, 1.442695
      %v3298 = vpow.pop %v3297
      %v3299 = vmul.f32 %v3244, 1.442695
      %v3300 = vpow.pop %v3299
      %v3301 = vmul.f32 %v3245, 1.442695
      %v3302 = vpow.pop %v3301
      %v3303 = vmul.f32 %v3246, 1.442695
      %v3304 = vpow.pop %v3303
      %v3305 = vmul.f32 %v3247, 1.442695
      %v3306 = vpow.pop %v3305
      %v3307 = vmul.f32 %v3248, 1.442695
      %v3308 = vpow.pop %v3307
      %v3309 = vmul.f32 %v3249, 1.442695
      %v3310 = vpow.pop %v3309
      %v3311 = vmul.f32 %v3250, 1.442695
      %v3312 = vpow.pop %v3311
      %v3313 = vmul.f32 %v3251, 1.442695
      %v3314 = vpow.pop %v3313
      %v3315 = vmul.f32 %v3252, 1.442695
      %v3316 = vpow.pop %v3315
      %v3317 = vsel %vm347, %v3254, 0.0
      %3318 = vadd.xlane.f32.xlu0 %v3317
      %v3319 = vpop.xlane.xlu0 %3318
      %v3320 = vsel %vm347, %v3256, 0.0
      %3321 = vadd.xlane.f32.xlu0 %v3320
      %v3322 = vpop.xlane.xlu0 %3321
      %v3323 = vsel %vm347, %v3258, 0.0
      %3324 = vadd.xlane.f32.xlu0 %v3323
      %v3325 = vpop.xlane.xlu0 %3324
      %v3326 = vsel %vm347, %v3260, 0.0
      %3327 = vadd.xlane.f32.xlu0 %v3326
      %v3328 = vpop.xlane.xlu0 %3327
      %v3329 = vsel %vm347, %v3262, 0.0
      %3330 = vadd.xlane.f32.xlu0 %v3329
      %v3331 = vpop.xlane.xlu0 %3330
      %v3332 = vsel %vm347, %v3264, 0.0
      %3333 = vadd.xlane.f32.xlu0 %v3332
      %v3334 = vpop.xlane.xlu0 %3333
      %v3335 = vsel %vm347, %v3266, 0.0
      %3336 = vadd.xlane.f32.xlu0 %v3335
      %v3337 = vpop.xlane.xlu0 %3336
      %v3338 = vsel %vm347, %v3268, 0.0
      %3339 = vadd.xlane.f32.xlu0 %v3338
      %v3340 = vpop.xlane.xlu0 %3339
      %v3341 = vsel %vm347, %v3270, 0.0
      %3342 = vadd.xlane.f32.xlu0 %v3341
      %v3343 = vpop.xlane.xlu0 %3342
      %v3344 = vsel %vm347, %v3272, 0.0
      %3345 = vadd.xlane.f32.xlu0 %v3344
      %v3346 = vpop.xlane.xlu0 %3345
      %v3347 = vsel %vm347, %v3274, 0.0
      %3348 = vadd.xlane.f32.xlu0 %v3347
      %v3349 = vpop.xlane.xlu0 %3348
      %v3350 = vsel %vm347, %v3276, 0.0
      %3351 = vadd.xlane.f32.xlu0 %v3350
      %v3352 = vpop.xlane.xlu0 %3351
      %v3353 = vsel %vm347, %v3278, 0.0
      %3354 = vadd.xlane.f32.xlu0 %v3353
      %v3355 = vpop.xlane.xlu0 %3354
      %v3356 = vsel %vm347, %v3280, 0.0
      %3357 = vadd.xlane.f32.xlu0 %v3356
      %v3358 = vpop.xlane.xlu0 %3357
      %v3359 = vsel %vm347, %v3282, 0.0
      %3360 = vadd.xlane.f32.xlu0 %v3359
      %v3361 = vpop.xlane.xlu0 %3360
      %v3362 = vsel %vm347, %v3284, 0.0
      %3363 = vadd.xlane.f32.xlu0 %v3362
      %v3364 = vpop.xlane.xlu0 %3363
      %v3365 = vsel %vm347, %v3286, 0.0
      %3366 = vadd.xlane.f32.xlu0 %v3365
      %v3367 = vpop.xlane.xlu0 %3366
      %v3368 = vsel %vm347, %v3288, 0.0
      %3369 = vadd.xlane.f32.xlu0 %v3368
      %v3370 = vpop.xlane.xlu0 %3369
      %v3371 = vsel %vm347, %v3290, 0.0
      %3372 = vadd.xlane.f32.xlu0 %v3371
      %v3373 = vpop.xlane.xlu0 %3372
      %v3374 = vsel %vm347, %v3292, 0.0
      %3375 = vadd.xlane.f32.xlu0 %v3374
      %v3376 = vpop.xlane.xlu0 %3375
      %v3377 = vsel %vm347, %v3294, 0.0
      %3378 = vadd.xlane.f32.xlu0 %v3377
      %v3379 = vpop.xlane.xlu0 %3378
      %v3380 = vsel %vm347, %v3296, 0.0
      %3381 = vadd.xlane.f32.xlu0 %v3380
      %v3382 = vpop.xlane.xlu0 %3381
      %v3383 = vsel %vm347, %v3298, 0.0
      %3384 = vadd.xlane.f32.xlu0 %v3383
      %v3385 = vpop.xlane.xlu0 %3384
      %v3386 = vsel %vm347, %v3300, 0.0
      %3387 = vadd.xlane.f32.xlu0 %v3386
      %v3388 = vpop.xlane.xlu0 %3387
      %v3389 = vsel %vm347, %v3302, 0.0
      %3390 = vadd.xlane.f32.xlu0 %v3389
      %v3391 = vpop.xlane.xlu0 %3390
      %v3392 = vsel %vm347, %v3304, 0.0
      %3393 = vadd.xlane.f32.xlu0 %v3392
      %v3394 = vpop.xlane.xlu0 %3393
      %v3395 = vsel %vm347, %v3306, 0.0
      %3396 = vadd.xlane.f32.xlu0 %v3395
      %v3397 = vpop.xlane.xlu0 %3396
      %v3398 = vsel %vm347, %v3308, 0.0
      %3399 = vadd.xlane.f32.xlu0 %v3398
      %v3400 = vpop.xlane.xlu0 %3399
      %v3401 = vsel %vm347, %v3310, 0.0
      %3402 = vadd.xlane.f32.xlu0 %v3401
      %v3403 = vpop.xlane.xlu0 %3402
      %v3404 = vsel %vm347, %v3312, 0.0
      %3405 = vadd.xlane.f32.xlu0 %v3404
      %v3406 = vpop.xlane.xlu0 %3405
      %v3407 = vsel %vm347, %v3314, 0.0
      %3408 = vadd.xlane.f32.xlu0 %v3407
      %v3409 = vpop.xlane.xlu0 %3408
      %v3410 = vsel %vm347, %v3316, 0.0
      %3411 = vadd.xlane.f32.xlu0 %v3410
      %v3412 = vpop.xlane.xlu0 %3411
      %v3413 = vrcp.pop %v3319
      %v3414 = vrcp.pop %v3322
      %v3415 = vrcp.pop %v3325
      %v3416 = vrcp.pop %v3328
      %v3417 = vrcp.pop %v3331
      %v3418 = vrcp.pop %v3334
      %v3419 = vrcp.pop %v3337
      %v3420 = vrcp.pop %v3340
      %v3421 = vrcp.pop %v3343
      %v3422 = vrcp.pop %v3346
      %v3423 = vrcp.pop %v3349
      %v3424 = vrcp.pop %v3352
      %v3425 = vrcp.pop %v3355
      %v3426 = vrcp.pop %v3358
      %v3427 = vrcp.pop %v3361
      %v3428 = vrcp.pop %v3364
      %v3429 = vrcp.pop %v3367
      %v3430 = vrcp.pop %v3370
      %v3431 = vrcp.pop %v3373
      %v3432 = vrcp.pop %v3376
      %v3433 = vrcp.pop %v3379
      %v3434 = vrcp.pop %v3382
      %v3435 = vrcp.pop %v3385
      %v3436 = vrcp.pop %v3388
      %v3437 = vrcp.pop %v3391
      %v3438 = vrcp.pop %v3394
      %v3439 = vrcp.pop %v3397
      %v3440 = vrcp.pop %v3400
      %v3441 = vrcp.pop %v3403
      %v3442 = vrcp.pop %v3406
      %v3443 = vrcp.pop %v3409
      %v3444 = vrcp.pop %v3412
      %v3445 = vmul.f32 %v3254, %v3413
      %v3446 = vmul.f32 %v3256, %v3414
      %v3447 = vmul.f32 %v3258, %v3415
      %v3448 = vmul.f32 %v3260, %v3416
      %v3449 = vmul.f32 %v3262, %v3417
      %v3450 = vmul.f32 %v3264, %v3418
      %v3451 = vmul.f32 %v3266, %v3419
      %v3452 = vmul.f32 %v3268, %v3420
      %v3453 = vmul.f32 %v3270, %v3421
      %v3454 = vmul.f32 %v3272, %v3422
      %v3455 = vmul.f32 %v3274, %v3423
      %v3456 = vmul.f32 %v3276, %v3424
      %v3457 = vmul.f32 %v3278, %v3425
      %v3458 = vmul.f32 %v3280, %v3426
      %v3459 = vmul.f32 %v3282, %v3427
      %v3460 = vmul.f32 %v3284, %v3428
      %v3461 = vmul.f32 %v3286, %v3429
      %v3462 = vmul.f32 %v3288, %v3430
      %v3463 = vmul.f32 %v3290, %v3431
      %v3464 = vmul.f32 %v3292, %v3432
      %v3465 = vmul.f32 %v3294, %v3433
      %v3466 = vmul.f32 %v3296, %v3434
      %v3467 = vmul.f32 %v3298, %v3435
      %v3468 = vmul.f32 %v3300, %v3436
      %v3469 = vmul.f32 %v3302, %v3437
      %v3470 = vmul.f32 %v3304, %v3438
      %v3471 = vmul.f32 %v3306, %v3439
      %v3472 = vmul.f32 %v3308, %v3440
      %v3473 = vmul.f32 %v3310, %v3441
      %v3474 = vmul.f32 %v3312, %v3442
      %v3475 = vmul.f32 %v3314, %v3443
      %v3476 = vmul.f32 %v3316, %v3444
      %v3477 = vpack.c.bf16 %v3446, %v3445
      %v3478 = vpack.c.bf16 %v3448, %v3447
      %v3479 = vpack.c.bf16 %v3450, %v3449
      %v3480 = vpack.c.bf16 %v3452, %v3451
      %v3481 = vpack.c.bf16 %v3454, %v3453
      %v3482 = vpack.c.bf16 %v3456, %v3455
      %v3483 = vpack.c.bf16 %v3458, %v3457
      %v3484 = vpack.c.bf16 %v3460, %v3459
      %v3485 = vpack.c.bf16 %v3462, %v3461
      %v3486 = vpack.c.bf16 %v3464, %v3463
      %v3487 = vpack.c.bf16 %v3466, %v3465
      %v3488 = vpack.c.bf16 %v3468, %v3467
      %v3489 = vpack.c.bf16 %v3470, %v3469
      %v3490 = vpack.c.bf16 %v3472, %v3471
      %v3491 = vpack.c.bf16 %v3474, %v3473
      %v3492 = vpack.c.bf16 %v3476, %v3475
      %3493 = vrot.lane.b32.xlu0 %v1139, 56
      %v3494 = vpop.permute.xlu0 %3493
      %3495 = vrot.lane.b32.xlu0 %v1140, 56
      %v3496 = vpop.permute.xlu0 %3495
      %v3500 = vsel %vm347, %v3477, 0
      %v3503 = vsel %vm347, %v3478, 0
      %3505 = vmatprep.subr.bf16.mxu0 0
      %3506 = vmatpush1.bf16.msra.mxu0 0
      %3507 = vmatprep.subr.bf16.mxu0 0
      %3508 = vmatpush1.bf16.msra.mxu0 0
      %3509 = vmatprep.subr.bf16.mxu0 0
      %3510 = vmatpush1.bf16.msra.mxu0 0
      %3511 = vmatprep.subr.bf16.mxu0 0
      %3512 = vmatpush1.bf16.msra.mxu0 0
      %3513 = vmatprep.subr.bf16.mxu0 0
      %3514 = vmatpush1.bf16.msra.mxu0 0
      %3515 = vmatprep.subr.bf16.mxu0 0
      %3516 = vmatpush1.bf16.msra.mxu0 0
      %3517 = vmatprep.subr.bf16.mxu0 0
      %3518 = vmatpush1.bf16.msra.mxu0 %v3496
      %3519 = vmatprep.subr.bf16.mxu0 0
      %3520 = vmatpush1.bf16.msra.mxu0 %v3494
      %3521 = vmatprep.subr.bf16.mxu0 0
      %3522 = vmatpush2.bf16.msra.mxu0 0
      %3523 = vmatprep.subr.bf16.mxu0 0
      %3524 = vmatpush2.bf16.msra.mxu0 0
      %3525 = vmatprep.subr.bf16.mxu0 0
      %3526 = vmatpush2.bf16.msra.mxu0 0
      %3527 = vmatprep.subr.bf16.mxu0 0
      %3528 = vmatpush2.bf16.msra.mxu0 0
      %3529 = vmatprep.subr.bf16.mxu0 0
      %3530 = vmatpush2.bf16.msra.mxu0 0
      %3531 = vmatprep.subr.bf16.mxu0 0
      %3532 = vmatpush2.bf16.msra.mxu0 0
      %3533 = vmatprep.subr.bf16.mxu0 0
      %3534 = vmatpush2.bf16.msra.mxu0 0
      %3535 = vmatprep.subr.bf16.mxu0 0
      %3536 = vmatpush2.bf16.msra.mxu0 0
      %3537 = vmatprep.mubr.bf16.mxu0 0
      %3538 = vmatmul.mubr.bf16.gmra.mxu0 %v3500
      %v3539 = vpop.f32.mrf.mxu0
      %v3540 = vadd.f32 0.0, %v3539
      %v3541 = vpop.f32.mrf.mxu0
      %v3542 = vpop.f32.mrf.mxu0
      %v3543 = vadd.f32 0.0, %v3542
      %v3544 = vpop.f32.mrf.mxu0
      %3545 = vmatprep.mubr.bf16.mxu0 0
      %3546 = vmatmul.mubr.bf16.gmra.mxu0 %v3503
      %v3547 = vpop.f32.mrf.mxu0
      %v3548 = vadd.f32 0.0, %v3547
      %v3549 = vpop.f32.mrf.mxu0
      %v3550 = vpop.f32.mrf.mxu0
      %v3551 = vadd.f32 0.0, %v3550
      %v3552 = vpop.f32.mrf.mxu0
      %3553 = vdwg.mxu0
      %3554 = vrot.lane.b32.xlu0 %v1141, 56
      %v3555 = vpop.permute.xlu0 %3554
      %3556 = vrot.lane.b32.xlu0 %v1142, 56
      %v3557 = vpop.permute.xlu0 %3556
      %v3561 = vsel %vm347, %v3479, 0
      %v3564 = vsel %vm347, %v3480, 0
      %3566 = vmatprep.subr.bf16.mxu0 0
      %3567 = vmatpush1.bf16.msra.mxu0 0
      %3568 = vmatprep.subr.bf16.mxu0 0
      %3569 = vmatpush1.bf16.msra.mxu0 0
      %3570 = vmatprep.subr.bf16.mxu0 0
      %3571 = vmatpush1.bf16.msra.mxu0 0
      %3572 = vmatprep.subr.bf16.mxu0 0
      %3573 = vmatpush1.bf16.msra.mxu0 0
      %3574 = vmatprep.subr.bf16.mxu0 0
      %3575 = vmatpush1.bf16.msra.mxu0 0
      %3576 = vmatprep.subr.bf16.mxu0 0
      %3577 = vmatpush1.bf16.msra.mxu0 0
      %3578 = vmatprep.subr.bf16.mxu0 0
      %3579 = vmatpush1.bf16.msra.mxu0 %v3557
      %3580 = vmatprep.subr.bf16.mxu0 0
      %3581 = vmatpush1.bf16.msra.mxu0 %v3555
      %3582 = vmatprep.subr.bf16.mxu0 0
      %3583 = vmatpush2.bf16.msra.mxu0 0
      %3584 = vmatprep.subr.bf16.mxu0 0
      %3585 = vmatpush2.bf16.msra.mxu0 0
      %3586 = vmatprep.subr.bf16.mxu0 0
      %3587 = vmatpush2.bf16.msra.mxu0 0
      %3588 = vmatprep.subr.bf16.mxu0 0
      %3589 = vmatpush2.bf16.msra.mxu0 0
      %3590 = vmatprep.subr.bf16.mxu0 0
      %3591 = vmatpush2.bf16.msra.mxu0 0
      %3592 = vmatprep.subr.bf16.mxu0 0
      %3593 = vmatpush2.bf16.msra.mxu0 0
      %3594 = vmatprep.subr.bf16.mxu0 0
      %3595 = vmatpush2.bf16.msra.mxu0 0
      %3596 = vmatprep.subr.bf16.mxu0 0
      %3597 = vmatpush2.bf16.msra.mxu0 0
      %3598 = vmatprep.mubr.bf16.mxu0 0
      %3599 = vmatmul.mubr.bf16.gmra.mxu0 %v3561
      %v3600 = vpop.f32.mrf.mxu0
      %v3601 = vadd.f32 0.0, %v3600
      %v3602 = vpop.f32.mrf.mxu0
      %v3603 = vpop.f32.mrf.mxu0
      %v3604 = vadd.f32 0.0, %v3603
      %v3605 = vpop.f32.mrf.mxu0
      %3606 = vmatprep.mubr.bf16.mxu0 0
      %3607 = vmatmul.mubr.bf16.gmra.mxu0 %v3564
      %v3608 = vpop.f32.mrf.mxu0
      %v3609 = vadd.f32 0.0, %v3608
      %v3610 = vpop.f32.mrf.mxu0
      %v3611 = vpop.f32.mrf.mxu0
      %v3612 = vadd.f32 0.0, %v3611
      %v3613 = vpop.f32.mrf.mxu0
      %3614 = vdwg.mxu0
      %3615 = vrot.lane.b32.xlu0 %v1143, 56
      %v3616 = vpop.permute.xlu0 %3615
      %3617 = vrot.lane.b32.xlu0 %v1144, 56
      %v3618 = vpop.permute.xlu0 %3617
      %v3622 = vsel %vm347, %v3481, 0
      %v3625 = vsel %vm347, %v3482, 0
      %3627 = vmatprep.subr.bf16.mxu0 0
      %3628 = vmatpush1.bf16.msra.mxu0 0
      %3629 = vmatprep.subr.bf16.mxu0 0
      %3630 = vmatpush1.bf16.msra.mxu0 0
      %3631 = vmatprep.subr.bf16.mxu0 0
      %3632 = vmatpush1.bf16.msra.mxu0 0
      %3633 = vmatprep.subr.bf16.mxu0 0
      %3634 = vmatpush1.bf16.msra.mxu0 0
      %3635 = vmatprep.subr.bf16.mxu0 0
      %3636 = vmatpush1.bf16.msra.mxu0 0
      %3637 = vmatprep.subr.bf16.mxu0 0
      %3638 = vmatpush1.bf16.msra.mxu0 0
      %3639 = vmatprep.subr.bf16.mxu0 0
      %3640 = vmatpush1.bf16.msra.mxu0 %v3618
      %3641 = vmatprep.subr.bf16.mxu0 0
      %3642 = vmatpush1.bf16.msra.mxu0 %v3616
      %3643 = vmatprep.subr.bf16.mxu0 0
      %3644 = vmatpush2.bf16.msra.mxu0 0
      %3645 = vmatprep.subr.bf16.mxu0 0
      %3646 = vmatpush2.bf16.msra.mxu0 0
      %3647 = vmatprep.subr.bf16.mxu0 0
      %3648 = vmatpush2.bf16.msra.mxu0 0
      %3649 = vmatprep.subr.bf16.mxu0 0
      %3650 = vmatpush2.bf16.msra.mxu0 0
      %3651 = vmatprep.subr.bf16.mxu0 0
      %3652 = vmatpush2.bf16.msra.mxu0 0
      %3653 = vmatprep.subr.bf16.mxu0 0
      %3654 = vmatpush2.bf16.msra.mxu0 0
      %3655 = vmatprep.subr.bf16.mxu0 0
      %3656 = vmatpush2.bf16.msra.mxu0 0
      %3657 = vmatprep.subr.bf16.mxu0 0
      %3658 = vmatpush2.bf16.msra.mxu0 0
      %3659 = vmatprep.mubr.bf16.mxu0 0
      %3660 = vmatmul.mubr.bf16.gmra.mxu0 %v3622
      %v3661 = vpop.f32.mrf.mxu0
      %v3662 = vadd.f32 0.0, %v3661
      %v3663 = vpop.f32.mrf.mxu0
      %v3664 = vpop.f32.mrf.mxu0
      %v3665 = vadd.f32 0.0, %v3664
      %v3666 = vpop.f32.mrf.mxu0
      %3667 = vmatprep.mubr.bf16.mxu0 0
      %3668 = vmatmul.mubr.bf16.gmra.mxu0 %v3625
      %v3669 = vpop.f32.mrf.mxu0
      %v3670 = vadd.f32 0.0, %v3669
      %v3671 = vpop.f32.mrf.mxu0
      %v3672 = vpop.f32.mrf.mxu0
      %v3673 = vadd.f32 0.0, %v3672
      %v3674 = vpop.f32.mrf.mxu0
      %3675 = vdwg.mxu0
      %3676 = vrot.lane.b32.xlu0 %v1145, 56
      %v3677 = vpop.permute.xlu0 %3676
      %3678 = vrot.lane.b32.xlu0 %v1146, 56
      %v3679 = vpop.permute.xlu0 %3678
      %v3683 = vsel %vm347, %v3483, 0
      %v3686 = vsel %vm347, %v3484, 0
      %3688 = vmatprep.subr.bf16.mxu0 0
      %3689 = vmatpush1.bf16.msra.mxu0 0
      %3690 = vmatprep.subr.bf16.mxu0 0
      %3691 = vmatpush1.bf16.msra.mxu0 0
      %3692 = vmatprep.subr.bf16.mxu0 0
      %3693 = vmatpush1.bf16.msra.mxu0 0
      %3694 = vmatprep.subr.bf16.mxu0 0
      %3695 = vmatpush1.bf16.msra.mxu0 0
      %3696 = vmatprep.subr.bf16.mxu0 0
      %3697 = vmatpush1.bf16.msra.mxu0 0
      %3698 = vmatprep.subr.bf16.mxu0 0
      %3699 = vmatpush1.bf16.msra.mxu0 0
      %3700 = vmatprep.subr.bf16.mxu0 0
      %3701 = vmatpush1.bf16.msra.mxu0 %v3679
      %3702 = vmatprep.subr.bf16.mxu0 0
      %3703 = vmatpush1.bf16.msra.mxu0 %v3677
      %3704 = vmatprep.subr.bf16.mxu0 0
      %3705 = vmatpush2.bf16.msra.mxu0 0
      %3706 = vmatprep.subr.bf16.mxu0 0
      %3707 = vmatpush2.bf16.msra.mxu0 0
      %3708 = vmatprep.subr.bf16.mxu0 0
      %3709 = vmatpush2.bf16.msra.mxu0 0
      %3710 = vmatprep.subr.bf16.mxu0 0
      %3711 = vmatpush2.bf16.msra.mxu0 0
      %3712 = vmatprep.subr.bf16.mxu0 0
      %3713 = vmatpush2.bf16.msra.mxu0 0
      %3714 = vmatprep.subr.bf16.mxu0 0
      %3715 = vmatpush2.bf16.msra.mxu0 0
      %3716 = vmatprep.subr.bf16.mxu0 0
      %3717 = vmatpush2.bf16.msra.mxu0 0
      %3718 = vmatprep.subr.bf16.mxu0 0
      %3719 = vmatpush2.bf16.msra.mxu0 0
      %3720 = vmatprep.mubr.bf16.mxu0 0
      %3721 = vmatmul.mubr.bf16.gmra.mxu0 %v3683
      %v3722 = vpop.f32.mrf.mxu0
      %v3723 = vadd.f32 0.0, %v3722
      %v3724 = vpop.f32.mrf.mxu0
      %v3725 = vpop.f32.mrf.mxu0
      %v3726 = vadd.f32 0.0, %v3725
      %v3727 = vpop.f32.mrf.mxu0
      %3728 = vmatprep.mubr.bf16.mxu0 0
      %3729 = vmatmul.mubr.bf16.gmra.mxu0 %v3686
      %v3730 = vpop.f32.mrf.mxu0
      %v3731 = vadd.f32 0.0, %v3730
      %v3732 = vpop.f32.mrf.mxu0
      %v3733 = vpop.f32.mrf.mxu0
      %v3734 = vadd.f32 0.0, %v3733
      %v3735 = vpop.f32.mrf.mxu0
      %3736 = vdwg.mxu0
      %3737 = vrot.lane.b32.xlu0 %v1147, 56
      %v3738 = vpop.permute.xlu0 %3737
      %3739 = vrot.lane.b32.xlu0 %v1148, 56
      %v3740 = vpop.permute.xlu0 %3739
      %v3744 = vsel %vm347, %v3485, 0
      %v3747 = vsel %vm347, %v3486, 0
      %3749 = vmatprep.subr.bf16.mxu0 0
      %3750 = vmatpush1.bf16.msra.mxu0 0
      %3751 = vmatprep.subr.bf16.mxu0 0
      %3752 = vmatpush1.bf16.msra.mxu0 0
      %3753 = vmatprep.subr.bf16.mxu0 0
      %3754 = vmatpush1.bf16.msra.mxu0 0
      %3755 = vmatprep.subr.bf16.mxu0 0
      %3756 = vmatpush1.bf16.msra.mxu0 0
      %3757 = vmatprep.subr.bf16.mxu0 0
      %3758 = vmatpush1.bf16.msra.mxu0 0
      %3759 = vmatprep.subr.bf16.mxu0 0
      %3760 = vmatpush1.bf16.msra.mxu0 0
      %3761 = vmatprep.subr.bf16.mxu0 0
      %3762 = vmatpush1.bf16.msra.mxu0 %v3740
      %3763 = vmatprep.subr.bf16.mxu0 0
      %3764 = vmatpush1.bf16.msra.mxu0 %v3738
      %3765 = vmatprep.subr.bf16.mxu0 0
      %3766 = vmatpush2.bf16.msra.mxu0 0
      %3767 = vmatprep.subr.bf16.mxu0 0
      %3768 = vmatpush2.bf16.msra.mxu0 0
      %3769 = vmatprep.subr.bf16.mxu0 0
      %3770 = vmatpush2.bf16.msra.mxu0 0
      %3771 = vmatprep.subr.bf16.mxu0 0
      %3772 = vmatpush2.bf16.msra.mxu0 0
      %3773 = vmatprep.subr.bf16.mxu0 0
      %3774 = vmatpush2.bf16.msra.mxu0 0
      %3775 = vmatprep.subr.bf16.mxu0 0
      %3776 = vmatpush2.bf16.msra.mxu0 0
      %3777 = vmatprep.subr.bf16.mxu0 0
      %3778 = vmatpush2.bf16.msra.mxu0 0
      %3779 = vmatprep.subr.bf16.mxu0 0
      %3780 = vmatpush2.bf16.msra.mxu0 0
      %3781 = vmatprep.mubr.bf16.mxu0 0
      %3782 = vmatmul.mubr.bf16.gmra.mxu0 %v3744
      %v3783 = vpop.f32.mrf.mxu0
      %v3784 = vadd.f32 0.0, %v3783
      %v3785 = vpop.f32.mrf.mxu0
      %v3786 = vpop.f32.mrf.mxu0
      %v3787 = vadd.f32 0.0, %v3786
      %v3788 = vpop.f32.mrf.mxu0
      %3789 = vmatprep.mubr.bf16.mxu0 0
      %3790 = vmatmul.mubr.bf16.gmra.mxu0 %v3747
      %v3791 = vpop.f32.mrf.mxu0
      %v3792 = vadd.f32 0.0, %v3791
      %v3793 = vpop.f32.mrf.mxu0
      %v3794 = vpop.f32.mrf.mxu0
      %v3795 = vadd.f32 0.0, %v3794
      %v3796 = vpop.f32.mrf.mxu0
      %3797 = vdwg.mxu0
      %3798 = vrot.lane.b32.xlu0 %v1149, 56
      %v3799 = vpop.permute.xlu0 %3798
      %3800 = vrot.lane.b32.xlu0 %v1150, 56
      %v3801 = vpop.permute.xlu0 %3800
      %v3805 = vsel %vm347, %v3487, 0
      %v3808 = vsel %vm347, %v3488, 0
      %3810 = vmatprep.subr.bf16.mxu0 0
      %3811 = vmatpush1.bf16.msra.mxu0 0
      %3812 = vmatprep.subr.bf16.mxu0 0
      %3813 = vmatpush1.bf16.msra.mxu0 0
      %3814 = vmatprep.subr.bf16.mxu0 0
      %3815 = vmatpush1.bf16.msra.mxu0 0
      %3816 = vmatprep.subr.bf16.mxu0 0
      %3817 = vmatpush1.bf16.msra.mxu0 0
      %3818 = vmatprep.subr.bf16.mxu0 0
      %3819 = vmatpush1.bf16.msra.mxu0 0
      %3820 = vmatprep.subr.bf16.mxu0 0
      %3821 = vmatpush1.bf16.msra.mxu0 0
      %3822 = vmatprep.subr.bf16.mxu0 0
      %3823 = vmatpush1.bf16.msra.mxu0 %v3801
      %3824 = vmatprep.subr.bf16.mxu0 0
      %3825 = vmatpush1.bf16.msra.mxu0 %v3799
      %3826 = vmatprep.subr.bf16.mxu0 0
      %3827 = vmatpush2.bf16.msra.mxu0 0
      %3828 = vmatprep.subr.bf16.mxu0 0
      %3829 = vmatpush2.bf16.msra.mxu0 0
      %3830 = vmatprep.subr.bf16.mxu0 0
      %3831 = vmatpush2.bf16.msra.mxu0 0
      %3832 = vmatprep.subr.bf16.mxu0 0
      %3833 = vmatpush2.bf16.msra.mxu0 0
      %3834 = vmatprep.subr.bf16.mxu0 0
      %3835 = vmatpush2.bf16.msra.mxu0 0
      %3836 = vmatprep.subr.bf16.mxu0 0
      %3837 = vmatpush2.bf16.msra.mxu0 0
      %3838 = vmatprep.subr.bf16.mxu0 0
      %3839 = vmatpush2.bf16.msra.mxu0 0
      %3840 = vmatprep.subr.bf16.mxu0 0
      %3841 = vmatpush2.bf16.msra.mxu0 0
      %3842 = vmatprep.mubr.bf16.mxu0 0
      %3843 = vmatmul.mubr.bf16.gmra.mxu0 %v3805
      %v3844 = vpop.f32.mrf.mxu0
      %v3845 = vadd.f32 0.0, %v3844
      %v3846 = vpop.f32.mrf.mxu0
      %v3847 = vpop.f32.mrf.mxu0
      %v3848 = vadd.f32 0.0, %v3847
      %v3849 = vpop.f32.mrf.mxu0
      %3850 = vmatprep.mubr.bf16.mxu0 0
      %3851 = vmatmul.mubr.bf16.gmra.mxu0 %v3808
      %v3852 = vpop.f32.mrf.mxu0
      %v3853 = vadd.f32 0.0, %v3852
      %v3854 = vpop.f32.mrf.mxu0
      %v3855 = vpop.f32.mrf.mxu0
      %v3856 = vadd.f32 0.0, %v3855
      %v3857 = vpop.f32.mrf.mxu0
      %3858 = vdwg.mxu0
      %3859 = vrot.lane.b32.xlu0 %v1151, 56
      %v3860 = vpop.permute.xlu0 %3859
      %3861 = vrot.lane.b32.xlu0 %v1152, 56
      %v3862 = vpop.permute.xlu0 %3861
      %v3866 = vsel %vm347, %v3489, 0
      %v3869 = vsel %vm347, %v3490, 0
      %3871 = vmatprep.subr.bf16.mxu0 0
      %3872 = vmatpush1.bf16.msra.mxu0 0
      %3873 = vmatprep.subr.bf16.mxu0 0
      %3874 = vmatpush1.bf16.msra.mxu0 0
      %3875 = vmatprep.subr.bf16.mxu0 0
      %3876 = vmatpush1.bf16.msra.mxu0 0
      %3877 = vmatprep.subr.bf16.mxu0 0
      %3878 = vmatpush1.bf16.msra.mxu0 0
      %3879 = vmatprep.subr.bf16.mxu0 0
      %3880 = vmatpush1.bf16.msra.mxu0 0
      %3881 = vmatprep.subr.bf16.mxu0 0
      %3882 = vmatpush1.bf16.msra.mxu0 0
      %3883 = vmatprep.subr.bf16.mxu0 0
      %3884 = vmatpush1.bf16.msra.mxu0 %v3862
      %3885 = vmatprep.subr.bf16.mxu0 0
      %3886 = vmatpush1.bf16.msra.mxu0 %v3860
      %3887 = vmatprep.subr.bf16.mxu0 0
      %3888 = vmatpush2.bf16.msra.mxu0 0
      %3889 = vmatprep.subr.bf16.mxu0 0
      %3890 = vmatpush2.bf16.msra.mxu0 0
      %3891 = vmatprep.subr.bf16.mxu0 0
      %3892 = vmatpush2.bf16.msra.mxu0 0
      %3893 = vmatprep.subr.bf16.mxu0 0
      %3894 = vmatpush2.bf16.msra.mxu0 0
      %3895 = vmatprep.subr.bf16.mxu0 0
      %3896 = vmatpush2.bf16.msra.mxu0 0
      %3897 = vmatprep.subr.bf16.mxu0 0
      %3898 = vmatpush2.bf16.msra.mxu0 0
      %3899 = vmatprep.subr.bf16.mxu0 0
      %3900 = vmatpush2.bf16.msra.mxu0 0
      %3901 = vmatprep.subr.bf16.mxu0 0
      %3902 = vmatpush2.bf16.msra.mxu0 0
      %3903 = vmatprep.mubr.bf16.mxu0 0
      %3904 = vmatmul.mubr.bf16.gmra.mxu0 %v3866
      %v3905 = vpop.f32.mrf.mxu0
      %v3906 = vadd.f32 0.0, %v3905
      %v3907 = vpop.f32.mrf.mxu0
      %v3908 = vpop.f32.mrf.mxu0
      %v3909 = vadd.f32 0.0, %v3908
      %v3910 = vpop.f32.mrf.mxu0
      %3911 = vmatprep.mubr.bf16.mxu0 0
      %3912 = vmatmul.mubr.bf16.gmra.mxu0 %v3869
      %v3913 = vpop.f32.mrf.mxu0
      %v3914 = vadd.f32 0.0, %v3913
      %v3915 = vpop.f32.mrf.mxu0
      %v3916 = vpop.f32.mrf.mxu0
      %v3917 = vadd.f32 0.0, %v3916
      %v3918 = vpop.f32.mrf.mxu0
      %3919 = vdwg.mxu0
      %3920 = vrot.lane.b32.xlu0 %v1153, 56
      %v3921 = vpop.permute.xlu0 %3920
      %3922 = vrot.lane.b32.xlu0 %v1154, 56
      %v3923 = vpop.permute.xlu0 %3922
      %v3927 = vsel %vm347, %v3491, 0
      %v3930 = vsel %vm347, %v3492, 0
      %3932 = vmatprep.subr.bf16.mxu0 0
      %3933 = vmatpush1.bf16.msra.mxu0 0
      %3934 = vmatprep.subr.bf16.mxu0 0
      %3935 = vmatpush1.bf16.msra.mxu0 0
      %3936 = vmatprep.subr.bf16.mxu0 0
      %3937 = vmatpush1.bf16.msra.mxu0 0
      %3938 = vmatprep.subr.bf16.mxu0 0
      %3939 = vmatpush1.bf16.msra.mxu0 0
      %3940 = vmatprep.subr.bf16.mxu0 0
      %3941 = vmatpush1.bf16.msra.mxu0 0
      %3942 = vmatprep.subr.bf16.mxu0 0
      %3943 = vmatpush1.bf16.msra.mxu0 0
      %3944 = vmatprep.subr.bf16.mxu0 0
      %3945 = vmatpush1.bf16.msra.mxu0 %v3923
      %3946 = vmatprep.subr.bf16.mxu0 0
      %3947 = vmatpush1.bf16.msra.mxu0 %v3921
      %3948 = vmatprep.subr.bf16.mxu0 0
      %3949 = vmatpush2.bf16.msra.mxu0 0
      %3950 = vmatprep.subr.bf16.mxu0 0
      %3951 = vmatpush2.bf16.msra.mxu0 0
      %3952 = vmatprep.subr.bf16.mxu0 0
      %3953 = vmatpush2.bf16.msra.mxu0 0
      %3954 = vmatprep.subr.bf16.mxu0 0
      %3955 = vmatpush2.bf16.msra.mxu0 0
      %3956 = vmatprep.subr.bf16.mxu0 0
      %3957 = vmatpush2.bf16.msra.mxu0 0
      %3958 = vmatprep.subr.bf16.mxu0 0
      %3959 = vmatpush2.bf16.msra.mxu0 0
      %3960 = vmatprep.subr.bf16.mxu0 0
      %3961 = vmatpush2.bf16.msra.mxu0 0
      %3962 = vmatprep.subr.bf16.mxu0 0
      %3963 = vmatpush2.bf16.msra.mxu0 0
      %3964 = vmatprep.mubr.bf16.mxu0 0
      %3965 = vmatmul.mubr.bf16.gmra.mxu0 %v3927
      %v3966 = vpop.f32.mrf.mxu0
      %v3967 = vadd.f32 0.0, %v3966
      %v3968 = vpop.f32.mrf.mxu0
      %v3969 = vpop.f32.mrf.mxu0
      %v3970 = vadd.f32 0.0, %v3969
      %v3971 = vpop.f32.mrf.mxu0
      %3972 = vmatprep.mubr.bf16.mxu0 0
      %3973 = vmatmul.mubr.bf16.gmra.mxu0 %v3930
      %v3974 = vpop.f32.mrf.mxu0
      %v3975 = vadd.f32 0.0, %v3974
      %v3976 = vpop.f32.mrf.mxu0
      %v3977 = vpop.f32.mrf.mxu0
      %v3978 = vadd.f32 0.0, %v3977
      %v3979 = vpop.f32.mrf.mxu0
      %3980 = vdwg.mxu0
      %s3981 = scalar_lea.vmem %s1, 64
      %v3982 = vld [vmem:[%s3981] sm:$0xff]
      %v3983 = vld [vmem:[%s3981 + $0x8] sm:$0xff]
      %v3984 = vld [vmem:[%s3981 + $0x10] sm:$0xff]
      %v3985 = vld [vmem:[%s3981 + $0x18] sm:$0xff]
      %3986 = vrot.lane.b32.xlu0 %v1123, 112
      %v3987 = vpop.permute.xlu0 %3986
      %3988 = vrot.lane.b32.xlu0 %v1124, 112
      %v3989 = vpop.permute.xlu0 %3988
      %3990 = vrot.lane.b32.xlu0 %v1139, 80
      %v3991 = vpop.permute.xlu0 %3990
      %3992 = vrot.lane.b32.xlu0 %v1140, 80
      %v3993 = vpop.permute.xlu0 %3992
      %v3995 = vsel %vm1165, %v3987, 0
      %v3998 = vsel %vm1165, %v3989, 0
      %v4001 = vsel %vm1165, %v3991, 0
      %v4004 = vsel %vm1165, %v3993, 0
      %4006 = vmatprep.subr.bf16.mxu0 0
      %4007 = vmatpush1.bf16.xpose.msra.mxu0 0
      %4008 = vmatprep.subr.bf16.mxu0 0
      %4009 = vmatpush1.bf16.xpose.msra.mxu0 0
      %4010 = vmatprep.subr.bf16.mxu0 0
      %4011 = vmatpush1.bf16.xpose.msra.mxu0 0
      %4012 = vmatprep.subr.bf16.mxu0 0
      %4013 = vmatpush1.bf16.xpose.msra.mxu0 0
      %4014 = vmatprep.subr.bf16.mxu0 0
      %4015 = vmatpush1.bf16.xpose.msra.mxu0 0
      %4016 = vmatprep.subr.bf16.mxu0 0
      %4017 = vmatpush1.bf16.xpose.msra.mxu0 0
      %4018 = vmatprep.subr.bf16.mxu0 0
      %4019 = vmatpush1.bf16.xpose.msra.mxu0 %v4004
      %4020 = vmatprep.subr.bf16.mxu0 0
      %4021 = vmatpush1.bf16.xpose.msra.mxu0 %v4001
      %4022 = vmatprep.subr.bf16.mxu0 0
      %4023 = vmatpush2.bf16.xpose.msra.mxu0 0
      %4024 = vmatprep.subr.bf16.mxu0 0
      %4025 = vmatpush2.bf16.xpose.msra.mxu0 0
      %4026 = vmatprep.subr.bf16.mxu0 0
      %4027 = vmatpush2.bf16.xpose.msra.mxu0 0
      %4028 = vmatprep.subr.bf16.mxu0 0
      %4029 = vmatpush2.bf16.xpose.msra.mxu0 0
      %4030 = vmatprep.subr.bf16.mxu0 0
      %4031 = vmatpush2.bf16.xpose.msra.mxu0 0
      %4032 = vmatprep.subr.bf16.mxu0 0
      %4033 = vmatpush2.bf16.xpose.msra.mxu0 0
      %4034 = vmatprep.subr.bf16.mxu0 0
      %4035 = vmatpush2.bf16.xpose.msra.mxu0 0
      %4036 = vmatprep.subr.bf16.mxu0 0
      %4037 = vmatpush2.bf16.xpose.msra.mxu0 0
      %4038 = vmatprep.mubr.bf16.mxu0 0
      %4039 = vmatmul.mubr.bf16.gmra.mxu0 %v3995
      %v4040 = vpop.f32.mrf.mxu0
      %v4041 = vadd.f32 %v3982, %v4040
      %v4042 = vpop.f32.mrf.mxu0
      %v4043 = vpop.f32.mrf.mxu0
      %v4044 = vadd.f32 %v3983, %v4043
      %v4045 = vpop.f32.mrf.mxu0
      %4046 = vmatprep.mubr.bf16.mxu0 0
      %4047 = vmatmul.mubr.bf16.gmra.mxu0 %v3998
      %v4048 = vpop.f32.mrf.mxu0
      %v4049 = vadd.f32 %v3984, %v4048
      %v4050 = vpop.f32.mrf.mxu0
      %v4051 = vpop.f32.mrf.mxu0
      %v4052 = vadd.f32 %v3985, %v4051
      %v4053 = vpop.f32.mrf.mxu0
      %4054 = vdwg.mxu0
      %4055 = vrot.lane.b32.xlu0 %v1125, 112
      %v4056 = vpop.permute.xlu0 %4055
      %4057 = vrot.lane.b32.xlu0 %v1126, 112
      %v4058 = vpop.permute.xlu0 %4057
      %4059 = vrot.lane.b32.xlu0 %v1141, 80
      %v4060 = vpop.permute.xlu0 %4059
      %4061 = vrot.lane.b32.xlu0 %v1142, 80
      %v4062 = vpop.permute.xlu0 %4061
      %v4064 = vsel %vm1165, %v4056, 0
      %v4067 = vsel %vm1165, %v4058, 0
      %v4070 = vsel %vm1165, %v4060, 0
      %v4073 = vsel %vm1165, %v4062, 0
      %4075 = vmatprep.subr.bf16.mxu0 0
      %4076 = vmatpush1.bf16.xpose.msra.mxu0 0
      %4077 = vmatprep.subr.bf16.mxu0 0
      %4078 = vmatpush1.bf16.xpose.msra.mxu0 0
      %4079 = vmatprep.subr.bf16.mxu0 0
      %4080 = vmatpush1.bf16.xpose.msra.mxu0 0
      %4081 = vmatprep.subr.bf16.mxu0 0
      %4082 = vmatpush1.bf16.xpose.msra.mxu0 0
      %4083 = vmatprep.subr.bf16.mxu0 0
      %4084 = vmatpush1.bf16.xpose.msra.mxu0 0
      %4085 = vmatprep.subr.bf16.mxu0 0
      %4086 = vmatpush1.bf16.xpose.msra.mxu0 0
      %4087 = vmatprep.subr.bf16.mxu0 0
      %4088 = vmatpush1.bf16.xpose.msra.mxu0 %v4073
      %4089 = vmatprep.subr.bf16.mxu0 0
      %4090 = vmatpush1.bf16.xpose.msra.mxu0 %v4070
      %4091 = vmatprep.subr.bf16.mxu0 0
      %4092 = vmatpush2.bf16.xpose.msra.mxu0 0
      %4093 = vmatprep.subr.bf16.mxu0 0
      %4094 = vmatpush2.bf16.xpose.msra.mxu0 0
      %4095 = vmatprep.subr.bf16.mxu0 0
      %4096 = vmatpush2.bf16.xpose.msra.mxu0 0
      %4097 = vmatprep.subr.bf16.mxu0 0
      %4098 = vmatpush2.bf16.xpose.msra.mxu0 0
      %4099 = vmatprep.subr.bf16.mxu0 0
      %4100 = vmatpush2.bf16.xpose.msra.mxu0 0
      %4101 = vmatprep.subr.bf16.mxu0 0
      %4102 = vmatpush2.bf16.xpose.msra.mxu0 0
      %4103 = vmatprep.subr.bf16.mxu0 0
      %4104 = vmatpush2.bf16.xpose.msra.mxu0 0
      %4105 = vmatprep.subr.bf16.mxu0 0
      %4106 = vmatpush2.bf16.xpose.msra.mxu0 0
      %4107 = vmatprep.mubr.bf16.mxu0 0
      %4108 = vmatmul.mubr.bf16.gmra.mxu0 %v4064
      %v4109 = vpop.f32.mrf.mxu0
      %v4110 = vadd.f32 %v3982, %v4109
      %v4111 = vpop.f32.mrf.mxu0
      %v4112 = vpop.f32.mrf.mxu0
      %v4113 = vadd.f32 %v3983, %v4112
      %v4114 = vpop.f32.mrf.mxu0
      %4115 = vmatprep.mubr.bf16.mxu0 0
      %4116 = vmatmul.mubr.bf16.gmra.mxu0 %v4067
      %v4117 = vpop.f32.mrf.mxu0
      %v4118 = vadd.f32 %v3984, %v4117
      %v4119 = vpop.f32.mrf.mxu0
      %v4120 = vpop.f32.mrf.mxu0
      %v4121 = vadd.f32 %v3985, %v4120
      %v4122 = vpop.f32.mrf.mxu0
      %4123 = vdwg.mxu0
      %4124 = vrot.lane.b32.xlu0 %v1127, 112
      %v4125 = vpop.permute.xlu0 %4124
      %4126 = vrot.lane.b32.xlu0 %v1128, 112
      %v4127 = vpop.permute.xlu0 %4126
      %4128 = vrot.lane.b32.xlu0 %v1143, 80
      %v4129 = vpop.permute.xlu0 %4128
      %4130 = vrot.lane.b32.xlu0 %v1144, 80
      %v4131 = vpop.permute.xlu0 %4130
      %v4133 = vsel %vm1165, %v4125, 0
      %v4136 = vsel %vm1165, %v4127, 0
      %v4139 = vsel %vm1165, %v4129, 0
      %v4142 = vsel %vm1165, %v4131, 0
      %4144 = vmatprep.subr.bf16.mxu0 0
      %4145 = vmatpush1.bf16.xpose.msra.mxu0 0
      %4146 = vmatprep.subr.bf16.mxu0 0
      %4147 = vmatpush1.bf16.xpose.msra.mxu0 0
      %4148 = vmatprep.subr.bf16.mxu0 0
      %4149 = vmatpush1.bf16.xpose.msra.mxu0 0
      %4150 = vmatprep.subr.bf16.mxu0 0
      %4151 = vmatpush1.bf16.xpose.msra.mxu0 0
      %4152 = vmatprep.subr.bf16.mxu0 0
      %4153 = vmatpush1.bf16.xpose.msra.mxu0 0
      %4154 = vmatprep.subr.bf16.mxu0 0
      %4155 = vmatpush1.bf16.xpose.msra.mxu0 0
      %4156 = vmatprep.subr.bf16.mxu0 0
      %4157 = vmatpush1.bf16.xpose.msra.mxu0 %v4142
      %4158 = vmatprep.subr.bf16.mxu0 0
      %4159 = vmatpush1.bf16.xpose.msra.mxu0 %v4139
      %4160 = vmatprep.subr.bf16.mxu0 0
      %4161 = vmatpush2.bf16.xpose.msra.mxu0 0
      %4162 = vmatprep.subr.bf16.mxu0 0
      %4163 = vmatpush2.bf16.xpose.msra.mxu0 0
      %4164 = vmatprep.subr.bf16.mxu0 0
      %4165 = vmatpush2.bf16.xpose.msra.mxu0 0
      %4166 = vmatprep.subr.bf16.mxu0 0
      %4167 = vmatpush2.bf16.xpose.msra.mxu0 0
      %4168 = vmatprep.subr.bf16.mxu0 0
      %4169 = vmatpush2.bf16.xpose.msra.mxu0 0
      %4170 = vmatprep.subr.bf16.mxu0 0
      %4171 = vmatpush2.bf16.xpose.msra.mxu0 0
      %4172 = vmatprep.subr.bf16.mxu0 0
      %4173 = vmatpush2.bf16.xpose.msra.mxu0 0
      %4174 = vmatprep.subr.bf16.mxu0 0
      %4175 = vmatpush2.bf16.xpose.msra.mxu0 0
      %4176 = vmatprep.mubr.bf16.mxu0 0
      %4177 = vmatmul.mubr.bf16.gmra.mxu0 %v4133
      %v4178 = vpop.f32.mrf.mxu0
      %v4179 = vadd.f32 %v3982, %v4178
      %v4180 = vpop.f32.mrf.mxu0
      %v4181 = vpop.f32.mrf.mxu0
      %v4182 = vadd.f32 %v3983, %v4181
      %v4183 = vpop.f32.mrf.mxu0
      %4184 = vmatprep.mubr.bf16.mxu0 0
      %4185 = vmatmul.mubr.bf16.gmra.mxu0 %v4136
      %v4186 = vpop.f32.mrf.mxu0
      %v4187 = vadd.f32 %v3984, %v4186
      %v4188 = vpop.f32.mrf.mxu0
      %v4189 = vpop.f32.mrf.mxu0
      %v4190 = vadd.f32 %v3985, %v4189
      %v4191 = vpop.f32.mrf.mxu0
      %4192 = vdwg.mxu0
      %4193 = vrot.lane.b32.xlu0 %v1129, 112
      %v4194 = vpop.permute.xlu0 %4193
      %4195 = vrot.lane.b32.xlu0 %v1130, 112
      %v4196 = vpop.permute.xlu0 %4195
      %4197 = vrot.lane.b32.xlu0 %v1145, 80
      %v4198 = vpop.permute.xlu0 %4197
      %4199 = vrot.lane.b32.xlu0 %v1146, 80
      %v4200 = vpop.permute.xlu0 %4199
      %v4202 = vsel %vm1165, %v4194, 0
      %v4205 = vsel %vm1165, %v4196, 0
      %v4208 = vsel %vm1165, %v4198, 0
      %v4211 = vsel %vm1165, %v4200, 0
      %4213 = vmatprep.subr.bf16.mxu0 0
      %4214 = vmatpush1.bf16.xpose.msra.mxu0 0
      %4215 = vmatprep.subr.bf16.mxu0 0
      %4216 = vmatpush1.bf16.xpose.msra.mxu0 0
      %4217 = vmatprep.subr.bf16.mxu0 0
      %4218 = vmatpush1.bf16.xpose.msra.mxu0 0
      %4219 = vmatprep.subr.bf16.mxu0 0
      %4220 = vmatpush1.bf16.xpose.msra.mxu0 0
      %4221 = vmatprep.subr.bf16.mxu0 0
      %4222 = vmatpush1.bf16.xpose.msra.mxu0 0
      %4223 = vmatprep.subr.bf16.mxu0 0
      %4224 = vmatpush1.bf16.xpose.msra.mxu0 0
      %4225 = vmatprep.subr.bf16.mxu0 0
      %4226 = vmatpush1.bf16.xpose.msra.mxu0 %v4211
      %4227 = vmatprep.subr.bf16.mxu0 0
      %4228 = vmatpush1.bf16.xpose.msra.mxu0 %v4208
      %4229 = vmatprep.subr.bf16.mxu0 0
      %4230 = vmatpush2.bf16.xpose.msra.mxu0 0
      %4231 = vmatprep.subr.bf16.mxu0 0
      %4232 = vmatpush2.bf16.xpose.msra.mxu0 0
      %4233 = vmatprep.subr.bf16.mxu0 0
      %4234 = vmatpush2.bf16.xpose.msra.mxu0 0
      %4235 = vmatprep.subr.bf16.mxu0 0
      %4236 = vmatpush2.bf16.xpose.msra.mxu0 0
      %4237 = vmatprep.subr.bf16.mxu0 0
      %4238 = vmatpush2.bf16.xpose.msra.mxu0 0
      %4239 = vmatprep.subr.bf16.mxu0 0
      %4240 = vmatpush2.bf16.xpose.msra.mxu0 0
      %4241 = vmatprep.subr.bf16.mxu0 0
      %4242 = vmatpush2.bf16.xpose.msra.mxu0 0
      %4243 = vmatprep.subr.bf16.mxu0 0
      %4244 = vmatpush2.bf16.xpose.msra.mxu0 0
      %4245 = vmatprep.mubr.bf16.mxu0 0
      %4246 = vmatmul.mubr.bf16.gmra.mxu0 %v4202
      %v4247 = vpop.f32.mrf.mxu0
      %v4248 = vadd.f32 %v3982, %v4247
      %v4249 = vpop.f32.mrf.mxu0
      %v4250 = vpop.f32.mrf.mxu0
      %v4251 = vadd.f32 %v3983, %v4250
      %v4252 = vpop.f32.mrf.mxu0
      %4253 = vmatprep.mubr.bf16.mxu0 0
      %4254 = vmatmul.mubr.bf16.gmra.mxu0 %v4205
      %v4255 = vpop.f32.mrf.mxu0
      %v4256 = vadd.f32 %v3984, %v4255
      %v4257 = vpop.f32.mrf.mxu0
      %v4258 = vpop.f32.mrf.mxu0
      %v4259 = vadd.f32 %v3985, %v4258
      %v4260 = vpop.f32.mrf.mxu0
      %4261 = vdwg.mxu0
      %4262 = vrot.lane.b32.xlu0 %v1131, 112
      %v4263 = vpop.permute.xlu0 %4262
      %4264 = vrot.lane.b32.xlu0 %v1132, 112
      %v4265 = vpop.permute.xlu0 %4264
      %4266 = vrot.lane.b32.xlu0 %v1147, 80
      %v4267 = vpop.permute.xlu0 %4266
      %4268 = vrot.lane.b32.xlu0 %v1148, 80
      %v4269 = vpop.permute.xlu0 %4268
      %v4271 = vsel %vm1165, %v4263, 0
      %v4274 = vsel %vm1165, %v4265, 0
      %v4277 = vsel %vm1165, %v4267, 0
      %v4280 = vsel %vm1165, %v4269, 0
      %4282 = vmatprep.subr.bf16.mxu0 0
      %4283 = vmatpush1.bf16.xpose.msra.mxu0 0
      %4284 = vmatprep.subr.bf16.mxu0 0
      %4285 = vmatpush1.bf16.xpose.msra.mxu0 0
      %4286 = vmatprep.subr.bf16.mxu0 0
      %4287 = vmatpush1.bf16.xpose.msra.mxu0 0
      %4288 = vmatprep.subr.bf16.mxu0 0
      %4289 = vmatpush1.bf16.xpose.msra.mxu0 0
      %4290 = vmatprep.subr.bf16.mxu0 0
      %4291 = vmatpush1.bf16.xpose.msra.mxu0 0
      %4292 = vmatprep.subr.bf16.mxu0 0
      %4293 = vmatpush1.bf16.xpose.msra.mxu0 0
      %4294 = vmatprep.subr.bf16.mxu0 0
      %4295 = vmatpush1.bf16.xpose.msra.mxu0 %v4280
      %4296 = vmatprep.subr.bf16.mxu0 0
      %4297 = vmatpush1.bf16.xpose.msra.mxu0 %v4277
      %4298 = vmatprep.subr.bf16.mxu0 0
      %4299 = vmatpush2.bf16.xpose.msra.mxu0 0
      %4300 = vmatprep.subr.bf16.mxu0 0
      %4301 = vmatpush2.bf16.xpose.msra.mxu0 0
      %4302 = vmatprep.subr.bf16.mxu0 0
      %4303 = vmatpush2.bf16.xpose.msra.mxu0 0
      %4304 = vmatprep.subr.bf16.mxu0 0
      %4305 = vmatpush2.bf16.xpose.msra.mxu0 0
      %4306 = vmatprep.subr.bf16.mxu0 0
      %4307 = vmatpush2.bf16.xpose.msra.mxu0 0
      %4308 = vmatprep.subr.bf16.mxu0 0
      %4309 = vmatpush2.bf16.xpose.msra.mxu0 0
      %4310 = vmatprep.subr.bf16.mxu0 0
      %4311 = vmatpush2.bf16.xpose.msra.mxu0 0
      %4312 = vmatprep.subr.bf16.mxu0 0
      %4313 = vmatpush2.bf16.xpose.msra.mxu0 0
      %4314 = vmatprep.mubr.bf16.mxu0 0
      %4315 = vmatmul.mubr.bf16.gmra.mxu0 %v4271
      %v4316 = vpop.f32.mrf.mxu0
      %v4317 = vadd.f32 %v3982, %v4316
      %v4318 = vpop.f32.mrf.mxu0
      %v4319 = vpop.f32.mrf.mxu0
      %v4320 = vadd.f32 %v3983, %v4319
      %v4321 = vpop.f32.mrf.mxu0
      %4322 = vmatprep.mubr.bf16.mxu0 0
      %4323 = vmatmul.mubr.bf16.gmra.mxu0 %v4274
      %v4324 = vpop.f32.mrf.mxu0
      %v4325 = vadd.f32 %v3984, %v4324
      %v4326 = vpop.f32.mrf.mxu0
      %v4327 = vpop.f32.mrf.mxu0
      %v4328 = vadd.f32 %v3985, %v4327
      %v4329 = vpop.f32.mrf.mxu0
      %4330 = vdwg.mxu0
      %4331 = vrot.lane.b32.xlu0 %v1133, 112
      %v4332 = vpop.permute.xlu0 %4331
      %4333 = vrot.lane.b32.xlu0 %v1134, 112
      %v4334 = vpop.permute.xlu0 %4333
      %4335 = vrot.lane.b32.xlu0 %v1149, 80
      %v4336 = vpop.permute.xlu0 %4335
      %4337 = vrot.lane.b32.xlu0 %v1150, 80
      %v4338 = vpop.permute.xlu0 %4337
      %v4340 = vsel %vm1165, %v4332, 0
      %v4343 = vsel %vm1165, %v4334, 0
      %v4346 = vsel %vm1165, %v4336, 0
      %v4349 = vsel %vm1165, %v4338, 0
      %4351 = vmatprep.subr.bf16.mxu0 0
      %4352 = vmatpush1.bf16.xpose.msra.mxu0 0
      %4353 = vmatprep.subr.bf16.mxu0 0
      %4354 = vmatpush1.bf16.xpose.msra.mxu0 0
      %4355 = vmatprep.subr.bf16.mxu0 0
      %4356 = vmatpush1.bf16.xpose.msra.mxu0 0
      %4357 = vmatprep.subr.bf16.mxu0 0
      %4358 = vmatpush1.bf16.xpose.msra.mxu0 0
      %4359 = vmatprep.subr.bf16.mxu0 0
      %4360 = vmatpush1.bf16.xpose.msra.mxu0 0
      %4361 = vmatprep.subr.bf16.mxu0 0
      %4362 = vmatpush1.bf16.xpose.msra.mxu0 0
      %4363 = vmatprep.subr.bf16.mxu0 0
      %4364 = vmatpush1.bf16.xpose.msra.mxu0 %v4349
      %4365 = vmatprep.subr.bf16.mxu0 0
      %4366 = vmatpush1.bf16.xpose.msra.mxu0 %v4346
      %4367 = vmatprep.subr.bf16.mxu0 0
      %4368 = vmatpush2.bf16.xpose.msra.mxu0 0
      %4369 = vmatprep.subr.bf16.mxu0 0
      %4370 = vmatpush2.bf16.xpose.msra.mxu0 0
      %4371 = vmatprep.subr.bf16.mxu0 0
      %4372 = vmatpush2.bf16.xpose.msra.mxu0 0
      %4373 = vmatprep.subr.bf16.mxu0 0
      %4374 = vmatpush2.bf16.xpose.msra.mxu0 0
      %4375 = vmatprep.subr.bf16.mxu0 0
      %4376 = vmatpush2.bf16.xpose.msra.mxu0 0
      %4377 = vmatprep.subr.bf16.mxu0 0
      %4378 = vmatpush2.bf16.xpose.msra.mxu0 0
      %4379 = vmatprep.subr.bf16.mxu0 0
      %4380 = vmatpush2.bf16.xpose.msra.mxu0 0
      %4381 = vmatprep.subr.bf16.mxu0 0
      %4382 = vmatpush2.bf16.xpose.msra.mxu0 0
      %4383 = vmatprep.mubr.bf16.mxu0 0
      %4384 = vmatmul.mubr.bf16.gmra.mxu0 %v4340
      %v4385 = vpop.f32.mrf.mxu0
      %v4386 = vadd.f32 %v3982, %v4385
      %v4387 = vpop.f32.mrf.mxu0
      %v4388 = vpop.f32.mrf.mxu0
      %v4389 = vadd.f32 %v3983, %v4388
      %v4390 = vpop.f32.mrf.mxu0
      %4391 = vmatprep.mubr.bf16.mxu0 0
      %4392 = vmatmul.mubr.bf16.gmra.mxu0 %v4343
      %v4393 = vpop.f32.mrf.mxu0
      %v4394 = vadd.f32 %v3984, %v4393
      %v4395 = vpop.f32.mrf.mxu0
      %v4396 = vpop.f32.mrf.mxu0
      %v4397 = vadd.f32 %v3985, %v4396
      %v4398 = vpop.f32.mrf.mxu0
      %4399 = vdwg.mxu0
      %4400 = vrot.lane.b32.xlu0 %v1135, 112
      %v4401 = vpop.permute.xlu0 %4400
      %4402 = vrot.lane.b32.xlu0 %v1136, 112
      %v4403 = vpop.permute.xlu0 %4402
      %4404 = vrot.lane.b32.xlu0 %v1151, 80
      %v4405 = vpop.permute.xlu0 %4404
      %4406 = vrot.lane.b32.xlu0 %v1152, 80
      %v4407 = vpop.permute.xlu0 %4406
      %v4409 = vsel %vm1165, %v4401, 0
      %v4412 = vsel %vm1165, %v4403, 0
      %v4415 = vsel %vm1165, %v4405, 0
      %v4418 = vsel %vm1165, %v4407, 0
      %4420 = vmatprep.subr.bf16.mxu0 0
      %4421 = vmatpush1.bf16.xpose.msra.mxu0 0
      %4422 = vmatprep.subr.bf16.mxu0 0
      %4423 = vmatpush1.bf16.xpose.msra.mxu0 0
      %4424 = vmatprep.subr.bf16.mxu0 0
      %4425 = vmatpush1.bf16.xpose.msra.mxu0 0
      %4426 = vmatprep.subr.bf16.mxu0 0
      %4427 = vmatpush1.bf16.xpose.msra.mxu0 0
      %4428 = vmatprep.subr.bf16.mxu0 0
      %4429 = vmatpush1.bf16.xpose.msra.mxu0 0
      %4430 = vmatprep.subr.bf16.mxu0 0
      %4431 = vmatpush1.bf16.xpose.msra.mxu0 0
      %4432 = vmatprep.subr.bf16.mxu0 0
      %4433 = vmatpush1.bf16.xpose.msra.mxu0 %v4418
      %4434 = vmatprep.subr.bf16.mxu0 0
      %4435 = vmatpush1.bf16.xpose.msra.mxu0 %v4415
      %4436 = vmatprep.subr.bf16.mxu0 0
      %4437 = vmatpush2.bf16.xpose.msra.mxu0 0
      %4438 = vmatprep.subr.bf16.mxu0 0
      %4439 = vmatpush2.bf16.xpose.msra.mxu0 0
      %4440 = vmatprep.subr.bf16.mxu0 0
      %4441 = vmatpush2.bf16.xpose.msra.mxu0 0
      %4442 = vmatprep.subr.bf16.mxu0 0
      %4443 = vmatpush2.bf16.xpose.msra.mxu0 0
      %4444 = vmatprep.subr.bf16.mxu0 0
      %4445 = vmatpush2.bf16.xpose.msra.mxu0 0
      %4446 = vmatprep.subr.bf16.mxu0 0
      %4447 = vmatpush2.bf16.xpose.msra.mxu0 0
      %4448 = vmatprep.subr.bf16.mxu0 0
      %4449 = vmatpush2.bf16.xpose.msra.mxu0 0
      %4450 = vmatprep.subr.bf16.mxu0 0
      %4451 = vmatpush2.bf16.xpose.msra.mxu0 0
      %4452 = vmatprep.mubr.bf16.mxu0 0
      %4453 = vmatmul.mubr.bf16.gmra.mxu0 %v4409
      %v4454 = vpop.f32.mrf.mxu0
      %v4455 = vadd.f32 %v3982, %v4454
      %v4456 = vpop.f32.mrf.mxu0
      %v4457 = vpop.f32.mrf.mxu0
      %v4458 = vadd.f32 %v3983, %v4457
      %v4459 = vpop.f32.mrf.mxu0
      %4460 = vmatprep.mubr.bf16.mxu0 0
      %4461 = vmatmul.mubr.bf16.gmra.mxu0 %v4412
      %v4462 = vpop.f32.mrf.mxu0
      %v4463 = vadd.f32 %v3984, %v4462
      %v4464 = vpop.f32.mrf.mxu0
      %v4465 = vpop.f32.mrf.mxu0
      %v4466 = vadd.f32 %v3985, %v4465
      %v4467 = vpop.f32.mrf.mxu0
      %4468 = vdwg.mxu0
      %4469 = vrot.lane.b32.xlu0 %v1137, 112
      %v4470 = vpop.permute.xlu0 %4469
      %4471 = vrot.lane.b32.xlu0 %v1138, 112
      %v4472 = vpop.permute.xlu0 %4471
      %4473 = vrot.lane.b32.xlu0 %v1153, 80
      %v4474 = vpop.permute.xlu0 %4473
      %4475 = vrot.lane.b32.xlu0 %v1154, 80
      %v4476 = vpop.permute.xlu0 %4475
      %v4478 = vsel %vm1165, %v4470, 0
      %v4481 = vsel %vm1165, %v4472, 0
      %v4484 = vsel %vm1165, %v4474, 0
      %v4487 = vsel %vm1165, %v4476, 0
      %4489 = vmatprep.subr.bf16.mxu0 0
      %4490 = vmatpush1.bf16.xpose.msra.mxu0 0
      %4491 = vmatprep.subr.bf16.mxu0 0
      %4492 = vmatpush1.bf16.xpose.msra.mxu0 0
      %4493 = vmatprep.subr.bf16.mxu0 0
      %4494 = vmatpush1.bf16.xpose.msra.mxu0 0
      %4495 = vmatprep.subr.bf16.mxu0 0
      %4496 = vmatpush1.bf16.xpose.msra.mxu0 0
      %4497 = vmatprep.subr.bf16.mxu0 0
      %4498 = vmatpush1.bf16.xpose.msra.mxu0 0
      %4499 = vmatprep.subr.bf16.mxu0 0
      %4500 = vmatpush1.bf16.xpose.msra.mxu0 0
      %4501 = vmatprep.subr.bf16.mxu0 0
      %4502 = vmatpush1.bf16.xpose.msra.mxu0 %v4487
      %4503 = vmatprep.subr.bf16.mxu0 0
      %4504 = vmatpush1.bf16.xpose.msra.mxu0 %v4484
      %4505 = vmatprep.subr.bf16.mxu0 0
      %4506 = vmatpush2.bf16.xpose.msra.mxu0 0
      %4507 = vmatprep.subr.bf16.mxu0 0
      %4508 = vmatpush2.bf16.xpose.msra.mxu0 0
      %4509 = vmatprep.subr.bf16.mxu0 0
      %4510 = vmatpush2.bf16.xpose.msra.mxu0 0
      %4511 = vmatprep.subr.bf16.mxu0 0
      %4512 = vmatpush2.bf16.xpose.msra.mxu0 0
      %4513 = vmatprep.subr.bf16.mxu0 0
      %4514 = vmatpush2.bf16.xpose.msra.mxu0 0
      %4515 = vmatprep.subr.bf16.mxu0 0
      %4516 = vmatpush2.bf16.xpose.msra.mxu0 0
      %4517 = vmatprep.subr.bf16.mxu0 0
      %4518 = vmatpush2.bf16.xpose.msra.mxu0 0
      %4519 = vmatprep.subr.bf16.mxu0 0
      %4520 = vmatpush2.bf16.xpose.msra.mxu0 0
      %4521 = vmatprep.mubr.bf16.mxu0 0
      %4522 = vmatmul.mubr.bf16.gmra.mxu0 %v4478
      %v4523 = vpop.f32.mrf.mxu0
      %v4524 = vadd.f32 %v3982, %v4523
      %v4525 = vpop.f32.mrf.mxu0
      %v4526 = vpop.f32.mrf.mxu0
      %v4527 = vadd.f32 %v3983, %v4526
      %v4528 = vpop.f32.mrf.mxu0
      %4529 = vmatprep.mubr.bf16.mxu0 0
      %4530 = vmatmul.mubr.bf16.gmra.mxu0 %v4481
      %v4531 = vpop.f32.mrf.mxu0
      %v4532 = vadd.f32 %v3984, %v4531
      %v4533 = vpop.f32.mrf.mxu0
      %v4534 = vpop.f32.mrf.mxu0
      %v4535 = vadd.f32 %v3985, %v4534
      %v4536 = vpop.f32.mrf.mxu0
      %4537 = vdwg.mxu0
      %v4538 = vsel %vm347, %v4041, -inf
      %4539 = vmax.xlane.f32.xlu0 %v4538
      %v4540 = vpop.xlane.xlu0 %4539
      %v4541 = vsel %vm347, %v4044, -inf
      %4542 = vmax.xlane.f32.xlu0 %v4541
      %v4543 = vpop.xlane.xlu0 %4542
      %v4544 = vsel %vm347, %v4049, -inf
      %4545 = vmax.xlane.f32.xlu0 %v4544
      %v4546 = vpop.xlane.xlu0 %4545
      %v4547 = vsel %vm347, %v4052, -inf
      %4548 = vmax.xlane.f32.xlu0 %v4547
      %v4549 = vpop.xlane.xlu0 %4548
      %v4550 = vsel %vm347, %v4110, -inf
      %4551 = vmax.xlane.f32.xlu0 %v4550
      %v4552 = vpop.xlane.xlu0 %4551
      %v4553 = vsel %vm347, %v4113, -inf
      %4554 = vmax.xlane.f32.xlu0 %v4553
      %v4555 = vpop.xlane.xlu0 %4554
      %v4556 = vsel %vm347, %v4118, -inf
      %4557 = vmax.xlane.f32.xlu0 %v4556
      %v4558 = vpop.xlane.xlu0 %4557
      %v4559 = vsel %vm347, %v4121, -inf
      %4560 = vmax.xlane.f32.xlu0 %v4559
      %v4561 = vpop.xlane.xlu0 %4560
      %v4562 = vsel %vm347, %v4179, -inf
      %4563 = vmax.xlane.f32.xlu0 %v4562
      %v4564 = vpop.xlane.xlu0 %4563
      %v4565 = vsel %vm347, %v4182, -inf
      %4566 = vmax.xlane.f32.xlu0 %v4565
      %v4567 = vpop.xlane.xlu0 %4566
      %v4568 = vsel %vm347, %v4187, -inf
      %4569 = vmax.xlane.f32.xlu0 %v4568
      %v4570 = vpop.xlane.xlu0 %4569
      %v4571 = vsel %vm347, %v4190, -inf
      %4572 = vmax.xlane.f32.xlu0 %v4571
      %v4573 = vpop.xlane.xlu0 %4572
      %v4574 = vsel %vm347, %v4248, -inf
      %4575 = vmax.xlane.f32.xlu0 %v4574
      %v4576 = vpop.xlane.xlu0 %4575
      %v4577 = vsel %vm347, %v4251, -inf
      %4578 = vmax.xlane.f32.xlu0 %v4577
      %v4579 = vpop.xlane.xlu0 %4578
      %v4580 = vsel %vm347, %v4256, -inf
      %4581 = vmax.xlane.f32.xlu0 %v4580
      %v4582 = vpop.xlane.xlu0 %4581
      %v4583 = vsel %vm347, %v4259, -inf
      %4584 = vmax.xlane.f32.xlu0 %v4583
      %v4585 = vpop.xlane.xlu0 %4584
      %v4586 = vsel %vm347, %v4317, -inf
      %4587 = vmax.xlane.f32.xlu0 %v4586
      %v4588 = vpop.xlane.xlu0 %4587
      %v4589 = vsel %vm347, %v4320, -inf
      %4590 = vmax.xlane.f32.xlu0 %v4589
      %v4591 = vpop.xlane.xlu0 %4590
      %v4592 = vsel %vm347, %v4325, -inf
      %4593 = vmax.xlane.f32.xlu0 %v4592
      %v4594 = vpop.xlane.xlu0 %4593
      %v4595 = vsel %vm347, %v4328, -inf
      %4596 = vmax.xlane.f32.xlu0 %v4595
      %v4597 = vpop.xlane.xlu0 %4596
      %v4598 = vsel %vm347, %v4386, -inf
      %4599 = vmax.xlane.f32.xlu0 %v4598
      %v4600 = vpop.xlane.xlu0 %4599
      %v4601 = vsel %vm347, %v4389, -inf
      %4602 = vmax.xlane.f32.xlu0 %v4601
      %v4603 = vpop.xlane.xlu0 %4602
      %v4604 = vsel %vm347, %v4394, -inf
      %4605 = vmax.xlane.f32.xlu0 %v4604
      %v4606 = vpop.xlane.xlu0 %4605
      %v4607 = vsel %vm347, %v4397, -inf
      %4608 = vmax.xlane.f32.xlu0 %v4607
      %v4609 = vpop.xlane.xlu0 %4608
      %v4610 = vsel %vm347, %v4455, -inf
      %4611 = vmax.xlane.f32.xlu0 %v4610
      %v4612 = vpop.xlane.xlu0 %4611
      %v4613 = vsel %vm347, %v4458, -inf
      %4614 = vmax.xlane.f32.xlu0 %v4613
      %v4615 = vpop.xlane.xlu0 %4614
      %v4616 = vsel %vm347, %v4463, -inf
      %4617 = vmax.xlane.f32.xlu0 %v4616
      %v4618 = vpop.xlane.xlu0 %4617
      %v4619 = vsel %vm347, %v4466, -inf
      %4620 = vmax.xlane.f32.xlu0 %v4619
      %v4621 = vpop.xlane.xlu0 %4620
      %v4622 = vsel %vm347, %v4524, -inf
      %4623 = vmax.xlane.f32.xlu0 %v4622
      %v4624 = vpop.xlane.xlu0 %4623
      %v4625 = vsel %vm347, %v4527, -inf
      %4626 = vmax.xlane.f32.xlu0 %v4625
      %v4627 = vpop.xlane.xlu0 %4626
      %v4628 = vsel %vm347, %v4532, -inf
      %4629 = vmax.xlane.f32.xlu0 %v4628
      %v4630 = vpop.xlane.xlu0 %4629
      %v4631 = vsel %vm347, %v4535, -inf
      %4632 = vmax.xlane.f32.xlu0 %v4631
      %v4633 = vpop.xlane.xlu0 %4632
      %v4634 = vsub.f32 %v4041, %v4540
      %v4635 = vsub.f32 %v4044, %v4543
      %v4636 = vsub.f32 %v4049, %v4546
      %v4637 = vsub.f32 %v4052, %v4549
      %v4638 = vsub.f32 %v4110, %v4552
      %v4639 = vsub.f32 %v4113, %v4555
      %v4640 = vsub.f32 %v4118, %v4558
      %v4641 = vsub.f32 %v4121, %v4561
      %v4642 = vsub.f32 %v4179, %v4564
      %v4643 = vsub.f32 %v4182, %v4567
      %v4644 = vsub.f32 %v4187, %v4570
      %v4645 = vsub.f32 %v4190, %v4573
      %v4646 = vsub.f32 %v4248, %v4576
      %v4647 = vsub.f32 %v4251, %v4579
      %v4648 = vsub.f32 %v4256, %v4582
      %v4649 = vsub.f32 %v4259, %v4585
      %v4650 = vsub.f32 %v4317, %v4588
      %v4651 = vsub.f32 %v4320, %v4591
      %v4652 = vsub.f32 %v4325, %v4594
      %v4653 = vsub.f32 %v4328, %v4597
      %v4654 = vsub.f32 %v4386, %v4600
      %v4655 = vsub.f32 %v4389, %v4603
      %v4656 = vsub.f32 %v4394, %v4606
      %v4657 = vsub.f32 %v4397, %v4609
      %v4658 = vsub.f32 %v4455, %v4612
      %v4659 = vsub.f32 %v4458, %v4615
      %v4660 = vsub.f32 %v4463, %v4618
      %v4661 = vsub.f32 %v4466, %v4621
      %v4662 = vsub.f32 %v4524, %v4624
      %v4663 = vsub.f32 %v4527, %v4627
      %v4664 = vsub.f32 %v4532, %v4630
      %v4665 = vsub.f32 %v4535, %v4633
      %v4666 = vmul.f32 %v4634, 1.442695
      %v4667 = vpow.pop %v4666
      %v4668 = vmul.f32 %v4635, 1.442695
      %v4669 = vpow.pop %v4668
      %v4670 = vmul.f32 %v4636, 1.442695
      %v4671 = vpow.pop %v4670
      %v4672 = vmul.f32 %v4637, 1.442695
      %v4673 = vpow.pop %v4672
      %v4674 = vmul.f32 %v4638, 1.442695
      %v4675 = vpow.pop %v4674
      %v4676 = vmul.f32 %v4639, 1.442695
      %v4677 = vpow.pop %v4676
      %v4678 = vmul.f32 %v4640, 1.442695
      %v4679 = vpow.pop %v4678
      %v4680 = vmul.f32 %v4641, 1.442695
      %v4681 = vpow.pop %v4680
      %v4682 = vmul.f32 %v4642, 1.442695
      %v4683 = vpow.pop %v4682
      %v4684 = vmul.f32 %v4643, 1.442695
      %v4685 = vpow.pop %v4684
      %v4686 = vmul.f32 %v4644, 1.442695
      %v4687 = vpow.pop %v4686
      %v4688 = vmul.f32 %v4645, 1.442695
      %v4689 = vpow.pop %v4688
      %v4690 = vmul.f32 %v4646, 1.442695
      %v4691 = vpow.pop %v4690
      %v4692 = vmul.f32 %v4647, 1.442695
      %v4693 = vpow.pop %v4692
      %v4694 = vmul.f32 %v4648, 1.442695
      %v4695 = vpow.pop %v4694
      %v4696 = vmul.f32 %v4649, 1.442695
      %v4697 = vpow.pop %v4696
      %v4698 = vmul.f32 %v4650, 1.442695
      %v4699 = vpow.pop %v4698
      %v4700 = vmul.f32 %v4651, 1.442695
      %v4701 = vpow.pop %v4700
      %v4702 = vmul.f32 %v4652, 1.442695
      %v4703 = vpow.pop %v4702
      %v4704 = vmul.f32 %v4653, 1.442695
      %v4705 = vpow.pop %v4704
      %v4706 = vmul.f32 %v4654, 1.442695
      %v4707 = vpow.pop %v4706
      %v4708 = vmul.f32 %v4655, 1.442695
      %v4709 = vpow.pop %v4708
      %v4710 = vmul.f32 %v4656, 1.442695
      %v4711 = vpow.pop %v4710
      %v4712 = vmul.f32 %v4657, 1.442695
      %v4713 = vpow.pop %v4712
      %v4714 = vmul.f32 %v4658, 1.442695
      %v4715 = vpow.pop %v4714
      %v4716 = vmul.f32 %v4659, 1.442695
      %v4717 = vpow.pop %v4716
      %v4718 = vmul.f32 %v4660, 1.442695
      %v4719 = vpow.pop %v4718
      %v4720 = vmul.f32 %v4661, 1.442695
      %v4721 = vpow.pop %v4720
      %v4722 = vmul.f32 %v4662, 1.442695
      %v4723 = vpow.pop %v4722
      %v4724 = vmul.f32 %v4663, 1.442695
      %v4725 = vpow.pop %v4724
      %v4726 = vmul.f32 %v4664, 1.442695
      %v4727 = vpow.pop %v4726
      %v4728 = vmul.f32 %v4665, 1.442695
      %v4729 = vpow.pop %v4728
      %v4730 = vsel %vm347, %v4667, 0.0
      %4731 = vadd.xlane.f32.xlu0 %v4730
      %v4732 = vpop.xlane.xlu0 %4731
      %v4733 = vsel %vm347, %v4669, 0.0
      %4734 = vadd.xlane.f32.xlu0 %v4733
      %v4735 = vpop.xlane.xlu0 %4734
      %v4736 = vsel %vm347, %v4671, 0.0
      %4737 = vadd.xlane.f32.xlu0 %v4736
      %v4738 = vpop.xlane.xlu0 %4737
      %v4739 = vsel %vm347, %v4673, 0.0
      %4740 = vadd.xlane.f32.xlu0 %v4739
      %v4741 = vpop.xlane.xlu0 %4740
      %v4742 = vsel %vm347, %v4675, 0.0
      %4743 = vadd.xlane.f32.xlu0 %v4742
      %v4744 = vpop.xlane.xlu0 %4743
      %v4745 = vsel %vm347, %v4677, 0.0
      %4746 = vadd.xlane.f32.xlu0 %v4745
      %v4747 = vpop.xlane.xlu0 %4746
      %v4748 = vsel %vm347, %v4679, 0.0
      %4749 = vadd.xlane.f32.xlu0 %v4748
      %v4750 = vpop.xlane.xlu0 %4749
      %v4751 = vsel %vm347, %v4681, 0.0
      %4752 = vadd.xlane.f32.xlu0 %v4751
      %v4753 = vpop.xlane.xlu0 %4752
      %v4754 = vsel %vm347, %v4683, 0.0
      %4755 = vadd.xlane.f32.xlu0 %v4754
      %v4756 = vpop.xlane.xlu0 %4755
      %v4757 = vsel %vm347, %v4685, 0.0
      %4758 = vadd.xlane.f32.xlu0 %v4757
      %v4759 = vpop.xlane.xlu0 %4758
      %v4760 = vsel %vm347, %v4687, 0.0
      %4761 = vadd.xlane.f32.xlu0 %v4760
      %v4762 = vpop.xlane.xlu0 %4761
      %v4763 = vsel %vm347, %v4689, 0.0
      %4764 = vadd.xlane.f32.xlu0 %v4763
      %v4765 = vpop.xlane.xlu0 %4764
      %v4766 = vsel %vm347, %v4691, 0.0
      %4767 = vadd.xlane.f32.xlu0 %v4766
      %v4768 = vpop.xlane.xlu0 %4767
      %v4769 = vsel %vm347, %v4693, 0.0
      %4770 = vadd.xlane.f32.xlu0 %v4769
      %v4771 = vpop.xlane.xlu0 %4770
      %v4772 = vsel %vm347, %v4695, 0.0
      %4773 = vadd.xlane.f32.xlu0 %v4772
      %v4774 = vpop.xlane.xlu0 %4773
      %v4775 = vsel %vm347, %v4697, 0.0
      %4776 = vadd.xlane.f32.xlu0 %v4775
      %v4777 = vpop.xlane.xlu0 %4776
      %v4778 = vsel %vm347, %v4699, 0.0
      %4779 = vadd.xlane.f32.xlu0 %v4778
      %v4780 = vpop.xlane.xlu0 %4779
      %v4781 = vsel %vm347, %v4701, 0.0
      %4782 = vadd.xlane.f32.xlu0 %v4781
      %v4783 = vpop.xlane.xlu0 %4782
      %v4784 = vsel %vm347, %v4703, 0.0
      %4785 = vadd.xlane.f32.xlu0 %v4784
      %v4786 = vpop.xlane.xlu0 %4785
      %v4787 = vsel %vm347, %v4705, 0.0
      %4788 = vadd.xlane.f32.xlu0 %v4787
      %v4789 = vpop.xlane.xlu0 %4788
      %v4790 = vsel %vm347, %v4707, 0.0
      %4791 = vadd.xlane.f32.xlu0 %v4790
      %v4792 = vpop.xlane.xlu0 %4791
      %v4793 = vsel %vm347, %v4709, 0.0
      %4794 = vadd.xlane.f32.xlu0 %v4793
      %v4795 = vpop.xlane.xlu0 %4794
      %v4796 = vsel %vm347, %v4711, 0.0
      %4797 = vadd.xlane.f32.xlu0 %v4796
      %v4798 = vpop.xlane.xlu0 %4797
      %v4799 = vsel %vm347, %v4713, 0.0
      %4800 = vadd.xlane.f32.xlu0 %v4799
      %v4801 = vpop.xlane.xlu0 %4800
      %v4802 = vsel %vm347, %v4715, 0.0
      %4803 = vadd.xlane.f32.xlu0 %v4802
      %v4804 = vpop.xlane.xlu0 %4803
      %v4805 = vsel %vm347, %v4717, 0.0
      %4806 = vadd.xlane.f32.xlu0 %v4805
      %v4807 = vpop.xlane.xlu0 %4806
      %v4808 = vsel %vm347, %v4719, 0.0
      %4809 = vadd.xlane.f32.xlu0 %v4808
      %v4810 = vpop.xlane.xlu0 %4809
      %v4811 = vsel %vm347, %v4721, 0.0
      %4812 = vadd.xlane.f32.xlu0 %v4811
      %v4813 = vpop.xlane.xlu0 %4812
      %v4814 = vsel %vm347, %v4723, 0.0
      %4815 = vadd.xlane.f32.xlu0 %v4814
      %v4816 = vpop.xlane.xlu0 %4815
      %v4817 = vsel %vm347, %v4725, 0.0
      %4818 = vadd.xlane.f32.xlu0 %v4817
      %v4819 = vpop.xlane.xlu0 %4818
      %v4820 = vsel %vm347, %v4727, 0.0
      %4821 = vadd.xlane.f32.xlu0 %v4820
      %v4822 = vpop.xlane.xlu0 %4821
      %v4823 = vsel %vm347, %v4729, 0.0
      %4824 = vadd.xlane.f32.xlu0 %v4823
      %v4825 = vpop.xlane.xlu0 %4824
      %v4826 = vrcp.pop %v4732
      %v4827 = vrcp.pop %v4735
      %v4828 = vrcp.pop %v4738
      %v4829 = vrcp.pop %v4741
      %v4830 = vrcp.pop %v4744
      %v4831 = vrcp.pop %v4747
      %v4832 = vrcp.pop %v4750
      %v4833 = vrcp.pop %v4753
      %v4834 = vrcp.pop %v4756
      %v4835 = vrcp.pop %v4759
      %v4836 = vrcp.pop %v4762
      %v4837 = vrcp.pop %v4765
      %v4838 = vrcp.pop %v4768
      %v4839 = vrcp.pop %v4771
      %v4840 = vrcp.pop %v4774
      %v4841 = vrcp.pop %v4777
      %v4842 = vrcp.pop %v4780
      %v4843 = vrcp.pop %v4783
      %v4844 = vrcp.pop %v4786
      %v4845 = vrcp.pop %v4789
      %v4846 = vrcp.pop %v4792
      %v4847 = vrcp.pop %v4795
      %v4848 = vrcp.pop %v4798
      %v4849 = vrcp.pop %v4801
      %v4850 = vrcp.pop %v4804
      %v4851 = vrcp.pop %v4807
      %v4852 = vrcp.pop %v4810
      %v4853 = vrcp.pop %v4813
      %v4854 = vrcp.pop %v4816
      %v4855 = vrcp.pop %v4819
      %v4856 = vrcp.pop %v4822
      %v4857 = vrcp.pop %v4825
      %v4858 = vmul.f32 %v4667, %v4826
      %v4859 = vmul.f32 %v4669, %v4827
      %v4860 = vmul.f32 %v4671, %v4828
      %v4861 = vmul.f32 %v4673, %v4829
      %v4862 = vmul.f32 %v4675, %v4830
      %v4863 = vmul.f32 %v4677, %v4831
      %v4864 = vmul.f32 %v4679, %v4832
      %v4865 = vmul.f32 %v4681, %v4833
      %v4866 = vmul.f32 %v4683, %v4834
      %v4867 = vmul.f32 %v4685, %v4835
      %v4868 = vmul.f32 %v4687, %v4836
      %v4869 = vmul.f32 %v4689, %v4837
      %v4870 = vmul.f32 %v4691, %v4838
      %v4871 = vmul.f32 %v4693, %v4839
      %v4872 = vmul.f32 %v4695, %v4840
      %v4873 = vmul.f32 %v4697, %v4841
      %v4874 = vmul.f32 %v4699, %v4842
      %v4875 = vmul.f32 %v4701, %v4843
      %v4876 = vmul.f32 %v4703, %v4844
      %v4877 = vmul.f32 %v4705, %v4845
      %v4878 = vmul.f32 %v4707, %v4846
      %v4879 = vmul.f32 %v4709, %v4847
      %v4880 = vmul.f32 %v4711, %v4848
      %v4881 = vmul.f32 %v4713, %v4849
      %v4882 = vmul.f32 %v4715, %v4850
      %v4883 = vmul.f32 %v4717, %v4851
      %v4884 = vmul.f32 %v4719, %v4852
      %v4885 = vmul.f32 %v4721, %v4853
      %v4886 = vmul.f32 %v4723, %v4854
      %v4887 = vmul.f32 %v4725, %v4855
      %v4888 = vmul.f32 %v4727, %v4856
      %v4889 = vmul.f32 %v4729, %v4857
      %v4890 = vpack.c.bf16 %v4859, %v4858
      %v4891 = vpack.c.bf16 %v4861, %v4860
      %v4892 = vpack.c.bf16 %v4863, %v4862
      %v4893 = vpack.c.bf16 %v4865, %v4864
      %v4894 = vpack.c.bf16 %v4867, %v4866
      %v4895 = vpack.c.bf16 %v4869, %v4868
      %v4896 = vpack.c.bf16 %v4871, %v4870
      %v4897 = vpack.c.bf16 %v4873, %v4872
      %v4898 = vpack.c.bf16 %v4875, %v4874
      %v4899 = vpack.c.bf16 %v4877, %v4876
      %v4900 = vpack.c.bf16 %v4879, %v4878
      %v4901 = vpack.c.bf16 %v4881, %v4880
      %v4902 = vpack.c.bf16 %v4883, %v4882
      %v4903 = vpack.c.bf16 %v4885, %v4884
      %v4904 = vpack.c.bf16 %v4887, %v4886
      %v4905 = vpack.c.bf16 %v4889, %v4888
      %4906 = vrot.lane.b32.xlu0 %v1139, 48
      %v4907 = vpop.permute.xlu0 %4906
      %4908 = vrot.lane.b32.xlu0 %v1140, 48
      %v4909 = vpop.permute.xlu0 %4908
      %v4913 = vsel %vm347, %v4890, 0
      %v4916 = vsel %vm347, %v4891, 0
      %4918 = vmatprep.subr.bf16.mxu0 0
      %4919 = vmatpush1.bf16.msra.mxu0 0
      %4920 = vmatprep.subr.bf16.mxu0 0
      %4921 = vmatpush1.bf16.msra.mxu0 0
      %4922 = vmatprep.subr.bf16.mxu0 0
      %4923 = vmatpush1.bf16.msra.mxu0 0
      %4924 = vmatprep.subr.bf16.mxu0 0
      %4925 = vmatpush1.bf16.msra.mxu0 0
      %4926 = vmatprep.subr.bf16.mxu0 0
      %4927 = vmatpush1.bf16.msra.mxu0 0
      %4928 = vmatprep.subr.bf16.mxu0 0
      %4929 = vmatpush1.bf16.msra.mxu0 0
      %4930 = vmatprep.subr.bf16.mxu0 0
      %4931 = vmatpush1.bf16.msra.mxu0 %v4909
      %4932 = vmatprep.subr.bf16.mxu0 0
      %4933 = vmatpush1.bf16.msra.mxu0 %v4907
      %4934 = vmatprep.subr.bf16.mxu0 0
      %4935 = vmatpush2.bf16.msra.mxu0 0
      %4936 = vmatprep.subr.bf16.mxu0 0
      %4937 = vmatpush2.bf16.msra.mxu0 0
      %4938 = vmatprep.subr.bf16.mxu0 0
      %4939 = vmatpush2.bf16.msra.mxu0 0
      %4940 = vmatprep.subr.bf16.mxu0 0
      %4941 = vmatpush2.bf16.msra.mxu0 0
      %4942 = vmatprep.subr.bf16.mxu0 0
      %4943 = vmatpush2.bf16.msra.mxu0 0
      %4944 = vmatprep.subr.bf16.mxu0 0
      %4945 = vmatpush2.bf16.msra.mxu0 0
      %4946 = vmatprep.subr.bf16.mxu0 0
      %4947 = vmatpush2.bf16.msra.mxu0 0
      %4948 = vmatprep.subr.bf16.mxu0 0
      %4949 = vmatpush2.bf16.msra.mxu0 0
      %4950 = vmatprep.mubr.bf16.mxu0 0
      %4951 = vmatmul.mubr.bf16.gmra.mxu0 %v4913
      %v4952 = vpop.f32.mrf.mxu0
      %v4953 = vadd.f32 0.0, %v4952
      %v4954 = vpop.f32.mrf.mxu0
      %v4955 = vpop.f32.mrf.mxu0
      %v4956 = vadd.f32 0.0, %v4955
      %v4957 = vpop.f32.mrf.mxu0
      %4958 = vmatprep.mubr.bf16.mxu0 0
      %4959 = vmatmul.mubr.bf16.gmra.mxu0 %v4916
      %v4960 = vpop.f32.mrf.mxu0
      %v4961 = vadd.f32 0.0, %v4960
      %v4962 = vpop.f32.mrf.mxu0
      %v4963 = vpop.f32.mrf.mxu0
      %v4964 = vadd.f32 0.0, %v4963
      %v4965 = vpop.f32.mrf.mxu0
      %4966 = vdwg.mxu0
      %4967 = vrot.lane.b32.xlu0 %v1141, 48
      %v4968 = vpop.permute.xlu0 %4967
      %4969 = vrot.lane.b32.xlu0 %v1142, 48
      %v4970 = vpop.permute.xlu0 %4969
      %v4974 = vsel %vm347, %v4892, 0
      %v4977 = vsel %vm347, %v4893, 0
      %4979 = vmatprep.subr.bf16.mxu0 0
      %4980 = vmatpush1.bf16.msra.mxu0 0
      %4981 = vmatprep.subr.bf16.mxu0 0
      %4982 = vmatpush1.bf16.msra.mxu0 0
      %4983 = vmatprep.subr.bf16.mxu0 0
      %4984 = vmatpush1.bf16.msra.mxu0 0
      %4985 = vmatprep.subr.bf16.mxu0 0
      %4986 = vmatpush1.bf16.msra.mxu0 0
      %4987 = vmatprep.subr.bf16.mxu0 0
      %4988 = vmatpush1.bf16.msra.mxu0 0
      %4989 = vmatprep.subr.bf16.mxu0 0
      %4990 = vmatpush1.bf16.msra.mxu0 0
      %4991 = vmatprep.subr.bf16.mxu0 0
      %4992 = vmatpush1.bf16.msra.mxu0 %v4970
      %4993 = vmatprep.subr.bf16.mxu0 0
      %4994 = vmatpush1.bf16.msra.mxu0 %v4968
      %4995 = vmatprep.subr.bf16.mxu0 0
      %4996 = vmatpush2.bf16.msra.mxu0 0
      %4997 = vmatprep.subr.bf16.mxu0 0
      %4998 = vmatpush2.bf16.msra.mxu0 0
      %4999 = vmatprep.subr.bf16.mxu0 0
      %5000 = vmatpush2.bf16.msra.mxu0 0
      %5001 = vmatprep.subr.bf16.mxu0 0
      %5002 = vmatpush2.bf16.msra.mxu0 0
      %5003 = vmatprep.subr.bf16.mxu0 0
      %5004 = vmatpush2.bf16.msra.mxu0 0
      %5005 = vmatprep.subr.bf16.mxu0 0
      %5006 = vmatpush2.bf16.msra.mxu0 0
      %5007 = vmatprep.subr.bf16.mxu0 0
      %5008 = vmatpush2.bf16.msra.mxu0 0
      %5009 = vmatprep.subr.bf16.mxu0 0
      %5010 = vmatpush2.bf16.msra.mxu0 0
      %5011 = vmatprep.mubr.bf16.mxu0 0
      %5012 = vmatmul.mubr.bf16.gmra.mxu0 %v4974
      %v5013 = vpop.f32.mrf.mxu0
      %v5014 = vadd.f32 0.0, %v5013
      %v5015 = vpop.f32.mrf.mxu0
      %v5016 = vpop.f32.mrf.mxu0
      %v5017 = vadd.f32 0.0, %v5016
      %v5018 = vpop.f32.mrf.mxu0
      %5019 = vmatprep.mubr.bf16.mxu0 0
      %5020 = vmatmul.mubr.bf16.gmra.mxu0 %v4977
      %v5021 = vpop.f32.mrf.mxu0
      %v5022 = vadd.f32 0.0, %v5021
      %v5023 = vpop.f32.mrf.mxu0
      %v5024 = vpop.f32.mrf.mxu0
      %v5025 = vadd.f32 0.0, %v5024
      %v5026 = vpop.f32.mrf.mxu0
      %5027 = vdwg.mxu0
      %5028 = vrot.lane.b32.xlu0 %v1143, 48
      %v5029 = vpop.permute.xlu0 %5028
      %5030 = vrot.lane.b32.xlu0 %v1144, 48
      %v5031 = vpop.permute.xlu0 %5030
      %v5035 = vsel %vm347, %v4894, 0
      %v5038 = vsel %vm347, %v4895, 0
      %5040 = vmatprep.subr.bf16.mxu0 0
      %5041 = vmatpush1.bf16.msra.mxu0 0
      %5042 = vmatprep.subr.bf16.mxu0 0
      %5043 = vmatpush1.bf16.msra.mxu0 0
      %5044 = vmatprep.subr.bf16.mxu0 0
      %5045 = vmatpush1.bf16.msra.mxu0 0
      %5046 = vmatprep.subr.bf16.mxu0 0
      %5047 = vmatpush1.bf16.msra.mxu0 0
      %5048 = vmatprep.subr.bf16.mxu0 0
      %5049 = vmatpush1.bf16.msra.mxu0 0
      %5050 = vmatprep.subr.bf16.mxu0 0
      %5051 = vmatpush1.bf16.msra.mxu0 0
      %5052 = vmatprep.subr.bf16.mxu0 0
      %5053 = vmatpush1.bf16.msra.mxu0 %v5031
      %5054 = vmatprep.subr.bf16.mxu0 0
      %5055 = vmatpush1.bf16.msra.mxu0 %v5029
      %5056 = vmatprep.subr.bf16.mxu0 0
      %5057 = vmatpush2.bf16.msra.mxu0 0
      %5058 = vmatprep.subr.bf16.mxu0 0
      %5059 = vmatpush2.bf16.msra.mxu0 0
      %5060 = vmatprep.subr.bf16.mxu0 0
      %5061 = vmatpush2.bf16.msra.mxu0 0
      %5062 = vmatprep.subr.bf16.mxu0 0
      %5063 = vmatpush2.bf16.msra.mxu0 0
      %5064 = vmatprep.subr.bf16.mxu0 0
      %5065 = vmatpush2.bf16.msra.mxu0 0
      %5066 = vmatprep.subr.bf16.mxu0 0
      %5067 = vmatpush2.bf16.msra.mxu0 0
      %5068 = vmatprep.subr.bf16.mxu0 0
      %5069 = vmatpush2.bf16.msra.mxu0 0
      %5070 = vmatprep.subr.bf16.mxu0 0
      %5071 = vmatpush2.bf16.msra.mxu0 0
      %5072 = vmatprep.mubr.bf16.mxu0 0
      %5073 = vmatmul.mubr.bf16.gmra.mxu0 %v5035
      %v5074 = vpop.f32.mrf.mxu0
      %v5075 = vadd.f32 0.0, %v5074
      %v5076 = vpop.f32.mrf.mxu0
      %v5077 = vpop.f32.mrf.mxu0
      %v5078 = vadd.f32 0.0, %v5077
      %v5079 = vpop.f32.mrf.mxu0
      %5080 = vmatprep.mubr.bf16.mxu0 0
      %5081 = vmatmul.mubr.bf16.gmra.mxu0 %v5038
      %v5082 = vpop.f32.mrf.mxu0
      %v5083 = vadd.f32 0.0, %v5082
      %v5084 = vpop.f32.mrf.mxu0
      %v5085 = vpop.f32.mrf.mxu0
      %v5086 = vadd.f32 0.0, %v5085
      %v5087 = vpop.f32.mrf.mxu0
      %5088 = vdwg.mxu0
      %5089 = vrot.lane.b32.xlu0 %v1145, 48
      %v5090 = vpop.permute.xlu0 %5089
      %5091 = vrot.lane.b32.xlu0 %v1146, 48
      %v5092 = vpop.permute.xlu0 %5091
      %v5096 = vsel %vm347, %v4896, 0
      %v5099 = vsel %vm347, %v4897, 0
      %5101 = vmatprep.subr.bf16.mxu0 0
      %5102 = vmatpush1.bf16.msra.mxu0 0
      %5103 = vmatprep.subr.bf16.mxu0 0
      %5104 = vmatpush1.bf16.msra.mxu0 0
      %5105 = vmatprep.subr.bf16.mxu0 0
      %5106 = vmatpush1.bf16.msra.mxu0 0
      %5107 = vmatprep.subr.bf16.mxu0 0
      %5108 = vmatpush1.bf16.msra.mxu0 0
      %5109 = vmatprep.subr.bf16.mxu0 0
      %5110 = vmatpush1.bf16.msra.mxu0 0
      %5111 = vmatprep.subr.bf16.mxu0 0
      %5112 = vmatpush1.bf16.msra.mxu0 0
      %5113 = vmatprep.subr.bf16.mxu0 0
      %5114 = vmatpush1.bf16.msra.mxu0 %v5092
      %5115 = vmatprep.subr.bf16.mxu0 0
      %5116 = vmatpush1.bf16.msra.mxu0 %v5090
      %5117 = vmatprep.subr.bf16.mxu0 0
      %5118 = vmatpush2.bf16.msra.mxu0 0
      %5119 = vmatprep.subr.bf16.mxu0 0
      %5120 = vmatpush2.bf16.msra.mxu0 0
      %5121 = vmatprep.subr.bf16.mxu0 0
      %5122 = vmatpush2.bf16.msra.mxu0 0
      %5123 = vmatprep.subr.bf16.mxu0 0
      %5124 = vmatpush2.bf16.msra.mxu0 0
      %5125 = vmatprep.subr.bf16.mxu0 0
      %5126 = vmatpush2.bf16.msra.mxu0 0
      %5127 = vmatprep.subr.bf16.mxu0 0
      %5128 = vmatpush2.bf16.msra.mxu0 0
      %5129 = vmatprep.subr.bf16.mxu0 0
      %5130 = vmatpush2.bf16.msra.mxu0 0
      %5131 = vmatprep.subr.bf16.mxu0 0
      %5132 = vmatpush2.bf16.msra.mxu0 0
      %5133 = vmatprep.mubr.bf16.mxu0 0
      %5134 = vmatmul.mubr.bf16.gmra.mxu0 %v5096
      %v5135 = vpop.f32.mrf.mxu0
      %v5136 = vadd.f32 0.0, %v5135
      %v5137 = vpop.f32.mrf.mxu0
      %v5138 = vpop.f32.mrf.mxu0
      %v5139 = vadd.f32 0.0, %v5138
      %v5140 = vpop.f32.mrf.mxu0
      %5141 = vmatprep.mubr.bf16.mxu0 0
      %5142 = vmatmul.mubr.bf16.gmra.mxu0 %v5099
      %v5143 = vpop.f32.mrf.mxu0
      %v5144 = vadd.f32 0.0, %v5143
      %v5145 = vpop.f32.mrf.mxu0
      %v5146 = vpop.f32.mrf.mxu0
      %v5147 = vadd.f32 0.0, %v5146
      %v5148 = vpop.f32.mrf.mxu0
      %5149 = vdwg.mxu0
      %5150 = vrot.lane.b32.xlu0 %v1147, 48
      %v5151 = vpop.permute.xlu0 %5150
      %5152 = vrot.lane.b32.xlu0 %v1148, 48
      %v5153 = vpop.permute.xlu0 %5152
      %v5157 = vsel %vm347, %v4898, 0
      %v5160 = vsel %vm347, %v4899, 0
      %5162 = vmatprep.subr.bf16.mxu0 0
      %5163 = vmatpush1.bf16.msra.mxu0 0
      %5164 = vmatprep.subr.bf16.mxu0 0
      %5165 = vmatpush1.bf16.msra.mxu0 0
      %5166 = vmatprep.subr.bf16.mxu0 0
      %5167 = vmatpush1.bf16.msra.mxu0 0
      %5168 = vmatprep.subr.bf16.mxu0 0
      %5169 = vmatpush1.bf16.msra.mxu0 0
      %5170 = vmatprep.subr.bf16.mxu0 0
      %5171 = vmatpush1.bf16.msra.mxu0 0
      %5172 = vmatprep.subr.bf16.mxu0 0
      %5173 = vmatpush1.bf16.msra.mxu0 0
      %5174 = vmatprep.subr.bf16.mxu0 0
      %5175 = vmatpush1.bf16.msra.mxu0 %v5153
      %5176 = vmatprep.subr.bf16.mxu0 0
      %5177 = vmatpush1.bf16.msra.mxu0 %v5151
      %5178 = vmatprep.subr.bf16.mxu0 0
      %5179 = vmatpush2.bf16.msra.mxu0 0
      %5180 = vmatprep.subr.bf16.mxu0 0
      %5181 = vmatpush2.bf16.msra.mxu0 0
      %5182 = vmatprep.subr.bf16.mxu0 0
      %5183 = vmatpush2.bf16.msra.mxu0 0
      %5184 = vmatprep.subr.bf16.mxu0 0
      %5185 = vmatpush2.bf16.msra.mxu0 0
      %5186 = vmatprep.subr.bf16.mxu0 0
      %5187 = vmatpush2.bf16.msra.mxu0 0
      %5188 = vmatprep.subr.bf16.mxu0 0
      %5189 = vmatpush2.bf16.msra.mxu0 0
      %5190 = vmatprep.subr.bf16.mxu0 0
      %5191 = vmatpush2.bf16.msra.mxu0 0
      %5192 = vmatprep.subr.bf16.mxu0 0
      %5193 = vmatpush2.bf16.msra.mxu0 0
      %5194 = vmatprep.mubr.bf16.mxu0 0
      %5195 = vmatmul.mubr.bf16.gmra.mxu0 %v5157
      %v5196 = vpop.f32.mrf.mxu0
      %v5197 = vadd.f32 0.0, %v5196
      %v5198 = vpop.f32.mrf.mxu0
      %v5199 = vpop.f32.mrf.mxu0
      %v5200 = vadd.f32 0.0, %v5199
      %v5201 = vpop.f32.mrf.mxu0
      %5202 = vmatprep.mubr.bf16.mxu0 0
      %5203 = vmatmul.mubr.bf16.gmra.mxu0 %v5160
      %v5204 = vpop.f32.mrf.mxu0
      %v5205 = vadd.f32 0.0, %v5204
      %v5206 = vpop.f32.mrf.mxu0
      %v5207 = vpop.f32.mrf.mxu0
      %v5208 = vadd.f32 0.0, %v5207
      %v5209 = vpop.f32.mrf.mxu0
      %5210 = vdwg.mxu0
      %5211 = vrot.lane.b32.xlu0 %v1149, 48
      %v5212 = vpop.permute.xlu0 %5211
      %5213 = vrot.lane.b32.xlu0 %v1150, 48
      %v5214 = vpop.permute.xlu0 %5213
      %v5218 = vsel %vm347, %v4900, 0
      %v5221 = vsel %vm347, %v4901, 0
      %5223 = vmatprep.subr.bf16.mxu0 0
      %5224 = vmatpush1.bf16.msra.mxu0 0
      %5225 = vmatprep.subr.bf16.mxu0 0
      %5226 = vmatpush1.bf16.msra.mxu0 0
      %5227 = vmatprep.subr.bf16.mxu0 0
      %5228 = vmatpush1.bf16.msra.mxu0 0
      %5229 = vmatprep.subr.bf16.mxu0 0
      %5230 = vmatpush1.bf16.msra.mxu0 0
      %5231 = vmatprep.subr.bf16.mxu0 0
      %5232 = vmatpush1.bf16.msra.mxu0 0
      %5233 = vmatprep.subr.bf16.mxu0 0
      %5234 = vmatpush1.bf16.msra.mxu0 0
      %5235 = vmatprep.subr.bf16.mxu0 0
      %5236 = vmatpush1.bf16.msra.mxu0 %v5214
      %5237 = vmatprep.subr.bf16.mxu0 0
      %5238 = vmatpush1.bf16.msra.mxu0 %v5212
      %5239 = vmatprep.subr.bf16.mxu0 0
      %5240 = vmatpush2.bf16.msra.mxu0 0
      %5241 = vmatprep.subr.bf16.mxu0 0
      %5242 = vmatpush2.bf16.msra.mxu0 0
      %5243 = vmatprep.subr.bf16.mxu0 0
      %5244 = vmatpush2.bf16.msra.mxu0 0
      %5245 = vmatprep.subr.bf16.mxu0 0
      %5246 = vmatpush2.bf16.msra.mxu0 0
      %5247 = vmatprep.subr.bf16.mxu0 0
      %5248 = vmatpush2.bf16.msra.mxu0 0
      %5249 = vmatprep.subr.bf16.mxu0 0
      %5250 = vmatpush2.bf16.msra.mxu0 0
      %5251 = vmatprep.subr.bf16.mxu0 0
      %5252 = vmatpush2.bf16.msra.mxu0 0
      %5253 = vmatprep.subr.bf16.mxu0 0
      %5254 = vmatpush2.bf16.msra.mxu0 0
      %5255 = vmatprep.mubr.bf16.mxu0 0
      %5256 = vmatmul.mubr.bf16.gmra.mxu0 %v5218
      %v5257 = vpop.f32.mrf.mxu0
      %v5258 = vadd.f32 0.0, %v5257
      %v5259 = vpop.f32.mrf.mxu0
      %v5260 = vpop.f32.mrf.mxu0
      %v5261 = vadd.f32 0.0, %v5260
      %v5262 = vpop.f32.mrf.mxu0
      %5263 = vmatprep.mubr.bf16.mxu0 0
      %5264 = vmatmul.mubr.bf16.gmra.mxu0 %v5221
      %v5265 = vpop.f32.mrf.mxu0
      %v5266 = vadd.f32 0.0, %v5265
      %v5267 = vpop.f32.mrf.mxu0
      %v5268 = vpop.f32.mrf.mxu0
      %v5269 = vadd.f32 0.0, %v5268
      %v5270 = vpop.f32.mrf.mxu0
      %5271 = vdwg.mxu0
      %5272 = vrot.lane.b32.xlu0 %v1151, 48
      %v5273 = vpop.permute.xlu0 %5272
      %5274 = vrot.lane.b32.xlu0 %v1152, 48
      %v5275 = vpop.permute.xlu0 %5274
      %v5279 = vsel %vm347, %v4902, 0
      %v5282 = vsel %vm347, %v4903, 0
      %5284 = vmatprep.subr.bf16.mxu0 0
      %5285 = vmatpush1.bf16.msra.mxu0 0
      %5286 = vmatprep.subr.bf16.mxu0 0
      %5287 = vmatpush1.bf16.msra.mxu0 0
      %5288 = vmatprep.subr.bf16.mxu0 0
      %5289 = vmatpush1.bf16.msra.mxu0 0
      %5290 = vmatprep.subr.bf16.mxu0 0
      %5291 = vmatpush1.bf16.msra.mxu0 0
      %5292 = vmatprep.subr.bf16.mxu0 0
      %5293 = vmatpush1.bf16.msra.mxu0 0
      %5294 = vmatprep.subr.bf16.mxu0 0
      %5295 = vmatpush1.bf16.msra.mxu0 0
      %5296 = vmatprep.subr.bf16.mxu0 0
      %5297 = vmatpush1.bf16.msra.mxu0 %v5275
      %5298 = vmatprep.subr.bf16.mxu0 0
      %5299 = vmatpush1.bf16.msra.mxu0 %v5273
      %5300 = vmatprep.subr.bf16.mxu0 0
      %5301 = vmatpush2.bf16.msra.mxu0 0
      %5302 = vmatprep.subr.bf16.mxu0 0
      %5303 = vmatpush2.bf16.msra.mxu0 0
      %5304 = vmatprep.subr.bf16.mxu0 0
      %5305 = vmatpush2.bf16.msra.mxu0 0
      %5306 = vmatprep.subr.bf16.mxu0 0
      %5307 = vmatpush2.bf16.msra.mxu0 0
      %5308 = vmatprep.subr.bf16.mxu0 0
      %5309 = vmatpush2.bf16.msra.mxu0 0
      %5310 = vmatprep.subr.bf16.mxu0 0
      %5311 = vmatpush2.bf16.msra.mxu0 0
      %5312 = vmatprep.subr.bf16.mxu0 0
      %5313 = vmatpush2.bf16.msra.mxu0 0
      %5314 = vmatprep.subr.bf16.mxu0 0
      %5315 = vmatpush2.bf16.msra.mxu0 0
      %5316 = vmatprep.mubr.bf16.mxu0 0
      %5317 = vmatmul.mubr.bf16.gmra.mxu0 %v5279
      %v5318 = vpop.f32.mrf.mxu0
      %v5319 = vadd.f32 0.0, %v5318
      %v5320 = vpop.f32.mrf.mxu0
      %v5321 = vpop.f32.mrf.mxu0
      %v5322 = vadd.f32 0.0, %v5321
      %v5323 = vpop.f32.mrf.mxu0
      %5324 = vmatprep.mubr.bf16.mxu0 0
      %5325 = vmatmul.mubr.bf16.gmra.mxu0 %v5282
      %v5326 = vpop.f32.mrf.mxu0
      %v5327 = vadd.f32 0.0, %v5326
      %v5328 = vpop.f32.mrf.mxu0
      %v5329 = vpop.f32.mrf.mxu0
      %v5330 = vadd.f32 0.0, %v5329
      %v5331 = vpop.f32.mrf.mxu0
      %5332 = vdwg.mxu0
      %5333 = vrot.lane.b32.xlu0 %v1153, 48
      %v5334 = vpop.permute.xlu0 %5333
      %5335 = vrot.lane.b32.xlu0 %v1154, 48
      %v5336 = vpop.permute.xlu0 %5335
      %v5340 = vsel %vm347, %v4904, 0
      %v5343 = vsel %vm347, %v4905, 0
      %5345 = vmatprep.subr.bf16.mxu0 0
      %5346 = vmatpush1.bf16.msra.mxu0 0
      %5347 = vmatprep.subr.bf16.mxu0 0
      %5348 = vmatpush1.bf16.msra.mxu0 0
      %5349 = vmatprep.subr.bf16.mxu0 0
      %5350 = vmatpush1.bf16.msra.mxu0 0
      %5351 = vmatprep.subr.bf16.mxu0 0
      %5352 = vmatpush1.bf16.msra.mxu0 0
      %5353 = vmatprep.subr.bf16.mxu0 0
      %5354 = vmatpush1.bf16.msra.mxu0 0
      %5355 = vmatprep.subr.bf16.mxu0 0
      %5356 = vmatpush1.bf16.msra.mxu0 0
      %5357 = vmatprep.subr.bf16.mxu0 0
      %5358 = vmatpush1.bf16.msra.mxu0 %v5336
      %5359 = vmatprep.subr.bf16.mxu0 0
      %5360 = vmatpush1.bf16.msra.mxu0 %v5334
      %5361 = vmatprep.subr.bf16.mxu0 0
      %5362 = vmatpush2.bf16.msra.mxu0 0
      %5363 = vmatprep.subr.bf16.mxu0 0
      %5364 = vmatpush2.bf16.msra.mxu0 0
      %5365 = vmatprep.subr.bf16.mxu0 0
      %5366 = vmatpush2.bf16.msra.mxu0 0
      %5367 = vmatprep.subr.bf16.mxu0 0
      %5368 = vmatpush2.bf16.msra.mxu0 0
      %5369 = vmatprep.subr.bf16.mxu0 0
      %5370 = vmatpush2.bf16.msra.mxu0 0
      %5371 = vmatprep.subr.bf16.mxu0 0
      %5372 = vmatpush2.bf16.msra.mxu0 0
      %5373 = vmatprep.subr.bf16.mxu0 0
      %5374 = vmatpush2.bf16.msra.mxu0 0
      %5375 = vmatprep.subr.bf16.mxu0 0
      %5376 = vmatpush2.bf16.msra.mxu0 0
      %5377 = vmatprep.mubr.bf16.mxu0 0
      %5378 = vmatmul.mubr.bf16.gmra.mxu0 %v5340
      %v5379 = vpop.f32.mrf.mxu0
      %v5380 = vadd.f32 0.0, %v5379
      %v5381 = vpop.f32.mrf.mxu0
      %v5382 = vpop.f32.mrf.mxu0
      %v5383 = vadd.f32 0.0, %v5382
      %v5384 = vpop.f32.mrf.mxu0
      %5385 = vmatprep.mubr.bf16.mxu0 0
      %5386 = vmatmul.mubr.bf16.gmra.mxu0 %v5343
      %v5387 = vpop.f32.mrf.mxu0
      %v5388 = vadd.f32 0.0, %v5387
      %v5389 = vpop.f32.mrf.mxu0
      %v5390 = vpop.f32.mrf.mxu0
      %v5391 = vadd.f32 0.0, %v5390
      %v5392 = vpop.f32.mrf.mxu0
      %5393 = vdwg.mxu0
      %s5394 = scalar_lea.vmem %s1, 96
      %v5395 = vld [vmem:[%s5394] sm:$0xff]
      %v5396 = vld [vmem:[%s5394 + $0x8] sm:$0xff]
      %v5397 = vld [vmem:[%s5394 + $0x10] sm:$0xff]
      %v5398 = vld [vmem:[%s5394 + $0x18] sm:$0xff]
      %5399 = vrot.lane.b32.xlu0 %v1123, 104
      %v5400 = vpop.permute.xlu0 %5399
      %5401 = vrot.lane.b32.xlu0 %v1124, 104
      %v5402 = vpop.permute.xlu0 %5401
      %5403 = vrot.lane.b32.xlu0 %v1139, 72
      %v5404 = vpop.permute.xlu0 %5403
      %5405 = vrot.lane.b32.xlu0 %v1140, 72
      %v5406 = vpop.permute.xlu0 %5405
      %v5408 = vsel %vm1165, %v5400, 0
      %v5411 = vsel %vm1165, %v5402, 0
      %v5414 = vsel %vm1165, %v5404, 0
      %v5417 = vsel %vm1165, %v5406, 0
      %5419 = vmatprep.subr.bf16.mxu0 0
      %5420 = vmatpush1.bf16.xpose.msra.mxu0 0
      %5421 = vmatprep.subr.bf16.mxu0 0
      %5422 = vmatpush1.bf16.xpose.msra.mxu0 0
      %5423 = vmatprep.subr.bf16.mxu0 0
      %5424 = vmatpush1.bf16.xpose.msra.mxu0 0
      %5425 = vmatprep.subr.bf16.mxu0 0
      %5426 = vmatpush1.bf16.xpose.msra.mxu0 0
      %5427 = vmatprep.subr.bf16.mxu0 0
      %5428 = vmatpush1.bf16.xpose.msra.mxu0 0
      %5429 = vmatprep.subr.bf16.mxu0 0
      %5430 = vmatpush1.bf16.xpose.msra.mxu0 0
      %5431 = vmatprep.subr.bf16.mxu0 0
      %5432 = vmatpush1.bf16.xpose.msra.mxu0 %v5417
      %5433 = vmatprep.subr.bf16.mxu0 0
      %5434 = vmatpush1.bf16.xpose.msra.mxu0 %v5414
      %5435 = vmatprep.subr.bf16.mxu0 0
      %5436 = vmatpush2.bf16.xpose.msra.mxu0 0
      %5437 = vmatprep.subr.bf16.mxu0 0
      %5438 = vmatpush2.bf16.xpose.msra.mxu0 0
      %5439 = vmatprep.subr.bf16.mxu0 0
      %5440 = vmatpush2.bf16.xpose.msra.mxu0 0
      %5441 = vmatprep.subr.bf16.mxu0 0
      %5442 = vmatpush2.bf16.xpose.msra.mxu0 0
      %5443 = vmatprep.subr.bf16.mxu0 0
      %5444 = vmatpush2.bf16.xpose.msra.mxu0 0
      %5445 = vmatprep.subr.bf16.mxu0 0
      %5446 = vmatpush2.bf16.xpose.msra.mxu0 0
      %5447 = vmatprep.subr.bf16.mxu0 0
      %5448 = vmatpush2.bf16.xpose.msra.mxu0 0
      %5449 = vmatprep.subr.bf16.mxu0 0
      %5450 = vmatpush2.bf16.xpose.msra.mxu0 0
      %5451 = vmatprep.mubr.bf16.mxu0 0
      %5452 = vmatmul.mubr.bf16.gmra.mxu0 %v5408
      %v5453 = vpop.f32.mrf.mxu0
      %v5454 = vadd.f32 %v5395, %v5453
      %v5455 = vpop.f32.mrf.mxu0
      %v5456 = vpop.f32.mrf.mxu0
      %v5457 = vadd.f32 %v5396, %v5456
      %v5458 = vpop.f32.mrf.mxu0
      %5459 = vmatprep.mubr.bf16.mxu0 0
      %5460 = vmatmul.mubr.bf16.gmra.mxu0 %v5411
      %v5461 = vpop.f32.mrf.mxu0
      %v5462 = vadd.f32 %v5397, %v5461
      %v5463 = vpop.f32.mrf.mxu0
      %v5464 = vpop.f32.mrf.mxu0
      %v5465 = vadd.f32 %v5398, %v5464
      %v5466 = vpop.f32.mrf.mxu0
      %5467 = vdwg.mxu0
      %5468 = vrot.lane.b32.xlu0 %v1125, 104
      %v5469 = vpop.permute.xlu0 %5468
      %5470 = vrot.lane.b32.xlu0 %v1126, 104
      %v5471 = vpop.permute.xlu0 %5470
      %5472 = vrot.lane.b32.xlu0 %v1141, 72
      %v5473 = vpop.permute.xlu0 %5472
      %5474 = vrot.lane.b32.xlu0 %v1142, 72
      %v5475 = vpop.permute.xlu0 %5474
      %v5477 = vsel %vm1165, %v5469, 0
      %v5480 = vsel %vm1165, %v5471, 0
      %v5483 = vsel %vm1165, %v5473, 0
      %v5486 = vsel %vm1165, %v5475, 0
      %5488 = vmatprep.subr.bf16.mxu0 0
      %5489 = vmatpush1.bf16.xpose.msra.mxu0 0
      %5490 = vmatprep.subr.bf16.mxu0 0
      %5491 = vmatpush1.bf16.xpose.msra.mxu0 0
      %5492 = vmatprep.subr.bf16.mxu0 0
      %5493 = vmatpush1.bf16.xpose.msra.mxu0 0
      %5494 = vmatprep.subr.bf16.mxu0 0
      %5495 = vmatpush1.bf16.xpose.msra.mxu0 0
      %5496 = vmatprep.subr.bf16.mxu0 0
      %5497 = vmatpush1.bf16.xpose.msra.mxu0 0
      %5498 = vmatprep.subr.bf16.mxu0 0
      %5499 = vmatpush1.bf16.xpose.msra.mxu0 0
      %5500 = vmatprep.subr.bf16.mxu0 0
      %5501 = vmatpush1.bf16.xpose.msra.mxu0 %v5486
      %5502 = vmatprep.subr.bf16.mxu0 0
      %5503 = vmatpush1.bf16.xpose.msra.mxu0 %v5483
      %5504 = vmatprep.subr.bf16.mxu0 0
      %5505 = vmatpush2.bf16.xpose.msra.mxu0 0
      %5506 = vmatprep.subr.bf16.mxu0 0
      %5507 = vmatpush2.bf16.xpose.msra.mxu0 0
      %5508 = vmatprep.subr.bf16.mxu0 0
      %5509 = vmatpush2.bf16.xpose.msra.mxu0 0
      %5510 = vmatprep.subr.bf16.mxu0 0
      %5511 = vmatpush2.bf16.xpose.msra.mxu0 0
      %5512 = vmatprep.subr.bf16.mxu0 0
      %5513 = vmatpush2.bf16.xpose.msra.mxu0 0
      %5514 = vmatprep.subr.bf16.mxu0 0
      %5515 = vmatpush2.bf16.xpose.msra.mxu0 0
      %5516 = vmatprep.subr.bf16.mxu0 0
      %5517 = vmatpush2.bf16.xpose.msra.mxu0 0
      %5518 = vmatprep.subr.bf16.mxu0 0
      %5519 = vmatpush2.bf16.xpose.msra.mxu0 0
      %5520 = vmatprep.mubr.bf16.mxu0 0
      %5521 = vmatmul.mubr.bf16.gmra.mxu0 %v5477
      %v5522 = vpop.f32.mrf.mxu0
      %v5523 = vadd.f32 %v5395, %v5522
      %v5524 = vpop.f32.mrf.mxu0
      %v5525 = vpop.f32.mrf.mxu0
      %v5526 = vadd.f32 %v5396, %v5525
      %v5527 = vpop.f32.mrf.mxu0
      %5528 = vmatprep.mubr.bf16.mxu0 0
      %5529 = vmatmul.mubr.bf16.gmra.mxu0 %v5480
      %v5530 = vpop.f32.mrf.mxu0
      %v5531 = vadd.f32 %v5397, %v5530
      %v5532 = vpop.f32.mrf.mxu0
      %v5533 = vpop.f32.mrf.mxu0
      %v5534 = vadd.f32 %v5398, %v5533
      %v5535 = vpop.f32.mrf.mxu0
      %5536 = vdwg.mxu0
      %5537 = vrot.lane.b32.xlu0 %v1127, 104
      %v5538 = vpop.permute.xlu0 %5537
      %5539 = vrot.lane.b32.xlu0 %v1128, 104
      %v5540 = vpop.permute.xlu0 %5539
      %5541 = vrot.lane.b32.xlu0 %v1143, 72
      %v5542 = vpop.permute.xlu0 %5541
      %5543 = vrot.lane.b32.xlu0 %v1144, 72
      %v5544 = vpop.permute.xlu0 %5543
      %v5546 = vsel %vm1165, %v5538, 0
      %v5549 = vsel %vm1165, %v5540, 0
      %v5552 = vsel %vm1165, %v5542, 0
      %v5555 = vsel %vm1165, %v5544, 0
      %5557 = vmatprep.subr.bf16.mxu0 0
      %5558 = vmatpush1.bf16.xpose.msra.mxu0 0
      %5559 = vmatprep.subr.bf16.mxu0 0
      %5560 = vmatpush1.bf16.xpose.msra.mxu0 0
      %5561 = vmatprep.subr.bf16.mxu0 0
      %5562 = vmatpush1.bf16.xpose.msra.mxu0 0
      %5563 = vmatprep.subr.bf16.mxu0 0
      %5564 = vmatpush1.bf16.xpose.msra.mxu0 0
      %5565 = vmatprep.subr.bf16.mxu0 0
      %5566 = vmatpush1.bf16.xpose.msra.mxu0 0
      %5567 = vmatprep.subr.bf16.mxu0 0
      %5568 = vmatpush1.bf16.xpose.msra.mxu0 0
      %5569 = vmatprep.subr.bf16.mxu0 0
      %5570 = vmatpush1.bf16.xpose.msra.mxu0 %v5555
      %5571 = vmatprep.subr.bf16.mxu0 0
      %5572 = vmatpush1.bf16.xpose.msra.mxu0 %v5552
      %5573 = vmatprep.subr.bf16.mxu0 0
      %5574 = vmatpush2.bf16.xpose.msra.mxu0 0
      %5575 = vmatprep.subr.bf16.mxu0 0
      %5576 = vmatpush2.bf16.xpose.msra.mxu0 0
      %5577 = vmatprep.subr.bf16.mxu0 0
      %5578 = vmatpush2.bf16.xpose.msra.mxu0 0
      %5579 = vmatprep.subr.bf16.mxu0 0
      %5580 = vmatpush2.bf16.xpose.msra.mxu0 0
      %5581 = vmatprep.subr.bf16.mxu0 0
      %5582 = vmatpush2.bf16.xpose.msra.mxu0 0
      %5583 = vmatprep.subr.bf16.mxu0 0
      %5584 = vmatpush2.bf16.xpose.msra.mxu0 0
      %5585 = vmatprep.subr.bf16.mxu0 0
      %5586 = vmatpush2.bf16.xpose.msra.mxu0 0
      %5587 = vmatprep.subr.bf16.mxu0 0
      %5588 = vmatpush2.bf16.xpose.msra.mxu0 0
      %5589 = vmatprep.mubr.bf16.mxu0 0
      %5590 = vmatmul.mubr.bf16.gmra.mxu0 %v5546
      %v5591 = vpop.f32.mrf.mxu0
      %v5592 = vadd.f32 %v5395, %v5591
      %v5593 = vpop.f32.mrf.mxu0
      %v5594 = vpop.f32.mrf.mxu0
      %v5595 = vadd.f32 %v5396, %v5594
      %v5596 = vpop.f32.mrf.mxu0
      %5597 = vmatprep.mubr.bf16.mxu0 0
      %5598 = vmatmul.mubr.bf16.gmra.mxu0 %v5549
      %v5599 = vpop.f32.mrf.mxu0
      %v5600 = vadd.f32 %v5397, %v5599
      %v5601 = vpop.f32.mrf.mxu0
      %v5602 = vpop.f32.mrf.mxu0
      %v5603 = vadd.f32 %v5398, %v5602
      %v5604 = vpop.f32.mrf.mxu0
      %5605 = vdwg.mxu0
      %5606 = vrot.lane.b32.xlu0 %v1129, 104
      %v5607 = vpop.permute.xlu0 %5606
      %5608 = vrot.lane.b32.xlu0 %v1130, 104
      %v5609 = vpop.permute.xlu0 %5608
      %5610 = vrot.lane.b32.xlu0 %v1145, 72
      %v5611 = vpop.permute.xlu0 %5610
      %5612 = vrot.lane.b32.xlu0 %v1146, 72
      %v5613 = vpop.permute.xlu0 %5612
      %v5615 = vsel %vm1165, %v5607, 0
      %v5618 = vsel %vm1165, %v5609, 0
      %v5621 = vsel %vm1165, %v5611, 0
      %v5624 = vsel %vm1165, %v5613, 0
      %5626 = vmatprep.subr.bf16.mxu0 0
      %5627 = vmatpush1.bf16.xpose.msra.mxu0 0
      %5628 = vmatprep.subr.bf16.mxu0 0
      %5629 = vmatpush1.bf16.xpose.msra.mxu0 0
      %5630 = vmatprep.subr.bf16.mxu0 0
      %5631 = vmatpush1.bf16.xpose.msra.mxu0 0
      %5632 = vmatprep.subr.bf16.mxu0 0
      %5633 = vmatpush1.bf16.xpose.msra.mxu0 0
      %5634 = vmatprep.subr.bf16.mxu0 0
      %5635 = vmatpush1.bf16.xpose.msra.mxu0 0
      %5636 = vmatprep.subr.bf16.mxu0 0
      %5637 = vmatpush1.bf16.xpose.msra.mxu0 0
      %5638 = vmatprep.subr.bf16.mxu0 0
      %5639 = vmatpush1.bf16.xpose.msra.mxu0 %v5624
      %5640 = vmatprep.subr.bf16.mxu0 0
      %5641 = vmatpush1.bf16.xpose.msra.mxu0 %v5621
      %5642 = vmatprep.subr.bf16.mxu0 0
      %5643 = vmatpush2.bf16.xpose.msra.mxu0 0
      %5644 = vmatprep.subr.bf16.mxu0 0
      %5645 = vmatpush2.bf16.xpose.msra.mxu0 0
      %5646 = vmatprep.subr.bf16.mxu0 0
      %5647 = vmatpush2.bf16.xpose.msra.mxu0 0
      %5648 = vmatprep.subr.bf16.mxu0 0
      %5649 = vmatpush2.bf16.xpose.msra.mxu0 0
      %5650 = vmatprep.subr.bf16.mxu0 0
      %5651 = vmatpush2.bf16.xpose.msra.mxu0 0
      %5652 = vmatprep.subr.bf16.mxu0 0
      %5653 = vmatpush2.bf16.xpose.msra.mxu0 0
      %5654 = vmatprep.subr.bf16.mxu0 0
      %5655 = vmatpush2.bf16.xpose.msra.mxu0 0
      %5656 = vmatprep.subr.bf16.mxu0 0
      %5657 = vmatpush2.bf16.xpose.msra.mxu0 0
      %5658 = vmatprep.mubr.bf16.mxu0 0
      %5659 = vmatmul.mubr.bf16.gmra.mxu0 %v5615
      %v5660 = vpop.f32.mrf.mxu0
      %v5661 = vadd.f32 %v5395, %v5660
      %v5662 = vpop.f32.mrf.mxu0
      %v5663 = vpop.f32.mrf.mxu0
      %v5664 = vadd.f32 %v5396, %v5663
      %v5665 = vpop.f32.mrf.mxu0
      %5666 = vmatprep.mubr.bf16.mxu0 0
      %5667 = vmatmul.mubr.bf16.gmra.mxu0 %v5618
      %v5668 = vpop.f32.mrf.mxu0
      %v5669 = vadd.f32 %v5397, %v5668
      %v5670 = vpop.f32.mrf.mxu0
      %v5671 = vpop.f32.mrf.mxu0
      %v5672 = vadd.f32 %v5398, %v5671
      %v5673 = vpop.f32.mrf.mxu0
      %5674 = vdwg.mxu0
      %5675 = vrot.lane.b32.xlu0 %v1131, 104
      %v5676 = vpop.permute.xlu0 %5675
      %5677 = vrot.lane.b32.xlu0 %v1132, 104
      %v5678 = vpop.permute.xlu0 %5677
      %5679 = vrot.lane.b32.xlu0 %v1147, 72
      %v5680 = vpop.permute.xlu0 %5679
      %5681 = vrot.lane.b32.xlu0 %v1148, 72
      %v5682 = vpop.permute.xlu0 %5681
      %v5684 = vsel %vm1165, %v5676, 0
      %v5687 = vsel %vm1165, %v5678, 0
      %v5690 = vsel %vm1165, %v5680, 0
      %v5693 = vsel %vm1165, %v5682, 0
      %5695 = vmatprep.subr.bf16.mxu0 0
      %5696 = vmatpush1.bf16.xpose.msra.mxu0 0
      %5697 = vmatprep.subr.bf16.mxu0 0
      %5698 = vmatpush1.bf16.xpose.msra.mxu0 0
      %5699 = vmatprep.subr.bf16.mxu0 0
      %5700 = vmatpush1.bf16.xpose.msra.mxu0 0
      %5701 = vmatprep.subr.bf16.mxu0 0
      %5702 = vmatpush1.bf16.xpose.msra.mxu0 0
      %5703 = vmatprep.subr.bf16.mxu0 0
      %5704 = vmatpush1.bf16.xpose.msra.mxu0 0
      %5705 = vmatprep.subr.bf16.mxu0 0
      %5706 = vmatpush1.bf16.xpose.msra.mxu0 0
      %5707 = vmatprep.subr.bf16.mxu0 0
      %5708 = vmatpush1.bf16.xpose.msra.mxu0 %v5693
      %5709 = vmatprep.subr.bf16.mxu0 0
      %5710 = vmatpush1.bf16.xpose.msra.mxu0 %v5690
      %5711 = vmatprep.subr.bf16.mxu0 0
      %5712 = vmatpush2.bf16.xpose.msra.mxu0 0
      %5713 = vmatprep.subr.bf16.mxu0 0
      %5714 = vmatpush2.bf16.xpose.msra.mxu0 0
      %5715 = vmatprep.subr.bf16.mxu0 0
      %5716 = vmatpush2.bf16.xpose.msra.mxu0 0
      %5717 = vmatprep.subr.bf16.mxu0 0
      %5718 = vmatpush2.bf16.xpose.msra.mxu0 0
      %5719 = vmatprep.subr.bf16.mxu0 0
      %5720 = vmatpush2.bf16.xpose.msra.mxu0 0
      %5721 = vmatprep.subr.bf16.mxu0 0
      %5722 = vmatpush2.bf16.xpose.msra.mxu0 0
      %5723 = vmatprep.subr.bf16.mxu0 0
      %5724 = vmatpush2.bf16.xpose.msra.mxu0 0
      %5725 = vmatprep.subr.bf16.mxu0 0
      %5726 = vmatpush2.bf16.xpose.msra.mxu0 0
      %5727 = vmatprep.mubr.bf16.mxu0 0
      %5728 = vmatmul.mubr.bf16.gmra.mxu0 %v5684
      %v5729 = vpop.f32.mrf.mxu0
      %v5730 = vadd.f32 %v5395, %v5729
      %v5731 = vpop.f32.mrf.mxu0
      %v5732 = vpop.f32.mrf.mxu0
      %v5733 = vadd.f32 %v5396, %v5732
      %v5734 = vpop.f32.mrf.mxu0
      %5735 = vmatprep.mubr.bf16.mxu0 0
      %5736 = vmatmul.mubr.bf16.gmra.mxu0 %v5687
      %v5737 = vpop.f32.mrf.mxu0
      %v5738 = vadd.f32 %v5397, %v5737
      %v5739 = vpop.f32.mrf.mxu0
      %v5740 = vpop.f32.mrf.mxu0
      %v5741 = vadd.f32 %v5398, %v5740
      %v5742 = vpop.f32.mrf.mxu0
      %5743 = vdwg.mxu0
      %5744 = vrot.lane.b32.xlu0 %v1133, 104
      %v5745 = vpop.permute.xlu0 %5744
      %5746 = vrot.lane.b32.xlu0 %v1134, 104
      %v5747 = vpop.permute.xlu0 %5746
      %5748 = vrot.lane.b32.xlu0 %v1149, 72
      %v5749 = vpop.permute.xlu0 %5748
      %5750 = vrot.lane.b32.xlu0 %v1150, 72
      %v5751 = vpop.permute.xlu0 %5750
      %v5753 = vsel %vm1165, %v5745, 0
      %v5756 = vsel %vm1165, %v5747, 0
      %v5759 = vsel %vm1165, %v5749, 0
      %v5762 = vsel %vm1165, %v5751, 0
      %5764 = vmatprep.subr.bf16.mxu0 0
      %5765 = vmatpush1.bf16.xpose.msra.mxu0 0
      %5766 = vmatprep.subr.bf16.mxu0 0
      %5767 = vmatpush1.bf16.xpose.msra.mxu0 0
      %5768 = vmatprep.subr.bf16.mxu0 0
      %5769 = vmatpush1.bf16.xpose.msra.mxu0 0
      %5770 = vmatprep.subr.bf16.mxu0 0
      %5771 = vmatpush1.bf16.xpose.msra.mxu0 0
      %5772 = vmatprep.subr.bf16.mxu0 0
      %5773 = vmatpush1.bf16.xpose.msra.mxu0 0
      %5774 = vmatprep.subr.bf16.mxu0 0
      %5775 = vmatpush1.bf16.xpose.msra.mxu0 0
      %5776 = vmatprep.subr.bf16.mxu0 0
      %5777 = vmatpush1.bf16.xpose.msra.mxu0 %v5762
      %5778 = vmatprep.subr.bf16.mxu0 0
      %5779 = vmatpush1.bf16.xpose.msra.mxu0 %v5759
      %5780 = vmatprep.subr.bf16.mxu0 0
      %5781 = vmatpush2.bf16.xpose.msra.mxu0 0
      %5782 = vmatprep.subr.bf16.mxu0 0
      %5783 = vmatpush2.bf16.xpose.msra.mxu0 0
      %5784 = vmatprep.subr.bf16.mxu0 0
      %5785 = vmatpush2.bf16.xpose.msra.mxu0 0
      %5786 = vmatprep.subr.bf16.mxu0 0
      %5787 = vmatpush2.bf16.xpose.msra.mxu0 0
      %5788 = vmatprep.subr.bf16.mxu0 0
      %5789 = vmatpush2.bf16.xpose.msra.mxu0 0
      %5790 = vmatprep.subr.bf16.mxu0 0
      %5791 = vmatpush2.bf16.xpose.msra.mxu0 0
      %5792 = vmatprep.subr.bf16.mxu0 0
      %5793 = vmatpush2.bf16.xpose.msra.mxu0 0
      %5794 = vmatprep.subr.bf16.mxu0 0
      %5795 = vmatpush2.bf16.xpose.msra.mxu0 0
      %5796 = vmatprep.mubr.bf16.mxu0 0
      %5797 = vmatmul.mubr.bf16.gmra.mxu0 %v5753
      %v5798 = vpop.f32.mrf.mxu0
      %v5799 = vadd.f32 %v5395, %v5798
      %v5800 = vpop.f32.mrf.mxu0
      %v5801 = vpop.f32.mrf.mxu0
      %v5802 = vadd.f32 %v5396, %v5801
      %v5803 = vpop.f32.mrf.mxu0
      %5804 = vmatprep.mubr.bf16.mxu0 0
      %5805 = vmatmul.mubr.bf16.gmra.mxu0 %v5756
      %v5806 = vpop.f32.mrf.mxu0
      %v5807 = vadd.f32 %v5397, %v5806
      %v5808 = vpop.f32.mrf.mxu0
      %v5809 = vpop.f32.mrf.mxu0
      %v5810 = vadd.f32 %v5398, %v5809
      %v5811 = vpop.f32.mrf.mxu0
      %5812 = vdwg.mxu0
      %5813 = vrot.lane.b32.xlu0 %v1135, 104
      %v5814 = vpop.permute.xlu0 %5813
      %5815 = vrot.lane.b32.xlu0 %v1136, 104
      %v5816 = vpop.permute.xlu0 %5815
      %5817 = vrot.lane.b32.xlu0 %v1151, 72
      %v5818 = vpop.permute.xlu0 %5817
      %5819 = vrot.lane.b32.xlu0 %v1152, 72
      %v5820 = vpop.permute.xlu0 %5819
      %v5822 = vsel %vm1165, %v5814, 0
      %v5825 = vsel %vm1165, %v5816, 0
      %v5828 = vsel %vm1165, %v5818, 0
      %v5831 = vsel %vm1165, %v5820, 0
      %5833 = vmatprep.subr.bf16.mxu0 0
      %5834 = vmatpush1.bf16.xpose.msra.mxu0 0
      %5835 = vmatprep.subr.bf16.mxu0 0
      %5836 = vmatpush1.bf16.xpose.msra.mxu0 0
      %5837 = vmatprep.subr.bf16.mxu0 0
      %5838 = vmatpush1.bf16.xpose.msra.mxu0 0
      %5839 = vmatprep.subr.bf16.mxu0 0
      %5840 = vmatpush1.bf16.xpose.msra.mxu0 0
      %5841 = vmatprep.subr.bf16.mxu0 0
      %5842 = vmatpush1.bf16.xpose.msra.mxu0 0
      %5843 = vmatprep.subr.bf16.mxu0 0
      %5844 = vmatpush1.bf16.xpose.msra.mxu0 0
      %5845 = vmatprep.subr.bf16.mxu0 0
      %5846 = vmatpush1.bf16.xpose.msra.mxu0 %v5831
      %5847 = vmatprep.subr.bf16.mxu0 0
      %5848 = vmatpush1.bf16.xpose.msra.mxu0 %v5828
      %5849 = vmatprep.subr.bf16.mxu0 0
      %5850 = vmatpush2.bf16.xpose.msra.mxu0 0
      %5851 = vmatprep.subr.bf16.mxu0 0
      %5852 = vmatpush2.bf16.xpose.msra.mxu0 0
      %5853 = vmatprep.subr.bf16.mxu0 0
      %5854 = vmatpush2.bf16.xpose.msra.mxu0 0
      %5855 = vmatprep.subr.bf16.mxu0 0
      %5856 = vmatpush2.bf16.xpose.msra.mxu0 0
      %5857 = vmatprep.subr.bf16.mxu0 0
      %5858 = vmatpush2.bf16.xpose.msra.mxu0 0
      %5859 = vmatprep.subr.bf16.mxu0 0
      %5860 = vmatpush2.bf16.xpose.msra.mxu0 0
      %5861 = vmatprep.subr.bf16.mxu0 0
      %5862 = vmatpush2.bf16.xpose.msra.mxu0 0
      %5863 = vmatprep.subr.bf16.mxu0 0
      %5864 = vmatpush2.bf16.xpose.msra.mxu0 0
      %5865 = vmatprep.mubr.bf16.mxu0 0
      %5866 = vmatmul.mubr.bf16.gmra.mxu0 %v5822
      %v5867 = vpop.f32.mrf.mxu0
      %v5868 = vadd.f32 %v5395, %v5867
      %v5869 = vpop.f32.mrf.mxu0
      %v5870 = vpop.f32.mrf.mxu0
      %v5871 = vadd.f32 %v5396, %v5870
      %v5872 = vpop.f32.mrf.mxu0
      %5873 = vmatprep.mubr.bf16.mxu0 0
      %5874 = vmatmul.mubr.bf16.gmra.mxu0 %v5825
      %v5875 = vpop.f32.mrf.mxu0
      %v5876 = vadd.f32 %v5397, %v5875
      %v5877 = vpop.f32.mrf.mxu0
      %v5878 = vpop.f32.mrf.mxu0
      %v5879 = vadd.f32 %v5398, %v5878
      %v5880 = vpop.f32.mrf.mxu0
      %5881 = vdwg.mxu0
      %5882 = vrot.lane.b32.xlu0 %v1137, 104
      %v5883 = vpop.permute.xlu0 %5882
      %5884 = vrot.lane.b32.xlu0 %v1138, 104
      %v5885 = vpop.permute.xlu0 %5884
      %5886 = vrot.lane.b32.xlu0 %v1153, 72
      %v5887 = vpop.permute.xlu0 %5886
      %5888 = vrot.lane.b32.xlu0 %v1154, 72
      %v5889 = vpop.permute.xlu0 %5888
      %v5891 = vsel %vm1165, %v5883, 0
      %v5894 = vsel %vm1165, %v5885, 0
      %v5897 = vsel %vm1165, %v5887, 0
      %v5900 = vsel %vm1165, %v5889, 0
      %5902 = vmatprep.subr.bf16.mxu0 0
      %5903 = vmatpush1.bf16.xpose.msra.mxu0 0
      %5904 = vmatprep.subr.bf16.mxu0 0
      %5905 = vmatpush1.bf16.xpose.msra.mxu0 0
      %5906 = vmatprep.subr.bf16.mxu0 0
      %5907 = vmatpush1.bf16.xpose.msra.mxu0 0
      %5908 = vmatprep.subr.bf16.mxu0 0
      %5909 = vmatpush1.bf16.xpose.msra.mxu0 0
      %5910 = vmatprep.subr.bf16.mxu0 0
      %5911 = vmatpush1.bf16.xpose.msra.mxu0 0
      %5912 = vmatprep.subr.bf16.mxu0 0
      %5913 = vmatpush1.bf16.xpose.msra.mxu0 0
      %5914 = vmatprep.subr.bf16.mxu0 0
      %5915 = vmatpush1.bf16.xpose.msra.mxu0 %v5900
      %5916 = vmatprep.subr.bf16.mxu0 0
      %5917 = vmatpush1.bf16.xpose.msra.mxu0 %v5897
      %5918 = vmatprep.subr.bf16.mxu0 0
      %5919 = vmatpush2.bf16.xpose.msra.mxu0 0
      %5920 = vmatprep.subr.bf16.mxu0 0
      %5921 = vmatpush2.bf16.xpose.msra.mxu0 0
      %5922 = vmatprep.subr.bf16.mxu0 0
      %5923 = vmatpush2.bf16.xpose.msra.mxu0 0
      %5924 = vmatprep.subr.bf16.mxu0 0
      %5925 = vmatpush2.bf16.xpose.msra.mxu0 0
      %5926 = vmatprep.subr.bf16.mxu0 0
      %5927 = vmatpush2.bf16.xpose.msra.mxu0 0
      %5928 = vmatprep.subr.bf16.mxu0 0
      %5929 = vmatpush2.bf16.xpose.msra.mxu0 0
      %5930 = vmatprep.subr.bf16.mxu0 0
      %5931 = vmatpush2.bf16.xpose.msra.mxu0 0
      %5932 = vmatprep.subr.bf16.mxu0 0
      %5933 = vmatpush2.bf16.xpose.msra.mxu0 0
      %5934 = vmatprep.mubr.bf16.mxu0 0
      %5935 = vmatmul.mubr.bf16.gmra.mxu0 %v5891
      %v5936 = vpop.f32.mrf.mxu0
      %v5937 = vadd.f32 %v5395, %v5936
      %v5938 = vpop.f32.mrf.mxu0
      %v5939 = vpop.f32.mrf.mxu0
      %v5940 = vadd.f32 %v5396, %v5939
      %v5941 = vpop.f32.mrf.mxu0
      %5942 = vmatprep.mubr.bf16.mxu0 0
      %5943 = vmatmul.mubr.bf16.gmra.mxu0 %v5894
      %v5944 = vpop.f32.mrf.mxu0
      %v5945 = vadd.f32 %v5397, %v5944
      %v5946 = vpop.f32.mrf.mxu0
      %v5947 = vpop.f32.mrf.mxu0
      %v5948 = vadd.f32 %v5398, %v5947
      %v5949 = vpop.f32.mrf.mxu0
      %5950 = vdwg.mxu0
      %v5951 = vsel %vm347, %v5454, -inf
      %5952 = vmax.xlane.f32.xlu0 %v5951
      %v5953 = vpop.xlane.xlu0 %5952
      %v5954 = vsel %vm347, %v5457, -inf
      %5955 = vmax.xlane.f32.xlu0 %v5954
      %v5956 = vpop.xlane.xlu0 %5955
      %v5957 = vsel %vm347, %v5462, -inf
      %5958 = vmax.xlane.f32.xlu0 %v5957
      %v5959 = vpop.xlane.xlu0 %5958
      %v5960 = vsel %vm347, %v5465, -inf
      %5961 = vmax.xlane.f32.xlu0 %v5960
      %v5962 = vpop.xlane.xlu0 %5961
      %v5963 = vsel %vm347, %v5523, -inf
      %5964 = vmax.xlane.f32.xlu0 %v5963
      %v5965 = vpop.xlane.xlu0 %5964
      %v5966 = vsel %vm347, %v5526, -inf
      %5967 = vmax.xlane.f32.xlu0 %v5966
      %v5968 = vpop.xlane.xlu0 %5967
      %v5969 = vsel %vm347, %v5531, -inf
      %5970 = vmax.xlane.f32.xlu0 %v5969
      %v5971 = vpop.xlane.xlu0 %5970
      %v5972 = vsel %vm347, %v5534, -inf
      %5973 = vmax.xlane.f32.xlu0 %v5972
      %v5974 = vpop.xlane.xlu0 %5973
      %v5975 = vsel %vm347, %v5592, -inf
      %5976 = vmax.xlane.f32.xlu0 %v5975
      %v5977 = vpop.xlane.xlu0 %5976
      %v5978 = vsel %vm347, %v5595, -inf
      %5979 = vmax.xlane.f32.xlu0 %v5978
      %v5980 = vpop.xlane.xlu0 %5979
      %v5981 = vsel %vm347, %v5600, -inf
      %5982 = vmax.xlane.f32.xlu0 %v5981
      %v5983 = vpop.xlane.xlu0 %5982
      %v5984 = vsel %vm347, %v5603, -inf
      %5985 = vmax.xlane.f32.xlu0 %v5984
      %v5986 = vpop.xlane.xlu0 %5985
      %v5987 = vsel %vm347, %v5661, -inf
      %5988 = vmax.xlane.f32.xlu0 %v5987
      %v5989 = vpop.xlane.xlu0 %5988
      %v5990 = vsel %vm347, %v5664, -inf
      %5991 = vmax.xlane.f32.xlu0 %v5990
      %v5992 = vpop.xlane.xlu0 %5991
      %v5993 = vsel %vm347, %v5669, -inf
      %5994 = vmax.xlane.f32.xlu0 %v5993
      %v5995 = vpop.xlane.xlu0 %5994
      %v5996 = vsel %vm347, %v5672, -inf
      %5997 = vmax.xlane.f32.xlu0 %v5996
      %v5998 = vpop.xlane.xlu0 %5997
      %v5999 = vsel %vm347, %v5730, -inf
      %6000 = vmax.xlane.f32.xlu0 %v5999
      %v6001 = vpop.xlane.xlu0 %6000
      %v6002 = vsel %vm347, %v5733, -inf
      %6003 = vmax.xlane.f32.xlu0 %v6002
      %v6004 = vpop.xlane.xlu0 %6003
      %v6005 = vsel %vm347, %v5738, -inf
      %6006 = vmax.xlane.f32.xlu0 %v6005
      %v6007 = vpop.xlane.xlu0 %6006
      %v6008 = vsel %vm347, %v5741, -inf
      %6009 = vmax.xlane.f32.xlu0 %v6008
      %v6010 = vpop.xlane.xlu0 %6009
      %v6011 = vsel %vm347, %v5799, -inf
      %6012 = vmax.xlane.f32.xlu0 %v6011
      %v6013 = vpop.xlane.xlu0 %6012
      %v6014 = vsel %vm347, %v5802, -inf
      %6015 = vmax.xlane.f32.xlu0 %v6014
      %v6016 = vpop.xlane.xlu0 %6015
      %v6017 = vsel %vm347, %v5807, -inf
      %6018 = vmax.xlane.f32.xlu0 %v6017
      %v6019 = vpop.xlane.xlu0 %6018
      %v6020 = vsel %vm347, %v5810, -inf
      %6021 = vmax.xlane.f32.xlu0 %v6020
      %v6022 = vpop.xlane.xlu0 %6021
      %v6023 = vsel %vm347, %v5868, -inf
      %6024 = vmax.xlane.f32.xlu0 %v6023
      %v6025 = vpop.xlane.xlu0 %6024
      %v6026 = vsel %vm347, %v5871, -inf
      %6027 = vmax.xlane.f32.xlu0 %v6026
      %v6028 = vpop.xlane.xlu0 %6027
      %v6029 = vsel %vm347, %v5876, -inf
      %6030 = vmax.xlane.f32.xlu0 %v6029
      %v6031 = vpop.xlane.xlu0 %6030
      %v6032 = vsel %vm347, %v5879, -inf
      %6033 = vmax.xlane.f32.xlu0 %v6032
      %v6034 = vpop.xlane.xlu0 %6033
      %v6035 = vsel %vm347, %v5937, -inf
      %6036 = vmax.xlane.f32.xlu0 %v6035
      %v6037 = vpop.xlane.xlu0 %6036
      %v6038 = vsel %vm347, %v5940, -inf
      %6039 = vmax.xlane.f32.xlu0 %v6038
      %v6040 = vpop.xlane.xlu0 %6039
      %v6041 = vsel %vm347, %v5945, -inf
      %6042 = vmax.xlane.f32.xlu0 %v6041
      %v6043 = vpop.xlane.xlu0 %6042
      %v6044 = vsel %vm347, %v5948, -inf
      %6045 = vmax.xlane.f32.xlu0 %v6044
      %v6046 = vpop.xlane.xlu0 %6045
      %v6047 = vsub.f32 %v5454, %v5953
      %v6048 = vsub.f32 %v5457, %v5956
      %v6049 = vsub.f32 %v5462, %v5959
      %v6050 = vsub.f32 %v5465, %v5962
      %v6051 = vsub.f32 %v5523, %v5965
      %v6052 = vsub.f32 %v5526, %v5968
      %v6053 = vsub.f32 %v5531, %v5971
      %v6054 = vsub.f32 %v5534, %v5974
      %v6055 = vsub.f32 %v5592, %v5977
      %v6056 = vsub.f32 %v5595, %v5980
      %v6057 = vsub.f32 %v5600, %v5983
      %v6058 = vsub.f32 %v5603, %v5986
      %v6059 = vsub.f32 %v5661, %v5989
      %v6060 = vsub.f32 %v5664, %v5992
      %v6061 = vsub.f32 %v5669, %v5995
      %v6062 = vsub.f32 %v5672, %v5998
      %v6063 = vsub.f32 %v5730, %v6001
      %v6064 = vsub.f32 %v5733, %v6004
      %v6065 = vsub.f32 %v5738, %v6007
      %v6066 = vsub.f32 %v5741, %v6010
      %v6067 = vsub.f32 %v5799, %v6013
      %v6068 = vsub.f32 %v5802, %v6016
      %v6069 = vsub.f32 %v5807, %v6019
      %v6070 = vsub.f32 %v5810, %v6022
      %v6071 = vsub.f32 %v5868, %v6025
      %v6072 = vsub.f32 %v5871, %v6028
      %v6073 = vsub.f32 %v5876, %v6031
      %v6074 = vsub.f32 %v5879, %v6034
      %v6075 = vsub.f32 %v5937, %v6037
      %v6076 = vsub.f32 %v5940, %v6040
      %v6077 = vsub.f32 %v5945, %v6043
      %v6078 = vsub.f32 %v5948, %v6046
      %v6079 = vmul.f32 %v6047, 1.442695
      %v6080 = vpow.pop %v6079
      %v6081 = vmul.f32 %v6048, 1.442695
      %v6082 = vpow.pop %v6081
      %v6083 = vmul.f32 %v6049, 1.442695
      %v6084 = vpow.pop %v6083
      %v6085 = vmul.f32 %v6050, 1.442695
      %v6086 = vpow.pop %v6085
      %v6087 = vmul.f32 %v6051, 1.442695
      %v6088 = vpow.pop %v6087
      %v6089 = vmul.f32 %v6052, 1.442695
      %v6090 = vpow.pop %v6089
      %v6091 = vmul.f32 %v6053, 1.442695
      %v6092 = vpow.pop %v6091
      %v6093 = vmul.f32 %v6054, 1.442695
      %v6094 = vpow.pop %v6093
      %v6095 = vmul.f32 %v6055, 1.442695
      %v6096 = vpow.pop %v6095
      %v6097 = vmul.f32 %v6056, 1.442695
      %v6098 = vpow.pop %v6097
      %v6099 = vmul.f32 %v6057, 1.442695
      %v6100 = vpow.pop %v6099
      %v6101 = vmul.f32 %v6058, 1.442695
      %v6102 = vpow.pop %v6101
      %v6103 = vmul.f32 %v6059, 1.442695
      %v6104 = vpow.pop %v6103
      %v6105 = vmul.f32 %v6060, 1.442695
      %v6106 = vpow.pop %v6105
      %v6107 = vmul.f32 %v6061, 1.442695
      %v6108 = vpow.pop %v6107
      %v6109 = vmul.f32 %v6062, 1.442695
      %v6110 = vpow.pop %v6109
      %v6111 = vmul.f32 %v6063, 1.442695
      %v6112 = vpow.pop %v6111
      %v6113 = vmul.f32 %v6064, 1.442695
      %v6114 = vpow.pop %v6113
      %v6115 = vmul.f32 %v6065, 1.442695
      %v6116 = vpow.pop %v6115
      %v6117 = vmul.f32 %v6066, 1.442695
      %v6118 = vpow.pop %v6117
      %v6119 = vmul.f32 %v6067, 1.442695
      %v6120 = vpow.pop %v6119
      %v6121 = vmul.f32 %v6068, 1.442695
      %v6122 = vpow.pop %v6121
      %v6123 = vmul.f32 %v6069, 1.442695
      %v6124 = vpow.pop %v6123
      %v6125 = vmul.f32 %v6070, 1.442695
      %v6126 = vpow.pop %v6125
      %v6127 = vmul.f32 %v6071, 1.442695
      %v6128 = vpow.pop %v6127
      %v6129 = vmul.f32 %v6072, 1.442695
      %v6130 = vpow.pop %v6129
      %v6131 = vmul.f32 %v6073, 1.442695
      %v6132 = vpow.pop %v6131
      %v6133 = vmul.f32 %v6074, 1.442695
      %v6134 = vpow.pop %v6133
      %v6135 = vmul.f32 %v6075, 1.442695
      %v6136 = vpow.pop %v6135
      %v6137 = vmul.f32 %v6076, 1.442695
      %v6138 = vpow.pop %v6137
      %v6139 = vmul.f32 %v6077, 1.442695
      %v6140 = vpow.pop %v6139
      %v6141 = vmul.f32 %v6078, 1.442695
      %v6142 = vpow.pop %v6141
      %v6143 = vsel %vm347, %v6080, 0.0
      %6144 = vadd.xlane.f32.xlu0 %v6143
      %v6145 = vpop.xlane.xlu0 %6144
      %v6146 = vsel %vm347, %v6082, 0.0
      %6147 = vadd.xlane.f32.xlu0 %v6146
      %v6148 = vpop.xlane.xlu0 %6147
      %v6149 = vsel %vm347, %v6084, 0.0
      %6150 = vadd.xlane.f32.xlu0 %v6149
      %v6151 = vpop.xlane.xlu0 %6150
      %v6152 = vsel %vm347, %v6086, 0.0
      %6153 = vadd.xlane.f32.xlu0 %v6152
      %v6154 = vpop.xlane.xlu0 %6153
      %v6155 = vsel %vm347, %v6088, 0.0
      %6156 = vadd.xlane.f32.xlu0 %v6155
      %v6157 = vpop.xlane.xlu0 %6156
      %v6158 = vsel %vm347, %v6090, 0.0
      %6159 = vadd.xlane.f32.xlu0 %v6158
      %v6160 = vpop.xlane.xlu0 %6159
      %v6161 = vsel %vm347, %v6092, 0.0
      %6162 = vadd.xlane.f32.xlu0 %v6161
      %v6163 = vpop.xlane.xlu0 %6162
      %v6164 = vsel %vm347, %v6094, 0.0
      %6165 = vadd.xlane.f32.xlu0 %v6164
      %v6166 = vpop.xlane.xlu0 %6165
      %v6167 = vsel %vm347, %v6096, 0.0
      %6168 = vadd.xlane.f32.xlu0 %v6167
      %v6169 = vpop.xlane.xlu0 %6168
      %v6170 = vsel %vm347, %v6098, 0.0
      %6171 = vadd.xlane.f32.xlu0 %v6170
      %v6172 = vpop.xlane.xlu0 %6171
      %v6173 = vsel %vm347, %v6100, 0.0
      %6174 = vadd.xlane.f32.xlu0 %v6173
      %v6175 = vpop.xlane.xlu0 %6174
      %v6176 = vsel %vm347, %v6102, 0.0
      %6177 = vadd.xlane.f32.xlu0 %v6176
      %v6178 = vpop.xlane.xlu0 %6177
      %v6179 = vsel %vm347, %v6104, 0.0
      %6180 = vadd.xlane.f32.xlu0 %v6179
      %v6181 = vpop.xlane.xlu0 %6180
      %v6182 = vsel %vm347, %v6106, 0.0
      %6183 = vadd.xlane.f32.xlu0 %v6182
      %v6184 = vpop.xlane.xlu0 %6183
      %v6185 = vsel %vm347, %v6108, 0.0
      %6186 = vadd.xlane.f32.xlu0 %v6185
      %v6187 = vpop.xlane.xlu0 %6186
      %v6188 = vsel %vm347, %v6110, 0.0
      %6189 = vadd.xlane.f32.xlu0 %v6188
      %v6190 = vpop.xlane.xlu0 %6189
      %v6191 = vsel %vm347, %v6112, 0.0
      %6192 = vadd.xlane.f32.xlu0 %v6191
      %v6193 = vpop.xlane.xlu0 %6192
      %v6194 = vsel %vm347, %v6114, 0.0
      %6195 = vadd.xlane.f32.xlu0 %v6194
      %v6196 = vpop.xlane.xlu0 %6195
      %v6197 = vsel %vm347, %v6116, 0.0
      %6198 = vadd.xlane.f32.xlu0 %v6197
      %v6199 = vpop.xlane.xlu0 %6198
      %v6200 = vsel %vm347, %v6118, 0.0
      %6201 = vadd.xlane.f32.xlu0 %v6200
      %v6202 = vpop.xlane.xlu0 %6201
      %v6203 = vsel %vm347, %v6120, 0.0
      %6204 = vadd.xlane.f32.xlu0 %v6203
      %v6205 = vpop.xlane.xlu0 %6204
      %v6206 = vsel %vm347, %v6122, 0.0
      %6207 = vadd.xlane.f32.xlu0 %v6206
      %v6208 = vpop.xlane.xlu0 %6207
      %v6209 = vsel %vm347, %v6124, 0.0
      %6210 = vadd.xlane.f32.xlu0 %v6209
      %v6211 = vpop.xlane.xlu0 %6210
      %v6212 = vsel %vm347, %v6126, 0.0
      %6213 = vadd.xlane.f32.xlu0 %v6212
      %v6214 = vpop.xlane.xlu0 %6213
      %v6215 = vsel %vm347, %v6128, 0.0
      %6216 = vadd.xlane.f32.xlu0 %v6215
      %v6217 = vpop.xlane.xlu0 %6216
      %v6218 = vsel %vm347, %v6130, 0.0
      %6219 = vadd.xlane.f32.xlu0 %v6218
      %v6220 = vpop.xlane.xlu0 %6219
      %v6221 = vsel %vm347, %v6132, 0.0
      %6222 = vadd.xlane.f32.xlu0 %v6221
      %v6223 = vpop.xlane.xlu0 %6222
      %v6224 = vsel %vm347, %v6134, 0.0
      %6225 = vadd.xlane.f32.xlu0 %v6224
      %v6226 = vpop.xlane.xlu0 %6225
      %v6227 = vsel %vm347, %v6136, 0.0
      %6228 = vadd.xlane.f32.xlu0 %v6227
      %v6229 = vpop.xlane.xlu0 %6228
      %v6230 = vsel %vm347, %v6138, 0.0
      %6231 = vadd.xlane.f32.xlu0 %v6230
      %v6232 = vpop.xlane.xlu0 %6231
      %v6233 = vsel %vm347, %v6140, 0.0
      %6234 = vadd.xlane.f32.xlu0 %v6233
      %v6235 = vpop.xlane.xlu0 %6234
      %v6236 = vsel %vm347, %v6142, 0.0
      %6237 = vadd.xlane.f32.xlu0 %v6236
      %v6238 = vpop.xlane.xlu0 %6237
      %v6239 = vrcp.pop %v6145
      %v6240 = vrcp.pop %v6148
      %v6241 = vrcp.pop %v6151
      %v6242 = vrcp.pop %v6154
      %v6243 = vrcp.pop %v6157
      %v6244 = vrcp.pop %v6160
      %v6245 = vrcp.pop %v6163
      %v6246 = vrcp.pop %v6166
      %v6247 = vrcp.pop %v6169
      %v6248 = vrcp.pop %v6172
      %v6249 = vrcp.pop %v6175
      %v6250 = vrcp.pop %v6178
      %v6251 = vrcp.pop %v6181
      %v6252 = vrcp.pop %v6184
      %v6253 = vrcp.pop %v6187
      %v6254 = vrcp.pop %v6190
      %v6255 = vrcp.pop %v6193
      %v6256 = vrcp.pop %v6196
      %v6257 = vrcp.pop %v6199
      %v6258 = vrcp.pop %v6202
      %v6259 = vrcp.pop %v6205
      %v6260 = vrcp.pop %v6208
      %v6261 = vrcp.pop %v6211
      %v6262 = vrcp.pop %v6214
      %v6263 = vrcp.pop %v6217
      %v6264 = vrcp.pop %v6220
      %v6265 = vrcp.pop %v6223
      %v6266 = vrcp.pop %v6226
      %v6267 = vrcp.pop %v6229
      %v6268 = vrcp.pop %v6232
      %v6269 = vrcp.pop %v6235
      %v6270 = vrcp.pop %v6238
      %v6271 = vmul.f32 %v6080, %v6239
      %v6272 = vmul.f32 %v6082, %v6240
      %v6273 = vmul.f32 %v6084, %v6241
      %v6274 = vmul.f32 %v6086, %v6242
      %v6275 = vmul.f32 %v6088, %v6243
      %v6276 = vmul.f32 %v6090, %v6244
      %v6277 = vmul.f32 %v6092, %v6245
      %v6278 = vmul.f32 %v6094, %v6246
      %v6279 = vmul.f32 %v6096, %v6247
      %v6280 = vmul.f32 %v6098, %v6248
      %v6281 = vmul.f32 %v6100, %v6249
      %v6282 = vmul.f32 %v6102, %v6250
      %v6283 = vmul.f32 %v6104, %v6251
      %v6284 = vmul.f32 %v6106, %v6252
      %v6285 = vmul.f32 %v6108, %v6253
      %v6286 = vmul.f32 %v6110, %v6254
      %v6287 = vmul.f32 %v6112, %v6255
      %v6288 = vmul.f32 %v6114, %v6256
      %v6289 = vmul.f32 %v6116, %v6257
      %v6290 = vmul.f32 %v6118, %v6258
      %v6291 = vmul.f32 %v6120, %v6259
      %v6292 = vmul.f32 %v6122, %v6260
      %v6293 = vmul.f32 %v6124, %v6261
      %v6294 = vmul.f32 %v6126, %v6262
      %v6295 = vmul.f32 %v6128, %v6263
      %v6296 = vmul.f32 %v6130, %v6264
      %v6297 = vmul.f32 %v6132, %v6265
      %v6298 = vmul.f32 %v6134, %v6266
      %v6299 = vmul.f32 %v6136, %v6267
      %v6300 = vmul.f32 %v6138, %v6268
      %v6301 = vmul.f32 %v6140, %v6269
      %v6302 = vmul.f32 %v6142, %v6270
      %v6303 = vpack.c.bf16 %v6272, %v6271
      %v6304 = vpack.c.bf16 %v6274, %v6273
      %v6305 = vpack.c.bf16 %v6276, %v6275
      %v6306 = vpack.c.bf16 %v6278, %v6277
      %v6307 = vpack.c.bf16 %v6280, %v6279
      %v6308 = vpack.c.bf16 %v6282, %v6281
      %v6309 = vpack.c.bf16 %v6284, %v6283
      %v6310 = vpack.c.bf16 %v6286, %v6285
      %v6311 = vpack.c.bf16 %v6288, %v6287
      %v6312 = vpack.c.bf16 %v6290, %v6289
      %v6313 = vpack.c.bf16 %v6292, %v6291
      %v6314 = vpack.c.bf16 %v6294, %v6293
      %v6315 = vpack.c.bf16 %v6296, %v6295
      %v6316 = vpack.c.bf16 %v6298, %v6297
      %v6317 = vpack.c.bf16 %v6300, %v6299
      %v6318 = vpack.c.bf16 %v6302, %v6301
      %6319 = vrot.lane.b32.xlu0 %v1139, 40
      %v6320 = vpop.permute.xlu0 %6319
      %6321 = vrot.lane.b32.xlu0 %v1140, 40
      %v6322 = vpop.permute.xlu0 %6321
      %v6326 = vsel %vm347, %v6303, 0
      %v6329 = vsel %vm347, %v6304, 0
      %6331 = vmatprep.subr.bf16.mxu0 0
      %6332 = vmatpush1.bf16.msra.mxu0 0
      %6333 = vmatprep.subr.bf16.mxu0 0
      %6334 = vmatpush1.bf16.msra.mxu0 0
      %6335 = vmatprep.subr.bf16.mxu0 0
      %6336 = vmatpush1.bf16.msra.mxu0 0
      %6337 = vmatprep.subr.bf16.mxu0 0
      %6338 = vmatpush1.bf16.msra.mxu0 0
      %6339 = vmatprep.subr.bf16.mxu0 0
      %6340 = vmatpush1.bf16.msra.mxu0 0
      %6341 = vmatprep.subr.bf16.mxu0 0
      %6342 = vmatpush1.bf16.msra.mxu0 0
      %6343 = vmatprep.subr.bf16.mxu0 0
      %6344 = vmatpush1.bf16.msra.mxu0 %v6322
      %6345 = vmatprep.subr.bf16.mxu0 0
      %6346 = vmatpush1.bf16.msra.mxu0 %v6320
      %6347 = vmatprep.subr.bf16.mxu0 0
      %6348 = vmatpush2.bf16.msra.mxu0 0
      %6349 = vmatprep.subr.bf16.mxu0 0
      %6350 = vmatpush2.bf16.msra.mxu0 0
      %6351 = vmatprep.subr.bf16.mxu0 0
      %6352 = vmatpush2.bf16.msra.mxu0 0
      %6353 = vmatprep.subr.bf16.mxu0 0
      %6354 = vmatpush2.bf16.msra.mxu0 0
      %6355 = vmatprep.subr.bf16.mxu0 0
      %6356 = vmatpush2.bf16.msra.mxu0 0
      %6357 = vmatprep.subr.bf16.mxu0 0
      %6358 = vmatpush2.bf16.msra.mxu0 0
      %6359 = vmatprep.subr.bf16.mxu0 0
      %6360 = vmatpush2.bf16.msra.mxu0 0
      %6361 = vmatprep.subr.bf16.mxu0 0
      %6362 = vmatpush2.bf16.msra.mxu0 0
      %6363 = vmatprep.mubr.bf16.mxu0 0
      %6364 = vmatmul.mubr.bf16.gmra.mxu0 %v6326
      %v6365 = vpop.f32.mrf.mxu0
      %v6366 = vadd.f32 0.0, %v6365
      %v6367 = vpop.f32.mrf.mxu0
      %v6368 = vpop.f32.mrf.mxu0
      %v6369 = vadd.f32 0.0, %v6368
      %v6370 = vpop.f32.mrf.mxu0
      %6371 = vmatprep.mubr.bf16.mxu0 0
      %6372 = vmatmul.mubr.bf16.gmra.mxu0 %v6329
      %v6373 = vpop.f32.mrf.mxu0
      %v6374 = vadd.f32 0.0, %v6373
      %v6375 = vpop.f32.mrf.mxu0
      %v6376 = vpop.f32.mrf.mxu0
      %v6377 = vadd.f32 0.0, %v6376
      %v6378 = vpop.f32.mrf.mxu0
      %6379 = vdwg.mxu0
      %6380 = vrot.lane.b32.xlu0 %v1141, 40
      %v6381 = vpop.permute.xlu0 %6380
      %6382 = vrot.lane.b32.xlu0 %v1142, 40
      %v6383 = vpop.permute.xlu0 %6382
      %v6387 = vsel %vm347, %v6305, 0
      %v6390 = vsel %vm347, %v6306, 0
      %6392 = vmatprep.subr.bf16.mxu0 0
      %6393 = vmatpush1.bf16.msra.mxu0 0
      %6394 = vmatprep.subr.bf16.mxu0 0
      %6395 = vmatpush1.bf16.msra.mxu0 0
      %6396 = vmatprep.subr.bf16.mxu0 0
      %6397 = vmatpush1.bf16.msra.mxu0 0
      %6398 = vmatprep.subr.bf16.mxu0 0
      %6399 = vmatpush1.bf16.msra.mxu0 0
      %6400 = vmatprep.subr.bf16.mxu0 0
      %6401 = vmatpush1.bf16.msra.mxu0 0
      %6402 = vmatprep.subr.bf16.mxu0 0
      %6403 = vmatpush1.bf16.msra.mxu0 0
      %6404 = vmatprep.subr.bf16.mxu0 0
      %6405 = vmatpush1.bf16.msra.mxu0 %v6383
      %6406 = vmatprep.subr.bf16.mxu0 0
      %6407 = vmatpush1.bf16.msra.mxu0 %v6381
      %6408 = vmatprep.subr.bf16.mxu0 0
      %6409 = vmatpush2.bf16.msra.mxu0 0
      %6410 = vmatprep.subr.bf16.mxu0 0
      %6411 = vmatpush2.bf16.msra.mxu0 0
      %6412 = vmatprep.subr.bf16.mxu0 0
      %6413 = vmatpush2.bf16.msra.mxu0 0
      %6414 = vmatprep.subr.bf16.mxu0 0
      %6415 = vmatpush2.bf16.msra.mxu0 0
      %6416 = vmatprep.subr.bf16.mxu0 0
      %6417 = vmatpush2.bf16.msra.mxu0 0
      %6418 = vmatprep.subr.bf16.mxu0 0
      %6419 = vmatpush2.bf16.msra.mxu0 0
      %6420 = vmatprep.subr.bf16.mxu0 0
      %6421 = vmatpush2.bf16.msra.mxu0 0
      %6422 = vmatprep.subr.bf16.mxu0 0
      %6423 = vmatpush2.bf16.msra.mxu0 0
      %6424 = vmatprep.mubr.bf16.mxu0 0
      %6425 = vmatmul.mubr.bf16.gmra.mxu0 %v6387
      %v6426 = vpop.f32.mrf.mxu0
      %v6427 = vadd.f32 0.0, %v6426
      %v6428 = vpop.f32.mrf.mxu0
      %v6429 = vpop.f32.mrf.mxu0
      %v6430 = vadd.f32 0.0, %v6429
      %v6431 = vpop.f32.mrf.mxu0
      %6432 = vmatprep.mubr.bf16.mxu0 0
      %6433 = vmatmul.mubr.bf16.gmra.mxu0 %v6390
      %v6434 = vpop.f32.mrf.mxu0
      %v6435 = vadd.f32 0.0, %v6434
      %v6436 = vpop.f32.mrf.mxu0
      %v6437 = vpop.f32.mrf.mxu0
      %v6438 = vadd.f32 0.0, %v6437
      %v6439 = vpop.f32.mrf.mxu0
      %6440 = vdwg.mxu0
      %6441 = vrot.lane.b32.xlu0 %v1143, 40
      %v6442 = vpop.permute.xlu0 %6441
      %6443 = vrot.lane.b32.xlu0 %v1144, 40
      %v6444 = vpop.permute.xlu0 %6443
      %v6448 = vsel %vm347, %v6307, 0
      %v6451 = vsel %vm347, %v6308, 0
      %6453 = vmatprep.subr.bf16.mxu0 0
      %6454 = vmatpush1.bf16.msra.mxu0 0
      %6455 = vmatprep.subr.bf16.mxu0 0
      %6456 = vmatpush1.bf16.msra.mxu0 0
      %6457 = vmatprep.subr.bf16.mxu0 0
      %6458 = vmatpush1.bf16.msra.mxu0 0
      %6459 = vmatprep.subr.bf16.mxu0 0
      %6460 = vmatpush1.bf16.msra.mxu0 0
      %6461 = vmatprep.subr.bf16.mxu0 0
      %6462 = vmatpush1.bf16.msra.mxu0 0
      %6463 = vmatprep.subr.bf16.mxu0 0
      %6464 = vmatpush1.bf16.msra.mxu0 0
      %6465 = vmatprep.subr.bf16.mxu0 0
      %6466 = vmatpush1.bf16.msra.mxu0 %v6444
      %6467 = vmatprep.subr.bf16.mxu0 0
      %6468 = vmatpush1.bf16.msra.mxu0 %v6442
      %6469 = vmatprep.subr.bf16.mxu0 0
      %6470 = vmatpush2.bf16.msra.mxu0 0
      %6471 = vmatprep.subr.bf16.mxu0 0
      %6472 = vmatpush2.bf16.msra.mxu0 0
      %6473 = vmatprep.subr.bf16.mxu0 0
      %6474 = vmatpush2.bf16.msra.mxu0 0
      %6475 = vmatprep.subr.bf16.mxu0 0
      %6476 = vmatpush2.bf16.msra.mxu0 0
      %6477 = vmatprep.subr.bf16.mxu0 0
      %6478 = vmatpush2.bf16.msra.mxu0 0
      %6479 = vmatprep.subr.bf16.mxu0 0
      %6480 = vmatpush2.bf16.msra.mxu0 0
      %6481 = vmatprep.subr.bf16.mxu0 0
      %6482 = vmatpush2.bf16.msra.mxu0 0
      %6483 = vmatprep.subr.bf16.mxu0 0
      %6484 = vmatpush2.bf16.msra.mxu0 0
      %6485 = vmatprep.mubr.bf16.mxu0 0
      %6486 = vmatmul.mubr.bf16.gmra.mxu0 %v6448
      %v6487 = vpop.f32.mrf.mxu0
      %v6488 = vadd.f32 0.0, %v6487
      %v6489 = vpop.f32.mrf.mxu0
      %v6490 = vpop.f32.mrf.mxu0
      %v6491 = vadd.f32 0.0, %v6490
      %v6492 = vpop.f32.mrf.mxu0
      %6493 = vmatprep.mubr.bf16.mxu0 0
      %6494 = vmatmul.mubr.bf16.gmra.mxu0 %v6451
      %v6495 = vpop.f32.mrf.mxu0
      %v6496 = vadd.f32 0.0, %v6495
      %v6497 = vpop.f32.mrf.mxu0
      %v6498 = vpop.f32.mrf.mxu0
      %v6499 = vadd.f32 0.0, %v6498
      %v6500 = vpop.f32.mrf.mxu0
      %6501 = vdwg.mxu0
      %6502 = vrot.lane.b32.xlu0 %v1145, 40
      %v6503 = vpop.permute.xlu0 %6502
      %6504 = vrot.lane.b32.xlu0 %v1146, 40
      %v6505 = vpop.permute.xlu0 %6504
      %v6509 = vsel %vm347, %v6309, 0
      %v6512 = vsel %vm347, %v6310, 0
      %6514 = vmatprep.subr.bf16.mxu0 0
      %6515 = vmatpush1.bf16.msra.mxu0 0
      %6516 = vmatprep.subr.bf16.mxu0 0
      %6517 = vmatpush1.bf16.msra.mxu0 0
      %6518 = vmatprep.subr.bf16.mxu0 0
      %6519 = vmatpush1.bf16.msra.mxu0 0
      %6520 = vmatprep.subr.bf16.mxu0 0
      %6521 = vmatpush1.bf16.msra.mxu0 0
      %6522 = vmatprep.subr.bf16.mxu0 0
      %6523 = vmatpush1.bf16.msra.mxu0 0
      %6524 = vmatprep.subr.bf16.mxu0 0
      %6525 = vmatpush1.bf16.msra.mxu0 0
      %6526 = vmatprep.subr.bf16.mxu0 0
      %6527 = vmatpush1.bf16.msra.mxu0 %v6505
      %6528 = vmatprep.subr.bf16.mxu0 0
      %6529 = vmatpush1.bf16.msra.mxu0 %v6503
      %6530 = vmatprep.subr.bf16.mxu0 0
      %6531 = vmatpush2.bf16.msra.mxu0 0
      %6532 = vmatprep.subr.bf16.mxu0 0
      %6533 = vmatpush2.bf16.msra.mxu0 0
      %6534 = vmatprep.subr.bf16.mxu0 0
      %6535 = vmatpush2.bf16.msra.mxu0 0
      %6536 = vmatprep.subr.bf16.mxu0 0
      %6537 = vmatpush2.bf16.msra.mxu0 0
      %6538 = vmatprep.subr.bf16.mxu0 0
      %6539 = vmatpush2.bf16.msra.mxu0 0
      %6540 = vmatprep.subr.bf16.mxu0 0
      %6541 = vmatpush2.bf16.msra.mxu0 0
      %6542 = vmatprep.subr.bf16.mxu0 0
      %6543 = vmatpush2.bf16.msra.mxu0 0
      %6544 = vmatprep.subr.bf16.mxu0 0
      %6545 = vmatpush2.bf16.msra.mxu0 0
      %6546 = vmatprep.mubr.bf16.mxu0 0
      %6547 = vmatmul.mubr.bf16.gmra.mxu0 %v6509
      %v6548 = vpop.f32.mrf.mxu0
      %v6549 = vadd.f32 0.0, %v6548
      %v6550 = vpop.f32.mrf.mxu0
      %v6551 = vpop.f32.mrf.mxu0
      %v6552 = vadd.f32 0.0, %v6551
      %v6553 = vpop.f32.mrf.mxu0
      %6554 = vmatprep.mubr.bf16.mxu0 0
      %6555 = vmatmul.mubr.bf16.gmra.mxu0 %v6512
      %v6556 = vpop.f32.mrf.mxu0
      %v6557 = vadd.f32 0.0, %v6556
      %v6558 = vpop.f32.mrf.mxu0
      %v6559 = vpop.f32.mrf.mxu0
      %v6560 = vadd.f32 0.0, %v6559
      %v6561 = vpop.f32.mrf.mxu0
      %6562 = vdwg.mxu0
      %6563 = vrot.lane.b32.xlu0 %v1147, 40
      %v6564 = vpop.permute.xlu0 %6563
      %6565 = vrot.lane.b32.xlu0 %v1148, 40
      %v6566 = vpop.permute.xlu0 %6565
      %v6570 = vsel %vm347, %v6311, 0
      %v6573 = vsel %vm347, %v6312, 0
      %6575 = vmatprep.subr.bf16.mxu0 0
      %6576 = vmatpush1.bf16.msra.mxu0 0
      %6577 = vmatprep.subr.bf16.mxu0 0
      %6578 = vmatpush1.bf16.msra.mxu0 0
      %6579 = vmatprep.subr.bf16.mxu0 0
      %6580 = vmatpush1.bf16.msra.mxu0 0
      %6581 = vmatprep.subr.bf16.mxu0 0
      %6582 = vmatpush1.bf16.msra.mxu0 0
      %6583 = vmatprep.subr.bf16.mxu0 0
      %6584 = vmatpush1.bf16.msra.mxu0 0
      %6585 = vmatprep.subr.bf16.mxu0 0
      %6586 = vmatpush1.bf16.msra.mxu0 0
      %6587 = vmatprep.subr.bf16.mxu0 0
      %6588 = vmatpush1.bf16.msra.mxu0 %v6566
      %6589 = vmatprep.subr.bf16.mxu0 0
      %6590 = vmatpush1.bf16.msra.mxu0 %v6564
      %6591 = vmatprep.subr.bf16.mxu0 0
      %6592 = vmatpush2.bf16.msra.mxu0 0
      %6593 = vmatprep.subr.bf16.mxu0 0
      %6594 = vmatpush2.bf16.msra.mxu0 0
      %6595 = vmatprep.subr.bf16.mxu0 0
      %6596 = vmatpush2.bf16.msra.mxu0 0
      %6597 = vmatprep.subr.bf16.mxu0 0
      %6598 = vmatpush2.bf16.msra.mxu0 0
      %6599 = vmatprep.subr.bf16.mxu0 0
      %6600 = vmatpush2.bf16.msra.mxu0 0
      %6601 = vmatprep.subr.bf16.mxu0 0
      %6602 = vmatpush2.bf16.msra.mxu0 0
      %6603 = vmatprep.subr.bf16.mxu0 0
      %6604 = vmatpush2.bf16.msra.mxu0 0
      %6605 = vmatprep.subr.bf16.mxu0 0
      %6606 = vmatpush2.bf16.msra.mxu0 0
      %6607 = vmatprep.mubr.bf16.mxu0 0
      %6608 = vmatmul.mubr.bf16.gmra.mxu0 %v6570
      %v6609 = vpop.f32.mrf.mxu0
      %v6610 = vadd.f32 0.0, %v6609
      %v6611 = vpop.f32.mrf.mxu0
      %v6612 = vpop.f32.mrf.mxu0
      %v6613 = vadd.f32 0.0, %v6612
      %v6614 = vpop.f32.mrf.mxu0
      %6615 = vmatprep.mubr.bf16.mxu0 0
      %6616 = vmatmul.mubr.bf16.gmra.mxu0 %v6573
      %v6617 = vpop.f32.mrf.mxu0
      %v6618 = vadd.f32 0.0, %v6617
      %v6619 = vpop.f32.mrf.mxu0
      %v6620 = vpop.f32.mrf.mxu0
      %v6621 = vadd.f32 0.0, %v6620
      %v6622 = vpop.f32.mrf.mxu0
      %6623 = vdwg.mxu0
      %6624 = vrot.lane.b32.xlu0 %v1149, 40
      %v6625 = vpop.permute.xlu0 %6624
      %6626 = vrot.lane.b32.xlu0 %v1150, 40
      %v6627 = vpop.permute.xlu0 %6626
      %v6631 = vsel %vm347, %v6313, 0
      %v6634 = vsel %vm347, %v6314, 0
      %6636 = vmatprep.subr.bf16.mxu0 0
      %6637 = vmatpush1.bf16.msra.mxu0 0
      %6638 = vmatprep.subr.bf16.mxu0 0
      %6639 = vmatpush1.bf16.msra.mxu0 0
      %6640 = vmatprep.subr.bf16.mxu0 0
      %6641 = vmatpush1.bf16.msra.mxu0 0
      %6642 = vmatprep.subr.bf16.mxu0 0
      %6643 = vmatpush1.bf16.msra.mxu0 0
      %6644 = vmatprep.subr.bf16.mxu0 0
      %6645 = vmatpush1.bf16.msra.mxu0 0
      %6646 = vmatprep.subr.bf16.mxu0 0
      %6647 = vmatpush1.bf16.msra.mxu0 0
      %6648 = vmatprep.subr.bf16.mxu0 0
      %6649 = vmatpush1.bf16.msra.mxu0 %v6627
      %6650 = vmatprep.subr.bf16.mxu0 0
      %6651 = vmatpush1.bf16.msra.mxu0 %v6625
      %6652 = vmatprep.subr.bf16.mxu0 0
      %6653 = vmatpush2.bf16.msra.mxu0 0
      %6654 = vmatprep.subr.bf16.mxu0 0
      %6655 = vmatpush2.bf16.msra.mxu0 0
      %6656 = vmatprep.subr.bf16.mxu0 0
      %6657 = vmatpush2.bf16.msra.mxu0 0
      %6658 = vmatprep.subr.bf16.mxu0 0
      %6659 = vmatpush2.bf16.msra.mxu0 0
      %6660 = vmatprep.subr.bf16.mxu0 0
      %6661 = vmatpush2.bf16.msra.mxu0 0
      %6662 = vmatprep.subr.bf16.mxu0 0
      %6663 = vmatpush2.bf16.msra.mxu0 0
      %6664 = vmatprep.subr.bf16.mxu0 0
      %6665 = vmatpush2.bf16.msra.mxu0 0
      %6666 = vmatprep.subr.bf16.mxu0 0
      %6667 = vmatpush2.bf16.msra.mxu0 0
      %6668 = vmatprep.mubr.bf16.mxu0 0
      %6669 = vmatmul.mubr.bf16.gmra.mxu0 %v6631
      %v6670 = vpop.f32.mrf.mxu0
      %v6671 = vadd.f32 0.0, %v6670
      %v6672 = vpop.f32.mrf.mxu0
      %v6673 = vpop.f32.mrf.mxu0
      %v6674 = vadd.f32 0.0, %v6673
      %v6675 = vpop.f32.mrf.mxu0
      %6676 = vmatprep.mubr.bf16.mxu0 0
      %6677 = vmatmul.mubr.bf16.gmra.mxu0 %v6634
      %v6678 = vpop.f32.mrf.mxu0
      %v6679 = vadd.f32 0.0, %v6678
      %v6680 = vpop.f32.mrf.mxu0
      %v6681 = vpop.f32.mrf.mxu0
      %v6682 = vadd.f32 0.0, %v6681
      %v6683 = vpop.f32.mrf.mxu0
      %6684 = vdwg.mxu0
      %6685 = vrot.lane.b32.xlu0 %v1151, 40
      %v6686 = vpop.permute.xlu0 %6685
      %6687 = vrot.lane.b32.xlu0 %v1152, 40
      %v6688 = vpop.permute.xlu0 %6687
      %v6692 = vsel %vm347, %v6315, 0
      %v6695 = vsel %vm347, %v6316, 0
      %6697 = vmatprep.subr.bf16.mxu0 0
      %6698 = vmatpush1.bf16.msra.mxu0 0
      %6699 = vmatprep.subr.bf16.mxu0 0
      %6700 = vmatpush1.bf16.msra.mxu0 0
      %6701 = vmatprep.subr.bf16.mxu0 0
      %6702 = vmatpush1.bf16.msra.mxu0 0
      %6703 = vmatprep.subr.bf16.mxu0 0
      %6704 = vmatpush1.bf16.msra.mxu0 0
      %6705 = vmatprep.subr.bf16.mxu0 0
      %6706 = vmatpush1.bf16.msra.mxu0 0
      %6707 = vmatprep.subr.bf16.mxu0 0
      %6708 = vmatpush1.bf16.msra.mxu0 0
      %6709 = vmatprep.subr.bf16.mxu0 0
      %6710 = vmatpush1.bf16.msra.mxu0 %v6688
      %6711 = vmatprep.subr.bf16.mxu0 0
      %6712 = vmatpush1.bf16.msra.mxu0 %v6686
      %6713 = vmatprep.subr.bf16.mxu0 0
      %6714 = vmatpush2.bf16.msra.mxu0 0
      %6715 = vmatprep.subr.bf16.mxu0 0
      %6716 = vmatpush2.bf16.msra.mxu0 0
      %6717 = vmatprep.subr.bf16.mxu0 0
      %6718 = vmatpush2.bf16.msra.mxu0 0
      %6719 = vmatprep.subr.bf16.mxu0 0
      %6720 = vmatpush2.bf16.msra.mxu0 0
      %6721 = vmatprep.subr.bf16.mxu0 0
      %6722 = vmatpush2.bf16.msra.mxu0 0
      %6723 = vmatprep.subr.bf16.mxu0 0
      %6724 = vmatpush2.bf16.msra.mxu0 0
      %6725 = vmatprep.subr.bf16.mxu0 0
      %6726 = vmatpush2.bf16.msra.mxu0 0
      %6727 = vmatprep.subr.bf16.mxu0 0
      %6728 = vmatpush2.bf16.msra.mxu0 0
      %6729 = vmatprep.mubr.bf16.mxu0 0
      %6730 = vmatmul.mubr.bf16.gmra.mxu0 %v6692
      %v6731 = vpop.f32.mrf.mxu0
      %v6732 = vadd.f32 0.0, %v6731
      %v6733 = vpop.f32.mrf.mxu0
      %v6734 = vpop.f32.mrf.mxu0
      %v6735 = vadd.f32 0.0, %v6734
      %v6736 = vpop.f32.mrf.mxu0
      %6737 = vmatprep.mubr.bf16.mxu0 0
      %6738 = vmatmul.mubr.bf16.gmra.mxu0 %v6695
      %v6739 = vpop.f32.mrf.mxu0
      %v6740 = vadd.f32 0.0, %v6739
      %v6741 = vpop.f32.mrf.mxu0
      %v6742 = vpop.f32.mrf.mxu0
      %v6743 = vadd.f32 0.0, %v6742
      %v6744 = vpop.f32.mrf.mxu0
      %6745 = vdwg.mxu0
      %6746 = vrot.lane.b32.xlu0 %v1153, 40
      %v6747 = vpop.permute.xlu0 %6746
      %6748 = vrot.lane.b32.xlu0 %v1154, 40
      %v6749 = vpop.permute.xlu0 %6748
      %v6753 = vsel %vm347, %v6317, 0
      %v6756 = vsel %vm347, %v6318, 0
      %6758 = vmatprep.subr.bf16.mxu0 0
      %6759 = vmatpush1.bf16.msra.mxu0 0
      %6760 = vmatprep.subr.bf16.mxu0 0
      %6761 = vmatpush1.bf16.msra.mxu0 0
      %6762 = vmatprep.subr.bf16.mxu0 0
      %6763 = vmatpush1.bf16.msra.mxu0 0
      %6764 = vmatprep.subr.bf16.mxu0 0
      %6765 = vmatpush1.bf16.msra.mxu0 0
      %6766 = vmatprep.subr.bf16.mxu0 0
      %6767 = vmatpush1.bf16.msra.mxu0 0
      %6768 = vmatprep.subr.bf16.mxu0 0
      %6769 = vmatpush1.bf16.msra.mxu0 0
      %6770 = vmatprep.subr.bf16.mxu0 0
      %6771 = vmatpush1.bf16.msra.mxu0 %v6749
      %6772 = vmatprep.subr.bf16.mxu0 0
      %6773 = vmatpush1.bf16.msra.mxu0 %v6747
      %6774 = vmatprep.subr.bf16.mxu0 0
      %6775 = vmatpush2.bf16.msra.mxu0 0
      %6776 = vmatprep.subr.bf16.mxu0 0
      %6777 = vmatpush2.bf16.msra.mxu0 0
      %6778 = vmatprep.subr.bf16.mxu0 0
      %6779 = vmatpush2.bf16.msra.mxu0 0
      %6780 = vmatprep.subr.bf16.mxu0 0
      %6781 = vmatpush2.bf16.msra.mxu0 0
      %6782 = vmatprep.subr.bf16.mxu0 0
      %6783 = vmatpush2.bf16.msra.mxu0 0
      %6784 = vmatprep.subr.bf16.mxu0 0
      %6785 = vmatpush2.bf16.msra.mxu0 0
      %6786 = vmatprep.subr.bf16.mxu0 0
      %6787 = vmatpush2.bf16.msra.mxu0 0
      %6788 = vmatprep.subr.bf16.mxu0 0
      %6789 = vmatpush2.bf16.msra.mxu0 0
      %6790 = vmatprep.mubr.bf16.mxu0 0
      %6791 = vmatmul.mubr.bf16.gmra.mxu0 %v6753
      %v6792 = vpop.f32.mrf.mxu0
      %v6793 = vadd.f32 0.0, %v6792
      %v6794 = vpop.f32.mrf.mxu0
      %v6795 = vpop.f32.mrf.mxu0
      %v6796 = vadd.f32 0.0, %v6795
      %v6797 = vpop.f32.mrf.mxu0
      %6798 = vmatprep.mubr.bf16.mxu0 0
      %6799 = vmatmul.mubr.bf16.gmra.mxu0 %v6756
      %v6800 = vpop.f32.mrf.mxu0
      %v6801 = vadd.f32 0.0, %v6800
      %v6802 = vpop.f32.mrf.mxu0
      %v6803 = vpop.f32.mrf.mxu0
      %v6804 = vadd.f32 0.0, %v6803
      %v6805 = vpop.f32.mrf.mxu0
      %6806 = vdwg.mxu0
      %6839 = vrot.lane.b32.xlu0 %v3540, 8
      %v6840 = vpop.permute.xlu0 %6839
      %6841 = vrot.lane.b32.xlu0 %v3543, 8
      %v6842 = vpop.permute.xlu0 %6841
      %6843 = vrot.lane.b32.xlu0 %v3548, 8
      %v6844 = vpop.permute.xlu0 %6843
      %6845 = vrot.lane.b32.xlu0 %v3551, 8
      %v6846 = vpop.permute.xlu0 %6845
      %6847 = vrot.lane.b32.xlu0 %v3601, 8
      %v6848 = vpop.permute.xlu0 %6847
      %6849 = vrot.lane.b32.xlu0 %v3604, 8
      %v6850 = vpop.permute.xlu0 %6849
      %6851 = vrot.lane.b32.xlu0 %v3609, 8
      %v6852 = vpop.permute.xlu0 %6851
      %6853 = vrot.lane.b32.xlu0 %v3612, 8
      %v6854 = vpop.permute.xlu0 %6853
      %6855 = vrot.lane.b32.xlu0 %v3662, 8
      %v6856 = vpop.permute.xlu0 %6855
      %6857 = vrot.lane.b32.xlu0 %v3665, 8
      %v6858 = vpop.permute.xlu0 %6857
      %6859 = vrot.lane.b32.xlu0 %v3670, 8
      %v6860 = vpop.permute.xlu0 %6859
      %6861 = vrot.lane.b32.xlu0 %v3673, 8
      %v6862 = vpop.permute.xlu0 %6861
      %6863 = vrot.lane.b32.xlu0 %v3723, 8
      %v6864 = vpop.permute.xlu0 %6863
      %6865 = vrot.lane.b32.xlu0 %v3726, 8
      %v6866 = vpop.permute.xlu0 %6865
      %6867 = vrot.lane.b32.xlu0 %v3731, 8
      %v6868 = vpop.permute.xlu0 %6867
      %6869 = vrot.lane.b32.xlu0 %v3734, 8
      %v6870 = vpop.permute.xlu0 %6869
      %6871 = vrot.lane.b32.xlu0 %v3784, 8
      %v6872 = vpop.permute.xlu0 %6871
      %6873 = vrot.lane.b32.xlu0 %v3787, 8
      %v6874 = vpop.permute.xlu0 %6873
      %6875 = vrot.lane.b32.xlu0 %v3792, 8
      %v6876 = vpop.permute.xlu0 %6875
      %6877 = vrot.lane.b32.xlu0 %v3795, 8
      %v6878 = vpop.permute.xlu0 %6877
      %6879 = vrot.lane.b32.xlu0 %v3845, 8
      %v6880 = vpop.permute.xlu0 %6879
      %6881 = vrot.lane.b32.xlu0 %v3848, 8
      %v6882 = vpop.permute.xlu0 %6881
      %6883 = vrot.lane.b32.xlu0 %v3853, 8
      %v6884 = vpop.permute.xlu0 %6883
      %6885 = vrot.lane.b32.xlu0 %v3856, 8
      %v6886 = vpop.permute.xlu0 %6885
      %6887 = vrot.lane.b32.xlu0 %v3906, 8
      %v6888 = vpop.permute.xlu0 %6887
      %6889 = vrot.lane.b32.xlu0 %v3909, 8
      %v6890 = vpop.permute.xlu0 %6889
      %6891 = vrot.lane.b32.xlu0 %v3914, 8
      %v6892 = vpop.permute.xlu0 %6891
      %6893 = vrot.lane.b32.xlu0 %v3917, 8
      %v6894 = vpop.permute.xlu0 %6893
      %6895 = vrot.lane.b32.xlu0 %v3967, 8
      %v6896 = vpop.permute.xlu0 %6895
      %6897 = vrot.lane.b32.xlu0 %v3970, 8
      %v6898 = vpop.permute.xlu0 %6897
      %6899 = vrot.lane.b32.xlu0 %v3975, 8
      %v6900 = vpop.permute.xlu0 %6899
      %6901 = vrot.lane.b32.xlu0 %v3978, 8
      %v6902 = vpop.permute.xlu0 %6901
      %6967 = vrot.lane.b32.xlu0 %v4953, 16
      %v6968 = vpop.permute.xlu0 %6967
      %6969 = vrot.lane.b32.xlu0 %v4956, 16
      %v6970 = vpop.permute.xlu0 %6969
      %6971 = vrot.lane.b32.xlu0 %v4961, 16
      %v6972 = vpop.permute.xlu0 %6971
      %6973 = vrot.lane.b32.xlu0 %v4964, 16
      %v6974 = vpop.permute.xlu0 %6973
      %6975 = vrot.lane.b32.xlu0 %v5014, 16
      %v6976 = vpop.permute.xlu0 %6975
      %6977 = vrot.lane.b32.xlu0 %v5017, 16
      %v6978 = vpop.permute.xlu0 %6977
      %6979 = vrot.lane.b32.xlu0 %v5022, 16
      %v6980 = vpop.permute.xlu0 %6979
      %6981 = vrot.lane.b32.xlu0 %v5025, 16
      %v6982 = vpop.permute.xlu0 %6981
      %6983 = vrot.lane.b32.xlu0 %v5075, 16
      %v6984 = vpop.permute.xlu0 %6983
      %6985 = vrot.lane.b32.xlu0 %v5078, 16
      %v6986 = vpop.permute.xlu0 %6985
      %6987 = vrot.lane.b32.xlu0 %v5083, 16
      %v6988 = vpop.permute.xlu0 %6987
      %6989 = vrot.lane.b32.xlu0 %v5086, 16
      %v6990 = vpop.permute.xlu0 %6989
      %6991 = vrot.lane.b32.xlu0 %v5136, 16
      %v6992 = vpop.permute.xlu0 %6991
      %6993 = vrot.lane.b32.xlu0 %v5139, 16
      %v6994 = vpop.permute.xlu0 %6993
      %6995 = vrot.lane.b32.xlu0 %v5144, 16
      %v6996 = vpop.permute.xlu0 %6995
      %6997 = vrot.lane.b32.xlu0 %v5147, 16
      %v6998 = vpop.permute.xlu0 %6997
      %6999 = vrot.lane.b32.xlu0 %v5197, 16
      %v7000 = vpop.permute.xlu0 %6999
      %7001 = vrot.lane.b32.xlu0 %v5200, 16
      %v7002 = vpop.permute.xlu0 %7001
      %7003 = vrot.lane.b32.xlu0 %v5205, 16
      %v7004 = vpop.permute.xlu0 %7003
      %7005 = vrot.lane.b32.xlu0 %v5208, 16
      %v7006 = vpop.permute.xlu0 %7005
      %7007 = vrot.lane.b32.xlu0 %v5258, 16
      %v7008 = vpop.permute.xlu0 %7007
      %7009 = vrot.lane.b32.xlu0 %v5261, 16
      %v7010 = vpop.permute.xlu0 %7009
      %7011 = vrot.lane.b32.xlu0 %v5266, 16
      %v7012 = vpop.permute.xlu0 %7011
      %7013 = vrot.lane.b32.xlu0 %v5269, 16
      %v7014 = vpop.permute.xlu0 %7013
      %7015 = vrot.lane.b32.xlu0 %v5319, 16
      %v7016 = vpop.permute.xlu0 %7015
      %7017 = vrot.lane.b32.xlu0 %v5322, 16
      %v7018 = vpop.permute.xlu0 %7017
      %7019 = vrot.lane.b32.xlu0 %v5327, 16
      %v7020 = vpop.permute.xlu0 %7019
      %7021 = vrot.lane.b32.xlu0 %v5330, 16
      %v7022 = vpop.permute.xlu0 %7021
      %7023 = vrot.lane.b32.xlu0 %v5380, 16
      %v7024 = vpop.permute.xlu0 %7023
      %7025 = vrot.lane.b32.xlu0 %v5383, 16
      %v7026 = vpop.permute.xlu0 %7025
      %7027 = vrot.lane.b32.xlu0 %v5388, 16
      %v7028 = vpop.permute.xlu0 %7027
      %7029 = vrot.lane.b32.xlu0 %v5391, 16
      %v7030 = vpop.permute.xlu0 %7029
      %7095 = vrot.lane.b32.xlu0 %v6366, 24
      %v7096 = vpop.permute.xlu0 %7095
      %7097 = vrot.lane.b32.xlu0 %v6369, 24
      %v7098 = vpop.permute.xlu0 %7097
      %7099 = vrot.lane.b32.xlu0 %v6374, 24
      %v7100 = vpop.permute.xlu0 %7099
      %7101 = vrot.lane.b32.xlu0 %v6377, 24
      %v7102 = vpop.permute.xlu0 %7101
      %7103 = vrot.lane.b32.xlu0 %v6427, 24
      %v7104 = vpop.permute.xlu0 %7103
      %7105 = vrot.lane.b32.xlu0 %v6430, 24
      %v7106 = vpop.permute.xlu0 %7105
      %7107 = vrot.lane.b32.xlu0 %v6435, 24
      %v7108 = vpop.permute.xlu0 %7107
      %7109 = vrot.lane.b32.xlu0 %v6438, 24
      %v7110 = vpop.permute.xlu0 %7109
      %7111 = vrot.lane.b32.xlu0 %v6488, 24
      %v7112 = vpop.permute.xlu0 %7111
      %7113 = vrot.lane.b32.xlu0 %v6491, 24
      %v7114 = vpop.permute.xlu0 %7113
      %7115 = vrot.lane.b32.xlu0 %v6496, 24
      %v7116 = vpop.permute.xlu0 %7115
      %7117 = vrot.lane.b32.xlu0 %v6499, 24
      %v7118 = vpop.permute.xlu0 %7117
      %7119 = vrot.lane.b32.xlu0 %v6549, 24
      %v7120 = vpop.permute.xlu0 %7119
      %7121 = vrot.lane.b32.xlu0 %v6552, 24
      %v7122 = vpop.permute.xlu0 %7121
      %7123 = vrot.lane.b32.xlu0 %v6557, 24
      %v7124 = vpop.permute.xlu0 %7123
      %7125 = vrot.lane.b32.xlu0 %v6560, 24
      %v7126 = vpop.permute.xlu0 %7125
      %7127 = vrot.lane.b32.xlu0 %v6610, 24
      %v7128 = vpop.permute.xlu0 %7127
      %7129 = vrot.lane.b32.xlu0 %v6613, 24
      %v7130 = vpop.permute.xlu0 %7129
      %7131 = vrot.lane.b32.xlu0 %v6618, 24
      %v7132 = vpop.permute.xlu0 %7131
      %7133 = vrot.lane.b32.xlu0 %v6621, 24
      %v7134 = vpop.permute.xlu0 %7133
      %7135 = vrot.lane.b32.xlu0 %v6671, 24
      %v7136 = vpop.permute.xlu0 %7135
      %7137 = vrot.lane.b32.xlu0 %v6674, 24
      %v7138 = vpop.permute.xlu0 %7137
      %7139 = vrot.lane.b32.xlu0 %v6679, 24
      %v7140 = vpop.permute.xlu0 %7139
      %7141 = vrot.lane.b32.xlu0 %v6682, 24
      %v7142 = vpop.permute.xlu0 %7141
      %7143 = vrot.lane.b32.xlu0 %v6732, 24
      %v7144 = vpop.permute.xlu0 %7143
      %7145 = vrot.lane.b32.xlu0 %v6735, 24
      %v7146 = vpop.permute.xlu0 %7145
      %7147 = vrot.lane.b32.xlu0 %v6740, 24
      %v7148 = vpop.permute.xlu0 %7147
      %7149 = vrot.lane.b32.xlu0 %v6743, 24
      %v7150 = vpop.permute.xlu0 %7149
      %7151 = vrot.lane.b32.xlu0 %v6793, 24
      %v7152 = vpop.permute.xlu0 %7151
      %7153 = vrot.lane.b32.xlu0 %v6796, 24
      %v7154 = vpop.permute.xlu0 %7153
      %7155 = vrot.lane.b32.xlu0 %v6801, 24
      %v7156 = vpop.permute.xlu0 %7155
      %7157 = vrot.lane.b32.xlu0 %v6804, 24
      %v7158 = vpop.permute.xlu0 %7157
      %v7191 = vsel %vm1165, %v2111, %v6840
      %v7192 = vsel %vm1165, %v2114, %v6842
      %v7193 = vsel %vm1165, %v2119, %v6844
      %v7194 = vsel %vm1165, %v2122, %v6846
      %v7195 = vsel %vm1165, %v2172, %v6848
      %v7196 = vsel %vm1165, %v2175, %v6850
      %v7197 = vsel %vm1165, %v2180, %v6852
      %v7198 = vsel %vm1165, %v2183, %v6854
      %v7199 = vsel %vm1165, %v2233, %v6856
      %v7200 = vsel %vm1165, %v2236, %v6858
      %v7201 = vsel %vm1165, %v2241, %v6860
      %v7202 = vsel %vm1165, %v2244, %v6862
      %v7203 = vsel %vm1165, %v2294, %v6864
      %v7204 = vsel %vm1165, %v2297, %v6866
      %v7205 = vsel %vm1165, %v2302, %v6868
      %v7206 = vsel %vm1165, %v2305, %v6870
      %v7207 = vsel %vm1165, %v2355, %v6872
      %v7208 = vsel %vm1165, %v2358, %v6874
      %v7209 = vsel %vm1165, %v2363, %v6876
      %v7210 = vsel %vm1165, %v2366, %v6878
      %v7211 = vsel %vm1165, %v2416, %v6880
      %v7212 = vsel %vm1165, %v2419, %v6882
      %v7213 = vsel %vm1165, %v2424, %v6884
      %v7214 = vsel %vm1165, %v2427, %v6886
      %v7215 = vsel %vm1165, %v2477, %v6888
      %v7216 = vsel %vm1165, %v2480, %v6890
      %v7217 = vsel %vm1165, %v2485, %v6892
      %v7218 = vsel %vm1165, %v2488, %v6894
      %v7219 = vsel %vm1165, %v2538, %v6896
      %v7220 = vsel %vm1165, %v2541, %v6898
      %v7221 = vsel %vm1165, %v2546, %v6900
      %v7222 = vsel %vm1165, %v2549, %v6902
      %vm7223 = vcmask 130048
      %v7224 = vsel %vm7223, %v7191, %v6968
      %v7225 = vsel %vm7223, %v7192, %v6970
      %v7226 = vsel %vm7223, %v7193, %v6972
      %v7227 = vsel %vm7223, %v7194, %v6974
      %v7228 = vsel %vm7223, %v7195, %v6976
      %v7229 = vsel %vm7223, %v7196, %v6978
      %v7230 = vsel %vm7223, %v7197, %v6980
      %v7231 = vsel %vm7223, %v7198, %v6982
      %v7232 = vsel %vm7223, %v7199, %v6984
      %v7233 = vsel %vm7223, %v7200, %v6986
      %v7234 = vsel %vm7223, %v7201, %v6988
      %v7235 = vsel %vm7223, %v7202, %v6990
      %v7236 = vsel %vm7223, %v7203, %v6992
      %v7237 = vsel %vm7223, %v7204, %v6994
      %v7238 = vsel %vm7223, %v7205, %v6996
      %v7239 = vsel %vm7223, %v7206, %v6998
      %v7240 = vsel %vm7223, %v7207, %v7000
      %v7241 = vsel %vm7223, %v7208, %v7002
      %v7242 = vsel %vm7223, %v7209, %v7004
      %v7243 = vsel %vm7223, %v7210, %v7006
      %v7244 = vsel %vm7223, %v7211, %v7008
      %v7245 = vsel %vm7223, %v7212, %v7010
      %v7246 = vsel %vm7223, %v7213, %v7012
      %v7247 = vsel %vm7223, %v7214, %v7014
      %v7248 = vsel %vm7223, %v7215, %v7016
      %v7249 = vsel %vm7223, %v7216, %v7018
      %v7250 = vsel %vm7223, %v7217, %v7020
      %v7251 = vsel %vm7223, %v7218, %v7022
      %v7252 = vsel %vm7223, %v7219, %v7024
      %v7253 = vsel %vm7223, %v7220, %v7026
      %v7254 = vsel %vm7223, %v7221, %v7028
      %v7255 = vsel %vm7223, %v7222, %v7030
      %vm7256 = vcmask 195584
      %v7257 = vsel %vm7256, %v7224, %v7096
      %v7258 = vsel %vm7256, %v7225, %v7098
      %v7259 = vsel %vm7256, %v7226, %v7100
      %v7260 = vsel %vm7256, %v7227, %v7102
      %v7261 = vsel %vm7256, %v7228, %v7104
      %v7262 = vsel %vm7256, %v7229, %v7106
      %v7263 = vsel %vm7256, %v7230, %v7108
      %v7264 = vsel %vm7256, %v7231, %v7110
      %v7265 = vsel %vm7256, %v7232, %v7112
      %v7266 = vsel %vm7256, %v7233, %v7114
      %v7267 = vsel %vm7256, %v7234, %v7116
      %v7268 = vsel %vm7256, %v7235, %v7118
      %v7269 = vsel %vm7256, %v7236, %v7120
      %v7270 = vsel %vm7256, %v7237, %v7122
      %v7271 = vsel %vm7256, %v7238, %v7124
      %v7272 = vsel %vm7256, %v7239, %v7126
      %v7273 = vsel %vm7256, %v7240, %v7128
      %v7274 = vsel %vm7256, %v7241, %v7130
      %v7275 = vsel %vm7256, %v7242, %v7132
      %v7276 = vsel %vm7256, %v7243, %v7134
      %v7277 = vsel %vm7256, %v7244, %v7136
      %v7278 = vsel %vm7256, %v7245, %v7138
      %v7279 = vsel %vm7256, %v7246, %v7140
      %v7280 = vsel %vm7256, %v7247, %v7142
      %v7281 = vsel %vm7256, %v7248, %v7144
      %v7282 = vsel %vm7256, %v7249, %v7146
      %v7283 = vsel %vm7256, %v7250, %v7148
      %v7284 = vsel %vm7256, %v7251, %v7150
      %v7285 = vsel %vm7256, %v7252, %v7152
      %v7286 = vsel %vm7256, %v7253, %v7154
      %v7287 = vsel %vm7256, %v7254, %v7156
      %v7288 = vsel %vm7256, %v7255, %v7158
      %v7289 = vpack.c.bf16 %v7258, %v7257
      %v7290 = vpack.c.bf16 %v7260, %v7259
      %v7291 = vpack.c.bf16 %v7262, %v7261
      %v7292 = vpack.c.bf16 %v7264, %v7263
      %v7293 = vpack.c.bf16 %v7266, %v7265
      %v7294 = vpack.c.bf16 %v7268, %v7267
      %v7295 = vpack.c.bf16 %v7270, %v7269
      %v7296 = vpack.c.bf16 %v7272, %v7271
      %v7297 = vpack.c.bf16 %v7274, %v7273
      %v7298 = vpack.c.bf16 %v7276, %v7275
      %v7299 = vpack.c.bf16 %v7278, %v7277
      %v7300 = vpack.c.bf16 %v7280, %v7279
      %v7301 = vpack.c.bf16 %v7282, %v7281
      %v7302 = vpack.c.bf16 %v7284, %v7283
      %v7303 = vpack.c.bf16 %v7286, %v7285
      %v7304 = vpack.c.bf16 %v7288, %v7287
      %v7305 = vld [vmem:[%s6] sm:$0xf]
      %v7306 = vld [vmem:[%s6 + $0x4] sm:$0xf]
      %v7307 = vld [vmem:[%s6 + $0x8] sm:$0xf]
      %v7308 = vld [vmem:[%s6 + $0xc] sm:$0xf]
      %v7309 = vld [vmem:[%s7] sm:$0x1]
      %v7311 = vlaneseq
      %v7312 = vshrl.u32 %v7311, 7
      %v7313 = vsub.s32 0, %v7312
      %v7314 = vrot.slane %v7309, %v7313
      %v7320 = vunpack.c.l.b16 %v7305
      %v7321 = vunpack.c.l.b16 %v7306
      %v7322 = vunpack.c.l.b16 %v7307
      %v7323 = vunpack.c.l.b16 %v7308
      %v7324 = vpack.c.b16 %v7321, %v7320
      %v7325 = vpack.c.b16 %v7323, %v7322
      %v7329 = vsel %vm347, %v7289, 0
      %v7332 = vsel %vm347, %v7290, 0
      %v7335 = vsel %vm347, %v7291, 0
      %v7338 = vsel %vm347, %v7292, 0
      %v7341 = vsel %vm347, %v7293, 0
      %v7344 = vsel %vm347, %v7294, 0
      %v7347 = vsel %vm347, %v7295, 0
      %v7350 = vsel %vm347, %v7296, 0
      %v7353 = vsel %vm347, %v7297, 0
      %v7356 = vsel %vm347, %v7298, 0
      %v7359 = vsel %vm347, %v7299, 0
      %v7362 = vsel %vm347, %v7300, 0
      %v7365 = vsel %vm347, %v7301, 0
      %v7368 = vsel %vm347, %v7302, 0
      %v7371 = vsel %vm347, %v7303, 0
      %v7374 = vsel %vm347, %v7304, 0
      %7376 = vmatprep.subr.bf16.mxu0 0
      %7377 = vmatpush1.bf16.msra.mxu0 0
      %7378 = vmatprep.subr.bf16.mxu0 0
      %7379 = vmatpush1.bf16.msra.mxu0 0
      %7380 = vmatprep.subr.bf16.mxu0 0
      %7381 = vmatpush1.bf16.msra.mxu0 0
      %7382 = vmatprep.subr.bf16.mxu0 0
      %7383 = vmatpush1.bf16.msra.mxu0 0
      %7384 = vmatprep.subr.bf16.mxu0 0
      %7385 = vmatpush1.bf16.msra.mxu0 0
      %7386 = vmatprep.subr.bf16.mxu0 0
      %7387 = vmatpush1.bf16.msra.mxu0 0
      %7388 = vmatprep.subr.bf16.mxu0 0
      %7389 = vmatpush1.bf16.msra.mxu0 %v7325
      %7390 = vmatprep.subr.bf16.mxu0 0
      %7391 = vmatpush1.bf16.msra.mxu0 %v7324
      %7392 = vmatprep.subr.bf16.mxu0 0
      %7393 = vmatpush2.bf16.msra.mxu0 0
      %7394 = vmatprep.subr.bf16.mxu0 0
      %7395 = vmatpush2.bf16.msra.mxu0 0
      %7396 = vmatprep.subr.bf16.mxu0 0
      %7397 = vmatpush2.bf16.msra.mxu0 0
      %7398 = vmatprep.subr.bf16.mxu0 0
      %7399 = vmatpush2.bf16.msra.mxu0 0
      %7400 = vmatprep.subr.bf16.mxu0 0
      %7401 = vmatpush2.bf16.msra.mxu0 0
      %7402 = vmatprep.subr.bf16.mxu0 0
      %7403 = vmatpush2.bf16.msra.mxu0 0
      %7404 = vmatprep.subr.bf16.mxu0 0
      %7405 = vmatpush2.bf16.msra.mxu0 0
      %7406 = vmatprep.subr.bf16.mxu0 0
      %7407 = vmatpush2.bf16.msra.mxu0 0
      %7408 = vmatprep.mubr.bf16.mxu0 0
      %7409 = vmatmul.mubr.bf16.gmra.mxu0 %v7329
      %v7410 = vpop.f32.mrf.mxu0
      %v7411 = vadd.f32 %v7314, %v7410
      %v7412 = vpop.f32.mrf.mxu0
      %v7413 = vpop.f32.mrf.mxu0
      %v7414 = vadd.f32 %v7314, %v7413
      %v7415 = vpop.f32.mrf.mxu0
      %7416 = vmatprep.mubr.bf16.mxu0 0
      %7417 = vmatmul.mubr.bf16.gmra.mxu0 %v7332
      %v7418 = vpop.f32.mrf.mxu0
      %v7419 = vadd.f32 %v7314, %v7418
      %v7420 = vpop.f32.mrf.mxu0
      %v7421 = vpop.f32.mrf.mxu0
      %v7422 = vadd.f32 %v7314, %v7421
      %v7423 = vpop.f32.mrf.mxu0
      %7424 = vmatprep.mubr.bf16.mxu0 0
      %7425 = vmatmul.mubr.bf16.gmra.mxu0 %v7335
      %v7426 = vpop.f32.mrf.mxu0
      %v7427 = vadd.f32 %v7314, %v7426
      %v7428 = vpop.f32.mrf.mxu0
      %v7429 = vpop.f32.mrf.mxu0
      %v7430 = vadd.f32 %v7314, %v7429
      %v7431 = vpop.f32.mrf.mxu0
      %7432 = vmatprep.mubr.bf16.mxu0 0
      %7433 = vmatmul.mubr.bf16.gmra.mxu0 %v7338
      %v7434 = vpop.f32.mrf.mxu0
      %v7435 = vadd.f32 %v7314, %v7434
      %v7436 = vpop.f32.mrf.mxu0
      %v7437 = vpop.f32.mrf.mxu0
      %v7438 = vadd.f32 %v7314, %v7437
      %v7439 = vpop.f32.mrf.mxu0
      %7440 = vmatprep.mubr.bf16.mxu0 0
      %7441 = vmatmul.mubr.bf16.gmra.mxu0 %v7341
      %v7442 = vpop.f32.mrf.mxu0
      %v7443 = vadd.f32 %v7314, %v7442
      %v7444 = vpop.f32.mrf.mxu0
      %v7445 = vpop.f32.mrf.mxu0
      %v7446 = vadd.f32 %v7314, %v7445
      %v7447 = vpop.f32.mrf.mxu0
      %7448 = vmatprep.mubr.bf16.mxu0 0
      %7449 = vmatmul.mubr.bf16.gmra.mxu0 %v7344
      %v7450 = vpop.f32.mrf.mxu0
      %v7451 = vadd.f32 %v7314, %v7450
      %v7452 = vpop.f32.mrf.mxu0
      %v7453 = vpop.f32.mrf.mxu0
      %v7454 = vadd.f32 %v7314, %v7453
      %v7455 = vpop.f32.mrf.mxu0
      %7456 = vmatprep.mubr.bf16.mxu0 0
      %7457 = vmatmul.mubr.bf16.gmra.mxu0 %v7347
      %v7458 = vpop.f32.mrf.mxu0
      %v7459 = vadd.f32 %v7314, %v7458
      %v7460 = vpop.f32.mrf.mxu0
      %v7461 = vpop.f32.mrf.mxu0
      %v7462 = vadd.f32 %v7314, %v7461
      %v7463 = vpop.f32.mrf.mxu0
      %7464 = vmatprep.mubr.bf16.mxu0 0
      %7465 = vmatmul.mubr.bf16.gmra.mxu0 %v7350
      %v7466 = vpop.f32.mrf.mxu0
      %v7467 = vadd.f32 %v7314, %v7466
      %v7468 = vpop.f32.mrf.mxu0
      %v7469 = vpop.f32.mrf.mxu0
      %v7470 = vadd.f32 %v7314, %v7469
      %v7471 = vpop.f32.mrf.mxu0
      %7472 = vmatprep.mubr.bf16.mxu0 0
      %7473 = vmatmul.mubr.bf16.gmra.mxu0 %v7353
      %v7474 = vpop.f32.mrf.mxu0
      %v7475 = vadd.f32 %v7314, %v7474
      %v7476 = vpop.f32.mrf.mxu0
      %v7477 = vpop.f32.mrf.mxu0
      %v7478 = vadd.f32 %v7314, %v7477
      %v7479 = vpop.f32.mrf.mxu0
      %7480 = vmatprep.mubr.bf16.mxu0 0
      %7481 = vmatmul.mubr.bf16.gmra.mxu0 %v7356
      %v7482 = vpop.f32.mrf.mxu0
      %v7483 = vadd.f32 %v7314, %v7482
      %v7484 = vpop.f32.mrf.mxu0
      %v7485 = vpop.f32.mrf.mxu0
      %v7486 = vadd.f32 %v7314, %v7485
      %v7487 = vpop.f32.mrf.mxu0
      %7488 = vmatprep.mubr.bf16.mxu0 0
      %7489 = vmatmul.mubr.bf16.gmra.mxu0 %v7359
      %v7490 = vpop.f32.mrf.mxu0
      %v7491 = vadd.f32 %v7314, %v7490
      %v7492 = vpop.f32.mrf.mxu0
      %v7493 = vpop.f32.mrf.mxu0
      %v7494 = vadd.f32 %v7314, %v7493
      %v7495 = vpop.f32.mrf.mxu0
      %7496 = vmatprep.mubr.bf16.mxu0 0
      %7497 = vmatmul.mubr.bf16.gmra.mxu0 %v7362
      %v7498 = vpop.f32.mrf.mxu0
      %v7499 = vadd.f32 %v7314, %v7498
      %v7500 = vpop.f32.mrf.mxu0
      %v7501 = vpop.f32.mrf.mxu0
      %v7502 = vadd.f32 %v7314, %v7501
      %v7503 = vpop.f32.mrf.mxu0
      %7504 = vmatprep.mubr.bf16.mxu0 0
      %7505 = vmatmul.mubr.bf16.gmra.mxu0 %v7365
      %v7506 = vpop.f32.mrf.mxu0
      %v7507 = vadd.f32 %v7314, %v7506
      %v7508 = vpop.f32.mrf.mxu0
      %v7509 = vpop.f32.mrf.mxu0
      %v7510 = vadd.f32 %v7314, %v7509
      %v7511 = vpop.f32.mrf.mxu0
      %7512 = vmatprep.mubr.bf16.mxu0 0
      %7513 = vmatmul.mubr.bf16.gmra.mxu0 %v7368
      %v7514 = vpop.f32.mrf.mxu0
      %v7515 = vadd.f32 %v7314, %v7514
      %v7516 = vpop.f32.mrf.mxu0
      %v7517 = vpop.f32.mrf.mxu0
      %v7518 = vadd.f32 %v7314, %v7517
      %v7519 = vpop.f32.mrf.mxu0
      %7520 = vmatprep.mubr.bf16.mxu0 0
      %7521 = vmatmul.mubr.bf16.gmra.mxu0 %v7371
      %v7522 = vpop.f32.mrf.mxu0
      %v7523 = vadd.f32 %v7314, %v7522
      %v7524 = vpop.f32.mrf.mxu0
      %v7525 = vpop.f32.mrf.mxu0
      %v7526 = vadd.f32 %v7314, %v7525
      %v7527 = vpop.f32.mrf.mxu0
      %7528 = vmatprep.mubr.bf16.mxu0 0
      %7529 = vmatmul.mubr.bf16.gmra.mxu0 %v7374
      %v7530 = vpop.f32.mrf.mxu0
      %v7531 = vadd.f32 %v7314, %v7530
      %v7532 = vpop.f32.mrf.mxu0
      %v7533 = vpop.f32.mrf.mxu0
      %v7534 = vadd.f32 %v7314, %v7533
      %v7535 = vpop.f32.mrf.mxu0
      %7536 = vdwg.mxu0
      %7537 = vst.msk [vmem:[%s312] sm:$0xff] %vm347, %v7411
      %7538 = vst.msk [vmem:[%s312 + $0x8] sm:$0xff] %vm347, %v7414
      %7539 = vst.msk [vmem:[%s312 + $0x10] sm:$0xff] %vm347, %v7419
      %7540 = vst.msk [vmem:[%s312 + $0x18] sm:$0xff] %vm347, %v7422
      %7541 = vst.msk [vmem:[%s312 + $0x20] sm:$0xff] %vm347, %v7427
      %7542 = vst.msk [vmem:[%s312 + $0x28] sm:$0xff] %vm347, %v7430
      %7543 = vst.msk [vmem:[%s312 + $0x30] sm:$0xff] %vm347, %v7435
      %7544 = vst.msk [vmem:[%s312 + $0x38] sm:$0xff] %vm347, %v7438
      %7545 = vst.msk [vmem:[%s312 + $0x40] sm:$0xff] %vm347, %v7443
      %7546 = vst.msk [vmem:[%s312 + $0x48] sm:$0xff] %vm347, %v7446
      %7547 = vst.msk [vmem:[%s312 + $0x50] sm:$0xff] %vm347, %v7451
      %7548 = vst.msk [vmem:[%s312 + $0x58] sm:$0xff] %vm347, %v7454
      %7549 = vst.msk [vmem:[%s312 + $0x60] sm:$0xff] %vm347, %v7459
      %7550 = vst.msk [vmem:[%s312 + $0x68] sm:$0xff] %vm347, %v7462
      %7551 = vst.msk [vmem:[%s312 + $0x70] sm:$0xff] %vm347, %v7467
      %7552 = vst.msk [vmem:[%s312 + $0x78] sm:$0xff] %vm347, %v7470
      %7553 = vst.msk [vmem:[%s312 + $0x80] sm:$0xff] %vm347, %v7475
      %7554 = vst.msk [vmem:[%s312 + $0x88] sm:$0xff] %vm347, %v7478
      %7555 = vst.msk [vmem:[%s312 + $0x90] sm:$0xff] %vm347, %v7483
      %7556 = vst.msk [vmem:[%s312 + $0x98] sm:$0xff] %vm347, %v7486
      %7557 = vst.msk [vmem:[%s312 + $0xa0] sm:$0xff] %vm347, %v7491
      %7558 = vst.msk [vmem:[%s312 + $0xa8] sm:$0xff] %vm347, %v7494
      %7559 = vst.msk [vmem:[%s312 + $0xb0] sm:$0xff] %vm347, %v7499
      %7560 = vst.msk [vmem:[%s312 + $0xb8] sm:$0xff] %vm347, %v7502
      %7561 = vst.msk [vmem:[%s312 + $0xc0] sm:$0xff] %vm347, %v7507
      %7562 = vst.msk [vmem:[%s312 + $0xc8] sm:$0xff] %vm347, %v7510
      %7563 = vst.msk [vmem:[%s312 + $0xd0] sm:$0xff] %vm347, %v7515
      %7564 = vst.msk [vmem:[%s312 + $0xd8] sm:$0xff] %vm347, %v7518
      %7565 = vst.msk [vmem:[%s312 + $0xe0] sm:$0xff] %vm347, %v7523
      %7566 = vst.msk [vmem:[%s312 + $0xe8] sm:$0xff] %vm347, %v7526
      %7567 = vst.msk [vmem:[%s312 + $0xf0] sm:$0xff] %vm347, %v7531
      %7568 = vst.msk [vmem:[%s312 + $0xf8] sm:$0xff] %vm347, %v7534
      %s7569 = smul.u32 8, %s19
      %p7570 = scmp.lt.s32.totalorder %s7569, 15
      %s7571 = scalar_select %p7570, %s7569, 15
      %s7572 = smul.addr %s7571, 4
      %s7573 = smul.addr %s7572, 8
      %s7574 = scalar_lea.vmem %s8, %s7573
      // Predicated region
      $region53: #{_lambda_.4} parent=51 // pred_check
        %p7575 = pneg %p210
      $region54: #{_lambda_.4} parent=51 // pred_check_branch
        %7577 = sbr.rel (%p7575) target = $region56
      $region55: #{_lambda_.4} parent=51 // pred_region
        %s7578 = smul.u32 8, %s19
      $region56: #{_lambda_.4} parent=51 // pred_fallthru
        _
    $region52: #{_lambda_.4} parent=5 // pred_fallthru
      _
    %p7579 = scmp.le.s32.totalorder 2, %s14
    // Predicated region
    $region57: #{_lambda_.4} parent=5 // pred_check
      %p7580 = pneg %p7579
    $region58: #{_lambda_.4} parent=5 // pred_check_branch
      %7582 = sbr.rel (%p7580) target = $region60
    $region59: #{_lambda_.4} parent=5 // pred_region
      %s7583 = ssub.s32 %s14, 2
      // Predicated region
      $region61: #{_lambda_.4} parent=59 // pred_check
        %p7584 = pneg %p216
      $region62: #{_lambda_.4} parent=59 // pred_check_branch
        %7586 = sbr.rel (%p7584) target = $region64
      $region63: #{_lambda_.4} parent=59 // pred_region
        %s7587 = smul.u32 8, %s20
        %p7588 = scmp.lt.s32.totalorder %s7587, 15
        %s7589 = scalar_select %p7588, %s7587, 15
        %s7590 = smul.addr %s7589, 4
        %s7591 = smul.addr %s7590, 8
        %s7592 = scalar_lea.vmem %s8, %s7591
      $region64: #{_lambda_.4} parent=59 // pred_fallthru
        _
    $region60: #{_lambda_.4} parent=5 // pred_fallthru
      _
  $region6: #{_lambda_.4} parent=0 // loop_footer
    %s18 = sadd.s32 1, %s14
  $region7: #{_lambda_.4} parent=0 // loop_footer_branch
    %13 = sbr.rel target = $region3
  $region8: #{_lambda_.4} parent=0 // loop_exit
    _

</llo_original>
